<compile_context>
chip_gen: v7x
topology: tpu7x:2x2x1
jax: 0.10.0
libtpu: 0.0.40
codegen_flags: <defaults>
</compile_context>

<pallas_src>
import jax
import jax.numpy as jnp
from jax import lax
from jax.experimental import pallas as pl
from jax.experimental.pallas import tpu as pltpu


# ---------------------------------------------------------------------------
# Pallas kernel: fused upsample(2x bilinear) + pad + 3x3 conv + InstanceNorm + LeakyReLU
# ---------------------------------------------------------------------------
def upblock_kernel(x_ref, taps_mat_ref, w_ref, o_ref):
    # x_ref        : (1, Cin, H*W)        one input image, spatial flattened (lane-dense)
    # taps_mat_ref : (9, H*W, 4*H*W)      per-tap composed upsample+pad+shift matrices
    # w_ref        : (Cout, 9*Cin)        conv weights, k = (dh*3+dw)*Cin + ci (VMEM)
    # o_ref        : (1, Cout, 4*H*W)     one output image, spatial flattened (lane-dense)
    n_taps = taps_mat_ref.shape[0]
    x2 = x_ref[0]                                                  # (Cin, H*W)

    # Build the shifted 3x3-tap stack with lane-dense MXU dots: row t*Cin+ci of `taps`
    # is the (i+dh, j+dw)-shifted, zero-padded, 2x-bilinear-upsampled channel ci,
    # flattened to 4*H*W lanes.
    taps = jnp.concatenate(
        [jnp.dot(x2, taps_mat_ref[t], preferred_element_type=jnp.float32)
         for t in range(n_taps)],
        axis=0)                                                    # (9*Cin, 4*H*W)

    # 3x3 conv == one MXU dot over the 9*Cin contraction axis.
    y = jnp.dot(w_ref[...], taps, preferred_element_type=jnp.float32)   # (Cout, 4*H*W)

    # InstanceNorm2d (affine=False, eps=1e-5): wide lane reductions, all channels at once.
    mean = jnp.mean(y, axis=-1, keepdims=True)
    cent = y - mean
    var = jnp.mean(cent * cent, axis=-1, keepdims=True)
    yn = cent * lax.rsqrt(var + 1e-5)

    # LeakyReLU(0.2); full-width (4*H*W-lane) unmasked store.
    o_ref[0] = jnp.where(yn >= 0, yn, 0.2 * yn)


# ---------------------------------------------------------------------------
# Wrapper
# ---------------------------------------------------------------------------
def _bilinear_up2_matrix(length):
    """(2L, L) matrix M s.t. M @ v is PyTorch's 2x bilinear (align_corners=False)
    upsample of v (0.75/0.25 taps with edge clamping)."""
    d = jnp.arange(2 * length)
    src = d // 2
    nb = jnp.where(d % 2 == 1,
                   jnp.minimum(src + 1, length - 1),
                   jnp.maximum(src - 1, 0))
    cols = jnp.arange(length)
    main = (cols[None, :] == src[:, None]).astype(jnp.float32)
    side = (cols[None, :] == nb[:, None]).astype(jnp.float32)
    return 0.75 * main + 0.25 * side


def _padded_up2_matrix(length):
    """(2L+2, L): bilinear 2x upsample with the conv's pad=1 halo folded in as zero
    first/last rows (no lane-axis concatenation needed inside the kernel)."""
    m = _bilinear_up2_matrix(length)
    z = jnp.zeros((1, length), jnp.float32)
    return jnp.concatenate([z, m, z], axis=0)


@jax.jit
def upblock_forward(x_nchw, w_oihw, bias=None):
    """UpBlock forward: (N, Cin, H, W) -> (N, Cout, 2H, 2W). NCHW in, NCHW out."""
    N, Cin, H, W = x_nchw.shape
    Cout = w_oihw.shape[0]
    H2, W2 = 2 * H, 2 * W
    HW, HW4 = H * W, H2 * W2

    # Lane-dense input: (N, Cin, H*W); reshape is free (H, W contiguous in NCHW).
    x_flat = x_nchw.reshape(N, Cin, HW).astype(jnp.float32)

    # Upsample + pad matrices along each axis, with the 3 conv-tap shifts folded in.
    mh = _padded_up2_matrix(H)                                     # (2H+2, H)
    mw = _padded_up2_matrix(W)                                     # (2W+2, W)
    mh_sh = jnp.stack([mh[dh:dh + H2] for dh in range(3)], axis=0)  # (3, H2, H)
    mw_sh = jnp.stack([mw[dw:dw + W2] for dw in range(3)], axis=0)  # (3, W2, W)
    # taps_mat[t, h*W + w, i*W2 + j] = mh[i+dh, h] * mw[j+dw, w],  t = dh*3 + dw
    taps_mat = jnp.einsum('aih,bjw->abhwij', mh_sh, mw_sh).reshape(9, HW, HW4)

    # OIHW -> (Cout, kh, kw, Cin) -> (Cout, 9*Cin); flat index = (dh*3+dw)*Cin + ci.
    w_flat = jnp.transpose(w_oihw, (0, 2, 3, 1)).reshape(Cout, 9 * Cin).astype(jnp.float32)

    # Conv bias intentionally unused: InstanceNorm2d(affine=False) subtracts the
    # per-channel mean, which cancels a per-channel bias exactly.  This is ONLY valid
    # because IN (affine=False) immediately follows the conv in this module.
    del bias

    # TODO(synk): for production shapes cast the MXU operands (x, taps_mat) to bf16
    # (the interpolation weights are dyadic and exact in bf16) and keep the post-matmul
    # math in f32; kept f32 here to hold the tight 5e-3 numerical check.
    out_flat = pl.pallas_call(
        upblock_kernel,
        out_shape=jax.ShapeDtypeStruct((N, Cout, HW4), jnp.float32),
        grid_spec=pltpu.PrefetchScalarGridSpec(
            num_scalar_prefetch=0,
            grid=(N,),                      # N>=2 keeps both v7x TensorCores busy
            in_specs=[
                pl.BlockSpec((1, Cin, HW), lambda n: (n, 0, 0)),
                pl.BlockSpec((9, HW, HW4), lambda n: (0, 0, 0)),   # resident constant
                pl.BlockSpec((Cout, 9 * Cin), lambda n: (0, 0)),   # weights in VMEM (MXU)
            ],
            out_specs=pl.BlockSpec((1, Cout, HW4), lambda n: (n, 0, 0)),
        ),
        compiler_params=pltpu.CompilerParams(
            dimension_semantics=("parallel",),
            vmem_limit_bytes=48 * 1024 * 1024,
        ),
    )(x_flat, taps_mat, w_flat)

    return out_flat.reshape(N, Cout, H2, W2)


# ---------------------------------------------------------------------------
# Pure-JAX reference (independent code path, for a silent sanity check)
# ---------------------------------------------------------------------------
def _upsample2x_axis_ref(x, axis):
    def take(sl):
        idx = [slice(None)] * x.ndim
        idx[axis] = sl
        return x[tuple(idx)]
    x_prev = jnp.concatenate([take(slice(0, 1)), take(slice(0, -1))], axis=axis)
    x_next = jnp.concatenate([take(slice(1, None)), take(slice(-1, None))], axis=axis)
    even = 0.75 * x + 0.25 * x_prev
    odd = 0.75 * x + 0.25 * x_next
    stacked = jnp.stack([even, odd], axis=axis + 1)
    new_shape = list(x.shape)
    new_shape[axis] = 2 * x.shape[axis]
    return stacked.reshape(new_shape)


def upblock_reference(x_nchw, w_oihw, bias):
    x = jnp.transpose(x_nchw, (0, 2, 3, 1)).astype(jnp.float32)
    x_up = _upsample2x_axis_ref(_upsample2x_axis_ref(x, 1), 2)
    w_hwio = jnp.transpose(w_oihw, (2, 3, 1, 0)).astype(jnp.float32)
    y = lax.conv_general_dilated(
        x_up, w_hwio, window_strides=(1, 1), padding="SAME",
        dimension_numbers=("NHWC", "HWIO", "NHWC"),
        precision=lax.Precision.HIGHEST,
    ) + bias[None, None, None, :]
    mean = jnp.mean(y, axis=(1, 2), keepdims=True)
    var = jnp.mean((y - mean) ** 2, axis=(1, 2), keepdims=True)
    y = (y - mean) * lax.rsqrt(var + 1e-5)
    y = jnp.where(y >= 0, y, 0.2 * y)
    return jnp.transpose(y, (0, 3, 1, 2))


if __name__ == "__main__":
    key = jax.random.PRNGKey(0)
    k_x, k_w, k_b = jax.random.split(key, 3)

    N, Cin, H, W = 2, 4, 16, 16
    Cout = 8

    x = jax.random.normal(k_x, (N, Cin, H, W), dtype=jnp.float32)
    # deterministic synthetic parameters (PyTorch OIHW conv weight layout)
    w = jax.random.normal(k_w, (Cout, Cin, 3, 3), dtype=jnp.float32) * 0.1
    b = jax.random.normal(k_b, (Cout,), dtype=jnp.float32) * 0.1

    out = jax.block_until_ready(upblock_forward(x, w, b))
    assert out.shape == (N, Cout, 2 * H, 2 * W), out.shape

    ref = jax.block_until_ready(upblock_reference(x, w, b))
    max_err = float(jnp.max(jnp.abs(out - ref)))
    assert jnp.allclose(out, ref, atol=5e-3, rtol=5e-3), max_err

    print("KERNEL_OK")
</pallas_src>

<mosaic_0001>
module attributes {stable_mosaic.version = 11 : i64} {
  func.func @upblock_kernel(%arg0: i32, %arg1: memref<1x4x256xf32, #tpu.memory_space<vmem>>, %arg2: memref<9x256x1024xf32, #tpu.memory_space<vmem>>, %arg3: memref<8x36xf32, #tpu.memory_space<vmem>>, %arg4: memref<1x8x1024xf32, #tpu.memory_space<vmem>>) attributes {dimension_semantics = [#tpu.dimension_semantics<parallel>], iteration_bounds = array<i64: 2>, scalar_prefetch = 0 : i64, scratch_operands = 0 : i64, tpu.core_type = #tpu.core_type<tc>, window_params = [{transform_indices = @transform_0, window_bounds = array<i64: 1, 4, 256>}, {pipeline_mode = #tpu.pipeline_mode<synchronous>, transform_indices = @transform_1, window_bounds = array<i64: 9, 256, 1024>}, {pipeline_mode = #tpu.pipeline_mode<synchronous>, transform_indices = @transform_2, window_bounds = array<i64: 8, 36>}, {transform_indices = @transform_3, window_bounds = array<i64: 1, 8, 1024>}]} {
    %c0 = arith.constant 0 : index
    %c0_0 = arith.constant 0 : index
    %c0_1 = arith.constant 0 : index
    %0 = vector.load %arg1[%c0, %c0_0, %c0_1] : memref<1x4x256xf32, #tpu.memory_space<vmem>>, vector<1x4x256xf32>
    %1 = vector.shape_cast %0 : vector<1x4x256xf32> to vector<4x256xf32>
    %c0_2 = arith.constant 0 : index
    %c0_3 = arith.constant 0 : index
    %c0_4 = arith.constant 0 : index
    %2 = vector.load %arg2[%c0_2, %c0_3, %c0_4] : memref<9x256x1024xf32, #tpu.memory_space<vmem>>, vector<1x256x1024xf32>
    %3 = vector.shape_cast %2 : vector<1x256x1024xf32> to vector<256x1024xf32>
    %cst = arith.constant dense<0.000000e+00> : vector<4x1024xf32>
    %4 = tpu.matmul %1, %3, %cst {dimension_numbers = #tpu.dot_dimension_numbers<[1], [0], [0], [1], [0, 0, 1, 1], [], []>} : vector<4x256xf32>, vector<256x1024xf32>, vector<4x1024xf32> -> vector<4x1024xf32>
    %c1 = arith.constant 1 : index
    %c0_5 = arith.constant 0 : index
    %c0_6 = arith.constant 0 : index
    %5 = vector.load %arg2[%c1, %c0_5, %c0_6] : memref<9x256x1024xf32, #tpu.memory_space<vmem>>, vector<1x256x1024xf32>
    %6 = vector.shape_cast %5 : vector<1x256x1024xf32> to vector<256x1024xf32>
    %cst_7 = arith.constant dense<0.000000e+00> : vector<4x1024xf32>
    %7 = tpu.matmul %1, %6, %cst_7 {dimension_numbers = #tpu.dot_dimension_numbers<[1], [0], [0], [1], [0, 0, 1, 1], [], []>} : vector<4x256xf32>, vector<256x1024xf32>, vector<4x1024xf32> -> vector<4x1024xf32>
    %c2 = arith.constant 2 : index
    %c0_8 = arith.constant 0 : index
    %c0_9 = arith.constant 0 : index
    %8 = vector.load %arg2[%c2, %c0_8, %c0_9] : memref<9x256x1024xf32, #tpu.memory_space<vmem>>, vector<1x256x1024xf32>
    %9 = vector.shape_cast %8 : vector<1x256x1024xf32> to vector<256x1024xf32>
    %cst_10 = arith.constant dense<0.000000e+00> : vector<4x1024xf32>
    %10 = tpu.matmul %1, %9, %cst_10 {dimension_numbers = #tpu.dot_dimension_numbers<[1], [0], [0], [1], [0, 0, 1, 1], [], []>} : vector<4x256xf32>, vector<256x1024xf32>, vector<4x1024xf32> -> vector<4x1024xf32>
    %c3 = arith.constant 3 : index
    %c0_11 = arith.constant 0 : index
    %c0_12 = arith.constant 0 : index
    %11 = vector.load %arg2[%c3, %c0_11, %c0_12] : memref<9x256x1024xf32, #tpu.memory_space<vmem>>, vector<1x256x1024xf32>
    %12 = vector.shape_cast %11 : vector<1x256x1024xf32> to vector<256x1024xf32>
    %cst_13 = arith.constant dense<0.000000e+00> : vector<4x1024xf32>
    %13 = tpu.matmul %1, %12, %cst_13 {dimension_numbers = #tpu.dot_dimension_numbers<[1], [0], [0], [1], [0, 0, 1, 1], [], []>} : vector<4x256xf32>, vector<256x1024xf32>, vector<4x1024xf32> -> vector<4x1024xf32>
    %c4 = arith.constant 4 : index
    %c0_14 = arith.constant 0 : index
    %c0_15 = arith.constant 0 : index
    %14 = vector.load %arg2[%c4, %c0_14, %c0_15] : memref<9x256x1024xf32, #tpu.memory_space<vmem>>, vector<1x256x1024xf32>
    %15 = vector.shape_cast %14 : vector<1x256x1024xf32> to vector<256x1024xf32>
    %cst_16 = arith.constant dense<0.000000e+00> : vector<4x1024xf32>
    %16 = tpu.matmul %1, %15, %cst_16 {dimension_numbers = #tpu.dot_dimension_numbers<[1], [0], [0], [1], [0, 0, 1, 1], [], []>} : vector<4x256xf32>, vector<256x1024xf32>, vector<4x1024xf32> -> vector<4x1024xf32>
    %c5 = arith.constant 5 : index
    %c0_17 = arith.constant 0 : index
    %c0_18 = arith.constant 0 : index
    %17 = vector.load %arg2[%c5, %c0_17, %c0_18] : memref<9x256x1024xf32, #tpu.memory_space<vmem>>, vector<1x256x1024xf32>
    %18 = vector.shape_cast %17 : vector<1x256x1024xf32> to vector<256x1024xf32>
    %cst_19 = arith.constant dense<0.000000e+00> : vector<4x1024xf32>
    %19 = tpu.matmul %1, %18, %cst_19 {dimension_numbers = #tpu.dot_dimension_numbers<[1], [0], [0], [1], [0, 0, 1, 1], [], []>} : vector<4x256xf32>, vector<256x1024xf32>, vector<4x1024xf32> -> vector<4x1024xf32>
    %c6 = arith.constant 6 : index
    %c0_20 = arith.constant 0 : index
    %c0_21 = arith.constant 0 : index
    %20 = vector.load %arg2[%c6, %c0_20, %c0_21] : memref<9x256x1024xf32, #tpu.memory_space<vmem>>, vector<1x256x1024xf32>
    %21 = vector.shape_cast %20 : vector<1x256x1024xf32> to vector<256x1024xf32>
    %cst_22 = arith.constant dense<0.000000e+00> : vector<4x1024xf32>
    %22 = tpu.matmul %1, %21, %cst_22 {dimension_numbers = #tpu.dot_dimension_numbers<[1], [0], [0], [1], [0, 0, 1, 1], [], []>} : vector<4x256xf32>, vector<256x1024xf32>, vector<4x1024xf32> -> vector<4x1024xf32>
    %c7 = arith.constant 7 : index
    %c0_23 = arith.constant 0 : index
    %c0_24 = arith.constant 0 : index
    %23 = vector.load %arg2[%c7, %c0_23, %c0_24] : memref<9x256x1024xf32, #tpu.memory_space<vmem>>, vector<1x256x1024xf32>
    %24 = vector.shape_cast %23 : vector<1x256x1024xf32> to vector<256x1024xf32>
    %cst_25 = arith.constant dense<0.000000e+00> : vector<4x1024xf32>
    %25 = tpu.matmul %1, %24, %cst_25 {dimension_numbers = #tpu.dot_dimension_numbers<[1], [0], [0], [1], [0, 0, 1, 1], [], []>} : vector<4x256xf32>, vector<256x1024xf32>, vector<4x1024xf32> -> vector<4x1024xf32>
    %c8 = arith.constant 8 : index
    %c0_26 = arith.constant 0 : index
    %c0_27 = arith.constant 0 : index
    %26 = vector.load %arg2[%c8, %c0_26, %c0_27] : memref<9x256x1024xf32, #tpu.memory_space<vmem>>, vector<1x256x1024xf32>
    %27 = vector.shape_cast %26 : vector<1x256x1024xf32> to vector<256x1024xf32>
    %cst_28 = arith.constant dense<0.000000e+00> : vector<4x1024xf32>
    %28 = tpu.matmul %1, %27, %cst_28 {dimension_numbers = #tpu.dot_dimension_numbers<[1], [0], [0], [1], [0, 0, 1, 1], [], []>} : vector<4x256xf32>, vector<256x1024xf32>, vector<4x1024xf32> -> vector<4x1024xf32>
    %29 = tpu.concatenate %4, %7, %10, %13, %16, %19, %22, %25, %28 in 0 : vector<4x1024xf32>, vector<4x1024xf32>, vector<4x1024xf32>, vector<4x1024xf32>, vector<4x1024xf32>, vector<4x1024xf32>, vector<4x1024xf32>, vector<4x1024xf32>, vector<4x1024xf32> -> vector<36x1024xf32>
    %c0_29 = arith.constant 0 : index
    %c0_30 = arith.constant 0 : index
    %30 = vector.load %arg3[%c0_29, %c0_30] : memref<8x36xf32, #tpu.memory_space<vmem>>, vector<8x36xf32>
    %cst_31 = arith.constant dense<0.000000e+00> : vector<8x1024xf32>
    %31 = tpu.matmul %30, %29, %cst_31 {dimension_numbers = #tpu.dot_dimension_numbers<[1], [0], [0], [1], [0, 0, 1, 1], [], []>} : vector<8x36xf32>, vector<36x1024xf32>, vector<8x1024xf32> -> vector<8x1024xf32>
    %cst_32 = arith.constant dense<0.000000e+00> : vector<8xf32>
    %32 = vector.multi_reduction <add>, %31, %cst_32 [1] : vector<8x1024xf32> to vector<8xf32>
    %33 = vector.shape_cast %32 : vector<8xf32> to vector<8x1xf32>
    %cst_33 = arith.constant 1.024000e+03 : f32
    %34 = vector.broadcast %cst_33 : f32 to vector<8x1xf32>
    %35 = arith.divf %33, %34 : vector<8x1xf32>
    %36 = vector.broadcast %35 : vector<8x1xf32> to vector<8x1024xf32>
    %37 = arith.subf %31, %36 : vector<8x1024xf32>
    %38 = arith.mulf %37, %37 : vector<8x1024xf32>
    %cst_34 = arith.constant dense<0.000000e+00> : vector<8xf32>
    %39 = vector.multi_reduction <add>, %38, %cst_34 [1] : vector<8x1024xf32> to vector<8xf32>
    %40 = vector.shape_cast %39 : vector<8xf32> to vector<8x1xf32>
    %cst_35 = arith.constant 1.024000e+03 : f32
    %41 = vector.broadcast %cst_35 : f32 to vector<8x1xf32>
    %42 = arith.divf %40, %41 : vector<8x1xf32>
    %cst_36 = arith.constant 9.99999974E-6 : f32
    %43 = vector.broadcast %cst_36 : f32 to vector<8x1xf32>
    %44 = arith.addf %42, %43 : vector<8x1xf32>
    %45 = math.rsqrt %44 : vector<8x1xf32>
    %46 = vector.broadcast %45 : vector<8x1xf32> to vector<8x1024xf32>
    %47 = arith.mulf %37, %46 : vector<8x1024xf32>
    %cst_37 = arith.constant 0.000000e+00 : f32
    %48 = vector.broadcast %cst_37 : f32 to vector<8x1024xf32>
    %49 = arith.cmpf oge, %47, %48 : vector<8x1024xf32>
    %cst_38 = arith.constant 2.000000e-01 : f32
    %50 = vector.broadcast %cst_38 : f32 to vector<8x1024xf32>
    %51 = arith.mulf %50, %47 : vector<8x1024xf32>
    %52 = arith.select %49, %47, %51 : vector<8x1024xi1>, vector<8x1024xf32>
    %c0_39 = arith.constant 0 : index
    %c0_40 = arith.constant 0 : index
    %c0_41 = arith.constant 0 : index
    %53 = vector.load %arg4[%c0_39, %c0_40, %c0_41] : memref<1x8x1024xf32, #tpu.memory_space<vmem>>, vector<1x8x1024xf32>
    %54 = vector.shape_cast %53 : vector<1x8x1024xf32> to vector<8x1024xf32>
    %55 = vector.shape_cast %52 : vector<8x1024xf32> to vector<1x8x1024xf32>
    tpu.vector_store %arg4[%c0_39, %c0_40, %c0_41], %55 {strides = array<i32>} : memref<1x8x1024xf32, #tpu.memory_space<vmem>>, vector<1x8x1024xf32>,
    return
  }
  func.func @transform_0(%arg0: i32) -> (i32, i32, i32) {
    %c0_i32 = arith.constant 0 : i32
    %c0_i32_0 = arith.constant 0 : i32
    %c0_i32_1 = arith.constant 0 : i32
    return %arg0, %c0_i32, %c0_i32_0 : i32, i32, i32
  }
  func.func @transform_1(%arg0: i32) -> (i32, i32, i32) {
    %c0_i32 = arith.constant 0 : i32
    %c0_i32_0 = arith.constant 0 : i32
    %c0_i32_1 = arith.constant 0 : i32
    %c0_i32_2 = arith.constant 0 : i32
    return %c0_i32, %c0_i32_0, %c0_i32_1 : i32, i32, i32
  }
  func.func @transform_2(%arg0: i32) -> (i32, i32) {
    %c0_i32 = arith.constant 0 : i32
    %c0_i32_0 = arith.constant 0 : i32
    %c0_i32_1 = arith.constant 0 : i32
    return %c0_i32, %c0_i32_0 : i32, i32
  }
  func.func @transform_3(%arg0: i32) -> (i32, i32, i32) {
    %c0_i32 = arith.constant 0 : i32
    %c0_i32_0 = arith.constant 0 : i32
    %c0_i32_1 = arith.constant 0 : i32
    return %arg0, %c0_i32, %c0_i32_0 : i32, i32, i32
  }
}

</mosaic_0001>

<llo_original>
// kernel: upblock_forward.1
$region0: #{upblock_forward.1}
  #allocation0 [shape = 'u32[]', space=smem, size = 0x4, offset = 0x4, fixed_abs, tag = 'smem constant byte address 0x4 - core index']
  #allocation1 [shape = 'u32[144,128]{1,0:T(1,128)}', space=vmem, size = 0x12000, scoped, tag = 'internal scratch']
  %s0 = inlined_call_operand.vmem [shape: f32[2,4,256], index: 0, kind: input, shape index: {}]
  %s1 = inlined_call_operand.vmem [shape: f32[9,256,1024], index: 1, kind: input, shape index: {}]
  %s2 = inlined_call_operand.vmem [shape: f32[8,36], index: 2, kind: input, shape index: {}]
  %s3 = inlined_call_operand.vmem [shape: f32[2,8,1024], index: 3, kind: output, shape index: {}]
  %s4 = sld [smem:[#allocation0]]
  $region45: #{upblock_forward.1} parent=0
    _
  %s6 = ssub.s32 1, %s4
  %s7 = scalar_select 0, %s6, %s4
  loop: start=0, step=1, limit=4
  $region2: #{upblock_forward.1} parent=0 // loop_pre_header
    _
  $region3: #{upblock_forward.1} parent=0 // loop_header
    %s9 = sphi 0, %s13
    %p10 = scmp.ge.s32.totalorder %s9, 4
    %s19 = sphi 0, %s21
    %s22 = sphi 0, %s19
    %s23 = sphi 0, %s22
    %s39 = sphi 0, %s23
    %s43 = sphi 0, %s43
    %s45 = sphi 0, %s43
    %s46 = sphi 0, %s45
    %s60 = sphi 0, %s46
    %s64 = sphi 0, %s64
    %s66 = sphi 0, %s64
    %s67 = sphi 0, %s66
    %s81 = sphi 0, %s67
    %s87 = sphi 0, %s89
    %s90 = sphi 0, %s87
    %s91 = sphi 0, %s90
    %s107 = sphi 0, %s91
  $region4: #{upblock_forward.1} parent=0 // loop_header_branch
    %12 = sbr.rel (%p10) target = $region8
  $region5: #{upblock_forward.1} parent=0 // loop_body
    %s14 = ssub.s32 %s9, 1
    %s15 = ssub.s32 %s9, 2
    %s16 = sadd.s32 %s9, 1
    %s17 = ssub.s32 %s9, %s16
    %p18 = scmp.eq.s32.totalorder %s17, 0
    %s20 = sadd.s32 %s19, 1
    %s21 = scalar_select %p18, %s19, %s20
    %p24 = pneg %p18
    %p25 = scmp.eq.s32.totalorder %s9, 1
    %p26 = por %p24, %p25
    %p27 = scmp.ne.s32.totalorder %s19, %s22
    %p28 = scmp.eq.s32.totalorder %s9, 0
    %p29 = por %p27, %p28
    %p30 = scmp.ne.s32.totalorder %s19, %s22
    %p31 = scmp.eq.s32.totalorder %s14, 1
    %p32 = por %p30, %p31
    %p33 = scmp.ne.s32.totalorder %s22, %s23
    %p34 = scmp.eq.s32.totalorder %s14, 0
    %p35 = por %p33, %p34
    %p36 = scmp.ne.s32.totalorder %s22, %s23
    %p37 = scmp.eq.s32.totalorder %s15, 1
    %p38 = por %p36, %p37
    %p40 = scmp.ne.s32.totalorder %s23, %s39
    %p41 = scmp.eq.s32.totalorder %s15, 0
    %p42 = por %p40, %p41
    %s44 = sadd.s32 %s43, 1
    %p47 = scmp.eq.s32.totalorder %s9, 1
    %p48 = scmp.ne.s32.totalorder %s43, %s45
    %p49 = scmp.eq.s32.totalorder %s9, 0
    %p50 = por %p48, %p49
    %p51 = scmp.ne.s32.totalorder %s43, %s45
    %p52 = scmp.eq.s32.totalorder %s14, 1
    %p53 = por %p51, %p52
    %p54 = scmp.ne.s32.totalorder %s45, %s46
    %p55 = scmp.eq.s32.totalorder %s14, 0
    %p56 = por %p54, %p55
    %p57 = scmp.ne.s32.totalorder %s45, %s46
    %p58 = scmp.eq.s32.totalorder %s15, 1
    %p59 = por %p57, %p58
    %p61 = scmp.ne.s32.totalorder %s46, %s60
    %p62 = scmp.eq.s32.totalorder %s15, 0
    %p63 = por %p61, %p62
    %s65 = sadd.s32 %s64, 1
    %p68 = scmp.eq.s32.totalorder %s9, 1
    %p69 = scmp.ne.s32.totalorder %s64, %s66
    %p70 = scmp.eq.s32.totalorder %s9, 0
    %p71 = por %p69, %p70
    %p72 = scmp.ne.s32.totalorder %s64, %s66
    %p73 = scmp.eq.s32.totalorder %s14, 1
    %p74 = por %p72, %p73
    %p75 = scmp.ne.s32.totalorder %s66, %s67
    %p76 = scmp.eq.s32.totalorder %s14, 0
    %p77 = por %p75, %p76
    %p78 = scmp.ne.s32.totalorder %s66, %s67
    %p79 = scmp.eq.s32.totalorder %s15, 1
    %p80 = por %p78, %p79
    %p82 = scmp.ne.s32.totalorder %s67, %s81
    %p83 = scmp.eq.s32.totalorder %s15, 0
    %p84 = por %p82, %p83
    %s85 = ssub.s32 %s9, %s16
    %p86 = scmp.eq.s32.totalorder %s85, 0
    %s88 = sadd.s32 %s87, 1
    %s89 = scalar_select %p86, %s87, %s88
    %p92 = pneg %p86
    %p93 = scmp.eq.s32.totalorder %s9, 1
    %p94 = por %p92, %p93
    %p95 = scmp.ne.s32.totalorder %s87, %s90
    %p96 = scmp.eq.s32.totalorder %s9, 0
    %p97 = por %p95, %p96
    %p98 = scmp.ne.s32.totalorder %s87, %s90
    %p99 = scmp.eq.s32.totalorder %s14, 1
    %p100 = por %p98, %p99
    %p101 = scmp.ne.s32.totalorder %s90, %s91
    %p102 = scmp.eq.s32.totalorder %s14, 0
    %p103 = por %p101, %p102
    %p104 = scmp.ne.s32.totalorder %s90, %s91
    %p105 = scmp.eq.s32.totalorder %s15, 1
    %p106 = por %p104, %p105
    %p108 = scmp.ne.s32.totalorder %s91, %s107
    %p109 = scmp.eq.s32.totalorder %s15, 0
    %p110 = por %p108, %p109
    %p111 = scmp.le.s32.totalorder 1, %s9
    %p112 = scmp.lt.s32.totalorder %s9, 3
    %p113 = pnand %p111, %p112
    %p114 = pneg %p113
    // Predicated region
    $region9: #{upblock_forward.1} parent=5 // pred_check
      _
    $region10: #{upblock_forward.1} parent=5 // pred_check_branch
      %116 = sbr.rel (%p113) target = $region12
    $region11: #{upblock_forward.1} parent=5 // pred_region
      %s117 = ssub.s32 %s9, 1
      // Predicated region
      $region13: #{upblock_forward.1} parent=11 // pred_check
        %p118 = pneg %p56
      $region14: #{upblock_forward.1} parent=11 // pred_check_branch
        %120 = sbr.rel (%p118) target = $region16
      $region15: #{upblock_forward.1} parent=11 // pred_region
        _
      $region16: #{upblock_forward.1} parent=11 // pred_fallthru
        _
      // Predicated region
      $region17: #{upblock_forward.1} parent=11 // pred_check
        %p121 = pneg %p77
      $region18: #{upblock_forward.1} parent=11 // pred_check_branch
        %123 = sbr.rel (%p121) target = $region20
      $region19: #{upblock_forward.1} parent=11 // pred_region
        _
      $region20: #{upblock_forward.1} parent=11 // pred_fallthru
        _
    $region12: #{upblock_forward.1} parent=5 // pred_fallthru
      _
    %p124 = scmp.lt.s32.totalorder %s9, 2
    // Predicated region
    $region21: #{upblock_forward.1} parent=5 // pred_check
      %p125 = pneg %p124
    $region22: #{upblock_forward.1} parent=5 // pred_check_branch
      %127 = sbr.rel (%p125) target = $region24
    $region23: #{upblock_forward.1} parent=5 // pred_region
      // Predicated region
      $region25: #{upblock_forward.1} parent=23 // pred_check
        %p128 = pneg %p29
      $region26: #{upblock_forward.1} parent=23 // pred_check_branch
        %130 = sbr.rel (%p128) target = $region28
      $region27: #{upblock_forward.1} parent=23 // pred_region
        %p131 = scmp.lt.s32.totalorder %s9, 1
        %s132 = scalar_select %p131, %s9, 1
        %s133 = smul.addr %s132, 2
        %s134 = smul.addr %s133, 4
        %s135 = scalar_lea.vmem %s0, %s134
      $region28: #{upblock_forward.1} parent=23 // pred_fallthru
        _
    $region24: #{upblock_forward.1} parent=5 // pred_fallthru
      _
    %p136 = scmp.le.s32.totalorder 1, %s9
    %p137 = scmp.lt.s32.totalorder %s9, 3
    %p138 = pnand %p136, %p137
    %p139 = pneg %p138
    // Predicated region
    $region29: #{upblock_forward.1} parent=5 // pred_check
      _
    $region30: #{upblock_forward.1} parent=5 // pred_check_branch
      %141 = sbr.rel (%p138) target = $region32
    $region31: #{upblock_forward.1} parent=5 // pred_region
      %s142 = ssub.s32 %s9, 1
      %p143 = scmp.lt.s32.totalorder %s14, 1
      %s144 = scalar_select %p143, %s14, 1
      %s145 = smul.addr %s144, 2
      %s146 = smul.addr %s145, 4
      %s147 = scalar_lea.vmem %s0, %s146
      %p148 = pneg %p35
      %p149 = pneg %p32
      %p150 = pneg %p56
      %p151 = pneg %p53
      %p152 = pneg %p77
      %p153 = pneg %p74
      %p154 = pneg %p103
      %p155 = pneg %p100
      %p156 = scmp.lt.s32.totalorder %s14, 1
      %s157 = scalar_select %p156, %s14, 1
      %s158 = smul.addr %s157, 8
      %s159 = smul.addr %s158, 8
      %s160 = scalar_lea.vmem %s3, %s159
      %p161 = scmp.lt.s32.totalorder %s14, 1
      %s162 = scalar_select %p161, %s14, 1
      %s163 = smul.addr %s162, 2
      %s164 = smul.addr %s163, 4
      %s165 = scalar_lea.vmem %s0, %s164
      %p166 = scmp.lt.s32.totalorder %s14, 1
      %s167 = scalar_select %p166, %s14, 1
      %s168 = smul.addr %s167, 8
      %s169 = smul.addr %s168, 8
      %s170 = scalar_lea.vmem %s3, %s169
      %v171 = vld [vmem:[%s165] sm:$0xff]
      %v172 = vld [vmem:[%s1] sm:$0xff]
      %v173 = vld [vmem:[%s1 + $0x8] sm:$0xff]
      %v174 = vld [vmem:[%s1 + $0x10] sm:$0xff]
      %v175 = vld [vmem:[%s1 + $0x18] sm:$0xff]
      %v176 = vld [vmem:[%s1 + $0x20] sm:$0xff]
      %v177 = vld [vmem:[%s1 + $0x28] sm:$0xff]
      %v178 = vld [vmem:[%s1 + $0x30] sm:$0xff]
      %v179 = vld [vmem:[%s1 + $0x38] sm:$0xff]
      %v180 = vld [vmem:[%s1 + $0x40] sm:$0xff]
      %v181 = vld [vmem:[%s1 + $0x48] sm:$0xff]
      %v182 = vld [vmem:[%s1 + $0x50] sm:$0xff]
      %v183 = vld [vmem:[%s1 + $0x58] sm:$0xff]
      %v184 = vld [vmem:[%s1 + $0x60] sm:$0xff]
      %v185 = vld [vmem:[%s1 + $0x68] sm:$0xff]
      %v186 = vld [vmem:[%s1 + $0x70] sm:$0xff]
      %v187 = vld [vmem:[%s1 + $0x78] sm:$0xff]
      %v188 = vld [vmem:[%s1 + $0x80] sm:$0xff]
      %v189 = vld [vmem:[%s1 + $0x88] sm:$0xff]
      %v190 = vld [vmem:[%s1 + $0x90] sm:$0xff]
      %v191 = vld [vmem:[%s1 + $0x98] sm:$0xff]
      %v192 = vld [vmem:[%s1 + $0xa0] sm:$0xff]
      %v193 = vld [vmem:[%s1 + $0xa8] sm:$0xff]
      %v194 = vld [vmem:[%s1 + $0xb0] sm:$0xff]
      %v195 = vld [vmem:[%s1 + $0xb8] sm:$0xff]
      %v196 = vld [vmem:[%s1 + $0xc0] sm:$0xff]
      %v197 = vld [vmem:[%s1 + $0xc8] sm:$0xff]
      %v198 = vld [vmem:[%s1 + $0xd0] sm:$0xff]
      %v199 = vld [vmem:[%s1 + $0xd8] sm:$0xff]
      %v200 = vld [vmem:[%s1 + $0xe0] sm:$0xff]
      %v201 = vld [vmem:[%s1 + $0xe8] sm:$0xff]
      %v202 = vld [vmem:[%s1 + $0xf0] sm:$0xff]
      %v203 = vld [vmem:[%s1 + $0xf8] sm:$0xff]
      %v204 = vld [vmem:[%s1 + $0x100] sm:$0xff]
      %v205 = vld [vmem:[%s1 + $0x108] sm:$0xff]
      %v206 = vld [vmem:[%s1 + $0x110] sm:$0xff]
      %v207 = vld [vmem:[%s1 + $0x118] sm:$0xff]
      %v208 = vld [vmem:[%s1 + $0x120] sm:$0xff]
      %v209 = vld [vmem:[%s1 + $0x128] sm:$0xff]
      %v210 = vld [vmem:[%s1 + $0x130] sm:$0xff]
      %v211 = vld [vmem:[%s1 + $0x138] sm:$0xff]
      %v212 = vld [vmem:[%s1 + $0x140] sm:$0xff]
      %v213 = vld [vmem:[%s1 + $0x148] sm:$0xff]
      %v214 = vld [vmem:[%s1 + $0x150] sm:$0xff]
      %v215 = vld [vmem:[%s1 + $0x158] sm:$0xff]
      %v216 = vld [vmem:[%s1 + $0x160] sm:$0xff]
      %v217 = vld [vmem:[%s1 + $0x168] sm:$0xff]
      %v218 = vld [vmem:[%s1 + $0x170] sm:$0xff]
      %v219 = vld [vmem:[%s1 + $0x178] sm:$0xff]
      %v220 = vld [vmem:[%s1 + $0x180] sm:$0xff]
      %v221 = vld [vmem:[%s1 + $0x188] sm:$0xff]
      %v222 = vld [vmem:[%s1 + $0x190] sm:$0xff]
      %v223 = vld [vmem:[%s1 + $0x198] sm:$0xff]
      %v224 = vld [vmem:[%s1 + $0x1a0] sm:$0xff]
      %v225 = vld [vmem:[%s1 + $0x1a8] sm:$0xff]
      %v226 = vld [vmem:[%s1 + $0x1b0] sm:$0xff]
      %v227 = vld [vmem:[%s1 + $0x1b8] sm:$0xff]
      %v228 = vld [vmem:[%s1 + $0x1c0] sm:$0xff]
      %v229 = vld [vmem:[%s1 + $0x1c8] sm:$0xff]
      %v230 = vld [vmem:[%s1 + $0x1d0] sm:$0xff]
      %v231 = vld [vmem:[%s1 + $0x1d8] sm:$0xff]
      %v232 = vld [vmem:[%s1 + $0x1e0] sm:$0xff]
      %v233 = vld [vmem:[%s1 + $0x1e8] sm:$0xff]
      %v234 = vld [vmem:[%s1 + $0x1f0] sm:$0xff]
      %v235 = vld [vmem:[%s1 + $0x1f8] sm:$0xff]
      %v236 = vld [vmem:[%s1 + $0x200] sm:$0xff]
      %v237 = vld [vmem:[%s1 + $0x208] sm:$0xff]
      %v238 = vld [vmem:[%s1 + $0x210] sm:$0xff]
      %v239 = vld [vmem:[%s1 + $0x218] sm:$0xff]
      %v240 = vld [vmem:[%s1 + $0x220] sm:$0xff]
      %v241 = vld [vmem:[%s1 + $0x228] sm:$0xff]
      %v242 = vld [vmem:[%s1 + $0x230] sm:$0xff]
      %v243 = vld [vmem:[%s1 + $0x238] sm:$0xff]
      %v244 = vld [vmem:[%s1 + $0x240] sm:$0xff]
      %v245 = vld [vmem:[%s1 + $0x248] sm:$0xff]
      %v246 = vld [vmem:[%s1 + $0x250] sm:$0xff]
      %v247 = vld [vmem:[%s1 + $0x258] sm:$0xff]
      %v248 = vld [vmem:[%s1 + $0x260] sm:$0xff]
      %v249 = vld [vmem:[%s1 + $0x268] sm:$0xff]
      %v250 = vld [vmem:[%s1 + $0x270] sm:$0xff]
      %v251 = vld [vmem:[%s1 + $0x278] sm:$0xff]
      %v252 = vld [vmem:[%s1 + $0x280] sm:$0xff]
      %v253 = vld [vmem:[%s1 + $0x288] sm:$0xff]
      %v254 = vld [vmem:[%s1 + $0x290] sm:$0xff]
      %v255 = vld [vmem:[%s1 + $0x298] sm:$0xff]
      %v256 = vld [vmem:[%s1 + $0x2a0] sm:$0xff]
      %v257 = vld [vmem:[%s1 + $0x2a8] sm:$0xff]
      %v258 = vld [vmem:[%s1 + $0x2b0] sm:$0xff]
      %v259 = vld [vmem:[%s1 + $0x2b8] sm:$0xff]
      %v260 = vld [vmem:[%s1 + $0x2c0] sm:$0xff]
      %v261 = vld [vmem:[%s1 + $0x2c8] sm:$0xff]
      %v262 = vld [vmem:[%s1 + $0x2d0] sm:$0xff]
      %v263 = vld [vmem:[%s1 + $0x2d8] sm:$0xff]
      %v264 = vld [vmem:[%s1 + $0x2e0] sm:$0xff]
      %v265 = vld [vmem:[%s1 + $0x2e8] sm:$0xff]
      %v266 = vld [vmem:[%s1 + $0x2f0] sm:$0xff]
      %v267 = vld [vmem:[%s1 + $0x2f8] sm:$0xff]
      %v268 = vld [vmem:[%s1 + $0x300] sm:$0xff]
      %v269 = vld [vmem:[%s1 + $0x308] sm:$0xff]
      %v270 = vld [vmem:[%s1 + $0x310] sm:$0xff]
      %v271 = vld [vmem:[%s1 + $0x318] sm:$0xff]
      %v272 = vld [vmem:[%s1 + $0x320] sm:$0xff]
      %v273 = vld [vmem:[%s1 + $0x328] sm:$0xff]
      %v274 = vld [vmem:[%s1 + $0x330] sm:$0xff]
      %v275 = vld [vmem:[%s1 + $0x338] sm:$0xff]
      %v276 = vld [vmem:[%s1 + $0x340] sm:$0xff]
      %v277 = vld [vmem:[%s1 + $0x348] sm:$0xff]
      %v278 = vld [vmem:[%s1 + $0x350] sm:$0xff]
      %v279 = vld [vmem:[%s1 + $0x358] sm:$0xff]
      %v280 = vld [vmem:[%s1 + $0x360] sm:$0xff]
      %v281 = vld [vmem:[%s1 + $0x368] sm:$0xff]
      %v282 = vld [vmem:[%s1 + $0x370] sm:$0xff]
      %v283 = vld [vmem:[%s1 + $0x378] sm:$0xff]
      %v284 = vld [vmem:[%s1 + $0x380] sm:$0xff]
      %v285 = vld [vmem:[%s1 + $0x388] sm:$0xff]
      %v286 = vld [vmem:[%s1 + $0x390] sm:$0xff]
      %v287 = vld [vmem:[%s1 + $0x398] sm:$0xff]
      %v288 = vld [vmem:[%s1 + $0x3a0] sm:$0xff]
      %v289 = vld [vmem:[%s1 + $0x3a8] sm:$0xff]
      %v290 = vld [vmem:[%s1 + $0x3b0] sm:$0xff]
      %v291 = vld [vmem:[%s1 + $0x3b8] sm:$0xff]
      %v292 = vld [vmem:[%s1 + $0x3c0] sm:$0xff]
      %v293 = vld [vmem:[%s1 + $0x3c8] sm:$0xff]
      %v294 = vld [vmem:[%s1 + $0x3d0] sm:$0xff]
      %v295 = vld [vmem:[%s1 + $0x3d8] sm:$0xff]
      %v296 = vld [vmem:[%s1 + $0x3e0] sm:$0xff]
      %v297 = vld [vmem:[%s1 + $0x3e8] sm:$0xff]
      %v298 = vld [vmem:[%s1 + $0x3f0] sm:$0xff]
      %v299 = vld [vmem:[%s1 + $0x3f8] sm:$0xff]
      %v300 = vld [vmem:[%s1 + $0x400] sm:$0xff]
      %v301 = vld [vmem:[%s1 + $0x408] sm:$0xff]
      %v302 = vld [vmem:[%s1 + $0x410] sm:$0xff]
      %v303 = vld [vmem:[%s1 + $0x418] sm:$0xff]
      %v304 = vld [vmem:[%s1 + $0x420] sm:$0xff]
      %v305 = vld [vmem:[%s1 + $0x428] sm:$0xff]
      %v306 = vld [vmem:[%s1 + $0x430] sm:$0xff]
      %v307 = vld [vmem:[%s1 + $0x438] sm:$0xff]
      %v308 = vld [vmem:[%s1 + $0x440] sm:$0xff]
      %v309 = vld [vmem:[%s1 + $0x448] sm:$0xff]
      %v310 = vld [vmem:[%s1 + $0x450] sm:$0xff]
      %v311 = vld [vmem:[%s1 + $0x458] sm:$0xff]
      %v312 = vld [vmem:[%s1 + $0x460] sm:$0xff]
      %v313 = vld [vmem:[%s1 + $0x468] sm:$0xff]
      %v314 = vld [vmem:[%s1 + $0x470] sm:$0xff]
      %v315 = vld [vmem:[%s1 + $0x478] sm:$0xff]
      %v316 = vld [vmem:[%s1 + $0x480] sm:$0xff]
      %v317 = vld [vmem:[%s1 + $0x488] sm:$0xff]
      %v318 = vld [vmem:[%s1 + $0x490] sm:$0xff]
      %v319 = vld [vmem:[%s1 + $0x498] sm:$0xff]
      %v320 = vld [vmem:[%s1 + $0x4a0] sm:$0xff]
      %v321 = vld [vmem:[%s1 + $0x4a8] sm:$0xff]
      %v322 = vld [vmem:[%s1 + $0x4b0] sm:$0xff]
      %v323 = vld [vmem:[%s1 + $0x4b8] sm:$0xff]
      %v324 = vld [vmem:[%s1 + $0x4c0] sm:$0xff]
      %v325 = vld [vmem:[%s1 + $0x4c8] sm:$0xff]
      %v326 = vld [vmem:[%s1 + $0x4d0] sm:$0xff]
      %v327 = vld [vmem:[%s1 + $0x4d8] sm:$0xff]
      %v328 = vld [vmem:[%s1 + $0x4e0] sm:$0xff]
      %v329 = vld [vmem:[%s1 + $0x4e8] sm:$0xff]
      %v330 = vld [vmem:[%s1 + $0x4f0] sm:$0xff]
      %v331 = vld [vmem:[%s1 + $0x4f8] sm:$0xff]
      %v332 = vld [vmem:[%s1 + $0x500] sm:$0xff]
      %v333 = vld [vmem:[%s1 + $0x508] sm:$0xff]
      %v334 = vld [vmem:[%s1 + $0x510] sm:$0xff]
      %v335 = vld [vmem:[%s1 + $0x518] sm:$0xff]
      %v336 = vld [vmem:[%s1 + $0x520] sm:$0xff]
      %v337 = vld [vmem:[%s1 + $0x528] sm:$0xff]
      %v338 = vld [vmem:[%s1 + $0x530] sm:$0xff]
      %v339 = vld [vmem:[%s1 + $0x538] sm:$0xff]
      %v340 = vld [vmem:[%s1 + $0x540] sm:$0xff]
      %v341 = vld [vmem:[%s1 + $0x548] sm:$0xff]
      %v342 = vld [vmem:[%s1 + $0x550] sm:$0xff]
      %v343 = vld [vmem:[%s1 + $0x558] sm:$0xff]
      %v344 = vld [vmem:[%s1 + $0x560] sm:$0xff]
      %v345 = vld [vmem:[%s1 + $0x568] sm:$0xff]
      %v346 = vld [vmem:[%s1 + $0x570] sm:$0xff]
      %v347 = vld [vmem:[%s1 + $0x578] sm:$0xff]
      %v348 = vld [vmem:[%s1 + $0x580] sm:$0xff]
      %v349 = vld [vmem:[%s1 + $0x588] sm:$0xff]
      %v350 = vld [vmem:[%s1 + $0x590] sm:$0xff]
      %v351 = vld [vmem:[%s1 + $0x598] sm:$0xff]
      %v352 = vld [vmem:[%s1 + $0x5a0] sm:$0xff]
      %v353 = vld [vmem:[%s1 + $0x5a8] sm:$0xff]
      %v354 = vld [vmem:[%s1 + $0x5b0] sm:$0xff]
      %v355 = vld [vmem:[%s1 + $0x5b8] sm:$0xff]
      %v356 = vld [vmem:[%s1 + $0x5c0] sm:$0xff]
      %v357 = vld [vmem:[%s1 + $0x5c8] sm:$0xff]
      %v358 = vld [vmem:[%s1 + $0x5d0] sm:$0xff]
      %v359 = vld [vmem:[%s1 + $0x5d8] sm:$0xff]
      %v360 = vld [vmem:[%s1 + $0x5e0] sm:$0xff]
      %v361 = vld [vmem:[%s1 + $0x5e8] sm:$0xff]
      %v362 = vld [vmem:[%s1 + $0x5f0] sm:$0xff]
      %v363 = vld [vmem:[%s1 + $0x5f8] sm:$0xff]
      %v364 = vld [vmem:[%s1 + $0x600] sm:$0xff]
      %v365 = vld [vmem:[%s1 + $0x608] sm:$0xff]
      %v366 = vld [vmem:[%s1 + $0x610] sm:$0xff]
      %v367 = vld [vmem:[%s1 + $0x618] sm:$0xff]
      %v368 = vld [vmem:[%s1 + $0x620] sm:$0xff]
      %v369 = vld [vmem:[%s1 + $0x628] sm:$0xff]
      %v370 = vld [vmem:[%s1 + $0x630] sm:$0xff]
      %v371 = vld [vmem:[%s1 + $0x638] sm:$0xff]
      %v372 = vld [vmem:[%s1 + $0x640] sm:$0xff]
      %v373 = vld [vmem:[%s1 + $0x648] sm:$0xff]
      %v374 = vld [vmem:[%s1 + $0x650] sm:$0xff]
      %v375 = vld [vmem:[%s1 + $0x658] sm:$0xff]
      %v376 = vld [vmem:[%s1 + $0x660] sm:$0xff]
      %v377 = vld [vmem:[%s1 + $0x668] sm:$0xff]
      %v378 = vld [vmem:[%s1 + $0x670] sm:$0xff]
      %v379 = vld [vmem:[%s1 + $0x678] sm:$0xff]
      %v380 = vld [vmem:[%s1 + $0x680] sm:$0xff]
      %v381 = vld [vmem:[%s1 + $0x688] sm:$0xff]
      %v382 = vld [vmem:[%s1 + $0x690] sm:$0xff]
      %v383 = vld [vmem:[%s1 + $0x698] sm:$0xff]
      %v384 = vld [vmem:[%s1 + $0x6a0] sm:$0xff]
      %v385 = vld [vmem:[%s1 + $0x6a8] sm:$0xff]
      %v386 = vld [vmem:[%s1 + $0x6b0] sm:$0xff]
      %v387 = vld [vmem:[%s1 + $0x6b8] sm:$0xff]
      %v388 = vld [vmem:[%s1 + $0x6c0] sm:$0xff]
      %v389 = vld [vmem:[%s1 + $0x6c8] sm:$0xff]
      %v390 = vld [vmem:[%s1 + $0x6d0] sm:$0xff]
      %v391 = vld [vmem:[%s1 + $0x6d8] sm:$0xff]
      %v392 = vld [vmem:[%s1 + $0x6e0] sm:$0xff]
      %v393 = vld [vmem:[%s1 + $0x6e8] sm:$0xff]
      %v394 = vld [vmem:[%s1 + $0x6f0] sm:$0xff]
      %v395 = vld [vmem:[%s1 + $0x6f8] sm:$0xff]
      %v396 = vld [vmem:[%s1 + $0x700] sm:$0xff]
      %v397 = vld [vmem:[%s1 + $0x708] sm:$0xff]
      %v398 = vld [vmem:[%s1 + $0x710] sm:$0xff]
      %v399 = vld [vmem:[%s1 + $0x718] sm:$0xff]
      %v400 = vld [vmem:[%s1 + $0x720] sm:$0xff]
      %v401 = vld [vmem:[%s1 + $0x728] sm:$0xff]
      %v402 = vld [vmem:[%s1 + $0x730] sm:$0xff]
      %v403 = vld [vmem:[%s1 + $0x738] sm:$0xff]
      %v404 = vld [vmem:[%s1 + $0x740] sm:$0xff]
      %v405 = vld [vmem:[%s1 + $0x748] sm:$0xff]
      %v406 = vld [vmem:[%s1 + $0x750] sm:$0xff]
      %v407 = vld [vmem:[%s1 + $0x758] sm:$0xff]
      %v408 = vld [vmem:[%s1 + $0x760] sm:$0xff]
      %v409 = vld [vmem:[%s1 + $0x768] sm:$0xff]
      %v410 = vld [vmem:[%s1 + $0x770] sm:$0xff]
      %v411 = vld [vmem:[%s1 + $0x778] sm:$0xff]
      %v412 = vld [vmem:[%s1 + $0x780] sm:$0xff]
      %v413 = vld [vmem:[%s1 + $0x788] sm:$0xff]
      %v414 = vld [vmem:[%s1 + $0x790] sm:$0xff]
      %v415 = vld [vmem:[%s1 + $0x798] sm:$0xff]
      %v416 = vld [vmem:[%s1 + $0x7a0] sm:$0xff]
      %v417 = vld [vmem:[%s1 + $0x7a8] sm:$0xff]
      %v418 = vld [vmem:[%s1 + $0x7b0] sm:$0xff]
      %v419 = vld [vmem:[%s1 + $0x7b8] sm:$0xff]
      %v420 = vld [vmem:[%s1 + $0x7c0] sm:$0xff]
      %v421 = vld [vmem:[%s1 + $0x7c8] sm:$0xff]
      %v422 = vld [vmem:[%s1 + $0x7d0] sm:$0xff]
      %v423 = vld [vmem:[%s1 + $0x7d8] sm:$0xff]
      %v424 = vld [vmem:[%s1 + $0x7e0] sm:$0xff]
      %v425 = vld [vmem:[%s1 + $0x7e8] sm:$0xff]
      %v426 = vld [vmem:[%s1 + $0x7f0] sm:$0xff]
      %v427 = vld [vmem:[%s1 + $0x7f8] sm:$0xff]
      %v429 = vcombine.high %v171, %v171
      %431 = vmatprep.subr.mxu0 %v173
      %432 = vmatpush1.msra.mxu0 %v172
      %433 = vmatprep.subr.mxu0 %v181
      %434 = vmatpush1.msra.mxu0 %v180
      %435 = vmatprep.subr.mxu0 %v189
      %436 = vmatpush1.msra.mxu0 %v188
      %437 = vmatprep.subr.mxu0 %v197
      %438 = vmatpush1.msra.mxu0 %v196
      %439 = vmatprep.subr.mxu0 %v205
      %440 = vmatpush1.msra.mxu0 %v204
      %441 = vmatprep.subr.mxu0 %v213
      %442 = vmatpush1.msra.mxu0 %v212
      %443 = vmatprep.subr.mxu0 %v221
      %444 = vmatpush1.msra.mxu0 %v220
      %445 = vmatprep.subr.mxu0 %v229
      %446 = vmatpush1.msra.mxu0 %v228
      %447 = vmatprep.subr.mxu0 %v237
      %448 = vmatpush1.msra.mxu0 %v236
      %449 = vmatprep.subr.mxu0 %v245
      %450 = vmatpush1.msra.mxu0 %v244
      %451 = vmatprep.subr.mxu0 %v253
      %452 = vmatpush1.msra.mxu0 %v252
      %453 = vmatprep.subr.mxu0 %v261
      %454 = vmatpush1.msra.mxu0 %v260
      %455 = vmatprep.subr.mxu0 %v269
      %456 = vmatpush1.msra.mxu0 %v268
      %457 = vmatprep.subr.mxu0 %v277
      %458 = vmatpush1.msra.mxu0 %v276
      %459 = vmatprep.subr.mxu0 %v285
      %460 = vmatpush1.msra.mxu0 %v284
      %461 = vmatprep.subr.mxu0 %v293
      %462 = vmatpush1.msra.mxu0 %v292
      %463 = vmatprep.subr.mxu0 %v301
      %464 = vmatpush1.msra.mxu0 %v300
      %465 = vmatprep.subr.mxu0 %v309
      %466 = vmatpush1.msra.mxu0 %v308
      %467 = vmatprep.subr.mxu0 %v317
      %468 = vmatpush1.msra.mxu0 %v316
      %469 = vmatprep.subr.mxu0 %v325
      %470 = vmatpush1.msra.mxu0 %v324
      %471 = vmatprep.subr.mxu0 %v333
      %472 = vmatpush1.msra.mxu0 %v332
      %473 = vmatprep.subr.mxu0 %v341
      %474 = vmatpush1.msra.mxu0 %v340
      %475 = vmatprep.subr.mxu0 %v349
      %476 = vmatpush1.msra.mxu0 %v348
      %477 = vmatprep.subr.mxu0 %v357
      %478 = vmatpush1.msra.mxu0 %v356
      %479 = vmatprep.subr.mxu0 %v365
      %480 = vmatpush1.msra.mxu0 %v364
      %481 = vmatprep.subr.mxu0 %v373
      %482 = vmatpush1.msra.mxu0 %v372
      %483 = vmatprep.subr.mxu0 %v381
      %484 = vmatpush1.msra.mxu0 %v380
      %485 = vmatprep.subr.mxu0 %v389
      %486 = vmatpush1.msra.mxu0 %v388
      %487 = vmatprep.subr.mxu0 %v397
      %488 = vmatpush1.msra.mxu0 %v396
      %489 = vmatprep.subr.mxu0 %v405
      %490 = vmatpush1.msra.mxu0 %v404
      %491 = vmatprep.subr.mxu0 %v413
      %492 = vmatpush1.msra.mxu0 %v412
      %493 = vmatprep.subr.mxu0 %v421
      %494 = vmatpush1.msra.mxu0 %v420
      %495 = vmatprep.mubr.f32.mxu0 %v429
      %496 = vmatmul.mubr.f32.gmra.mrb[0].mxu0 %v171
      %v497 = vpop.f32.mrb[0].mxu0
      %v498 = vadd.f32 0.0, %v497
      %v499 = vpop.f32.mrb[0].mxu0
      %v500 = vadd.f32 0.0, %v499
      %501 = vdwg.mxu0
      %502 = vmatprep.subr.mxu0 %v175
      %503 = vmatpush1.msra.mxu0 %v174
      %504 = vmatprep.subr.mxu0 %v183
      %505 = vmatpush1.msra.mxu0 %v182
      %506 = vmatprep.subr.mxu0 %v191
      %507 = vmatpush1.msra.mxu0 %v190
      %508 = vmatprep.subr.mxu0 %v199
      %509 = vmatpush1.msra.mxu0 %v198
      %510 = vmatprep.subr.mxu0 %v207
      %511 = vmatpush1.msra.mxu0 %v206
      %512 = vmatprep.subr.mxu0 %v215
      %513 = vmatpush1.msra.mxu0 %v214
      %514 = vmatprep.subr.mxu0 %v223
      %515 = vmatpush1.msra.mxu0 %v222
      %516 = vmatprep.subr.mxu0 %v231
      %517 = vmatpush1.msra.mxu0 %v230
      %518 = vmatprep.subr.mxu0 %v239
      %519 = vmatpush1.msra.mxu0 %v238
      %520 = vmatprep.subr.mxu0 %v247
      %521 = vmatpush1.msra.mxu0 %v246
      %522 = vmatprep.subr.mxu0 %v255
      %523 = vmatpush1.msra.mxu0 %v254
      %524 = vmatprep.subr.mxu0 %v263
      %525 = vmatpush1.msra.mxu0 %v262
      %526 = vmatprep.subr.mxu0 %v271
      %527 = vmatpush1.msra.mxu0 %v270
      %528 = vmatprep.subr.mxu0 %v279
      %529 = vmatpush1.msra.mxu0 %v278
      %530 = vmatprep.subr.mxu0 %v287
      %531 = vmatpush1.msra.mxu0 %v286
      %532 = vmatprep.subr.mxu0 %v295
      %533 = vmatpush1.msra.mxu0 %v294
      %534 = vmatprep.subr.mxu0 %v303
      %535 = vmatpush1.msra.mxu0 %v302
      %536 = vmatprep.subr.mxu0 %v311
      %537 = vmatpush1.msra.mxu0 %v310
      %538 = vmatprep.subr.mxu0 %v319
      %539 = vmatpush1.msra.mxu0 %v318
      %540 = vmatprep.subr.mxu0 %v327
      %541 = vmatpush1.msra.mxu0 %v326
      %542 = vmatprep.subr.mxu0 %v335
      %543 = vmatpush1.msra.mxu0 %v334
      %544 = vmatprep.subr.mxu0 %v343
      %545 = vmatpush1.msra.mxu0 %v342
      %546 = vmatprep.subr.mxu0 %v351
      %547 = vmatpush1.msra.mxu0 %v350
      %548 = vmatprep.subr.mxu0 %v359
      %549 = vmatpush1.msra.mxu0 %v358
      %550 = vmatprep.subr.mxu0 %v367
      %551 = vmatpush1.msra.mxu0 %v366
      %552 = vmatprep.subr.mxu0 %v375
      %553 = vmatpush1.msra.mxu0 %v374
      %554 = vmatprep.subr.mxu0 %v383
      %555 = vmatpush1.msra.mxu0 %v382
      %556 = vmatprep.subr.mxu0 %v391
      %557 = vmatpush1.msra.mxu0 %v390
      %558 = vmatprep.subr.mxu0 %v399
      %559 = vmatpush1.msra.mxu0 %v398
      %560 = vmatprep.subr.mxu0 %v407
      %561 = vmatpush1.msra.mxu0 %v406
      %562 = vmatprep.subr.mxu0 %v415
      %563 = vmatpush1.msra.mxu0 %v414
      %564 = vmatprep.subr.mxu0 %v423
      %565 = vmatpush1.msra.mxu0 %v422
      %566 = vmatprep.mubr.f32.mxu0 %v429
      %567 = vmatmul.mubr.f32.gmra.mrb[0].mxu0 %v171
      %v568 = vpop.f32.mrb[0].mxu0
      %v569 = vadd.f32 0.0, %v568
      %v570 = vpop.f32.mrb[0].mxu0
      %v571 = vadd.f32 0.0, %v570
      %572 = vdwg.mxu0
      %573 = vmatprep.subr.mxu0 %v177
      %574 = vmatpush1.msra.mxu0 %v176
      %575 = vmatprep.subr.mxu0 %v185
      %576 = vmatpush1.msra.mxu0 %v184
      %577 = vmatprep.subr.mxu0 %v193
      %578 = vmatpush1.msra.mxu0 %v192
      %579 = vmatprep.subr.mxu0 %v201
      %580 = vmatpush1.msra.mxu0 %v200
      %581 = vmatprep.subr.mxu0 %v209
      %582 = vmatpush1.msra.mxu0 %v208
      %583 = vmatprep.subr.mxu0 %v217
      %584 = vmatpush1.msra.mxu0 %v216
      %585 = vmatprep.subr.mxu0 %v225
      %586 = vmatpush1.msra.mxu0 %v224
      %587 = vmatprep.subr.mxu0 %v233
      %588 = vmatpush1.msra.mxu0 %v232
      %589 = vmatprep.subr.mxu0 %v241
      %590 = vmatpush1.msra.mxu0 %v240
      %591 = vmatprep.subr.mxu0 %v249
      %592 = vmatpush1.msra.mxu0 %v248
      %593 = vmatprep.subr.mxu0 %v257
      %594 = vmatpush1.msra.mxu0 %v256
      %595 = vmatprep.subr.mxu0 %v265
      %596 = vmatpush1.msra.mxu0 %v264
      %597 = vmatprep.subr.mxu0 %v273
      %598 = vmatpush1.msra.mxu0 %v272
      %599 = vmatprep.subr.mxu0 %v281
      %600 = vmatpush1.msra.mxu0 %v280
      %601 = vmatprep.subr.mxu0 %v289
      %602 = vmatpush1.msra.mxu0 %v288
      %603 = vmatprep.subr.mxu0 %v297
      %604 = vmatpush1.msra.mxu0 %v296
      %605 = vmatprep.subr.mxu0 %v305
      %606 = vmatpush1.msra.mxu0 %v304
      %607 = vmatprep.subr.mxu0 %v313
      %608 = vmatpush1.msra.mxu0 %v312
      %609 = vmatprep.subr.mxu0 %v321
      %610 = vmatpush1.msra.mxu0 %v320
      %611 = vmatprep.subr.mxu0 %v329
      %612 = vmatpush1.msra.mxu0 %v328
      %613 = vmatprep.subr.mxu0 %v337
      %614 = vmatpush1.msra.mxu0 %v336
      %615 = vmatprep.subr.mxu0 %v345
      %616 = vmatpush1.msra.mxu0 %v344
      %617 = vmatprep.subr.mxu0 %v353
      %618 = vmatpush1.msra.mxu0 %v352
      %619 = vmatprep.subr.mxu0 %v361
      %620 = vmatpush1.msra.mxu0 %v360
      %621 = vmatprep.subr.mxu0 %v369
      %622 = vmatpush1.msra.mxu0 %v368
      %623 = vmatprep.subr.mxu0 %v377
      %624 = vmatpush1.msra.mxu0 %v376
      %625 = vmatprep.subr.mxu0 %v385
      %626 = vmatpush1.msra.mxu0 %v384
      %627 = vmatprep.subr.mxu0 %v393
      %628 = vmatpush1.msra.mxu0 %v392
      %629 = vmatprep.subr.mxu0 %v401
      %630 = vmatpush1.msra.mxu0 %v400
      %631 = vmatprep.subr.mxu0 %v409
      %632 = vmatpush1.msra.mxu0 %v408
      %633 = vmatprep.subr.mxu0 %v417
      %634 = vmatpush1.msra.mxu0 %v416
      %635 = vmatprep.subr.mxu0 %v425
      %636 = vmatpush1.msra.mxu0 %v424
      %637 = vmatprep.mubr.f32.mxu0 %v429
      %638 = vmatmul.mubr.f32.gmra.mrb[0].mxu0 %v171
      %v639 = vpop.f32.mrb[0].mxu0
      %v640 = vadd.f32 0.0, %v639
      %v641 = vpop.f32.mrb[0].mxu0
      %v642 = vadd.f32 0.0, %v641
      %643 = vdwg.mxu0
      %644 = vmatprep.subr.mxu0 %v179
      %645 = vmatpush1.msra.mxu0 %v178
      %646 = vmatprep.subr.mxu0 %v187
      %647 = vmatpush1.msra.mxu0 %v186
      %648 = vmatprep.subr.mxu0 %v195
      %649 = vmatpush1.msra.mxu0 %v194
      %650 = vmatprep.subr.mxu0 %v203
      %651 = vmatpush1.msra.mxu0 %v202
      %652 = vmatprep.subr.mxu0 %v211
      %653 = vmatpush1.msra.mxu0 %v210
      %654 = vmatprep.subr.mxu0 %v219
      %655 = vmatpush1.msra.mxu0 %v218
      %656 = vmatprep.subr.mxu0 %v227
      %657 = vmatpush1.msra.mxu0 %v226
      %658 = vmatprep.subr.mxu0 %v235
      %659 = vmatpush1.msra.mxu0 %v234
      %660 = vmatprep.subr.mxu0 %v243
      %661 = vmatpush1.msra.mxu0 %v242
      %662 = vmatprep.subr.mxu0 %v251
      %663 = vmatpush1.msra.mxu0 %v250
      %664 = vmatprep.subr.mxu0 %v259
      %665 = vmatpush1.msra.mxu0 %v258
      %666 = vmatprep.subr.mxu0 %v267
      %667 = vmatpush1.msra.mxu0 %v266
      %668 = vmatprep.subr.mxu0 %v275
      %669 = vmatpush1.msra.mxu0 %v274
      %670 = vmatprep.subr.mxu0 %v283
      %671 = vmatpush1.msra.mxu0 %v282
      %672 = vmatprep.subr.mxu0 %v291
      %673 = vmatpush1.msra.mxu0 %v290
      %674 = vmatprep.subr.mxu0 %v299
      %675 = vmatpush1.msra.mxu0 %v298
      %676 = vmatprep.subr.mxu0 %v307
      %677 = vmatpush1.msra.mxu0 %v306
      %678 = vmatprep.subr.mxu0 %v315
      %679 = vmatpush1.msra.mxu0 %v314
      %680 = vmatprep.subr.mxu0 %v323
      %681 = vmatpush1.msra.mxu0 %v322
      %682 = vmatprep.subr.mxu0 %v331
      %683 = vmatpush1.msra.mxu0 %v330
      %684 = vmatprep.subr.mxu0 %v339
      %685 = vmatpush1.msra.mxu0 %v338
      %686 = vmatprep.subr.mxu0 %v347
      %687 = vmatpush1.msra.mxu0 %v346
      %688 = vmatprep.subr.mxu0 %v355
      %689 = vmatpush1.msra.mxu0 %v354
      %690 = vmatprep.subr.mxu0 %v363
      %691 = vmatpush1.msra.mxu0 %v362
      %692 = vmatprep.subr.mxu0 %v371
      %693 = vmatpush1.msra.mxu0 %v370
      %694 = vmatprep.subr.mxu0 %v379
      %695 = vmatpush1.msra.mxu0 %v378
      %696 = vmatprep.subr.mxu0 %v387
      %697 = vmatpush1.msra.mxu0 %v386
      %698 = vmatprep.subr.mxu0 %v395
      %699 = vmatpush1.msra.mxu0 %v394
      %700 = vmatprep.subr.mxu0 %v403
      %701 = vmatpush1.msra.mxu0 %v402
      %702 = vmatprep.subr.mxu0 %v411
      %703 = vmatpush1.msra.mxu0 %v410
      %704 = vmatprep.subr.mxu0 %v419
      %705 = vmatpush1.msra.mxu0 %v418
      %706 = vmatprep.subr.mxu0 %v427
      %707 = vmatpush1.msra.mxu0 %v426
      %708 = vmatprep.mubr.f32.mxu0 %v429
      %709 = vmatmul.mubr.f32.gmra.mrb[0].mxu0 %v171
      %v710 = vpop.f32.mrb[0].mxu0
      %v711 = vadd.f32 0.0, %v710
      %v712 = vpop.f32.mrb[0].mxu0
      %v713 = vadd.f32 0.0, %v712
      %714 = vdwg.mxu0
      %s715 = scalar_lea.vmem %s1, 2048
      %v716 = vld [vmem:[%s715] sm:$0xff]
      %v717 = vld [vmem:[%s715 + $0x8] sm:$0xff]
      %v718 = vld [vmem:[%s715 + $0x10] sm:$0xff]
      %v719 = vld [vmem:[%s715 + $0x18] sm:$0xff]
      %v720 = vld [vmem:[%s715 + $0x20] sm:$0xff]
      %v721 = vld [vmem:[%s715 + $0x28] sm:$0xff]
      %v722 = vld [vmem:[%s715 + $0x30] sm:$0xff]
      %v723 = vld [vmem:[%s715 + $0x38] sm:$0xff]
      %v724 = vld [vmem:[%s715 + $0x40] sm:$0xff]
      %v725 = vld [vmem:[%s715 + $0x48] sm:$0xff]
      %v726 = vld [vmem:[%s715 + $0x50] sm:$0xff]
      %v727 = vld [vmem:[%s715 + $0x58] sm:$0xff]
      %v728 = vld [vmem:[%s715 + $0x60] sm:$0xff]
      %v729 = vld [vmem:[%s715 + $0x68] sm:$0xff]
      %v730 = vld [vmem:[%s715 + $0x70] sm:$0xff]
      %v731 = vld [vmem:[%s715 + $0x78] sm:$0xff]
      %v732 = vld [vmem:[%s715 + $0x80] sm:$0xff]
      %v733 = vld [vmem:[%s715 + $0x88] sm:$0xff]
      %v734 = vld [vmem:[%s715 + $0x90] sm:$0xff]
      %v735 = vld [vmem:[%s715 + $0x98] sm:$0xff]
      %v736 = vld [vmem:[%s715 + $0xa0] sm:$0xff]
      %v737 = vld [vmem:[%s715 + $0xa8] sm:$0xff]
      %v738 = vld [vmem:[%s715 + $0xb0] sm:$0xff]
      %v739 = vld [vmem:[%s715 + $0xb8] sm:$0xff]
      %v740 = vld [vmem:[%s715 + $0xc0] sm:$0xff]
      %v741 = vld [vmem:[%s715 + $0xc8] sm:$0xff]
      %v742 = vld [vmem:[%s715 + $0xd0] sm:$0xff]
      %v743 = vld [vmem:[%s715 + $0xd8] sm:$0xff]
      %v744 = vld [vmem:[%s715 + $0xe0] sm:$0xff]
      %v745 = vld [vmem:[%s715 + $0xe8] sm:$0xff]
      %v746 = vld [vmem:[%s715 + $0xf0] sm:$0xff]
      %v747 = vld [vmem:[%s715 + $0xf8] sm:$0xff]
      %v748 = vld [vmem:[%s715 + $0x100] sm:$0xff]
      %v749 = vld [vmem:[%s715 + $0x108] sm:$0xff]
      %v750 = vld [vmem:[%s715 + $0x110] sm:$0xff]
      %v751 = vld [vmem:[%s715 + $0x118] sm:$0xff]
      %v752 = vld [vmem:[%s715 + $0x120] sm:$0xff]
      %v753 = vld [vmem:[%s715 + $0x128] sm:$0xff]
      %v754 = vld [vmem:[%s715 + $0x130] sm:$0xff]
      %v755 = vld [vmem:[%s715 + $0x138] sm:$0xff]
      %v756 = vld [vmem:[%s715 + $0x140] sm:$0xff]
      %v757 = vld [vmem:[%s715 + $0x148] sm:$0xff]
      %v758 = vld [vmem:[%s715 + $0x150] sm:$0xff]
      %v759 = vld [vmem:[%s715 + $0x158] sm:$0xff]
      %v760 = vld [vmem:[%s715 + $0x160] sm:$0xff]
      %v761 = vld [vmem:[%s715 + $0x168] sm:$0xff]
      %v762 = vld [vmem:[%s715 + $0x170] sm:$0xff]
      %v763 = vld [vmem:[%s715 + $0x178] sm:$0xff]
      %v764 = vld [vmem:[%s715 + $0x180] sm:$0xff]
      %v765 = vld [vmem:[%s715 + $0x188] sm:$0xff]
      %v766 = vld [vmem:[%s715 + $0x190] sm:$0xff]
      %v767 = vld [vmem:[%s715 + $0x198] sm:$0xff]
      %v768 = vld [vmem:[%s715 + $0x1a0] sm:$0xff]
      %v769 = vld [vmem:[%s715 + $0x1a8] sm:$0xff]
      %v770 = vld [vmem:[%s715 + $0x1b0] sm:$0xff]
      %v771 = vld [vmem:[%s715 + $0x1b8] sm:$0xff]
      %v772 = vld [vmem:[%s715 + $0x1c0] sm:$0xff]
      %v773 = vld [vmem:[%s715 + $0x1c8] sm:$0xff]
      %v774 = vld [vmem:[%s715 + $0x1d0] sm:$0xff]
      %v775 = vld [vmem:[%s715 + $0x1d8] sm:$0xff]
      %v776 = vld [vmem:[%s715 + $0x1e0] sm:$0xff]
      %v777 = vld [vmem:[%s715 + $0x1e8] sm:$0xff]
      %v778 = vld [vmem:[%s715 + $0x1f0] sm:$0xff]
      %v779 = vld [vmem:[%s715 + $0x1f8] sm:$0xff]
      %v780 = vld [vmem:[%s715 + $0x200] sm:$0xff]
      %v781 = vld [vmem:[%s715 + $0x208] sm:$0xff]
      %v782 = vld [vmem:[%s715 + $0x210] sm:$0xff]
      %v783 = vld [vmem:[%s715 + $0x218] sm:$0xff]
      %v784 = vld [vmem:[%s715 + $0x220] sm:$0xff]
      %v785 = vld [vmem:[%s715 + $0x228] sm:$0xff]
      %v786 = vld [vmem:[%s715 + $0x230] sm:$0xff]
      %v787 = vld [vmem:[%s715 + $0x238] sm:$0xff]
      %v788 = vld [vmem:[%s715 + $0x240] sm:$0xff]
      %v789 = vld [vmem:[%s715 + $0x248] sm:$0xff]
      %v790 = vld [vmem:[%s715 + $0x250] sm:$0xff]
      %v791 = vld [vmem:[%s715 + $0x258] sm:$0xff]
      %v792 = vld [vmem:[%s715 + $0x260] sm:$0xff]
      %v793 = vld [vmem:[%s715 + $0x268] sm:$0xff]
      %v794 = vld [vmem:[%s715 + $0x270] sm:$0xff]
      %v795 = vld [vmem:[%s715 + $0x278] sm:$0xff]
      %v796 = vld [vmem:[%s715 + $0x280] sm:$0xff]
      %v797 = vld [vmem:[%s715 + $0x288] sm:$0xff]
      %v798 = vld [vmem:[%s715 + $0x290] sm:$0xff]
      %v799 = vld [vmem:[%s715 + $0x298] sm:$0xff]
      %v800 = vld [vmem:[%s715 + $0x2a0] sm:$0xff]
      %v801 = vld [vmem:[%s715 + $0x2a8] sm:$0xff]
      %v802 = vld [vmem:[%s715 + $0x2b0] sm:$0xff]
      %v803 = vld [vmem:[%s715 + $0x2b8] sm:$0xff]
      %v804 = vld [vmem:[%s715 + $0x2c0] sm:$0xff]
      %v805 = vld [vmem:[%s715 + $0x2c8] sm:$0xff]
      %v806 = vld [vmem:[%s715 + $0x2d0] sm:$0xff]
      %v807 = vld [vmem:[%s715 + $0x2d8] sm:$0xff]
      %v808 = vld [vmem:[%s715 + $0x2e0] sm:$0xff]
      %v809 = vld [vmem:[%s715 + $0x2e8] sm:$0xff]
      %v810 = vld [vmem:[%s715 + $0x2f0] sm:$0xff]
      %v811 = vld [vmem:[%s715 + $0x2f8] sm:$0xff]
      %v812 = vld [vmem:[%s715 + $0x300] sm:$0xff]
      %v813 = vld [vmem:[%s715 + $0x308] sm:$0xff]
      %v814 = vld [vmem:[%s715 + $0x310] sm:$0xff]
      %v815 = vld [vmem:[%s715 + $0x318] sm:$0xff]
      %v816 = vld [vmem:[%s715 + $0x320] sm:$0xff]
      %v817 = vld [vmem:[%s715 + $0x328] sm:$0xff]
      %v818 = vld [vmem:[%s715 + $0x330] sm:$0xff]
      %v819 = vld [vmem:[%s715 + $0x338] sm:$0xff]
      %v820 = vld [vmem:[%s715 + $0x340] sm:$0xff]
      %v821 = vld [vmem:[%s715 + $0x348] sm:$0xff]
      %v822 = vld [vmem:[%s715 + $0x350] sm:$0xff]
      %v823 = vld [vmem:[%s715 + $0x358] sm:$0xff]
      %v824 = vld [vmem:[%s715 + $0x360] sm:$0xff]
      %v825 = vld [vmem:[%s715 + $0x368] sm:$0xff]
      %v826 = vld [vmem:[%s715 + $0x370] sm:$0xff]
      %v827 = vld [vmem:[%s715 + $0x378] sm:$0xff]
      %v828 = vld [vmem:[%s715 + $0x380] sm:$0xff]
      %v829 = vld [vmem:[%s715 + $0x388] sm:$0xff]
      %v830 = vld [vmem:[%s715 + $0x390] sm:$0xff]
      %v831 = vld [vmem:[%s715 + $0x398] sm:$0xff]
      %v832 = vld [vmem:[%s715 + $0x3a0] sm:$0xff]
      %v833 = vld [vmem:[%s715 + $0x3a8] sm:$0xff]
      %v834 = vld [vmem:[%s715 + $0x3b0] sm:$0xff]
      %v835 = vld [vmem:[%s715 + $0x3b8] sm:$0xff]
      %v836 = vld [vmem:[%s715 + $0x3c0] sm:$0xff]
      %v837 = vld [vmem:[%s715 + $0x3c8] sm:$0xff]
      %v838 = vld [vmem:[%s715 + $0x3d0] sm:$0xff]
      %v839 = vld [vmem:[%s715 + $0x3d8] sm:$0xff]
      %v840 = vld [vmem:[%s715 + $0x3e0] sm:$0xff]
      %v841 = vld [vmem:[%s715 + $0x3e8] sm:$0xff]
      %v842 = vld [vmem:[%s715 + $0x3f0] sm:$0xff]
      %v843 = vld [vmem:[%s715 + $0x3f8] sm:$0xff]
      %v844 = vld [vmem:[%s715 + $0x400] sm:$0xff]
      %v845 = vld [vmem:[%s715 + $0x408] sm:$0xff]
      %v846 = vld [vmem:[%s715 + $0x410] sm:$0xff]
      %v847 = vld [vmem:[%s715 + $0x418] sm:$0xff]
      %v848 = vld [vmem:[%s715 + $0x420] sm:$0xff]
      %v849 = vld [vmem:[%s715 + $0x428] sm:$0xff]
      %v850 = vld [vmem:[%s715 + $0x430] sm:$0xff]
      %v851 = vld [vmem:[%s715 + $0x438] sm:$0xff]
      %v852 = vld [vmem:[%s715 + $0x440] sm:$0xff]
      %v853 = vld [vmem:[%s715 + $0x448] sm:$0xff]
      %v854 = vld [vmem:[%s715 + $0x450] sm:$0xff]
      %v855 = vld [vmem:[%s715 + $0x458] sm:$0xff]
      %v856 = vld [vmem:[%s715 + $0x460] sm:$0xff]
      %v857 = vld [vmem:[%s715 + $0x468] sm:$0xff]
      %v858 = vld [vmem:[%s715 + $0x470] sm:$0xff]
      %v859 = vld [vmem:[%s715 + $0x478] sm:$0xff]
      %v860 = vld [vmem:[%s715 + $0x480] sm:$0xff]
      %v861 = vld [vmem:[%s715 + $0x488] sm:$0xff]
      %v862 = vld [vmem:[%s715 + $0x490] sm:$0xff]
      %v863 = vld [vmem:[%s715 + $0x498] sm:$0xff]
      %v864 = vld [vmem:[%s715 + $0x4a0] sm:$0xff]
      %v865 = vld [vmem:[%s715 + $0x4a8] sm:$0xff]
      %v866 = vld [vmem:[%s715 + $0x4b0] sm:$0xff]
      %v867 = vld [vmem:[%s715 + $0x4b8] sm:$0xff]
      %v868 = vld [vmem:[%s715 + $0x4c0] sm:$0xff]
      %v869 = vld [vmem:[%s715 + $0x4c8] sm:$0xff]
      %v870 = vld [vmem:[%s715 + $0x4d0] sm:$0xff]
      %v871 = vld [vmem:[%s715 + $0x4d8] sm:$0xff]
      %v872 = vld [vmem:[%s715 + $0x4e0] sm:$0xff]
      %v873 = vld [vmem:[%s715 + $0x4e8] sm:$0xff]
      %v874 = vld [vmem:[%s715 + $0x4f0] sm:$0xff]
      %v875 = vld [vmem:[%s715 + $0x4f8] sm:$0xff]
      %v876 = vld [vmem:[%s715 + $0x500] sm:$0xff]
      %v877 = vld [vmem:[%s715 + $0x508] sm:$0xff]
      %v878 = vld [vmem:[%s715 + $0x510] sm:$0xff]
      %v879 = vld [vmem:[%s715 + $0x518] sm:$0xff]
      %v880 = vld [vmem:[%s715 + $0x520] sm:$0xff]
      %v881 = vld [vmem:[%s715 + $0x528] sm:$0xff]
      %v882 = vld [vmem:[%s715 + $0x530] sm:$0xff]
      %v883 = vld [vmem:[%s715 + $0x538] sm:$0xff]
      %v884 = vld [vmem:[%s715 + $0x540] sm:$0xff]
      %v885 = vld [vmem:[%s715 + $0x548] sm:$0xff]
      %v886 = vld [vmem:[%s715 + $0x550] sm:$0xff]
      %v887 = vld [vmem:[%s715 + $0x558] sm:$0xff]
      %v888 = vld [vmem:[%s715 + $0x560] sm:$0xff]
      %v889 = vld [vmem:[%s715 + $0x568] sm:$0xff]
      %v890 = vld [vmem:[%s715 + $0x570] sm:$0xff]
      %v891 = vld [vmem:[%s715 + $0x578] sm:$0xff]
      %v892 = vld [vmem:[%s715 + $0x580] sm:$0xff]
      %v893 = vld [vmem:[%s715 + $0x588] sm:$0xff]
      %v894 = vld [vmem:[%s715 + $0x590] sm:$0xff]
      %v895 = vld [vmem:[%s715 + $0x598] sm:$0xff]
      %v896 = vld [vmem:[%s715 + $0x5a0] sm:$0xff]
      %v897 = vld [vmem:[%s715 + $0x5a8] sm:$0xff]
      %v898 = vld [vmem:[%s715 + $0x5b0] sm:$0xff]
      %v899 = vld [vmem:[%s715 + $0x5b8] sm:$0xff]
      %v900 = vld [vmem:[%s715 + $0x5c0] sm:$0xff]
      %v901 = vld [vmem:[%s715 + $0x5c8] sm:$0xff]
      %v902 = vld [vmem:[%s715 + $0x5d0] sm:$0xff]
      %v903 = vld [vmem:[%s715 + $0x5d8] sm:$0xff]
      %v904 = vld [vmem:[%s715 + $0x5e0] sm:$0xff]
      %v905 = vld [vmem:[%s715 + $0x5e8] sm:$0xff]
      %v906 = vld [vmem:[%s715 + $0x5f0] sm:$0xff]
      %v907 = vld [vmem:[%s715 + $0x5f8] sm:$0xff]
      %v908 = vld [vmem:[%s715 + $0x600] sm:$0xff]
      %v909 = vld [vmem:[%s715 + $0x608] sm:$0xff]
      %v910 = vld [vmem:[%s715 + $0x610] sm:$0xff]
      %v911 = vld [vmem:[%s715 + $0x618] sm:$0xff]
      %v912 = vld [vmem:[%s715 + $0x620] sm:$0xff]
      %v913 = vld [vmem:[%s715 + $0x628] sm:$0xff]
      %v914 = vld [vmem:[%s715 + $0x630] sm:$0xff]
      %v915 = vld [vmem:[%s715 + $0x638] sm:$0xff]
      %v916 = vld [vmem:[%s715 + $0x640] sm:$0xff]
      %v917 = vld [vmem:[%s715 + $0x648] sm:$0xff]
      %v918 = vld [vmem:[%s715 + $0x650] sm:$0xff]
      %v919 = vld [vmem:[%s715 + $0x658] sm:$0xff]
      %v920 = vld [vmem:[%s715 + $0x660] sm:$0xff]
      %v921 = vld [vmem:[%s715 + $0x668] sm:$0xff]
      %v922 = vld [vmem:[%s715 + $0x670] sm:$0xff]
      %v923 = vld [vmem:[%s715 + $0x678] sm:$0xff]
      %v924 = vld [vmem:[%s715 + $0x680] sm:$0xff]
      %v925 = vld [vmem:[%s715 + $0x688] sm:$0xff]
      %v926 = vld [vmem:[%s715 + $0x690] sm:$0xff]
      %v927 = vld [vmem:[%s715 + $0x698] sm:$0xff]
      %v928 = vld [vmem:[%s715 + $0x6a0] sm:$0xff]
      %v929 = vld [vmem:[%s715 + $0x6a8] sm:$0xff]
      %v930 = vld [vmem:[%s715 + $0x6b0] sm:$0xff]
      %v931 = vld [vmem:[%s715 + $0x6b8] sm:$0xff]
      %v932 = vld [vmem:[%s715 + $0x6c0] sm:$0xff]
      %v933 = vld [vmem:[%s715 + $0x6c8] sm:$0xff]
      %v934 = vld [vmem:[%s715 + $0x6d0] sm:$0xff]
      %v935 = vld [vmem:[%s715 + $0x6d8] sm:$0xff]
      %v936 = vld [vmem:[%s715 + $0x6e0] sm:$0xff]
      %v937 = vld [vmem:[%s715 + $0x6e8] sm:$0xff]
      %v938 = vld [vmem:[%s715 + $0x6f0] sm:$0xff]
      %v939 = vld [vmem:[%s715 + $0x6f8] sm:$0xff]
      %v940 = vld [vmem:[%s715 + $0x700] sm:$0xff]
      %v941 = vld [vmem:[%s715 + $0x708] sm:$0xff]
      %v942 = vld [vmem:[%s715 + $0x710] sm:$0xff]
      %v943 = vld [vmem:[%s715 + $0x718] sm:$0xff]
      %v944 = vld [vmem:[%s715 + $0x720] sm:$0xff]
      %v945 = vld [vmem:[%s715 + $0x728] sm:$0xff]
      %v946 = vld [vmem:[%s715 + $0x730] sm:$0xff]
      %v947 = vld [vmem:[%s715 + $0x738] sm:$0xff]
      %v948 = vld [vmem:[%s715 + $0x740] sm:$0xff]
      %v949 = vld [vmem:[%s715 + $0x748] sm:$0xff]
      %v950 = vld [vmem:[%s715 + $0x750] sm:$0xff]
      %v951 = vld [vmem:[%s715 + $0x758] sm:$0xff]
      %v952 = vld [vmem:[%s715 + $0x760] sm:$0xff]
      %v953 = vld [vmem:[%s715 + $0x768] sm:$0xff]
      %v954 = vld [vmem:[%s715 + $0x770] sm:$0xff]
      %v955 = vld [vmem:[%s715 + $0x778] sm:$0xff]
      %v956 = vld [vmem:[%s715 + $0x780] sm:$0xff]
      %v957 = vld [vmem:[%s715 + $0x788] sm:$0xff]
      %v958 = vld [vmem:[%s715 + $0x790] sm:$0xff]
      %v959 = vld [vmem:[%s715 + $0x798] sm:$0xff]
      %v960 = vld [vmem:[%s715 + $0x7a0] sm:$0xff]
      %v961 = vld [vmem:[%s715 + $0x7a8] sm:$0xff]
      %v962 = vld [vmem:[%s715 + $0x7b0] sm:$0xff]
      %v963 = vld [vmem:[%s715 + $0x7b8] sm:$0xff]
      %v964 = vld [vmem:[%s715 + $0x7c0] sm:$0xff]
      %v965 = vld [vmem:[%s715 + $0x7c8] sm:$0xff]
      %v966 = vld [vmem:[%s715 + $0x7d0] sm:$0xff]
      %v967 = vld [vmem:[%s715 + $0x7d8] sm:$0xff]
      %v968 = vld [vmem:[%s715 + $0x7e0] sm:$0xff]
      %v969 = vld [vmem:[%s715 + $0x7e8] sm:$0xff]
      %v970 = vld [vmem:[%s715 + $0x7f0] sm:$0xff]
      %v971 = vld [vmem:[%s715 + $0x7f8] sm:$0xff]
      %972 = vmatprep.subr.mxu0 %v717
      %973 = vmatpush1.msra.mxu0 %v716
      %974 = vmatprep.subr.mxu0 %v725
      %975 = vmatpush1.msra.mxu0 %v724
      %976 = vmatprep.subr.mxu0 %v733
      %977 = vmatpush1.msra.mxu0 %v732
      %978 = vmatprep.subr.mxu0 %v741
      %979 = vmatpush1.msra.mxu0 %v740
      %980 = vmatprep.subr.mxu0 %v749
      %981 = vmatpush1.msra.mxu0 %v748
      %982 = vmatprep.subr.mxu0 %v757
      %983 = vmatpush1.msra.mxu0 %v756
      %984 = vmatprep.subr.mxu0 %v765
      %985 = vmatpush1.msra.mxu0 %v764
      %986 = vmatprep.subr.mxu0 %v773
      %987 = vmatpush1.msra.mxu0 %v772
      %988 = vmatprep.subr.mxu0 %v781
      %989 = vmatpush1.msra.mxu0 %v780
      %990 = vmatprep.subr.mxu0 %v789
      %991 = vmatpush1.msra.mxu0 %v788
      %992 = vmatprep.subr.mxu0 %v797
      %993 = vmatpush1.msra.mxu0 %v796
      %994 = vmatprep.subr.mxu0 %v805
      %995 = vmatpush1.msra.mxu0 %v804
      %996 = vmatprep.subr.mxu0 %v813
      %997 = vmatpush1.msra.mxu0 %v812
      %998 = vmatprep.subr.mxu0 %v821
      %999 = vmatpush1.msra.mxu0 %v820
      %1000 = vmatprep.subr.mxu0 %v829
      %1001 = vmatpush1.msra.mxu0 %v828
      %1002 = vmatprep.subr.mxu0 %v837
      %1003 = vmatpush1.msra.mxu0 %v836
      %1004 = vmatprep.subr.mxu0 %v845
      %1005 = vmatpush1.msra.mxu0 %v844
      %1006 = vmatprep.subr.mxu0 %v853
      %1007 = vmatpush1.msra.mxu0 %v852
      %1008 = vmatprep.subr.mxu0 %v861
      %1009 = vmatpush1.msra.mxu0 %v860
      %1010 = vmatprep.subr.mxu0 %v869
      %1011 = vmatpush1.msra.mxu0 %v868
      %1012 = vmatprep.subr.mxu0 %v877
      %1013 = vmatpush1.msra.mxu0 %v876
      %1014 = vmatprep.subr.mxu0 %v885
      %1015 = vmatpush1.msra.mxu0 %v884
      %1016 = vmatprep.subr.mxu0 %v893
      %1017 = vmatpush1.msra.mxu0 %v892
      %1018 = vmatprep.subr.mxu0 %v901
      %1019 = vmatpush1.msra.mxu0 %v900
      %1020 = vmatprep.subr.mxu0 %v909
      %1021 = vmatpush1.msra.mxu0 %v908
      %1022 = vmatprep.subr.mxu0 %v917
      %1023 = vmatpush1.msra.mxu0 %v916
      %1024 = vmatprep.subr.mxu0 %v925
      %1025 = vmatpush1.msra.mxu0 %v924
      %1026 = vmatprep.subr.mxu0 %v933
      %1027 = vmatpush1.msra.mxu0 %v932
      %1028 = vmatprep.subr.mxu0 %v941
      %1029 = vmatpush1.msra.mxu0 %v940
      %1030 = vmatprep.subr.mxu0 %v949
      %1031 = vmatpush1.msra.mxu0 %v948
      %1032 = vmatprep.subr.mxu0 %v957
      %1033 = vmatpush1.msra.mxu0 %v956
      %1034 = vmatprep.subr.mxu0 %v965
      %1035 = vmatpush1.msra.mxu0 %v964
      %1036 = vmatprep.mubr.f32.mxu0 %v429
      %1037 = vmatmul.mubr.f32.gmra.mrb[0].mxu0 %v171
      %v1038 = vpop.f32.mrb[0].mxu0
      %v1039 = vadd.f32 0.0, %v1038
      %v1040 = vpop.f32.mrb[0].mxu0
      %v1041 = vadd.f32 0.0, %v1040
      %1042 = vdwg.mxu0
      %1043 = vmatprep.subr.mxu0 %v719
      %1044 = vmatpush1.msra.mxu0 %v718
      %1045 = vmatprep.subr.mxu0 %v727
      %1046 = vmatpush1.msra.mxu0 %v726
      %1047 = vmatprep.subr.mxu0 %v735
      %1048 = vmatpush1.msra.mxu0 %v734
      %1049 = vmatprep.subr.mxu0 %v743
      %1050 = vmatpush1.msra.mxu0 %v742
      %1051 = vmatprep.subr.mxu0 %v751
      %1052 = vmatpush1.msra.mxu0 %v750
      %1053 = vmatprep.subr.mxu0 %v759
      %1054 = vmatpush1.msra.mxu0 %v758
      %1055 = vmatprep.subr.mxu0 %v767
      %1056 = vmatpush1.msra.mxu0 %v766
      %1057 = vmatprep.subr.mxu0 %v775
      %1058 = vmatpush1.msra.mxu0 %v774
      %1059 = vmatprep.subr.mxu0 %v783
      %1060 = vmatpush1.msra.mxu0 %v782
      %1061 = vmatprep.subr.mxu0 %v791
      %1062 = vmatpush1.msra.mxu0 %v790
      %1063 = vmatprep.subr.mxu0 %v799
      %1064 = vmatpush1.msra.mxu0 %v798
      %1065 = vmatprep.subr.mxu0 %v807
      %1066 = vmatpush1.msra.mxu0 %v806
      %1067 = vmatprep.subr.mxu0 %v815
      %1068 = vmatpush1.msra.mxu0 %v814
      %1069 = vmatprep.subr.mxu0 %v823
      %1070 = vmatpush1.msra.mxu0 %v822
      %1071 = vmatprep.subr.mxu0 %v831
      %1072 = vmatpush1.msra.mxu0 %v830
      %1073 = vmatprep.subr.mxu0 %v839
      %1074 = vmatpush1.msra.mxu0 %v838
      %1075 = vmatprep.subr.mxu0 %v847
      %1076 = vmatpush1.msra.mxu0 %v846
      %1077 = vmatprep.subr.mxu0 %v855
      %1078 = vmatpush1.msra.mxu0 %v854
      %1079 = vmatprep.subr.mxu0 %v863
      %1080 = vmatpush1.msra.mxu0 %v862
      %1081 = vmatprep.subr.mxu0 %v871
      %1082 = vmatpush1.msra.mxu0 %v870
      %1083 = vmatprep.subr.mxu0 %v879
      %1084 = vmatpush1.msra.mxu0 %v878
      %1085 = vmatprep.subr.mxu0 %v887
      %1086 = vmatpush1.msra.mxu0 %v886
      %1087 = vmatprep.subr.mxu0 %v895
      %1088 = vmatpush1.msra.mxu0 %v894
      %1089 = vmatprep.subr.mxu0 %v903
      %1090 = vmatpush1.msra.mxu0 %v902
      %1091 = vmatprep.subr.mxu0 %v911
      %1092 = vmatpush1.msra.mxu0 %v910
      %1093 = vmatprep.subr.mxu0 %v919
      %1094 = vmatpush1.msra.mxu0 %v918
      %1095 = vmatprep.subr.mxu0 %v927
      %1096 = vmatpush1.msra.mxu0 %v926
      %1097 = vmatprep.subr.mxu0 %v935
      %1098 = vmatpush1.msra.mxu0 %v934
      %1099 = vmatprep.subr.mxu0 %v943
      %1100 = vmatpush1.msra.mxu0 %v942
      %1101 = vmatprep.subr.mxu0 %v951
      %1102 = vmatpush1.msra.mxu0 %v950
      %1103 = vmatprep.subr.mxu0 %v959
      %1104 = vmatpush1.msra.mxu0 %v958
      %1105 = vmatprep.subr.mxu0 %v967
      %1106 = vmatpush1.msra.mxu0 %v966
      %1107 = vmatprep.mubr.f32.mxu0 %v429
      %1108 = vmatmul.mubr.f32.gmra.mrb[0].mxu0 %v171
      %v1109 = vpop.f32.mrb[0].mxu0
      %v1110 = vadd.f32 0.0, %v1109
      %v1111 = vpop.f32.mrb[0].mxu0
      %v1112 = vadd.f32 0.0, %v1111
      %1113 = vdwg.mxu0
      %1114 = vmatprep.subr.mxu0 %v721
      %1115 = vmatpush1.msra.mxu0 %v720
      %1116 = vmatprep.subr.mxu0 %v729
      %1117 = vmatpush1.msra.mxu0 %v728
      %1118 = vmatprep.subr.mxu0 %v737
      %1119 = vmatpush1.msra.mxu0 %v736
      %1120 = vmatprep.subr.mxu0 %v745
      %1121 = vmatpush1.msra.mxu0 %v744
      %1122 = vmatprep.subr.mxu0 %v753
      %1123 = vmatpush1.msra.mxu0 %v752
      %1124 = vmatprep.subr.mxu0 %v761
      %1125 = vmatpush1.msra.mxu0 %v760
      %1126 = vmatprep.subr.mxu0 %v769
      %1127 = vmatpush1.msra.mxu0 %v768
      %1128 = vmatprep.subr.mxu0 %v777
      %1129 = vmatpush1.msra.mxu0 %v776
      %1130 = vmatprep.subr.mxu0 %v785
      %1131 = vmatpush1.msra.mxu0 %v784
      %1132 = vmatprep.subr.mxu0 %v793
      %1133 = vmatpush1.msra.mxu0 %v792
      %1134 = vmatprep.subr.mxu0 %v801
      %1135 = vmatpush1.msra.mxu0 %v800
      %1136 = vmatprep.subr.mxu0 %v809
      %1137 = vmatpush1.msra.mxu0 %v808
      %1138 = vmatprep.subr.mxu0 %v817
      %1139 = vmatpush1.msra.mxu0 %v816
      %1140 = vmatprep.subr.mxu0 %v825
      %1141 = vmatpush1.msra.mxu0 %v824
      %1142 = vmatprep.subr.mxu0 %v833
      %1143 = vmatpush1.msra.mxu0 %v832
      %1144 = vmatprep.subr.mxu0 %v841
      %1145 = vmatpush1.msra.mxu0 %v840
      %1146 = vmatprep.subr.mxu0 %v849
      %1147 = vmatpush1.msra.mxu0 %v848
      %1148 = vmatprep.subr.mxu0 %v857
      %1149 = vmatpush1.msra.mxu0 %v856
      %1150 = vmatprep.subr.mxu0 %v865
      %1151 = vmatpush1.msra.mxu0 %v864
      %1152 = vmatprep.subr.mxu0 %v873
      %1153 = vmatpush1.msra.mxu0 %v872
      %1154 = vmatprep.subr.mxu0 %v881
      %1155 = vmatpush1.msra.mxu0 %v880
      %1156 = vmatprep.subr.mxu0 %v889
      %1157 = vmatpush1.msra.mxu0 %v888
      %1158 = vmatprep.subr.mxu0 %v897
      %1159 = vmatpush1.msra.mxu0 %v896
      %1160 = vmatprep.subr.mxu0 %v905
      %1161 = vmatpush1.msra.mxu0 %v904
      %1162 = vmatprep.subr.mxu0 %v913
      %1163 = vmatpush1.msra.mxu0 %v912
      %1164 = vmatprep.subr.mxu0 %v921
      %1165 = vmatpush1.msra.mxu0 %v920
      %1166 = vmatprep.subr.mxu0 %v929
      %1167 = vmatpush1.msra.mxu0 %v928
      %1168 = vmatprep.subr.mxu0 %v937
      %1169 = vmatpush1.msra.mxu0 %v936
      %1170 = vmatprep.subr.mxu0 %v945
      %1171 = vmatpush1.msra.mxu0 %v944
      %1172 = vmatprep.subr.mxu0 %v953
      %1173 = vmatpush1.msra.mxu0 %v952
      %1174 = vmatprep.subr.mxu0 %v961
      %1175 = vmatpush1.msra.mxu0 %v960
      %1176 = vmatprep.subr.mxu0 %v969
      %1177 = vmatpush1.msra.mxu0 %v968
      %1178 = vmatprep.mubr.f32.mxu0 %v429
      %1179 = vmatmul.mubr.f32.gmra.mrb[0].mxu0 %v171
      %v1180 = vpop.f32.mrb[0].mxu0
      %v1181 = vadd.f32 0.0, %v1180
      %v1182 = vpop.f32.mrb[0].mxu0
      %v1183 = vadd.f32 0.0, %v1182
      %1184 = vdwg.mxu0
      %1185 = vmatprep.subr.mxu0 %v723
      %1186 = vmatpush1.msra.mxu0 %v722
      %1187 = vmatprep.subr.mxu0 %v731
      %1188 = vmatpush1.msra.mxu0 %v730
      %1189 = vmatprep.subr.mxu0 %v739
      %1190 = vmatpush1.msra.mxu0 %v738
      %1191 = vmatprep.subr.mxu0 %v747
      %1192 = vmatpush1.msra.mxu0 %v746
      %1193 = vmatprep.subr.mxu0 %v755
      %1194 = vmatpush1.msra.mxu0 %v754
      %1195 = vmatprep.subr.mxu0 %v763
      %1196 = vmatpush1.msra.mxu0 %v762
      %1197 = vmatprep.subr.mxu0 %v771
      %1198 = vmatpush1.msra.mxu0 %v770
      %1199 = vmatprep.subr.mxu0 %v779
      %1200 = vmatpush1.msra.mxu0 %v778
      %1201 = vmatprep.subr.mxu0 %v787
      %1202 = vmatpush1.msra.mxu0 %v786
      %1203 = vmatprep.subr.mxu0 %v795
      %1204 = vmatpush1.msra.mxu0 %v794
      %1205 = vmatprep.subr.mxu0 %v803
      %1206 = vmatpush1.msra.mxu0 %v802
      %1207 = vmatprep.subr.mxu0 %v811
      %1208 = vmatpush1.msra.mxu0 %v810
      %1209 = vmatprep.subr.mxu0 %v819
      %1210 = vmatpush1.msra.mxu0 %v818
      %1211 = vmatprep.subr.mxu0 %v827
      %1212 = vmatpush1.msra.mxu0 %v826
      %1213 = vmatprep.subr.mxu0 %v835
      %1214 = vmatpush1.msra.mxu0 %v834
      %1215 = vmatprep.subr.mxu0 %v843
      %1216 = vmatpush1.msra.mxu0 %v842
      %1217 = vmatprep.subr.mxu0 %v851
      %1218 = vmatpush1.msra.mxu0 %v850
      %1219 = vmatprep.subr.mxu0 %v859
      %1220 = vmatpush1.msra.mxu0 %v858
      %1221 = vmatprep.subr.mxu0 %v867
      %1222 = vmatpush1.msra.mxu0 %v866
      %1223 = vmatprep.subr.mxu0 %v875
      %1224 = vmatpush1.msra.mxu0 %v874
      %1225 = vmatprep.subr.mxu0 %v883
      %1226 = vmatpush1.msra.mxu0 %v882
      %1227 = vmatprep.subr.mxu0 %v891
      %1228 = vmatpush1.msra.mxu0 %v890
      %1229 = vmatprep.subr.mxu0 %v899
      %1230 = vmatpush1.msra.mxu0 %v898
      %1231 = vmatprep.subr.mxu0 %v907
      %1232 = vmatpush1.msra.mxu0 %v906
      %1233 = vmatprep.subr.mxu0 %v915
      %1234 = vmatpush1.msra.mxu0 %v914
      %1235 = vmatprep.subr.mxu0 %v923
      %1236 = vmatpush1.msra.mxu0 %v922
      %1237 = vmatprep.subr.mxu0 %v931
      %1238 = vmatpush1.msra.mxu0 %v930
      %1239 = vmatprep.subr.mxu0 %v939
      %1240 = vmatpush1.msra.mxu0 %v938
      %1241 = vmatprep.subr.mxu0 %v947
      %1242 = vmatpush1.msra.mxu0 %v946
      %1243 = vmatprep.subr.mxu0 %v955
      %1244 = vmatpush1.msra.mxu0 %v954
      %1245 = vmatprep.subr.mxu0 %v963
      %1246 = vmatpush1.msra.mxu0 %v962
      %1247 = vmatprep.subr.mxu0 %v971
      %1248 = vmatpush1.msra.mxu0 %v970
      %1249 = vmatprep.mubr.f32.mxu0 %v429
      %1250 = vmatmul.mubr.f32.gmra.mrb[0].mxu0 %v171
      %v1251 = vpop.f32.mrb[0].mxu0
      %v1252 = vadd.f32 0.0, %v1251
      %v1253 = vpop.f32.mrb[0].mxu0
      %v1254 = vadd.f32 0.0, %v1253
      %1255 = vdwg.mxu0
      %s1256 = scalar_lea.vmem %s1, 4096
      %v1257 = vld [vmem:[%s1256] sm:$0xff]
      %v1258 = vld [vmem:[%s1256 + $0x8] sm:$0xff]
      %v1259 = vld [vmem:[%s1256 + $0x10] sm:$0xff]
      %v1260 = vld [vmem:[%s1256 + $0x18] sm:$0xff]
      %v1261 = vld [vmem:[%s1256 + $0x20] sm:$0xff]
      %v1262 = vld [vmem:[%s1256 + $0x28] sm:$0xff]
      %v1263 = vld [vmem:[%s1256 + $0x30] sm:$0xff]
      %v1264 = vld [vmem:[%s1256 + $0x38] sm:$0xff]
      %v1265 = vld [vmem:[%s1256 + $0x40] sm:$0xff]
      %v1266 = vld [vmem:[%s1256 + $0x48] sm:$0xff]
      %v1267 = vld [vmem:[%s1256 + $0x50] sm:$0xff]
      %v1268 = vld [vmem:[%s1256 + $0x58] sm:$0xff]
      %v1269 = vld [vmem:[%s1256 + $0x60] sm:$0xff]
      %v1270 = vld [vmem:[%s1256 + $0x68] sm:$0xff]
      %v1271 = vld [vmem:[%s1256 + $0x70] sm:$0xff]
      %v1272 = vld [vmem:[%s1256 + $0x78] sm:$0xff]
      %v1273 = vld [vmem:[%s1256 + $0x80] sm:$0xff]
      %v1274 = vld [vmem:[%s1256 + $0x88] sm:$0xff]
      %v1275 = vld [vmem:[%s1256 + $0x90] sm:$0xff]
      %v1276 = vld [vmem:[%s1256 + $0x98] sm:$0xff]
      %v1277 = vld [vmem:[%s1256 + $0xa0] sm:$0xff]
      %v1278 = vld [vmem:[%s1256 + $0xa8] sm:$0xff]
      %v1279 = vld [vmem:[%s1256 + $0xb0] sm:$0xff]
      %v1280 = vld [vmem:[%s1256 + $0xb8] sm:$0xff]
      %v1281 = vld [vmem:[%s1256 + $0xc0] sm:$0xff]
      %v1282 = vld [vmem:[%s1256 + $0xc8] sm:$0xff]
      %v1283 = vld [vmem:[%s1256 + $0xd0] sm:$0xff]
      %v1284 = vld [vmem:[%s1256 + $0xd8] sm:$0xff]
      %v1285 = vld [vmem:[%s1256 + $0xe0] sm:$0xff]
      %v1286 = vld [vmem:[%s1256 + $0xe8] sm:$0xff]
      %v1287 = vld [vmem:[%s1256 + $0xf0] sm:$0xff]
      %v1288 = vld [vmem:[%s1256 + $0xf8] sm:$0xff]
      %v1289 = vld [vmem:[%s1256 + $0x100] sm:$0xff]
      %v1290 = vld [vmem:[%s1256 + $0x108] sm:$0xff]
      %v1291 = vld [vmem:[%s1256 + $0x110] sm:$0xff]
      %v1292 = vld [vmem:[%s1256 + $0x118] sm:$0xff]
      %v1293 = vld [vmem:[%s1256 + $0x120] sm:$0xff]
      %v1294 = vld [vmem:[%s1256 + $0x128] sm:$0xff]
      %v1295 = vld [vmem:[%s1256 + $0x130] sm:$0xff]
      %v1296 = vld [vmem:[%s1256 + $0x138] sm:$0xff]
      %v1297 = vld [vmem:[%s1256 + $0x140] sm:$0xff]
      %v1298 = vld [vmem:[%s1256 + $0x148] sm:$0xff]
      %v1299 = vld [vmem:[%s1256 + $0x150] sm:$0xff]
      %v1300 = vld [vmem:[%s1256 + $0x158] sm:$0xff]
      %v1301 = vld [vmem:[%s1256 + $0x160] sm:$0xff]
      %v1302 = vld [vmem:[%s1256 + $0x168] sm:$0xff]
      %v1303 = vld [vmem:[%s1256 + $0x170] sm:$0xff]
      %v1304 = vld [vmem:[%s1256 + $0x178] sm:$0xff]
      %v1305 = vld [vmem:[%s1256 + $0x180] sm:$0xff]
      %v1306 = vld [vmem:[%s1256 + $0x188] sm:$0xff]
      %v1307 = vld [vmem:[%s1256 + $0x190] sm:$0xff]
      %v1308 = vld [vmem:[%s1256 + $0x198] sm:$0xff]
      %v1309 = vld [vmem:[%s1256 + $0x1a0] sm:$0xff]
      %v1310 = vld [vmem:[%s1256 + $0x1a8] sm:$0xff]
      %v1311 = vld [vmem:[%s1256 + $0x1b0] sm:$0xff]
      %v1312 = vld [vmem:[%s1256 + $0x1b8] sm:$0xff]
      %v1313 = vld [vmem:[%s1256 + $0x1c0] sm:$0xff]
      %v1314 = vld [vmem:[%s1256 + $0x1c8] sm:$0xff]
      %v1315 = vld [vmem:[%s1256 + $0x1d0] sm:$0xff]
      %v1316 = vld [vmem:[%s1256 + $0x1d8] sm:$0xff]
      %v1317 = vld [vmem:[%s1256 + $0x1e0] sm:$0xff]
      %v1318 = vld [vmem:[%s1256 + $0x1e8] sm:$0xff]
      %v1319 = vld [vmem:[%s1256 + $0x1f0] sm:$0xff]
      %v1320 = vld [vmem:[%s1256 + $0x1f8] sm:$0xff]
      %v1321 = vld [vmem:[%s1256 + $0x200] sm:$0xff]
      %v1322 = vld [vmem:[%s1256 + $0x208] sm:$0xff]
      %v1323 = vld [vmem:[%s1256 + $0x210] sm:$0xff]
      %v1324 = vld [vmem:[%s1256 + $0x218] sm:$0xff]
      %v1325 = vld [vmem:[%s1256 + $0x220] sm:$0xff]
      %v1326 = vld [vmem:[%s1256 + $0x228] sm:$0xff]
      %v1327 = vld [vmem:[%s1256 + $0x230] sm:$0xff]
      %v1328 = vld [vmem:[%s1256 + $0x238] sm:$0xff]
      %v1329 = vld [vmem:[%s1256 + $0x240] sm:$0xff]
      %v1330 = vld [vmem:[%s1256 + $0x248] sm:$0xff]
      %v1331 = vld [vmem:[%s1256 + $0x250] sm:$0xff]
      %v1332 = vld [vmem:[%s1256 + $0x258] sm:$0xff]
      %v1333 = vld [vmem:[%s1256 + $0x260] sm:$0xff]
      %v1334 = vld [vmem:[%s1256 + $0x268] sm:$0xff]
      %v1335 = vld [vmem:[%s1256 + $0x270] sm:$0xff]
      %v1336 = vld [vmem:[%s1256 + $0x278] sm:$0xff]
      %v1337 = vld [vmem:[%s1256 + $0x280] sm:$0xff]
      %v1338 = vld [vmem:[%s1256 + $0x288] sm:$0xff]
      %v1339 = vld [vmem:[%s1256 + $0x290] sm:$0xff]
      %v1340 = vld [vmem:[%s1256 + $0x298] sm:$0xff]
      %v1341 = vld [vmem:[%s1256 + $0x2a0] sm:$0xff]
      %v1342 = vld [vmem:[%s1256 + $0x2a8] sm:$0xff]
      %v1343 = vld [vmem:[%s1256 + $0x2b0] sm:$0xff]
      %v1344 = vld [vmem:[%s1256 + $0x2b8] sm:$0xff]
      %v1345 = vld [vmem:[%s1256 + $0x2c0] sm:$0xff]
      %v1346 = vld [vmem:[%s1256 + $0x2c8] sm:$0xff]
      %v1347 = vld [vmem:[%s1256 + $0x2d0] sm:$0xff]
      %v1348 = vld [vmem:[%s1256 + $0x2d8] sm:$0xff]
      %v1349 = vld [vmem:[%s1256 + $0x2e0] sm:$0xff]
      %v1350 = vld [vmem:[%s1256 + $0x2e8] sm:$0xff]
      %v1351 = vld [vmem:[%s1256 + $0x2f0] sm:$0xff]
      %v1352 = vld [vmem:[%s1256 + $0x2f8] sm:$0xff]
      %v1353 = vld [vmem:[%s1256 + $0x300] sm:$0xff]
      %v1354 = vld [vmem:[%s1256 + $0x308] sm:$0xff]
      %v1355 = vld [vmem:[%s1256 + $0x310] sm:$0xff]
      %v1356 = vld [vmem:[%s1256 + $0x318] sm:$0xff]
      %v1357 = vld [vmem:[%s1256 + $0x320] sm:$0xff]
      %v1358 = vld [vmem:[%s1256 + $0x328] sm:$0xff]
      %v1359 = vld [vmem:[%s1256 + $0x330] sm:$0xff]
      %v1360 = vld [vmem:[%s1256 + $0x338] sm:$0xff]
      %v1361 = vld [vmem:[%s1256 + $0x340] sm:$0xff]
      %v1362 = vld [vmem:[%s1256 + $0x348] sm:$0xff]
      %v1363 = vld [vmem:[%s1256 + $0x350] sm:$0xff]
      %v1364 = vld [vmem:[%s1256 + $0x358] sm:$0xff]
      %v1365 = vld [vmem:[%s1256 + $0x360] sm:$0xff]
      %v1366 = vld [vmem:[%s1256 + $0x368] sm:$0xff]
      %v1367 = vld [vmem:[%s1256 + $0x370] sm:$0xff]
      %v1368 = vld [vmem:[%s1256 + $0x378] sm:$0xff]
      %v1369 = vld [vmem:[%s1256 + $0x380] sm:$0xff]
      %v1370 = vld [vmem:[%s1256 + $0x388] sm:$0xff]
      %v1371 = vld [vmem:[%s1256 + $0x390] sm:$0xff]
      %v1372 = vld [vmem:[%s1256 + $0x398] sm:$0xff]
      %v1373 = vld [vmem:[%s1256 + $0x3a0] sm:$0xff]
      %v1374 = vld [vmem:[%s1256 + $0x3a8] sm:$0xff]
      %v1375 = vld [vmem:[%s1256 + $0x3b0] sm:$0xff]
      %v1376 = vld [vmem:[%s1256 + $0x3b8] sm:$0xff]
      %v1377 = vld [vmem:[%s1256 + $0x3c0] sm:$0xff]
      %v1378 = vld [vmem:[%s1256 + $0x3c8] sm:$0xff]
      %v1379 = vld [vmem:[%s1256 + $0x3d0] sm:$0xff]
      %v1380 = vld [vmem:[%s1256 + $0x3d8] sm:$0xff]
      %v1381 = vld [vmem:[%s1256 + $0x3e0] sm:$0xff]
      %v1382 = vld [vmem:[%s1256 + $0x3e8] sm:$0xff]
      %v1383 = vld [vmem:[%s1256 + $0x3f0] sm:$0xff]
      %v1384 = vld [vmem:[%s1256 + $0x3f8] sm:$0xff]
      %v1385 = vld [vmem:[%s1256 + $0x400] sm:$0xff]
      %v1386 = vld [vmem:[%s1256 + $0x408] sm:$0xff]
      %v1387 = vld [vmem:[%s1256 + $0x410] sm:$0xff]
      %v1388 = vld [vmem:[%s1256 + $0x418] sm:$0xff]
      %v1389 = vld [vmem:[%s1256 + $0x420] sm:$0xff]
      %v1390 = vld [vmem:[%s1256 + $0x428] sm:$0xff]
      %v1391 = vld [vmem:[%s1256 + $0x430] sm:$0xff]
      %v1392 = vld [vmem:[%s1256 + $0x438] sm:$0xff]
      %v1393 = vld [vmem:[%s1256 + $0x440] sm:$0xff]
      %v1394 = vld [vmem:[%s1256 + $0x448] sm:$0xff]
      %v1395 = vld [vmem:[%s1256 + $0x450] sm:$0xff]
      %v1396 = vld [vmem:[%s1256 + $0x458] sm:$0xff]
      %v1397 = vld [vmem:[%s1256 + $0x460] sm:$0xff]
      %v1398 = vld [vmem:[%s1256 + $0x468] sm:$0xff]
      %v1399 = vld [vmem:[%s1256 + $0x470] sm:$0xff]
      %v1400 = vld [vmem:[%s1256 + $0x478] sm:$0xff]
      %v1401 = vld [vmem:[%s1256 + $0x480] sm:$0xff]
      %v1402 = vld [vmem:[%s1256 + $0x488] sm:$0xff]
      %v1403 = vld [vmem:[%s1256 + $0x490] sm:$0xff]
      %v1404 = vld [vmem:[%s1256 + $0x498] sm:$0xff]
      %v1405 = vld [vmem:[%s1256 + $0x4a0] sm:$0xff]
      %v1406 = vld [vmem:[%s1256 + $0x4a8] sm:$0xff]
      %v1407 = vld [vmem:[%s1256 + $0x4b0] sm:$0xff]
      %v1408 = vld [vmem:[%s1256 + $0x4b8] sm:$0xff]
      %v1409 = vld [vmem:[%s1256 + $0x4c0] sm:$0xff]
      %v1410 = vld [vmem:[%s1256 + $0x4c8] sm:$0xff]
      %v1411 = vld [vmem:[%s1256 + $0x4d0] sm:$0xff]
      %v1412 = vld [vmem:[%s1256 + $0x4d8] sm:$0xff]
      %v1413 = vld [vmem:[%s1256 + $0x4e0] sm:$0xff]
      %v1414 = vld [vmem:[%s1256 + $0x4e8] sm:$0xff]
      %v1415 = vld [vmem:[%s1256 + $0x4f0] sm:$0xff]
      %v1416 = vld [vmem:[%s1256 + $0x4f8] sm:$0xff]
      %v1417 = vld [vmem:[%s1256 + $0x500] sm:$0xff]
      %v1418 = vld [vmem:[%s1256 + $0x508] sm:$0xff]
      %v1419 = vld [vmem:[%s1256 + $0x510] sm:$0xff]
      %v1420 = vld [vmem:[%s1256 + $0x518] sm:$0xff]
      %v1421 = vld [vmem:[%s1256 + $0x520] sm:$0xff]
      %v1422 = vld [vmem:[%s1256 + $0x528] sm:$0xff]
      %v1423 = vld [vmem:[%s1256 + $0x530] sm:$0xff]
      %v1424 = vld [vmem:[%s1256 + $0x538] sm:$0xff]
      %v1425 = vld [vmem:[%s1256 + $0x540] sm:$0xff]
      %v1426 = vld [vmem:[%s1256 + $0x548] sm:$0xff]
      %v1427 = vld [vmem:[%s1256 + $0x550] sm:$0xff]
      %v1428 = vld [vmem:[%s1256 + $0x558] sm:$0xff]
      %v1429 = vld [vmem:[%s1256 + $0x560] sm:$0xff]
      %v1430 = vld [vmem:[%s1256 + $0x568] sm:$0xff]
      %v1431 = vld [vmem:[%s1256 + $0x570] sm:$0xff]
      %v1432 = vld [vmem:[%s1256 + $0x578] sm:$0xff]
      %v1433 = vld [vmem:[%s1256 + $0x580] sm:$0xff]
      %v1434 = vld [vmem:[%s1256 + $0x588] sm:$0xff]
      %v1435 = vld [vmem:[%s1256 + $0x590] sm:$0xff]
      %v1436 = vld [vmem:[%s1256 + $0x598] sm:$0xff]
      %v1437 = vld [vmem:[%s1256 + $0x5a0] sm:$0xff]
      %v1438 = vld [vmem:[%s1256 + $0x5a8] sm:$0xff]
      %v1439 = vld [vmem:[%s1256 + $0x5b0] sm:$0xff]
      %v1440 = vld [vmem:[%s1256 + $0x5b8] sm:$0xff]
      %v1441 = vld [vmem:[%s1256 + $0x5c0] sm:$0xff]
      %v1442 = vld [vmem:[%s1256 + $0x5c8] sm:$0xff]
      %v1443 = vld [vmem:[%s1256 + $0x5d0] sm:$0xff]
      %v1444 = vld [vmem:[%s1256 + $0x5d8] sm:$0xff]
      %v1445 = vld [vmem:[%s1256 + $0x5e0] sm:$0xff]
      %v1446 = vld [vmem:[%s1256 + $0x5e8] sm:$0xff]
      %v1447 = vld [vmem:[%s1256 + $0x5f0] sm:$0xff]
      %v1448 = vld [vmem:[%s1256 + $0x5f8] sm:$0xff]
      %v1449 = vld [vmem:[%s1256 + $0x600] sm:$0xff]
      %v1450 = vld [vmem:[%s1256 + $0x608] sm:$0xff]
      %v1451 = vld [vmem:[%s1256 + $0x610] sm:$0xff]
      %v1452 = vld [vmem:[%s1256 + $0x618] sm:$0xff]
      %v1453 = vld [vmem:[%s1256 + $0x620] sm:$0xff]
      %v1454 = vld [vmem:[%s1256 + $0x628] sm:$0xff]
      %v1455 = vld [vmem:[%s1256 + $0x630] sm:$0xff]
      %v1456 = vld [vmem:[%s1256 + $0x638] sm:$0xff]
      %v1457 = vld [vmem:[%s1256 + $0x640] sm:$0xff]
      %v1458 = vld [vmem:[%s1256 + $0x648] sm:$0xff]
      %v1459 = vld [vmem:[%s1256 + $0x650] sm:$0xff]
      %v1460 = vld [vmem:[%s1256 + $0x658] sm:$0xff]
      %v1461 = vld [vmem:[%s1256 + $0x660] sm:$0xff]
      %v1462 = vld [vmem:[%s1256 + $0x668] sm:$0xff]
      %v1463 = vld [vmem:[%s1256 + $0x670] sm:$0xff]
      %v1464 = vld [vmem:[%s1256 + $0x678] sm:$0xff]
      %v1465 = vld [vmem:[%s1256 + $0x680] sm:$0xff]
      %v1466 = vld [vmem:[%s1256 + $0x688] sm:$0xff]
      %v1467 = vld [vmem:[%s1256 + $0x690] sm:$0xff]
      %v1468 = vld [vmem:[%s1256 + $0x698] sm:$0xff]
      %v1469 = vld [vmem:[%s1256 + $0x6a0] sm:$0xff]
      %v1470 = vld [vmem:[%s1256 + $0x6a8] sm:$0xff]
      %v1471 = vld [vmem:[%s1256 + $0x6b0] sm:$0xff]
      %v1472 = vld [vmem:[%s1256 + $0x6b8] sm:$0xff]
      %v1473 = vld [vmem:[%s1256 + $0x6c0] sm:$0xff]
      %v1474 = vld [vmem:[%s1256 + $0x6c8] sm:$0xff]
      %v1475 = vld [vmem:[%s1256 + $0x6d0] sm:$0xff]
      %v1476 = vld [vmem:[%s1256 + $0x6d8] sm:$0xff]
      %v1477 = vld [vmem:[%s1256 + $0x6e0] sm:$0xff]
      %v1478 = vld [vmem:[%s1256 + $0x6e8] sm:$0xff]
      %v1479 = vld [vmem:[%s1256 + $0x6f0] sm:$0xff]
      %v1480 = vld [vmem:[%s1256 + $0x6f8] sm:$0xff]
      %v1481 = vld [vmem:[%s1256 + $0x700] sm:$0xff]
      %v1482 = vld [vmem:[%s1256 + $0x708] sm:$0xff]
      %v1483 = vld [vmem:[%s1256 + $0x710] sm:$0xff]
      %v1484 = vld [vmem:[%s1256 + $0x718] sm:$0xff]
      %v1485 = vld [vmem:[%s1256 + $0x720] sm:$0xff]
      %v1486 = vld [vmem:[%s1256 + $0x728] sm:$0xff]
      %v1487 = vld [vmem:[%s1256 + $0x730] sm:$0xff]
      %v1488 = vld [vmem:[%s1256 + $0x738] sm:$0xff]
      %v1489 = vld [vmem:[%s1256 + $0x740] sm:$0xff]
      %v1490 = vld [vmem:[%s1256 + $0x748] sm:$0xff]
      %v1491 = vld [vmem:[%s1256 + $0x750] sm:$0xff]
      %v1492 = vld [vmem:[%s1256 + $0x758] sm:$0xff]
      %v1493 = vld [vmem:[%s1256 + $0x760] sm:$0xff]
      %v1494 = vld [vmem:[%s1256 + $0x768] sm:$0xff]
      %v1495 = vld [vmem:[%s1256 + $0x770] sm:$0xff]
      %v1496 = vld [vmem:[%s1256 + $0x778] sm:$0xff]
      %v1497 = vld [vmem:[%s1256 + $0x780] sm:$0xff]
      %v1498 = vld [vmem:[%s1256 + $0x788] sm:$0xff]
      %v1499 = vld [vmem:[%s1256 + $0x790] sm:$0xff]
      %v1500 = vld [vmem:[%s1256 + $0x798] sm:$0xff]
      %v1501 = vld [vmem:[%s1256 + $0x7a0] sm:$0xff]
      %v1502 = vld [vmem:[%s1256 + $0x7a8] sm:$0xff]
      %v1503 = vld [vmem:[%s1256 + $0x7b0] sm:$0xff]
      %v1504 = vld [vmem:[%s1256 + $0x7b8] sm:$0xff]
      %v1505 = vld [vmem:[%s1256 + $0x7c0] sm:$0xff]
      %v1506 = vld [vmem:[%s1256 + $0x7c8] sm:$0xff]
      %v1507 = vld [vmem:[%s1256 + $0x7d0] sm:$0xff]
      %v1508 = vld [vmem:[%s1256 + $0x7d8] sm:$0xff]
      %v1509 = vld [vmem:[%s1256 + $0x7e0] sm:$0xff]
      %v1510 = vld [vmem:[%s1256 + $0x7e8] sm:$0xff]
      %v1511 = vld [vmem:[%s1256 + $0x7f0] sm:$0xff]
      %v1512 = vld [vmem:[%s1256 + $0x7f8] sm:$0xff]
      %1513 = vmatprep.subr.mxu0 %v1258
      %1514 = vmatpush1.msra.mxu0 %v1257
      %1515 = vmatprep.subr.mxu0 %v1266
      %1516 = vmatpush1.msra.mxu0 %v1265
      %1517 = vmatprep.subr.mxu0 %v1274
      %1518 = vmatpush1.msra.mxu0 %v1273
      %1519 = vmatprep.subr.mxu0 %v1282
      %1520 = vmatpush1.msra.mxu0 %v1281
      %1521 = vmatprep.subr.mxu0 %v1290
      %1522 = vmatpush1.msra.mxu0 %v1289
      %1523 = vmatprep.subr.mxu0 %v1298
      %1524 = vmatpush1.msra.mxu0 %v1297
      %1525 = vmatprep.subr.mxu0 %v1306
      %1526 = vmatpush1.msra.mxu0 %v1305
      %1527 = vmatprep.subr.mxu0 %v1314
      %1528 = vmatpush1.msra.mxu0 %v1313
      %1529 = vmatprep.subr.mxu0 %v1322
      %1530 = vmatpush1.msra.mxu0 %v1321
      %1531 = vmatprep.subr.mxu0 %v1330
      %1532 = vmatpush1.msra.mxu0 %v1329
      %1533 = vmatprep.subr.mxu0 %v1338
      %1534 = vmatpush1.msra.mxu0 %v1337
      %1535 = vmatprep.subr.mxu0 %v1346
      %1536 = vmatpush1.msra.mxu0 %v1345
      %1537 = vmatprep.subr.mxu0 %v1354
      %1538 = vmatpush1.msra.mxu0 %v1353
      %1539 = vmatprep.subr.mxu0 %v1362
      %1540 = vmatpush1.msra.mxu0 %v1361
      %1541 = vmatprep.subr.mxu0 %v1370
      %1542 = vmatpush1.msra.mxu0 %v1369
      %1543 = vmatprep.subr.mxu0 %v1378
      %1544 = vmatpush1.msra.mxu0 %v1377
      %1545 = vmatprep.subr.mxu0 %v1386
      %1546 = vmatpush1.msra.mxu0 %v1385
      %1547 = vmatprep.subr.mxu0 %v1394
      %1548 = vmatpush1.msra.mxu0 %v1393
      %1549 = vmatprep.subr.mxu0 %v1402
      %1550 = vmatpush1.msra.mxu0 %v1401
      %1551 = vmatprep.subr.mxu0 %v1410
      %1552 = vmatpush1.msra.mxu0 %v1409
      %1553 = vmatprep.subr.mxu0 %v1418
      %1554 = vmatpush1.msra.mxu0 %v1417
      %1555 = vmatprep.subr.mxu0 %v1426
      %1556 = vmatpush1.msra.mxu0 %v1425
      %1557 = vmatprep.subr.mxu0 %v1434
      %1558 = vmatpush1.msra.mxu0 %v1433
      %1559 = vmatprep.subr.mxu0 %v1442
      %1560 = vmatpush1.msra.mxu0 %v1441
      %1561 = vmatprep.subr.mxu0 %v1450
      %1562 = vmatpush1.msra.mxu0 %v1449
      %1563 = vmatprep.subr.mxu0 %v1458
      %1564 = vmatpush1.msra.mxu0 %v1457
      %1565 = vmatprep.subr.mxu0 %v1466
      %1566 = vmatpush1.msra.mxu0 %v1465
      %1567 = vmatprep.subr.mxu0 %v1474
      %1568 = vmatpush1.msra.mxu0 %v1473
      %1569 = vmatprep.subr.mxu0 %v1482
      %1570 = vmatpush1.msra.mxu0 %v1481
      %1571 = vmatprep.subr.mxu0 %v1490
      %1572 = vmatpush1.msra.mxu0 %v1489
      %1573 = vmatprep.subr.mxu0 %v1498
      %1574 = vmatpush1.msra.mxu0 %v1497
      %1575 = vmatprep.subr.mxu0 %v1506
      %1576 = vmatpush1.msra.mxu0 %v1505
      %1577 = vmatprep.mubr.f32.mxu0 %v429
      %1578 = vmatmul.mubr.f32.gmra.mrb[0].mxu0 %v171
      %v1579 = vpop.f32.mrb[0].mxu0
      %v1580 = vadd.f32 0.0, %v1579
      %v1581 = vpop.f32.mrb[0].mxu0
      %v1582 = vadd.f32 0.0, %v1581
      %1583 = vdwg.mxu0
      %1584 = vmatprep.subr.mxu0 %v1260
      %1585 = vmatpush1.msra.mxu0 %v1259
      %1586 = vmatprep.subr.mxu0 %v1268
      %1587 = vmatpush1.msra.mxu0 %v1267
      %1588 = vmatprep.subr.mxu0 %v1276
      %1589 = vmatpush1.msra.mxu0 %v1275
      %1590 = vmatprep.subr.mxu0 %v1284
      %1591 = vmatpush1.msra.mxu0 %v1283
      %1592 = vmatprep.subr.mxu0 %v1292
      %1593 = vmatpush1.msra.mxu0 %v1291
      %1594 = vmatprep.subr.mxu0 %v1300
      %1595 = vmatpush1.msra.mxu0 %v1299
      %1596 = vmatprep.subr.mxu0 %v1308
      %1597 = vmatpush1.msra.mxu0 %v1307
      %1598 = vmatprep.subr.mxu0 %v1316
      %1599 = vmatpush1.msra.mxu0 %v1315
      %1600 = vmatprep.subr.mxu0 %v1324
      %1601 = vmatpush1.msra.mxu0 %v1323
      %1602 = vmatprep.subr.mxu0 %v1332
      %1603 = vmatpush1.msra.mxu0 %v1331
      %1604 = vmatprep.subr.mxu0 %v1340
      %1605 = vmatpush1.msra.mxu0 %v1339
      %1606 = vmatprep.subr.mxu0 %v1348
      %1607 = vmatpush1.msra.mxu0 %v1347
      %1608 = vmatprep.subr.mxu0 %v1356
      %1609 = vmatpush1.msra.mxu0 %v1355
      %1610 = vmatprep.subr.mxu0 %v1364
      %1611 = vmatpush1.msra.mxu0 %v1363
      %1612 = vmatprep.subr.mxu0 %v1372
      %1613 = vmatpush1.msra.mxu0 %v1371
      %1614 = vmatprep.subr.mxu0 %v1380
      %1615 = vmatpush1.msra.mxu0 %v1379
      %1616 = vmatprep.subr.mxu0 %v1388
      %1617 = vmatpush1.msra.mxu0 %v1387
      %1618 = vmatprep.subr.mxu0 %v1396
      %1619 = vmatpush1.msra.mxu0 %v1395
      %1620 = vmatprep.subr.mxu0 %v1404
      %1621 = vmatpush1.msra.mxu0 %v1403
      %1622 = vmatprep.subr.mxu0 %v1412
      %1623 = vmatpush1.msra.mxu0 %v1411
      %1624 = vmatprep.subr.mxu0 %v1420
      %1625 = vmatpush1.msra.mxu0 %v1419
      %1626 = vmatprep.subr.mxu0 %v1428
      %1627 = vmatpush1.msra.mxu0 %v1427
      %1628 = vmatprep.subr.mxu0 %v1436
      %1629 = vmatpush1.msra.mxu0 %v1435
      %1630 = vmatprep.subr.mxu0 %v1444
      %1631 = vmatpush1.msra.mxu0 %v1443
      %1632 = vmatprep.subr.mxu0 %v1452
      %1633 = vmatpush1.msra.mxu0 %v1451
      %1634 = vmatprep.subr.mxu0 %v1460
      %1635 = vmatpush1.msra.mxu0 %v1459
      %1636 = vmatprep.subr.mxu0 %v1468
      %1637 = vmatpush1.msra.mxu0 %v1467
      %1638 = vmatprep.subr.mxu0 %v1476
      %1639 = vmatpush1.msra.mxu0 %v1475
      %1640 = vmatprep.subr.mxu0 %v1484
      %1641 = vmatpush1.msra.mxu0 %v1483
      %1642 = vmatprep.subr.mxu0 %v1492
      %1643 = vmatpush1.msra.mxu0 %v1491
      %1644 = vmatprep.subr.mxu0 %v1500
      %1645 = vmatpush1.msra.mxu0 %v1499
      %1646 = vmatprep.subr.mxu0 %v1508
      %1647 = vmatpush1.msra.mxu0 %v1507
      %1648 = vmatprep.mubr.f32.mxu0 %v429
      %1649 = vmatmul.mubr.f32.gmra.mrb[0].mxu0 %v171
      %v1650 = vpop.f32.mrb[0].mxu0
      %v1651 = vadd.f32 0.0, %v1650
      %v1652 = vpop.f32.mrb[0].mxu0
      %v1653 = vadd.f32 0.0, %v1652
      %1654 = vdwg.mxu0
      %1655 = vmatprep.subr.mxu0 %v1262
      %1656 = vmatpush1.msra.mxu0 %v1261
      %1657 = vmatprep.subr.mxu0 %v1270
      %1658 = vmatpush1.msra.mxu0 %v1269
      %1659 = vmatprep.subr.mxu0 %v1278
      %1660 = vmatpush1.msra.mxu0 %v1277
      %1661 = vmatprep.subr.mxu0 %v1286
      %1662 = vmatpush1.msra.mxu0 %v1285
      %1663 = vmatprep.subr.mxu0 %v1294
      %1664 = vmatpush1.msra.mxu0 %v1293
      %1665 = vmatprep.subr.mxu0 %v1302
      %1666 = vmatpush1.msra.mxu0 %v1301
      %1667 = vmatprep.subr.mxu0 %v1310
      %1668 = vmatpush1.msra.mxu0 %v1309
      %1669 = vmatprep.subr.mxu0 %v1318
      %1670 = vmatpush1.msra.mxu0 %v1317
      %1671 = vmatprep.subr.mxu0 %v1326
      %1672 = vmatpush1.msra.mxu0 %v1325
      %1673 = vmatprep.subr.mxu0 %v1334
      %1674 = vmatpush1.msra.mxu0 %v1333
      %1675 = vmatprep.subr.mxu0 %v1342
      %1676 = vmatpush1.msra.mxu0 %v1341
      %1677 = vmatprep.subr.mxu0 %v1350
      %1678 = vmatpush1.msra.mxu0 %v1349
      %1679 = vmatprep.subr.mxu0 %v1358
      %1680 = vmatpush1.msra.mxu0 %v1357
      %1681 = vmatprep.subr.mxu0 %v1366
      %1682 = vmatpush1.msra.mxu0 %v1365
      %1683 = vmatprep.subr.mxu0 %v1374
      %1684 = vmatpush1.msra.mxu0 %v1373
      %1685 = vmatprep.subr.mxu0 %v1382
      %1686 = vmatpush1.msra.mxu0 %v1381
      %1687 = vmatprep.subr.mxu0 %v1390
      %1688 = vmatpush1.msra.mxu0 %v1389
      %1689 = vmatprep.subr.mxu0 %v1398
      %1690 = vmatpush1.msra.mxu0 %v1397
      %1691 = vmatprep.subr.mxu0 %v1406
      %1692 = vmatpush1.msra.mxu0 %v1405
      %1693 = vmatprep.subr.mxu0 %v1414
      %1694 = vmatpush1.msra.mxu0 %v1413
      %1695 = vmatprep.subr.mxu0 %v1422
      %1696 = vmatpush1.msra.mxu0 %v1421
      %1697 = vmatprep.subr.mxu0 %v1430
      %1698 = vmatpush1.msra.mxu0 %v1429
      %1699 = vmatprep.subr.mxu0 %v1438
      %1700 = vmatpush1.msra.mxu0 %v1437
      %1701 = vmatprep.subr.mxu0 %v1446
      %1702 = vmatpush1.msra.mxu0 %v1445
      %1703 = vmatprep.subr.mxu0 %v1454
      %1704 = vmatpush1.msra.mxu0 %v1453
      %1705 = vmatprep.subr.mxu0 %v1462
      %1706 = vmatpush1.msra.mxu0 %v1461
      %1707 = vmatprep.subr.mxu0 %v1470
      %1708 = vmatpush1.msra.mxu0 %v1469
      %1709 = vmatprep.subr.mxu0 %v1478
      %1710 = vmatpush1.msra.mxu0 %v1477
      %1711 = vmatprep.subr.mxu0 %v1486
      %1712 = vmatpush1.msra.mxu0 %v1485
      %1713 = vmatprep.subr.mxu0 %v1494
      %1714 = vmatpush1.msra.mxu0 %v1493
      %1715 = vmatprep.subr.mxu0 %v1502
      %1716 = vmatpush1.msra.mxu0 %v1501
      %1717 = vmatprep.subr.mxu0 %v1510
      %1718 = vmatpush1.msra.mxu0 %v1509
      %1719 = vmatprep.mubr.f32.mxu0 %v429
      %1720 = vmatmul.mubr.f32.gmra.mrb[0].mxu0 %v171
      %v1721 = vpop.f32.mrb[0].mxu0
      %v1722 = vadd.f32 0.0, %v1721
      %v1723 = vpop.f32.mrb[0].mxu0
      %v1724 = vadd.f32 0.0, %v1723
      %1725 = vdwg.mxu0
      %1726 = vmatprep.subr.mxu0 %v1264
      %1727 = vmatpush1.msra.mxu0 %v1263
      %1728 = vmatprep.subr.mxu0 %v1272
      %1729 = vmatpush1.msra.mxu0 %v1271
      %1730 = vmatprep.subr.mxu0 %v1280
      %1731 = vmatpush1.msra.mxu0 %v1279
      %1732 = vmatprep.subr.mxu0 %v1288
      %1733 = vmatpush1.msra.mxu0 %v1287
      %1734 = vmatprep.subr.mxu0 %v1296
      %1735 = vmatpush1.msra.mxu0 %v1295
      %1736 = vmatprep.subr.mxu0 %v1304
      %1737 = vmatpush1.msra.mxu0 %v1303
      %1738 = vmatprep.subr.mxu0 %v1312
      %1739 = vmatpush1.msra.mxu0 %v1311
      %1740 = vmatprep.subr.mxu0 %v1320
      %1741 = vmatpush1.msra.mxu0 %v1319
      %1742 = vmatprep.subr.mxu0 %v1328
      %1743 = vmatpush1.msra.mxu0 %v1327
      %1744 = vmatprep.subr.mxu0 %v1336
      %1745 = vmatpush1.msra.mxu0 %v1335
      %1746 = vmatprep.subr.mxu0 %v1344
      %1747 = vmatpush1.msra.mxu0 %v1343
      %1748 = vmatprep.subr.mxu0 %v1352
      %1749 = vmatpush1.msra.mxu0 %v1351
      %1750 = vmatprep.subr.mxu0 %v1360
      %1751 = vmatpush1.msra.mxu0 %v1359
      %1752 = vmatprep.subr.mxu0 %v1368
      %1753 = vmatpush1.msra.mxu0 %v1367
      %1754 = vmatprep.subr.mxu0 %v1376
      %1755 = vmatpush1.msra.mxu0 %v1375
      %1756 = vmatprep.subr.mxu0 %v1384
      %1757 = vmatpush1.msra.mxu0 %v1383
      %1758 = vmatprep.subr.mxu0 %v1392
      %1759 = vmatpush1.msra.mxu0 %v1391
      %1760 = vmatprep.subr.mxu0 %v1400
      %1761 = vmatpush1.msra.mxu0 %v1399
      %1762 = vmatprep.subr.mxu0 %v1408
      %1763 = vmatpush1.msra.mxu0 %v1407
      %1764 = vmatprep.subr.mxu0 %v1416
      %1765 = vmatpush1.msra.mxu0 %v1415
      %1766 = vmatprep.subr.mxu0 %v1424
      %1767 = vmatpush1.msra.mxu0 %v1423
      %1768 = vmatprep.subr.mxu0 %v1432
      %1769 = vmatpush1.msra.mxu0 %v1431
      %1770 = vmatprep.subr.mxu0 %v1440
      %1771 = vmatpush1.msra.mxu0 %v1439
      %1772 = vmatprep.subr.mxu0 %v1448
      %1773 = vmatpush1.msra.mxu0 %v1447
      %1774 = vmatprep.subr.mxu0 %v1456
      %1775 = vmatpush1.msra.mxu0 %v1455
      %1776 = vmatprep.subr.mxu0 %v1464
      %1777 = vmatpush1.msra.mxu0 %v1463
      %1778 = vmatprep.subr.mxu0 %v1472
      %1779 = vmatpush1.msra.mxu0 %v1471
      %1780 = vmatprep.subr.mxu0 %v1480
      %1781 = vmatpush1.msra.mxu0 %v1479
      %1782 = vmatprep.subr.mxu0 %v1488
      %1783 = vmatpush1.msra.mxu0 %v1487
      %1784 = vmatprep.subr.mxu0 %v1496
      %1785 = vmatpush1.msra.mxu0 %v1495
      %1786 = vmatprep.subr.mxu0 %v1504
      %1787 = vmatpush1.msra.mxu0 %v1503
      %1788 = vmatprep.subr.mxu0 %v1512
      %1789 = vmatpush1.msra.mxu0 %v1511
      %1790 = vmatprep.mubr.f32.mxu0 %v429
      %1791 = vmatmul.mubr.f32.gmra.mrb[0].mxu0 %v171
      %v1792 = vpop.f32.mrb[0].mxu0
      %v1793 = vadd.f32 0.0, %v1792
      %v1794 = vpop.f32.mrb[0].mxu0
      %v1795 = vadd.f32 0.0, %v1794
      %1796 = vdwg.mxu0
      %s1797 = scalar_lea.vmem %s1, 6144
      %v1798 = vld [vmem:[%s1797] sm:$0xff]
      %v1799 = vld [vmem:[%s1797 + $0x8] sm:$0xff]
      %v1800 = vld [vmem:[%s1797 + $0x10] sm:$0xff]
      %v1801 = vld [vmem:[%s1797 + $0x18] sm:$0xff]
      %v1802 = vld [vmem:[%s1797 + $0x20] sm:$0xff]
      %v1803 = vld [vmem:[%s1797 + $0x28] sm:$0xff]
      %v1804 = vld [vmem:[%s1797 + $0x30] sm:$0xff]
      %v1805 = vld [vmem:[%s1797 + $0x38] sm:$0xff]
      %v1806 = vld [vmem:[%s1797 + $0x40] sm:$0xff]
      %v1807 = vld [vmem:[%s1797 + $0x48] sm:$0xff]
      %v1808 = vld [vmem:[%s1797 + $0x50] sm:$0xff]
      %v1809 = vld [vmem:[%s1797 + $0x58] sm:$0xff]
      %v1810 = vld [vmem:[%s1797 + $0x60] sm:$0xff]
      %v1811 = vld [vmem:[%s1797 + $0x68] sm:$0xff]
      %v1812 = vld [vmem:[%s1797 + $0x70] sm:$0xff]
      %v1813 = vld [vmem:[%s1797 + $0x78] sm:$0xff]
      %v1814 = vld [vmem:[%s1797 + $0x80] sm:$0xff]
      %v1815 = vld [vmem:[%s1797 + $0x88] sm:$0xff]
      %v1816 = vld [vmem:[%s1797 + $0x90] sm:$0xff]
      %v1817 = vld [vmem:[%s1797 + $0x98] sm:$0xff]
      %v1818 = vld [vmem:[%s1797 + $0xa0] sm:$0xff]
      %v1819 = vld [vmem:[%s1797 + $0xa8] sm:$0xff]
      %v1820 = vld [vmem:[%s1797 + $0xb0] sm:$0xff]
      %v1821 = vld [vmem:[%s1797 + $0xb8] sm:$0xff]
      %v1822 = vld [vmem:[%s1797 + $0xc0] sm:$0xff]
      %v1823 = vld [vmem:[%s1797 + $0xc8] sm:$0xff]
      %v1824 = vld [vmem:[%s1797 + $0xd0] sm:$0xff]
      %v1825 = vld [vmem:[%s1797 + $0xd8] sm:$0xff]
      %v1826 = vld [vmem:[%s1797 + $0xe0] sm:$0xff]
      %v1827 = vld [vmem:[%s1797 + $0xe8] sm:$0xff]
      %v1828 = vld [vmem:[%s1797 + $0xf0] sm:$0xff]
      %v1829 = vld [vmem:[%s1797 + $0xf8] sm:$0xff]
      %v1830 = vld [vmem:[%s1797 + $0x100] sm:$0xff]
      %v1831 = vld [vmem:[%s1797 + $0x108] sm:$0xff]
      %v1832 = vld [vmem:[%s1797 + $0x110] sm:$0xff]
      %v1833 = vld [vmem:[%s1797 + $0x118] sm:$0xff]
      %v1834 = vld [vmem:[%s1797 + $0x120] sm:$0xff]
      %v1835 = vld [vmem:[%s1797 + $0x128] sm:$0xff]
      %v1836 = vld [vmem:[%s1797 + $0x130] sm:$0xff]
      %v1837 = vld [vmem:[%s1797 + $0x138] sm:$0xff]
      %v1838 = vld [vmem:[%s1797 + $0x140] sm:$0xff]
      %v1839 = vld [vmem:[%s1797 + $0x148] sm:$0xff]
      %v1840 = vld [vmem:[%s1797 + $0x150] sm:$0xff]
      %v1841 = vld [vmem:[%s1797 + $0x158] sm:$0xff]
      %v1842 = vld [vmem:[%s1797 + $0x160] sm:$0xff]
      %v1843 = vld [vmem:[%s1797 + $0x168] sm:$0xff]
      %v1844 = vld [vmem:[%s1797 + $0x170] sm:$0xff]
      %v1845 = vld [vmem:[%s1797 + $0x178] sm:$0xff]
      %v1846 = vld [vmem:[%s1797 + $0x180] sm:$0xff]
      %v1847 = vld [vmem:[%s1797 + $0x188] sm:$0xff]
      %v1848 = vld [vmem:[%s1797 + $0x190] sm:$0xff]
      %v1849 = vld [vmem:[%s1797 + $0x198] sm:$0xff]
      %v1850 = vld [vmem:[%s1797 + $0x1a0] sm:$0xff]
      %v1851 = vld [vmem:[%s1797 + $0x1a8] sm:$0xff]
      %v1852 = vld [vmem:[%s1797 + $0x1b0] sm:$0xff]
      %v1853 = vld [vmem:[%s1797 + $0x1b8] sm:$0xff]
      %v1854 = vld [vmem:[%s1797 + $0x1c0] sm:$0xff]
      %v1855 = vld [vmem:[%s1797 + $0x1c8] sm:$0xff]
      %v1856 = vld [vmem:[%s1797 + $0x1d0] sm:$0xff]
      %v1857 = vld [vmem:[%s1797 + $0x1d8] sm:$0xff]
      %v1858 = vld [vmem:[%s1797 + $0x1e0] sm:$0xff]
      %v1859 = vld [vmem:[%s1797 + $0x1e8] sm:$0xff]
      %v1860 = vld [vmem:[%s1797 + $0x1f0] sm:$0xff]
      %v1861 = vld [vmem:[%s1797 + $0x1f8] sm:$0xff]
      %v1862 = vld [vmem:[%s1797 + $0x200] sm:$0xff]
      %v1863 = vld [vmem:[%s1797 + $0x208] sm:$0xff]
      %v1864 = vld [vmem:[%s1797 + $0x210] sm:$0xff]
      %v1865 = vld [vmem:[%s1797 + $0x218] sm:$0xff]
      %v1866 = vld [vmem:[%s1797 + $0x220] sm:$0xff]
      %v1867 = vld [vmem:[%s1797 + $0x228] sm:$0xff]
      %v1868 = vld [vmem:[%s1797 + $0x230] sm:$0xff]
      %v1869 = vld [vmem:[%s1797 + $0x238] sm:$0xff]
      %v1870 = vld [vmem:[%s1797 + $0x240] sm:$0xff]
      %v1871 = vld [vmem:[%s1797 + $0x248] sm:$0xff]
      %v1872 = vld [vmem:[%s1797 + $0x250] sm:$0xff]
      %v1873 = vld [vmem:[%s1797 + $0x258] sm:$0xff]
      %v1874 = vld [vmem:[%s1797 + $0x260] sm:$0xff]
      %v1875 = vld [vmem:[%s1797 + $0x268] sm:$0xff]
      %v1876 = vld [vmem:[%s1797 + $0x270] sm:$0xff]
      %v1877 = vld [vmem:[%s1797 + $0x278] sm:$0xff]
      %v1878 = vld [vmem:[%s1797 + $0x280] sm:$0xff]
      %v1879 = vld [vmem:[%s1797 + $0x288] sm:$0xff]
      %v1880 = vld [vmem:[%s1797 + $0x290] sm:$0xff]
      %v1881 = vld [vmem:[%s1797 + $0x298] sm:$0xff]
      %v1882 = vld [vmem:[%s1797 + $0x2a0] sm:$0xff]
      %v1883 = vld [vmem:[%s1797 + $0x2a8] sm:$0xff]
      %v1884 = vld [vmem:[%s1797 + $0x2b0] sm:$0xff]
      %v1885 = vld [vmem:[%s1797 + $0x2b8] sm:$0xff]
      %v1886 = vld [vmem:[%s1797 + $0x2c0] sm:$0xff]
      %v1887 = vld [vmem:[%s1797 + $0x2c8] sm:$0xff]
      %v1888 = vld [vmem:[%s1797 + $0x2d0] sm:$0xff]
      %v1889 = vld [vmem:[%s1797 + $0x2d8] sm:$0xff]
      %v1890 = vld [vmem:[%s1797 + $0x2e0] sm:$0xff]
      %v1891 = vld [vmem:[%s1797 + $0x2e8] sm:$0xff]
      %v1892 = vld [vmem:[%s1797 + $0x2f0] sm:$0xff]
      %v1893 = vld [vmem:[%s1797 + $0x2f8] sm:$0xff]
      %v1894 = vld [vmem:[%s1797 + $0x300] sm:$0xff]
      %v1895 = vld [vmem:[%s1797 + $0x308] sm:$0xff]
      %v1896 = vld [vmem:[%s1797 + $0x310] sm:$0xff]
      %v1897 = vld [vmem:[%s1797 + $0x318] sm:$0xff]
      %v1898 = vld [vmem:[%s1797 + $0x320] sm:$0xff]
      %v1899 = vld [vmem:[%s1797 + $0x328] sm:$0xff]
      %v1900 = vld [vmem:[%s1797 + $0x330] sm:$0xff]
      %v1901 = vld [vmem:[%s1797 + $0x338] sm:$0xff]
      %v1902 = vld [vmem:[%s1797 + $0x340] sm:$0xff]
      %v1903 = vld [vmem:[%s1797 + $0x348] sm:$0xff]
      %v1904 = vld [vmem:[%s1797 + $0x350] sm:$0xff]
      %v1905 = vld [vmem:[%s1797 + $0x358] sm:$0xff]
      %v1906 = vld [vmem:[%s1797 + $0x360] sm:$0xff]
      %v1907 = vld [vmem:[%s1797 + $0x368] sm:$0xff]
      %v1908 = vld [vmem:[%s1797 + $0x370] sm:$0xff]
      %v1909 = vld [vmem:[%s1797 + $0x378] sm:$0xff]
      %v1910 = vld [vmem:[%s1797 + $0x380] sm:$0xff]
      %v1911 = vld [vmem:[%s1797 + $0x388] sm:$0xff]
      %v1912 = vld [vmem:[%s1797 + $0x390] sm:$0xff]
      %v1913 = vld [vmem:[%s1797 + $0x398] sm:$0xff]
      %v1914 = vld [vmem:[%s1797 + $0x3a0] sm:$0xff]
      %v1915 = vld [vmem:[%s1797 + $0x3a8] sm:$0xff]
      %v1916 = vld [vmem:[%s1797 + $0x3b0] sm:$0xff]
      %v1917 = vld [vmem:[%s1797 + $0x3b8] sm:$0xff]
      %v1918 = vld [vmem:[%s1797 + $0x3c0] sm:$0xff]
      %v1919 = vld [vmem:[%s1797 + $0x3c8] sm:$0xff]
      %v1920 = vld [vmem:[%s1797 + $0x3d0] sm:$0xff]
      %v1921 = vld [vmem:[%s1797 + $0x3d8] sm:$0xff]
      %v1922 = vld [vmem:[%s1797 + $0x3e0] sm:$0xff]
      %v1923 = vld [vmem:[%s1797 + $0x3e8] sm:$0xff]
      %v1924 = vld [vmem:[%s1797 + $0x3f0] sm:$0xff]
      %v1925 = vld [vmem:[%s1797 + $0x3f8] sm:$0xff]
      %v1926 = vld [vmem:[%s1797 + $0x400] sm:$0xff]
      %v1927 = vld [vmem:[%s1797 + $0x408] sm:$0xff]
      %v1928 = vld [vmem:[%s1797 + $0x410] sm:$0xff]
      %v1929 = vld [vmem:[%s1797 + $0x418] sm:$0xff]
      %v1930 = vld [vmem:[%s1797 + $0x420] sm:$0xff]
      %v1931 = vld [vmem:[%s1797 + $0x428] sm:$0xff]
      %v1932 = vld [vmem:[%s1797 + $0x430] sm:$0xff]
      %v1933 = vld [vmem:[%s1797 + $0x438] sm:$0xff]
      %v1934 = vld [vmem:[%s1797 + $0x440] sm:$0xff]
      %v1935 = vld [vmem:[%s1797 + $0x448] sm:$0xff]
      %v1936 = vld [vmem:[%s1797 + $0x450] sm:$0xff]
      %v1937 = vld [vmem:[%s1797 + $0x458] sm:$0xff]
      %v1938 = vld [vmem:[%s1797 + $0x460] sm:$0xff]
      %v1939 = vld [vmem:[%s1797 + $0x468] sm:$0xff]
      %v1940 = vld [vmem:[%s1797 + $0x470] sm:$0xff]
      %v1941 = vld [vmem:[%s1797 + $0x478] sm:$0xff]
      %v1942 = vld [vmem:[%s1797 + $0x480] sm:$0xff]
      %v1943 = vld [vmem:[%s1797 + $0x488] sm:$0xff]
      %v1944 = vld [vmem:[%s1797 + $0x490] sm:$0xff]
      %v1945 = vld [vmem:[%s1797 + $0x498] sm:$0xff]
      %v1946 = vld [vmem:[%s1797 + $0x4a0] sm:$0xff]
      %v1947 = vld [vmem:[%s1797 + $0x4a8] sm:$0xff]
      %v1948 = vld [vmem:[%s1797 + $0x4b0] sm:$0xff]
      %v1949 = vld [vmem:[%s1797 + $0x4b8] sm:$0xff]
      %v1950 = vld [vmem:[%s1797 + $0x4c0] sm:$0xff]
      %v1951 = vld [vmem:[%s1797 + $0x4c8] sm:$0xff]
      %v1952 = vld [vmem:[%s1797 + $0x4d0] sm:$0xff]
      %v1953 = vld [vmem:[%s1797 + $0x4d8] sm:$0xff]
      %v1954 = vld [vmem:[%s1797 + $0x4e0] sm:$0xff]
      %v1955 = vld [vmem:[%s1797 + $0x4e8] sm:$0xff]
      %v1956 = vld [vmem:[%s1797 + $0x4f0] sm:$0xff]
      %v1957 = vld [vmem:[%s1797 + $0x4f8] sm:$0xff]
      %v1958 = vld [vmem:[%s1797 + $0x500] sm:$0xff]
      %v1959 = vld [vmem:[%s1797 + $0x508] sm:$0xff]
      %v1960 = vld [vmem:[%s1797 + $0x510] sm:$0xff]
      %v1961 = vld [vmem:[%s1797 + $0x518] sm:$0xff]
      %v1962 = vld [vmem:[%s1797 + $0x520] sm:$0xff]
      %v1963 = vld [vmem:[%s1797 + $0x528] sm:$0xff]
      %v1964 = vld [vmem:[%s1797 + $0x530] sm:$0xff]
      %v1965 = vld [vmem:[%s1797 + $0x538] sm:$0xff]
      %v1966 = vld [vmem:[%s1797 + $0x540] sm:$0xff]
      %v1967 = vld [vmem:[%s1797 + $0x548] sm:$0xff]
      %v1968 = vld [vmem:[%s1797 + $0x550] sm:$0xff]
      %v1969 = vld [vmem:[%s1797 + $0x558] sm:$0xff]
      %v1970 = vld [vmem:[%s1797 + $0x560] sm:$0xff]
      %v1971 = vld [vmem:[%s1797 + $0x568] sm:$0xff]
      %v1972 = vld [vmem:[%s1797 + $0x570] sm:$0xff]
      %v1973 = vld [vmem:[%s1797 + $0x578] sm:$0xff]
      %v1974 = vld [vmem:[%s1797 + $0x580] sm:$0xff]
      %v1975 = vld [vmem:[%s1797 + $0x588] sm:$0xff]
      %v1976 = vld [vmem:[%s1797 + $0x590] sm:$0xff]
      %v1977 = vld [vmem:[%s1797 + $0x598] sm:$0xff]
      %v1978 = vld [vmem:[%s1797 + $0x5a0] sm:$0xff]
      %v1979 = vld [vmem:[%s1797 + $0x5a8] sm:$0xff]
      %v1980 = vld [vmem:[%s1797 + $0x5b0] sm:$0xff]
      %v1981 = vld [vmem:[%s1797 + $0x5b8] sm:$0xff]
      %v1982 = vld [vmem:[%s1797 + $0x5c0] sm:$0xff]
      %v1983 = vld [vmem:[%s1797 + $0x5c8] sm:$0xff]
      %v1984 = vld [vmem:[%s1797 + $0x5d0] sm:$0xff]
      %v1985 = vld [vmem:[%s1797 + $0x5d8] sm:$0xff]
      %v1986 = vld [vmem:[%s1797 + $0x5e0] sm:$0xff]
      %v1987 = vld [vmem:[%s1797 + $0x5e8] sm:$0xff]
      %v1988 = vld [vmem:[%s1797 + $0x5f0] sm:$0xff]
      %v1989 = vld [vmem:[%s1797 + $0x5f8] sm:$0xff]
      %v1990 = vld [vmem:[%s1797 + $0x600] sm:$0xff]
      %v1991 = vld [vmem:[%s1797 + $0x608] sm:$0xff]
      %v1992 = vld [vmem:[%s1797 + $0x610] sm:$0xff]
      %v1993 = vld [vmem:[%s1797 + $0x618] sm:$0xff]
      %v1994 = vld [vmem:[%s1797 + $0x620] sm:$0xff]
      %v1995 = vld [vmem:[%s1797 + $0x628] sm:$0xff]
      %v1996 = vld [vmem:[%s1797 + $0x630] sm:$0xff]
      %v1997 = vld [vmem:[%s1797 + $0x638] sm:$0xff]
      %v1998 = vld [vmem:[%s1797 + $0x640] sm:$0xff]
      %v1999 = vld [vmem:[%s1797 + $0x648] sm:$0xff]
      %v2000 = vld [vmem:[%s1797 + $0x650] sm:$0xff]
      %v2001 = vld [vmem:[%s1797 + $0x658] sm:$0xff]
      %v2002 = vld [vmem:[%s1797 + $0x660] sm:$0xff]
      %v2003 = vld [vmem:[%s1797 + $0x668] sm:$0xff]
      %v2004 = vld [vmem:[%s1797 + $0x670] sm:$0xff]
      %v2005 = vld [vmem:[%s1797 + $0x678] sm:$0xff]
      %v2006 = vld [vmem:[%s1797 + $0x680] sm:$0xff]
      %v2007 = vld [vmem:[%s1797 + $0x688] sm:$0xff]
      %v2008 = vld [vmem:[%s1797 + $0x690] sm:$0xff]
      %v2009 = vld [vmem:[%s1797 + $0x698] sm:$0xff]
      %v2010 = vld [vmem:[%s1797 + $0x6a0] sm:$0xff]
      %v2011 = vld [vmem:[%s1797 + $0x6a8] sm:$0xff]
      %v2012 = vld [vmem:[%s1797 + $0x6b0] sm:$0xff]
      %v2013 = vld [vmem:[%s1797 + $0x6b8] sm:$0xff]
      %v2014 = vld [vmem:[%s1797 + $0x6c0] sm:$0xff]
      %v2015 = vld [vmem:[%s1797 + $0x6c8] sm:$0xff]
      %v2016 = vld [vmem:[%s1797 + $0x6d0] sm:$0xff]
      %v2017 = vld [vmem:[%s1797 + $0x6d8] sm:$0xff]
      %v2018 = vld [vmem:[%s1797 + $0x6e0] sm:$0xff]
      %v2019 = vld [vmem:[%s1797 + $0x6e8] sm:$0xff]
      %v2020 = vld [vmem:[%s1797 + $0x6f0] sm:$0xff]
      %v2021 = vld [vmem:[%s1797 + $0x6f8] sm:$0xff]
      %v2022 = vld [vmem:[%s1797 + $0x700] sm:$0xff]
      %v2023 = vld [vmem:[%s1797 + $0x708] sm:$0xff]
      %v2024 = vld [vmem:[%s1797 + $0x710] sm:$0xff]
      %v2025 = vld [vmem:[%s1797 + $0x718] sm:$0xff]
      %v2026 = vld [vmem:[%s1797 + $0x720] sm:$0xff]
      %v2027 = vld [vmem:[%s1797 + $0x728] sm:$0xff]
      %v2028 = vld [vmem:[%s1797 + $0x730] sm:$0xff]
      %v2029 = vld [vmem:[%s1797 + $0x738] sm:$0xff]
      %v2030 = vld [vmem:[%s1797 + $0x740] sm:$0xff]
      %v2031 = vld [vmem:[%s1797 + $0x748] sm:$0xff]
      %v2032 = vld [vmem:[%s1797 + $0x750] sm:$0xff]
      %v2033 = vld [vmem:[%s1797 + $0x758] sm:$0xff]
      %v2034 = vld [vmem:[%s1797 + $0x760] sm:$0xff]
      %v2035 = vld [vmem:[%s1797 + $0x768] sm:$0xff]
      %v2036 = vld [vmem:[%s1797 + $0x770] sm:$0xff]
      %v2037 = vld [vmem:[%s1797 + $0x778] sm:$0xff]
      %v2038 = vld [vmem:[%s1797 + $0x780] sm:$0xff]
      %v2039 = vld [vmem:[%s1797 + $0x788] sm:$0xff]
      %v2040 = vld [vmem:[%s1797 + $0x790] sm:$0xff]
      %v2041 = vld [vmem:[%s1797 + $0x798] sm:$0xff]
      %v2042 = vld [vmem:[%s1797 + $0x7a0] sm:$0xff]
      %v2043 = vld [vmem:[%s1797 + $0x7a8] sm:$0xff]
      %v2044 = vld [vmem:[%s1797 + $0x7b0] sm:$0xff]
      %v2045 = vld [vmem:[%s1797 + $0x7b8] sm:$0xff]
      %v2046 = vld [vmem:[%s1797 + $0x7c0] sm:$0xff]
      %v2047 = vld [vmem:[%s1797 + $0x7c8] sm:$0xff]
      %v2048 = vld [vmem:[%s1797 + $0x7d0] sm:$0xff]
      %v2049 = vld [vmem:[%s1797 + $0x7d8] sm:$0xff]
      %v2050 = vld [vmem:[%s1797 + $0x7e0] sm:$0xff]
      %v2051 = vld [vmem:[%s1797 + $0x7e8] sm:$0xff]
      %v2052 = vld [vmem:[%s1797 + $0x7f0] sm:$0xff]
      %v2053 = vld [vmem:[%s1797 + $0x7f8] sm:$0xff]
      %2054 = vmatprep.subr.mxu0 %v1799
      %2055 = vmatpush1.msra.mxu0 %v1798
      %2056 = vmatprep.subr.mxu0 %v1807
      %2057 = vmatpush1.msra.mxu0 %v1806
      %2058 = vmatprep.subr.mxu0 %v1815
      %2059 = vmatpush1.msra.mxu0 %v1814
      %2060 = vmatprep.subr.mxu0 %v1823
      %2061 = vmatpush1.msra.mxu0 %v1822
      %2062 = vmatprep.subr.mxu0 %v1831
      %2063 = vmatpush1.msra.mxu0 %v1830
      %2064 = vmatprep.subr.mxu0 %v1839
      %2065 = vmatpush1.msra.mxu0 %v1838
      %2066 = vmatprep.subr.mxu0 %v1847
      %2067 = vmatpush1.msra.mxu0 %v1846
      %2068 = vmatprep.subr.mxu0 %v1855
      %2069 = vmatpush1.msra.mxu0 %v1854
      %2070 = vmatprep.subr.mxu0 %v1863
      %2071 = vmatpush1.msra.mxu0 %v1862
      %2072 = vmatprep.subr.mxu0 %v1871
      %2073 = vmatpush1.msra.mxu0 %v1870
      %2074 = vmatprep.subr.mxu0 %v1879
      %2075 = vmatpush1.msra.mxu0 %v1878
      %2076 = vmatprep.subr.mxu0 %v1887
      %2077 = vmatpush1.msra.mxu0 %v1886
      %2078 = vmatprep.subr.mxu0 %v1895
      %2079 = vmatpush1.msra.mxu0 %v1894
      %2080 = vmatprep.subr.mxu0 %v1903
      %2081 = vmatpush1.msra.mxu0 %v1902
      %2082 = vmatprep.subr.mxu0 %v1911
      %2083 = vmatpush1.msra.mxu0 %v1910
      %2084 = vmatprep.subr.mxu0 %v1919
      %2085 = vmatpush1.msra.mxu0 %v1918
      %2086 = vmatprep.subr.mxu0 %v1927
      %2087 = vmatpush1.msra.mxu0 %v1926
      %2088 = vmatprep.subr.mxu0 %v1935
      %2089 = vmatpush1.msra.mxu0 %v1934
      %2090 = vmatprep.subr.mxu0 %v1943
      %2091 = vmatpush1.msra.mxu0 %v1942
      %2092 = vmatprep.subr.mxu0 %v1951
      %2093 = vmatpush1.msra.mxu0 %v1950
      %2094 = vmatprep.subr.mxu0 %v1959
      %2095 = vmatpush1.msra.mxu0 %v1958
      %2096 = vmatprep.subr.mxu0 %v1967
      %2097 = vmatpush1.msra.mxu0 %v1966
      %2098 = vmatprep.subr.mxu0 %v1975
      %2099 = vmatpush1.msra.mxu0 %v1974
      %2100 = vmatprep.subr.mxu0 %v1983
      %2101 = vmatpush1.msra.mxu0 %v1982
      %2102 = vmatprep.subr.mxu0 %v1991
      %2103 = vmatpush1.msra.mxu0 %v1990
      %2104 = vmatprep.subr.mxu0 %v1999
      %2105 = vmatpush1.msra.mxu0 %v1998
      %2106 = vmatprep.subr.mxu0 %v2007
      %2107 = vmatpush1.msra.mxu0 %v2006
      %2108 = vmatprep.subr.mxu0 %v2015
      %2109 = vmatpush1.msra.mxu0 %v2014
      %2110 = vmatprep.subr.mxu0 %v2023
      %2111 = vmatpush1.msra.mxu0 %v2022
      %2112 = vmatprep.subr.mxu0 %v2031
      %2113 = vmatpush1.msra.mxu0 %v2030
      %2114 = vmatprep.subr.mxu0 %v2039
      %2115 = vmatpush1.msra.mxu0 %v2038
      %2116 = vmatprep.subr.mxu0 %v2047
      %2117 = vmatpush1.msra.mxu0 %v2046
      %2118 = vmatprep.mubr.f32.mxu0 %v429
      %2119 = vmatmul.mubr.f32.gmra.mrb[0].mxu0 %v171
      %v2120 = vpop.f32.mrb[0].mxu0
      %v2121 = vadd.f32 0.0, %v2120
      %v2122 = vpop.f32.mrb[0].mxu0
      %v2123 = vadd.f32 0.0, %v2122
      %2124 = vdwg.mxu0
      %2125 = vmatprep.subr.mxu0 %v1801
      %2126 = vmatpush1.msra.mxu0 %v1800
      %2127 = vmatprep.subr.mxu0 %v1809
      %2128 = vmatpush1.msra.mxu0 %v1808
      %2129 = vmatprep.subr.mxu0 %v1817
      %2130 = vmatpush1.msra.mxu0 %v1816
      %2131 = vmatprep.subr.mxu0 %v1825
      %2132 = vmatpush1.msra.mxu0 %v1824
      %2133 = vmatprep.subr.mxu0 %v1833
      %2134 = vmatpush1.msra.mxu0 %v1832
      %2135 = vmatprep.subr.mxu0 %v1841
      %2136 = vmatpush1.msra.mxu0 %v1840
      %2137 = vmatprep.subr.mxu0 %v1849
      %2138 = vmatpush1.msra.mxu0 %v1848
      %2139 = vmatprep.subr.mxu0 %v1857
      %2140 = vmatpush1.msra.mxu0 %v1856
      %2141 = vmatprep.subr.mxu0 %v1865
      %2142 = vmatpush1.msra.mxu0 %v1864
      %2143 = vmatprep.subr.mxu0 %v1873
      %2144 = vmatpush1.msra.mxu0 %v1872
      %2145 = vmatprep.subr.mxu0 %v1881
      %2146 = vmatpush1.msra.mxu0 %v1880
      %2147 = vmatprep.subr.mxu0 %v1889
      %2148 = vmatpush1.msra.mxu0 %v1888
      %2149 = vmatprep.subr.mxu0 %v1897
      %2150 = vmatpush1.msra.mxu0 %v1896
      %2151 = vmatprep.subr.mxu0 %v1905
      %2152 = vmatpush1.msra.mxu0 %v1904
      %2153 = vmatprep.subr.mxu0 %v1913
      %2154 = vmatpush1.msra.mxu0 %v1912
      %2155 = vmatprep.subr.mxu0 %v1921
      %2156 = vmatpush1.msra.mxu0 %v1920
      %2157 = vmatprep.subr.mxu0 %v1929
      %2158 = vmatpush1.msra.mxu0 %v1928
      %2159 = vmatprep.subr.mxu0 %v1937
      %2160 = vmatpush1.msra.mxu0 %v1936
      %2161 = vmatprep.subr.mxu0 %v1945
      %2162 = vmatpush1.msra.mxu0 %v1944
      %2163 = vmatprep.subr.mxu0 %v1953
      %2164 = vmatpush1.msra.mxu0 %v1952
      %2165 = vmatprep.subr.mxu0 %v1961
      %2166 = vmatpush1.msra.mxu0 %v1960
      %2167 = vmatprep.subr.mxu0 %v1969
      %2168 = vmatpush1.msra.mxu0 %v1968
      %2169 = vmatprep.subr.mxu0 %v1977
      %2170 = vmatpush1.msra.mxu0 %v1976
      %2171 = vmatprep.subr.mxu0 %v1985
      %2172 = vmatpush1.msra.mxu0 %v1984
      %2173 = vmatprep.subr.mxu0 %v1993
      %2174 = vmatpush1.msra.mxu0 %v1992
      %2175 = vmatprep.subr.mxu0 %v2001
      %2176 = vmatpush1.msra.mxu0 %v2000
      %2177 = vmatprep.subr.mxu0 %v2009
      %2178 = vmatpush1.msra.mxu0 %v2008
      %2179 = vmatprep.subr.mxu0 %v2017
      %2180 = vmatpush1.msra.mxu0 %v2016
      %2181 = vmatprep.subr.mxu0 %v2025
      %2182 = vmatpush1.msra.mxu0 %v2024
      %2183 = vmatprep.subr.mxu0 %v2033
      %2184 = vmatpush1.msra.mxu0 %v2032
      %2185 = vmatprep.subr.mxu0 %v2041
      %2186 = vmatpush1.msra.mxu0 %v2040
      %2187 = vmatprep.subr.mxu0 %v2049
      %2188 = vmatpush1.msra.mxu0 %v2048
      %2189 = vmatprep.mubr.f32.mxu0 %v429
      %2190 = vmatmul.mubr.f32.gmra.mrb[0].mxu0 %v171
      %v2191 = vpop.f32.mrb[0].mxu0
      %v2192 = vadd.f32 0.0, %v2191
      %v2193 = vpop.f32.mrb[0].mxu0
      %v2194 = vadd.f32 0.0, %v2193
      %2195 = vdwg.mxu0
      %2196 = vmatprep.subr.mxu0 %v1803
      %2197 = vmatpush1.msra.mxu0 %v1802
      %2198 = vmatprep.subr.mxu0 %v1811
      %2199 = vmatpush1.msra.mxu0 %v1810
      %2200 = vmatprep.subr.mxu0 %v1819
      %2201 = vmatpush1.msra.mxu0 %v1818
      %2202 = vmatprep.subr.mxu0 %v1827
      %2203 = vmatpush1.msra.mxu0 %v1826
      %2204 = vmatprep.subr.mxu0 %v1835
      %2205 = vmatpush1.msra.mxu0 %v1834
      %2206 = vmatprep.subr.mxu0 %v1843
      %2207 = vmatpush1.msra.mxu0 %v1842
      %2208 = vmatprep.subr.mxu0 %v1851
      %2209 = vmatpush1.msra.mxu0 %v1850
      %2210 = vmatprep.subr.mxu0 %v1859
      %2211 = vmatpush1.msra.mxu0 %v1858
      %2212 = vmatprep.subr.mxu0 %v1867
      %2213 = vmatpush1.msra.mxu0 %v1866
      %2214 = vmatprep.subr.mxu0 %v1875
      %2215 = vmatpush1.msra.mxu0 %v1874
      %2216 = vmatprep.subr.mxu0 %v1883
      %2217 = vmatpush1.msra.mxu0 %v1882
      %2218 = vmatprep.subr.mxu0 %v1891
      %2219 = vmatpush1.msra.mxu0 %v1890
      %2220 = vmatprep.subr.mxu0 %v1899
      %2221 = vmatpush1.msra.mxu0 %v1898
      %2222 = vmatprep.subr.mxu0 %v1907
      %2223 = vmatpush1.msra.mxu0 %v1906
      %2224 = vmatprep.subr.mxu0 %v1915
      %2225 = vmatpush1.msra.mxu0 %v1914
      %2226 = vmatprep.subr.mxu0 %v1923
      %2227 = vmatpush1.msra.mxu0 %v1922
      %2228 = vmatprep.subr.mxu0 %v1931
      %2229 = vmatpush1.msra.mxu0 %v1930
      %2230 = vmatprep.subr.mxu0 %v1939
      %2231 = vmatpush1.msra.mxu0 %v1938
      %2232 = vmatprep.subr.mxu0 %v1947
      %2233 = vmatpush1.msra.mxu0 %v1946
      %2234 = vmatprep.subr.mxu0 %v1955
      %2235 = vmatpush1.msra.mxu0 %v1954
      %2236 = vmatprep.subr.mxu0 %v1963
      %2237 = vmatpush1.msra.mxu0 %v1962
      %2238 = vmatprep.subr.mxu0 %v1971
      %2239 = vmatpush1.msra.mxu0 %v1970
      %2240 = vmatprep.subr.mxu0 %v1979
      %2241 = vmatpush1.msra.mxu0 %v1978
      %2242 = vmatprep.subr.mxu0 %v1987
      %2243 = vmatpush1.msra.mxu0 %v1986
      %2244 = vmatprep.subr.mxu0 %v1995
      %2245 = vmatpush1.msra.mxu0 %v1994
      %2246 = vmatprep.subr.mxu0 %v2003
      %2247 = vmatpush1.msra.mxu0 %v2002
      %2248 = vmatprep.subr.mxu0 %v2011
      %2249 = vmatpush1.msra.mxu0 %v2010
      %2250 = vmatprep.subr.mxu0 %v2019
      %2251 = vmatpush1.msra.mxu0 %v2018
      %2252 = vmatprep.subr.mxu0 %v2027
      %2253 = vmatpush1.msra.mxu0 %v2026
      %2254 = vmatprep.subr.mxu0 %v2035
      %2255 = vmatpush1.msra.mxu0 %v2034
      %2256 = vmatprep.subr.mxu0 %v2043
      %2257 = vmatpush1.msra.mxu0 %v2042
      %2258 = vmatprep.subr.mxu0 %v2051
      %2259 = vmatpush1.msra.mxu0 %v2050
      %2260 = vmatprep.mubr.f32.mxu0 %v429
      %2261 = vmatmul.mubr.f32.gmra.mrb[0].mxu0 %v171
      %v2262 = vpop.f32.mrb[0].mxu0
      %v2263 = vadd.f32 0.0, %v2262
      %v2264 = vpop.f32.mrb[0].mxu0
      %v2265 = vadd.f32 0.0, %v2264
      %2266 = vdwg.mxu0
      %2267 = vmatprep.subr.mxu0 %v1805
      %2268 = vmatpush1.msra.mxu0 %v1804
      %2269 = vmatprep.subr.mxu0 %v1813
      %2270 = vmatpush1.msra.mxu0 %v1812
      %2271 = vmatprep.subr.mxu0 %v1821
      %2272 = vmatpush1.msra.mxu0 %v1820
      %2273 = vmatprep.subr.mxu0 %v1829
      %2274 = vmatpush1.msra.mxu0 %v1828
      %2275 = vmatprep.subr.mxu0 %v1837
      %2276 = vmatpush1.msra.mxu0 %v1836
      %2277 = vmatprep.subr.mxu0 %v1845
      %2278 = vmatpush1.msra.mxu0 %v1844
      %2279 = vmatprep.subr.mxu0 %v1853
      %2280 = vmatpush1.msra.mxu0 %v1852
      %2281 = vmatprep.subr.mxu0 %v1861
      %2282 = vmatpush1.msra.mxu0 %v1860
      %2283 = vmatprep.subr.mxu0 %v1869
      %2284 = vmatpush1.msra.mxu0 %v1868
      %2285 = vmatprep.subr.mxu0 %v1877
      %2286 = vmatpush1.msra.mxu0 %v1876
      %2287 = vmatprep.subr.mxu0 %v1885
      %2288 = vmatpush1.msra.mxu0 %v1884
      %2289 = vmatprep.subr.mxu0 %v1893
      %2290 = vmatpush1.msra.mxu0 %v1892
      %2291 = vmatprep.subr.mxu0 %v1901
      %2292 = vmatpush1.msra.mxu0 %v1900
      %2293 = vmatprep.subr.mxu0 %v1909
      %2294 = vmatpush1.msra.mxu0 %v1908
      %2295 = vmatprep.subr.mxu0 %v1917
      %2296 = vmatpush1.msra.mxu0 %v1916
      %2297 = vmatprep.subr.mxu0 %v1925
      %2298 = vmatpush1.msra.mxu0 %v1924
      %2299 = vmatprep.subr.mxu0 %v1933
      %2300 = vmatpush1.msra.mxu0 %v1932
      %2301 = vmatprep.subr.mxu0 %v1941
      %2302 = vmatpush1.msra.mxu0 %v1940
      %2303 = vmatprep.subr.mxu0 %v1949
      %2304 = vmatpush1.msra.mxu0 %v1948
      %2305 = vmatprep.subr.mxu0 %v1957
      %2306 = vmatpush1.msra.mxu0 %v1956
      %2307 = vmatprep.subr.mxu0 %v1965
      %2308 = vmatpush1.msra.mxu0 %v1964
      %2309 = vmatprep.subr.mxu0 %v1973
      %2310 = vmatpush1.msra.mxu0 %v1972
      %2311 = vmatprep.subr.mxu0 %v1981
      %2312 = vmatpush1.msra.mxu0 %v1980
      %2313 = vmatprep.subr.mxu0 %v1989
      %2314 = vmatpush1.msra.mxu0 %v1988
      %2315 = vmatprep.subr.mxu0 %v1997
      %2316 = vmatpush1.msra.mxu0 %v1996
      %2317 = vmatprep.subr.mxu0 %v2005
      %2318 = vmatpush1.msra.mxu0 %v2004
      %2319 = vmatprep.subr.mxu0 %v2013
      %2320 = vmatpush1.msra.mxu0 %v2012
      %2321 = vmatprep.subr.mxu0 %v2021
      %2322 = vmatpush1.msra.mxu0 %v2020
      %2323 = vmatprep.subr.mxu0 %v2029
      %2324 = vmatpush1.msra.mxu0 %v2028
      %2325 = vmatprep.subr.mxu0 %v2037
      %2326 = vmatpush1.msra.mxu0 %v2036
      %2327 = vmatprep.subr.mxu0 %v2045
      %2328 = vmatpush1.msra.mxu0 %v2044
      %2329 = vmatprep.subr.mxu0 %v2053
      %2330 = vmatpush1.msra.mxu0 %v2052
      %2331 = vmatprep.mubr.f32.mxu0 %v429
      %2332 = vmatmul.mubr.f32.gmra.mrb[0].mxu0 %v171
      %v2333 = vpop.f32.mrb[0].mxu0
      %v2334 = vadd.f32 0.0, %v2333
      %v2335 = vpop.f32.mrb[0].mxu0
      %v2336 = vadd.f32 0.0, %v2335
      %2337 = vdwg.mxu0
      %s2338 = scalar_lea.vmem %s1, 8192
      %v2339 = vld [vmem:[%s2338] sm:$0xff]
      %v2340 = vld [vmem:[%s2338 + $0x8] sm:$0xff]
      %v2341 = vld [vmem:[%s2338 + $0x10] sm:$0xff]
      %v2342 = vld [vmem:[%s2338 + $0x18] sm:$0xff]
      %v2343 = vld [vmem:[%s2338 + $0x20] sm:$0xff]
      %v2344 = vld [vmem:[%s2338 + $0x28] sm:$0xff]
      %v2345 = vld [vmem:[%s2338 + $0x30] sm:$0xff]
      %v2346 = vld [vmem:[%s2338 + $0x38] sm:$0xff]
      %v2347 = vld [vmem:[%s2338 + $0x40] sm:$0xff]
      %v2348 = vld [vmem:[%s2338 + $0x48] sm:$0xff]
      %v2349 = vld [vmem:[%s2338 + $0x50] sm:$0xff]
      %v2350 = vld [vmem:[%s2338 + $0x58] sm:$0xff]
      %v2351 = vld [vmem:[%s2338 + $0x60] sm:$0xff]
      %v2352 = vld [vmem:[%s2338 + $0x68] sm:$0xff]
      %v2353 = vld [vmem:[%s2338 + $0x70] sm:$0xff]
      %v2354 = vld [vmem:[%s2338 + $0x78] sm:$0xff]
      %v2355 = vld [vmem:[%s2338 + $0x80] sm:$0xff]
      %v2356 = vld [vmem:[%s2338 + $0x88] sm:$0xff]
      %v2357 = vld [vmem:[%s2338 + $0x90] sm:$0xff]
      %v2358 = vld [vmem:[%s2338 + $0x98] sm:$0xff]
      %v2359 = vld [vmem:[%s2338 + $0xa0] sm:$0xff]
      %v2360 = vld [vmem:[%s2338 + $0xa8] sm:$0xff]
      %v2361 = vld [vmem:[%s2338 + $0xb0] sm:$0xff]
      %v2362 = vld [vmem:[%s2338 + $0xb8] sm:$0xff]
      %v2363 = vld [vmem:[%s2338 + $0xc0] sm:$0xff]
      %v2364 = vld [vmem:[%s2338 + $0xc8] sm:$0xff]
      %v2365 = vld [vmem:[%s2338 + $0xd0] sm:$0xff]
      %v2366 = vld [vmem:[%s2338 + $0xd8] sm:$0xff]
      %v2367 = vld [vmem:[%s2338 + $0xe0] sm:$0xff]
      %v2368 = vld [vmem:[%s2338 + $0xe8] sm:$0xff]
      %v2369 = vld [vmem:[%s2338 + $0xf0] sm:$0xff]
      %v2370 = vld [vmem:[%s2338 + $0xf8] sm:$0xff]
      %v2371 = vld [vmem:[%s2338 + $0x100] sm:$0xff]
      %v2372 = vld [vmem:[%s2338 + $0x108] sm:$0xff]
      %v2373 = vld [vmem:[%s2338 + $0x110] sm:$0xff]
      %v2374 = vld [vmem:[%s2338 + $0x118] sm:$0xff]
      %v2375 = vld [vmem:[%s2338 + $0x120] sm:$0xff]
      %v2376 = vld [vmem:[%s2338 + $0x128] sm:$0xff]
      %v2377 = vld [vmem:[%s2338 + $0x130] sm:$0xff]
      %v2378 = vld [vmem:[%s2338 + $0x138] sm:$0xff]
      %v2379 = vld [vmem:[%s2338 + $0x140] sm:$0xff]
      %v2380 = vld [vmem:[%s2338 + $0x148] sm:$0xff]
      %v2381 = vld [vmem:[%s2338 + $0x150] sm:$0xff]
      %v2382 = vld [vmem:[%s2338 + $0x158] sm:$0xff]
      %v2383 = vld [vmem:[%s2338 + $0x160] sm:$0xff]
      %v2384 = vld [vmem:[%s2338 + $0x168] sm:$0xff]
      %v2385 = vld [vmem:[%s2338 + $0x170] sm:$0xff]
      %v2386 = vld [vmem:[%s2338 + $0x178] sm:$0xff]
      %v2387 = vld [vmem:[%s2338 + $0x180] sm:$0xff]
      %v2388 = vld [vmem:[%s2338 + $0x188] sm:$0xff]
      %v2389 = vld [vmem:[%s2338 + $0x190] sm:$0xff]
      %v2390 = vld [vmem:[%s2338 + $0x198] sm:$0xff]
      %v2391 = vld [vmem:[%s2338 + $0x1a0] sm:$0xff]
      %v2392 = vld [vmem:[%s2338 + $0x1a8] sm:$0xff]
      %v2393 = vld [vmem:[%s2338 + $0x1b0] sm:$0xff]
      %v2394 = vld [vmem:[%s2338 + $0x1b8] sm:$0xff]
      %v2395 = vld [vmem:[%s2338 + $0x1c0] sm:$0xff]
      %v2396 = vld [vmem:[%s2338 + $0x1c8] sm:$0xff]
      %v2397 = vld [vmem:[%s2338 + $0x1d0] sm:$0xff]
      %v2398 = vld [vmem:[%s2338 + $0x1d8] sm:$0xff]
      %v2399 = vld [vmem:[%s2338 + $0x1e0] sm:$0xff]
      %v2400 = vld [vmem:[%s2338 + $0x1e8] sm:$0xff]
      %v2401 = vld [vmem:[%s2338 + $0x1f0] sm:$0xff]
      %v2402 = vld [vmem:[%s2338 + $0x1f8] sm:$0xff]
      %v2403 = vld [vmem:[%s2338 + $0x200] sm:$0xff]
      %v2404 = vld [vmem:[%s2338 + $0x208] sm:$0xff]
      %v2405 = vld [vmem:[%s2338 + $0x210] sm:$0xff]
      %v2406 = vld [vmem:[%s2338 + $0x218] sm:$0xff]
      %v2407 = vld [vmem:[%s2338 + $0x220] sm:$0xff]
      %v2408 = vld [vmem:[%s2338 + $0x228] sm:$0xff]
      %v2409 = vld [vmem:[%s2338 + $0x230] sm:$0xff]
      %v2410 = vld [vmem:[%s2338 + $0x238] sm:$0xff]
      %v2411 = vld [vmem:[%s2338 + $0x240] sm:$0xff]
      %v2412 = vld [vmem:[%s2338 + $0x248] sm:$0xff]
      %v2413 = vld [vmem:[%s2338 + $0x250] sm:$0xff]
      %v2414 = vld [vmem:[%s2338 + $0x258] sm:$0xff]
      %v2415 = vld [vmem:[%s2338 + $0x260] sm:$0xff]
      %v2416 = vld [vmem:[%s2338 + $0x268] sm:$0xff]
      %v2417 = vld [vmem:[%s2338 + $0x270] sm:$0xff]
      %v2418 = vld [vmem:[%s2338 + $0x278] sm:$0xff]
      %v2419 = vld [vmem:[%s2338 + $0x280] sm:$0xff]
      %v2420 = vld [vmem:[%s2338 + $0x288] sm:$0xff]
      %v2421 = vld [vmem:[%s2338 + $0x290] sm:$0xff]
      %v2422 = vld [vmem:[%s2338 + $0x298] sm:$0xff]
      %v2423 = vld [vmem:[%s2338 + $0x2a0] sm:$0xff]
      %v2424 = vld [vmem:[%s2338 + $0x2a8] sm:$0xff]
      %v2425 = vld [vmem:[%s2338 + $0x2b0] sm:$0xff]
      %v2426 = vld [vmem:[%s2338 + $0x2b8] sm:$0xff]
      %v2427 = vld [vmem:[%s2338 + $0x2c0] sm:$0xff]
      %v2428 = vld [vmem:[%s2338 + $0x2c8] sm:$0xff]
      %v2429 = vld [vmem:[%s2338 + $0x2d0] sm:$0xff]
      %v2430 = vld [vmem:[%s2338 + $0x2d8] sm:$0xff]
      %v2431 = vld [vmem:[%s2338 + $0x2e0] sm:$0xff]
      %v2432 = vld [vmem:[%s2338 + $0x2e8] sm:$0xff]
      %v2433 = vld [vmem:[%s2338 + $0x2f0] sm:$0xff]
      %v2434 = vld [vmem:[%s2338 + $0x2f8] sm:$0xff]
      %v2435 = vld [vmem:[%s2338 + $0x300] sm:$0xff]
      %v2436 = vld [vmem:[%s2338 + $0x308] sm:$0xff]
      %v2437 = vld [vmem:[%s2338 + $0x310] sm:$0xff]
      %v2438 = vld [vmem:[%s2338 + $0x318] sm:$0xff]
      %v2439 = vld [vmem:[%s2338 + $0x320] sm:$0xff]
      %v2440 = vld [vmem:[%s2338 + $0x328] sm:$0xff]
      %v2441 = vld [vmem:[%s2338 + $0x330] sm:$0xff]
      %v2442 = vld [vmem:[%s2338 + $0x338] sm:$0xff]
      %v2443 = vld [vmem:[%s2338 + $0x340] sm:$0xff]
      %v2444 = vld [vmem:[%s2338 + $0x348] sm:$0xff]
      %v2445 = vld [vmem:[%s2338 + $0x350] sm:$0xff]
      %v2446 = vld [vmem:[%s2338 + $0x358] sm:$0xff]
      %v2447 = vld [vmem:[%s2338 + $0x360] sm:$0xff]
      %v2448 = vld [vmem:[%s2338 + $0x368] sm:$0xff]
      %v2449 = vld [vmem:[%s2338 + $0x370] sm:$0xff]
      %v2450 = vld [vmem:[%s2338 + $0x378] sm:$0xff]
      %v2451 = vld [vmem:[%s2338 + $0x380] sm:$0xff]
      %v2452 = vld [vmem:[%s2338 + $0x388] sm:$0xff]
      %v2453 = vld [vmem:[%s2338 + $0x390] sm:$0xff]
      %v2454 = vld [vmem:[%s2338 + $0x398] sm:$0xff]
      %v2455 = vld [vmem:[%s2338 + $0x3a0] sm:$0xff]
      %v2456 = vld [vmem:[%s2338 + $0x3a8] sm:$0xff]
      %v2457 = vld [vmem:[%s2338 + $0x3b0] sm:$0xff]
      %v2458 = vld [vmem:[%s2338 + $0x3b8] sm:$0xff]
      %v2459 = vld [vmem:[%s2338 + $0x3c0] sm:$0xff]
      %v2460 = vld [vmem:[%s2338 + $0x3c8] sm:$0xff]
      %v2461 = vld [vmem:[%s2338 + $0x3d0] sm:$0xff]
      %v2462 = vld [vmem:[%s2338 + $0x3d8] sm:$0xff]
      %v2463 = vld [vmem:[%s2338 + $0x3e0] sm:$0xff]
      %v2464 = vld [vmem:[%s2338 + $0x3e8] sm:$0xff]
      %v2465 = vld [vmem:[%s2338 + $0x3f0] sm:$0xff]
      %v2466 = vld [vmem:[%s2338 + $0x3f8] sm:$0xff]
      %v2467 = vld [vmem:[%s2338 + $0x400] sm:$0xff]
      %v2468 = vld [vmem:[%s2338 + $0x408] sm:$0xff]
      %v2469 = vld [vmem:[%s2338 + $0x410] sm:$0xff]
      %v2470 = vld [vmem:[%s2338 + $0x418] sm:$0xff]
      %v2471 = vld [vmem:[%s2338 + $0x420] sm:$0xff]
      %v2472 = vld [vmem:[%s2338 + $0x428] sm:$0xff]
      %v2473 = vld [vmem:[%s2338 + $0x430] sm:$0xff]
      %v2474 = vld [vmem:[%s2338 + $0x438] sm:$0xff]
      %v2475 = vld [vmem:[%s2338 + $0x440] sm:$0xff]
      %v2476 = vld [vmem:[%s2338 + $0x448] sm:$0xff]
      %v2477 = vld [vmem:[%s2338 + $0x450] sm:$0xff]
      %v2478 = vld [vmem:[%s2338 + $0x458] sm:$0xff]
      %v2479 = vld [vmem:[%s2338 + $0x460] sm:$0xff]
      %v2480 = vld [vmem:[%s2338 + $0x468] sm:$0xff]
      %v2481 = vld [vmem:[%s2338 + $0x470] sm:$0xff]
      %v2482 = vld [vmem:[%s2338 + $0x478] sm:$0xff]
      %v2483 = vld [vmem:[%s2338 + $0x480] sm:$0xff]
      %v2484 = vld [vmem:[%s2338 + $0x488] sm:$0xff]
      %v2485 = vld [vmem:[%s2338 + $0x490] sm:$0xff]
      %v2486 = vld [vmem:[%s2338 + $0x498] sm:$0xff]
      %v2487 = vld [vmem:[%s2338 + $0x4a0] sm:$0xff]
      %v2488 = vld [vmem:[%s2338 + $0x4a8] sm:$0xff]
      %v2489 = vld [vmem:[%s2338 + $0x4b0] sm:$0xff]
      %v2490 = vld [vmem:[%s2338 + $0x4b8] sm:$0xff]
      %v2491 = vld [vmem:[%s2338 + $0x4c0] sm:$0xff]
      %v2492 = vld [vmem:[%s2338 + $0x4c8] sm:$0xff]
      %v2493 = vld [vmem:[%s2338 + $0x4d0] sm:$0xff]
      %v2494 = vld [vmem:[%s2338 + $0x4d8] sm:$0xff]
      %v2495 = vld [vmem:[%s2338 + $0x4e0] sm:$0xff]
      %v2496 = vld [vmem:[%s2338 + $0x4e8] sm:$0xff]
      %v2497 = vld [vmem:[%s2338 + $0x4f0] sm:$0xff]
      %v2498 = vld [vmem:[%s2338 + $0x4f8] sm:$0xff]
      %v2499 = vld [vmem:[%s2338 + $0x500] sm:$0xff]
      %v2500 = vld [vmem:[%s2338 + $0x508] sm:$0xff]
      %v2501 = vld [vmem:[%s2338 + $0x510] sm:$0xff]
      %v2502 = vld [vmem:[%s2338 + $0x518] sm:$0xff]
      %v2503 = vld [vmem:[%s2338 + $0x520] sm:$0xff]
      %v2504 = vld [vmem:[%s2338 + $0x528] sm:$0xff]
      %v2505 = vld [vmem:[%s2338 + $0x530] sm:$0xff]
      %v2506 = vld [vmem:[%s2338 + $0x538] sm:$0xff]
      %v2507 = vld [vmem:[%s2338 + $0x540] sm:$0xff]
      %v2508 = vld [vmem:[%s2338 + $0x548] sm:$0xff]
      %v2509 = vld [vmem:[%s2338 + $0x550] sm:$0xff]
      %v2510 = vld [vmem:[%s2338 + $0x558] sm:$0xff]
      %v2511 = vld [vmem:[%s2338 + $0x560] sm:$0xff]
      %v2512 = vld [vmem:[%s2338 + $0x568] sm:$0xff]
      %v2513 = vld [vmem:[%s2338 + $0x570] sm:$0xff]
      %v2514 = vld [vmem:[%s2338 + $0x578] sm:$0xff]
      %v2515 = vld [vmem:[%s2338 + $0x580] sm:$0xff]
      %v2516 = vld [vmem:[%s2338 + $0x588] sm:$0xff]
      %v2517 = vld [vmem:[%s2338 + $0x590] sm:$0xff]
      %v2518 = vld [vmem:[%s2338 + $0x598] sm:$0xff]
      %v2519 = vld [vmem:[%s2338 + $0x5a0] sm:$0xff]
      %v2520 = vld [vmem:[%s2338 + $0x5a8] sm:$0xff]
      %v2521 = vld [vmem:[%s2338 + $0x5b0] sm:$0xff]
      %v2522 = vld [vmem:[%s2338 + $0x5b8] sm:$0xff]
      %v2523 = vld [vmem:[%s2338 + $0x5c0] sm:$0xff]
      %v2524 = vld [vmem:[%s2338 + $0x5c8] sm:$0xff]
      %v2525 = vld [vmem:[%s2338 + $0x5d0] sm:$0xff]
      %v2526 = vld [vmem:[%s2338 + $0x5d8] sm:$0xff]
      %v2527 = vld [vmem:[%s2338 + $0x5e0] sm:$0xff]
      %v2528 = vld [vmem:[%s2338 + $0x5e8] sm:$0xff]
      %v2529 = vld [vmem:[%s2338 + $0x5f0] sm:$0xff]
      %v2530 = vld [vmem:[%s2338 + $0x5f8] sm:$0xff]
      %v2531 = vld [vmem:[%s2338 + $0x600] sm:$0xff]
      %v2532 = vld [vmem:[%s2338 + $0x608] sm:$0xff]
      %v2533 = vld [vmem:[%s2338 + $0x610] sm:$0xff]
      %v2534 = vld [vmem:[%s2338 + $0x618] sm:$0xff]
      %v2535 = vld [vmem:[%s2338 + $0x620] sm:$0xff]
      %v2536 = vld [vmem:[%s2338 + $0x628] sm:$0xff]
      %v2537 = vld [vmem:[%s2338 + $0x630] sm:$0xff]
      %v2538 = vld [vmem:[%s2338 + $0x638] sm:$0xff]
      %v2539 = vld [vmem:[%s2338 + $0x640] sm:$0xff]
      %v2540 = vld [vmem:[%s2338 + $0x648] sm:$0xff]
      %v2541 = vld [vmem:[%s2338 + $0x650] sm:$0xff]
      %v2542 = vld [vmem:[%s2338 + $0x658] sm:$0xff]
      %v2543 = vld [vmem:[%s2338 + $0x660] sm:$0xff]
      %v2544 = vld [vmem:[%s2338 + $0x668] sm:$0xff]
      %v2545 = vld [vmem:[%s2338 + $0x670] sm:$0xff]
      %v2546 = vld [vmem:[%s2338 + $0x678] sm:$0xff]
      %v2547 = vld [vmem:[%s2338 + $0x680] sm:$0xff]
      %v2548 = vld [vmem:[%s2338 + $0x688] sm:$0xff]
      %v2549 = vld [vmem:[%s2338 + $0x690] sm:$0xff]
      %v2550 = vld [vmem:[%s2338 + $0x698] sm:$0xff]
      %v2551 = vld [vmem:[%s2338 + $0x6a0] sm:$0xff]
      %v2552 = vld [vmem:[%s2338 + $0x6a8] sm:$0xff]
      %v2553 = vld [vmem:[%s2338 + $0x6b0] sm:$0xff]
      %v2554 = vld [vmem:[%s2338 + $0x6b8] sm:$0xff]
      %v2555 = vld [vmem:[%s2338 + $0x6c0] sm:$0xff]
      %v2556 = vld [vmem:[%s2338 + $0x6c8] sm:$0xff]
      %v2557 = vld [vmem:[%s2338 + $0x6d0] sm:$0xff]
      %v2558 = vld [vmem:[%s2338 + $0x6d8] sm:$0xff]
      %v2559 = vld [vmem:[%s2338 + $0x6e0] sm:$0xff]
      %v2560 = vld [vmem:[%s2338 + $0x6e8] sm:$0xff]
      %v2561 = vld [vmem:[%s2338 + $0x6f0] sm:$0xff]
      %v2562 = vld [vmem:[%s2338 + $0x6f8] sm:$0xff]
      %v2563 = vld [vmem:[%s2338 + $0x700] sm:$0xff]
      %v2564 = vld [vmem:[%s2338 + $0x708] sm:$0xff]
      %v2565 = vld [vmem:[%s2338 + $0x710] sm:$0xff]
      %v2566 = vld [vmem:[%s2338 + $0x718] sm:$0xff]
      %v2567 = vld [vmem:[%s2338 + $0x720] sm:$0xff]
      %v2568 = vld [vmem:[%s2338 + $0x728] sm:$0xff]
      %v2569 = vld [vmem:[%s2338 + $0x730] sm:$0xff]
      %v2570 = vld [vmem:[%s2338 + $0x738] sm:$0xff]
      %v2571 = vld [vmem:[%s2338 + $0x740] sm:$0xff]
      %v2572 = vld [vmem:[%s2338 + $0x748] sm:$0xff]
      %v2573 = vld [vmem:[%s2338 + $0x750] sm:$0xff]
      %v2574 = vld [vmem:[%s2338 + $0x758] sm:$0xff]
      %v2575 = vld [vmem:[%s2338 + $0x760] sm:$0xff]
      %v2576 = vld [vmem:[%s2338 + $0x768] sm:$0xff]
      %v2577 = vld [vmem:[%s2338 + $0x770] sm:$0xff]
      %v2578 = vld [vmem:[%s2338 + $0x778] sm:$0xff]
      %v2579 = vld [vmem:[%s2338 + $0x780] sm:$0xff]
      %v2580 = vld [vmem:[%s2338 + $0x788] sm:$0xff]
      %v2581 = vld [vmem:[%s2338 + $0x790] sm:$0xff]
      %v2582 = vld [vmem:[%s2338 + $0x798] sm:$0xff]
      %v2583 = vld [vmem:[%s2338 + $0x7a0] sm:$0xff]
      %v2584 = vld [vmem:[%s2338 + $0x7a8] sm:$0xff]
      %v2585 = vld [vmem:[%s2338 + $0x7b0] sm:$0xff]
      %v2586 = vld [vmem:[%s2338 + $0x7b8] sm:$0xff]
      %v2587 = vld [vmem:[%s2338 + $0x7c0] sm:$0xff]
      %v2588 = vld [vmem:[%s2338 + $0x7c8] sm:$0xff]
      %v2589 = vld [vmem:[%s2338 + $0x7d0] sm:$0xff]
      %v2590 = vld [vmem:[%s2338 + $0x7d8] sm:$0xff]
      %v2591 = vld [vmem:[%s2338 + $0x7e0] sm:$0xff]
      %v2592 = vld [vmem:[%s2338 + $0x7e8] sm:$0xff]
      %v2593 = vld [vmem:[%s2338 + $0x7f0] sm:$0xff]
      %v2594 = vld [vmem:[%s2338 + $0x7f8] sm:$0xff]
      %2595 = vmatprep.subr.mxu0 %v2340
      %2596 = vmatpush1.msra.mxu0 %v2339
      %2597 = vmatprep.subr.mxu0 %v2348
      %2598 = vmatpush1.msra.mxu0 %v2347
      %2599 = vmatprep.subr.mxu0 %v2356
      %2600 = vmatpush1.msra.mxu0 %v2355
      %2601 = vmatprep.subr.mxu0 %v2364
      %2602 = vmatpush1.msra.mxu0 %v2363
      %2603 = vmatprep.subr.mxu0 %v2372
      %2604 = vmatpush1.msra.mxu0 %v2371
      %2605 = vmatprep.subr.mxu0 %v2380
      %2606 = vmatpush1.msra.mxu0 %v2379
      %2607 = vmatprep.subr.mxu0 %v2388
      %2608 = vmatpush1.msra.mxu0 %v2387
      %2609 = vmatprep.subr.mxu0 %v2396
      %2610 = vmatpush1.msra.mxu0 %v2395
      %2611 = vmatprep.subr.mxu0 %v2404
      %2612 = vmatpush1.msra.mxu0 %v2403
      %2613 = vmatprep.subr.mxu0 %v2412
      %2614 = vmatpush1.msra.mxu0 %v2411
      %2615 = vmatprep.subr.mxu0 %v2420
      %2616 = vmatpush1.msra.mxu0 %v2419
      %2617 = vmatprep.subr.mxu0 %v2428
      %2618 = vmatpush1.msra.mxu0 %v2427
      %2619 = vmatprep.subr.mxu0 %v2436
      %2620 = vmatpush1.msra.mxu0 %v2435
      %2621 = vmatprep.subr.mxu0 %v2444
      %2622 = vmatpush1.msra.mxu0 %v2443
      %2623 = vmatprep.subr.mxu0 %v2452
      %2624 = vmatpush1.msra.mxu0 %v2451
      %2625 = vmatprep.subr.mxu0 %v2460
      %2626 = vmatpush1.msra.mxu0 %v2459
      %2627 = vmatprep.subr.mxu0 %v2468
      %2628 = vmatpush1.msra.mxu0 %v2467
      %2629 = vmatprep.subr.mxu0 %v2476
      %2630 = vmatpush1.msra.mxu0 %v2475
      %2631 = vmatprep.subr.mxu0 %v2484
      %2632 = vmatpush1.msra.mxu0 %v2483
      %2633 = vmatprep.subr.mxu0 %v2492
      %2634 = vmatpush1.msra.mxu0 %v2491
      %2635 = vmatprep.subr.mxu0 %v2500
      %2636 = vmatpush1.msra.mxu0 %v2499
      %2637 = vmatprep.subr.mxu0 %v2508
      %2638 = vmatpush1.msra.mxu0 %v2507
      %2639 = vmatprep.subr.mxu0 %v2516
      %2640 = vmatpush1.msra.mxu0 %v2515
      %2641 = vmatprep.subr.mxu0 %v2524
      %2642 = vmatpush1.msra.mxu0 %v2523
      %2643 = vmatprep.subr.mxu0 %v2532
      %2644 = vmatpush1.msra.mxu0 %v2531
      %2645 = vmatprep.subr.mxu0 %v2540
      %2646 = vmatpush1.msra.mxu0 %v2539
      %2647 = vmatprep.subr.mxu0 %v2548
      %2648 = vmatpush1.msra.mxu0 %v2547
      %2649 = vmatprep.subr.mxu0 %v2556
      %2650 = vmatpush1.msra.mxu0 %v2555
      %2651 = vmatprep.subr.mxu0 %v2564
      %2652 = vmatpush1.msra.mxu0 %v2563
      %2653 = vmatprep.subr.mxu0 %v2572
      %2654 = vmatpush1.msra.mxu0 %v2571
      %2655 = vmatprep.subr.mxu0 %v2580
      %2656 = vmatpush1.msra.mxu0 %v2579
      %2657 = vmatprep.subr.mxu0 %v2588
      %2658 = vmatpush1.msra.mxu0 %v2587
      %2659 = vmatprep.mubr.f32.mxu0 %v429
      %2660 = vmatmul.mubr.f32.gmra.mrb[0].mxu0 %v171
      %v2661 = vpop.f32.mrb[0].mxu0
      %v2662 = vadd.f32 0.0, %v2661
      %v2663 = vpop.f32.mrb[0].mxu0
      %v2664 = vadd.f32 0.0, %v2663
      %2665 = vdwg.mxu0
      %2666 = vmatprep.subr.mxu0 %v2342
      %2667 = vmatpush1.msra.mxu0 %v2341
      %2668 = vmatprep.subr.mxu0 %v2350
      %2669 = vmatpush1.msra.mxu0 %v2349
      %2670 = vmatprep.subr.mxu0 %v2358
      %2671 = vmatpush1.msra.mxu0 %v2357
      %2672 = vmatprep.subr.mxu0 %v2366
      %2673 = vmatpush1.msra.mxu0 %v2365
      %2674 = vmatprep.subr.mxu0 %v2374
      %2675 = vmatpush1.msra.mxu0 %v2373
      %2676 = vmatprep.subr.mxu0 %v2382
      %2677 = vmatpush1.msra.mxu0 %v2381
      %2678 = vmatprep.subr.mxu0 %v2390
      %2679 = vmatpush1.msra.mxu0 %v2389
      %2680 = vmatprep.subr.mxu0 %v2398
      %2681 = vmatpush1.msra.mxu0 %v2397
      %2682 = vmatprep.subr.mxu0 %v2406
      %2683 = vmatpush1.msra.mxu0 %v2405
      %2684 = vmatprep.subr.mxu0 %v2414
      %2685 = vmatpush1.msra.mxu0 %v2413
      %2686 = vmatprep.subr.mxu0 %v2422
      %2687 = vmatpush1.msra.mxu0 %v2421
      %2688 = vmatprep.subr.mxu0 %v2430
      %2689 = vmatpush1.msra.mxu0 %v2429
      %2690 = vmatprep.subr.mxu0 %v2438
      %2691 = vmatpush1.msra.mxu0 %v2437
      %2692 = vmatprep.subr.mxu0 %v2446
      %2693 = vmatpush1.msra.mxu0 %v2445
      %2694 = vmatprep.subr.mxu0 %v2454
      %2695 = vmatpush1.msra.mxu0 %v2453
      %2696 = vmatprep.subr.mxu0 %v2462
      %2697 = vmatpush1.msra.mxu0 %v2461
      %2698 = vmatprep.subr.mxu0 %v2470
      %2699 = vmatpush1.msra.mxu0 %v2469
      %2700 = vmatprep.subr.mxu0 %v2478
      %2701 = vmatpush1.msra.mxu0 %v2477
      %2702 = vmatprep.subr.mxu0 %v2486
      %2703 = vmatpush1.msra.mxu0 %v2485
      %2704 = vmatprep.subr.mxu0 %v2494
      %2705 = vmatpush1.msra.mxu0 %v2493
      %2706 = vmatprep.subr.mxu0 %v2502
      %2707 = vmatpush1.msra.mxu0 %v2501
      %2708 = vmatprep.subr.mxu0 %v2510
      %2709 = vmatpush1.msra.mxu0 %v2509
      %2710 = vmatprep.subr.mxu0 %v2518
      %2711 = vmatpush1.msra.mxu0 %v2517
      %2712 = vmatprep.subr.mxu0 %v2526
      %2713 = vmatpush1.msra.mxu0 %v2525
      %2714 = vmatprep.subr.mxu0 %v2534
      %2715 = vmatpush1.msra.mxu0 %v2533
      %2716 = vmatprep.subr.mxu0 %v2542
      %2717 = vmatpush1.msra.mxu0 %v2541
      %2718 = vmatprep.subr.mxu0 %v2550
      %2719 = vmatpush1.msra.mxu0 %v2549
      %2720 = vmatprep.subr.mxu0 %v2558
      %2721 = vmatpush1.msra.mxu0 %v2557
      %2722 = vmatprep.subr.mxu0 %v2566
      %2723 = vmatpush1.msra.mxu0 %v2565
      %2724 = vmatprep.subr.mxu0 %v2574
      %2725 = vmatpush1.msra.mxu0 %v2573
      %2726 = vmatprep.subr.mxu0 %v2582
      %2727 = vmatpush1.msra.mxu0 %v2581
      %2728 = vmatprep.subr.mxu0 %v2590
      %2729 = vmatpush1.msra.mxu0 %v2589
      %2730 = vmatprep.mubr.f32.mxu0 %v429
      %2731 = vmatmul.mubr.f32.gmra.mrb[0].mxu0 %v171
      %v2732 = vpop.f32.mrb[0].mxu0
      %v2733 = vadd.f32 0.0, %v2732
      %v2734 = vpop.f32.mrb[0].mxu0
      %v2735 = vadd.f32 0.0, %v2734
      %2736 = vdwg.mxu0
      %2737 = vmatprep.subr.mxu0 %v2344
      %2738 = vmatpush1.msra.mxu0 %v2343
      %2739 = vmatprep.subr.mxu0 %v2352
      %2740 = vmatpush1.msra.mxu0 %v2351
      %2741 = vmatprep.subr.mxu0 %v2360
      %2742 = vmatpush1.msra.mxu0 %v2359
      %2743 = vmatprep.subr.mxu0 %v2368
      %2744 = vmatpush1.msra.mxu0 %v2367
      %2745 = vmatprep.subr.mxu0 %v2376
      %2746 = vmatpush1.msra.mxu0 %v2375
      %2747 = vmatprep.subr.mxu0 %v2384
      %2748 = vmatpush1.msra.mxu0 %v2383
      %2749 = vmatprep.subr.mxu0 %v2392
      %2750 = vmatpush1.msra.mxu0 %v2391
      %2751 = vmatprep.subr.mxu0 %v2400
      %2752 = vmatpush1.msra.mxu0 %v2399
      %2753 = vmatprep.subr.mxu0 %v2408
      %2754 = vmatpush1.msra.mxu0 %v2407
      %2755 = vmatprep.subr.mxu0 %v2416
      %2756 = vmatpush1.msra.mxu0 %v2415
      %2757 = vmatprep.subr.mxu0 %v2424
      %2758 = vmatpush1.msra.mxu0 %v2423
      %2759 = vmatprep.subr.mxu0 %v2432
      %2760 = vmatpush1.msra.mxu0 %v2431
      %2761 = vmatprep.subr.mxu0 %v2440
      %2762 = vmatpush1.msra.mxu0 %v2439
      %2763 = vmatprep.subr.mxu0 %v2448
      %2764 = vmatpush1.msra.mxu0 %v2447
      %2765 = vmatprep.subr.mxu0 %v2456
      %2766 = vmatpush1.msra.mxu0 %v2455
      %2767 = vmatprep.subr.mxu0 %v2464
      %2768 = vmatpush1.msra.mxu0 %v2463
      %2769 = vmatprep.subr.mxu0 %v2472
      %2770 = vmatpush1.msra.mxu0 %v2471
      %2771 = vmatprep.subr.mxu0 %v2480
      %2772 = vmatpush1.msra.mxu0 %v2479
      %2773 = vmatprep.subr.mxu0 %v2488
      %2774 = vmatpush1.msra.mxu0 %v2487
      %2775 = vmatprep.subr.mxu0 %v2496
      %2776 = vmatpush1.msra.mxu0 %v2495
      %2777 = vmatprep.subr.mxu0 %v2504
      %2778 = vmatpush1.msra.mxu0 %v2503
      %2779 = vmatprep.subr.mxu0 %v2512
      %2780 = vmatpush1.msra.mxu0 %v2511
      %2781 = vmatprep.subr.mxu0 %v2520
      %2782 = vmatpush1.msra.mxu0 %v2519
      %2783 = vmatprep.subr.mxu0 %v2528
      %2784 = vmatpush1.msra.mxu0 %v2527
      %2785 = vmatprep.subr.mxu0 %v2536
      %2786 = vmatpush1.msra.mxu0 %v2535
      %2787 = vmatprep.subr.mxu0 %v2544
      %2788 = vmatpush1.msra.mxu0 %v2543
      %2789 = vmatprep.subr.mxu0 %v2552
      %2790 = vmatpush1.msra.mxu0 %v2551
      %2791 = vmatprep.subr.mxu0 %v2560
      %2792 = vmatpush1.msra.mxu0 %v2559
      %2793 = vmatprep.subr.mxu0 %v2568
      %2794 = vmatpush1.msra.mxu0 %v2567
      %2795 = vmatprep.subr.mxu0 %v2576
      %2796 = vmatpush1.msra.mxu0 %v2575
      %2797 = vmatprep.subr.mxu0 %v2584
      %2798 = vmatpush1.msra.mxu0 %v2583
      %2799 = vmatprep.subr.mxu0 %v2592
      %2800 = vmatpush1.msra.mxu0 %v2591
      %2801 = vmatprep.mubr.f32.mxu0 %v429
      %2802 = vmatmul.mubr.f32.gmra.mrb[0].mxu0 %v171
      %v2803 = vpop.f32.mrb[0].mxu0
      %v2804 = vadd.f32 0.0, %v2803
      %v2805 = vpop.f32.mrb[0].mxu0
      %v2806 = vadd.f32 0.0, %v2805
      %2807 = vdwg.mxu0
      %2808 = vmatprep.subr.mxu0 %v2346
      %2809 = vmatpush1.msra.mxu0 %v2345
      %2810 = vmatprep.subr.mxu0 %v2354
      %2811 = vmatpush1.msra.mxu0 %v2353
      %2812 = vmatprep.subr.mxu0 %v2362
      %2813 = vmatpush1.msra.mxu0 %v2361
      %2814 = vmatprep.subr.mxu0 %v2370
      %2815 = vmatpush1.msra.mxu0 %v2369
      %2816 = vmatprep.subr.mxu0 %v2378
      %2817 = vmatpush1.msra.mxu0 %v2377
      %2818 = vmatprep.subr.mxu0 %v2386
      %2819 = vmatpush1.msra.mxu0 %v2385
      %2820 = vmatprep.subr.mxu0 %v2394
      %2821 = vmatpush1.msra.mxu0 %v2393
      %2822 = vmatprep.subr.mxu0 %v2402
      %2823 = vmatpush1.msra.mxu0 %v2401
      %2824 = vmatprep.subr.mxu0 %v2410
      %2825 = vmatpush1.msra.mxu0 %v2409
      %2826 = vmatprep.subr.mxu0 %v2418
      %2827 = vmatpush1.msra.mxu0 %v2417
      %2828 = vmatprep.subr.mxu0 %v2426
      %2829 = vmatpush1.msra.mxu0 %v2425
      %2830 = vmatprep.subr.mxu0 %v2434
      %2831 = vmatpush1.msra.mxu0 %v2433
      %2832 = vmatprep.subr.mxu0 %v2442
      %2833 = vmatpush1.msra.mxu0 %v2441
      %2834 = vmatprep.subr.mxu0 %v2450
      %2835 = vmatpush1.msra.mxu0 %v2449
      %2836 = vmatprep.subr.mxu0 %v2458
      %2837 = vmatpush1.msra.mxu0 %v2457
      %2838 = vmatprep.subr.mxu0 %v2466
      %2839 = vmatpush1.msra.mxu0 %v2465
      %2840 = vmatprep.subr.mxu0 %v2474
      %2841 = vmatpush1.msra.mxu0 %v2473
      %2842 = vmatprep.subr.mxu0 %v2482
      %2843 = vmatpush1.msra.mxu0 %v2481
      %2844 = vmatprep.subr.mxu0 %v2490
      %2845 = vmatpush1.msra.mxu0 %v2489
      %2846 = vmatprep.subr.mxu0 %v2498
      %2847 = vmatpush1.msra.mxu0 %v2497
      %2848 = vmatprep.subr.mxu0 %v2506
      %2849 = vmatpush1.msra.mxu0 %v2505
      %2850 = vmatprep.subr.mxu0 %v2514
      %2851 = vmatpush1.msra.mxu0 %v2513
      %2852 = vmatprep.subr.mxu0 %v2522
      %2853 = vmatpush1.msra.mxu0 %v2521
      %2854 = vmatprep.subr.mxu0 %v2530
      %2855 = vmatpush1.msra.mxu0 %v2529
      %2856 = vmatprep.subr.mxu0 %v2538
      %2857 = vmatpush1.msra.mxu0 %v2537
      %2858 = vmatprep.subr.mxu0 %v2546
      %2859 = vmatpush1.msra.mxu0 %v2545
      %2860 = vmatprep.subr.mxu0 %v2554
      %2861 = vmatpush1.msra.mxu0 %v2553
      %2862 = vmatprep.subr.mxu0 %v2562
      %2863 = vmatpush1.msra.mxu0 %v2561
      %2864 = vmatprep.subr.mxu0 %v2570
      %2865 = vmatpush1.msra.mxu0 %v2569
      %2866 = vmatprep.subr.mxu0 %v2578
      %2867 = vmatpush1.msra.mxu0 %v2577
      %2868 = vmatprep.subr.mxu0 %v2586
      %2869 = vmatpush1.msra.mxu0 %v2585
      %2870 = vmatprep.subr.mxu0 %v2594
      %2871 = vmatpush1.msra.mxu0 %v2593
      %2872 = vmatprep.mubr.f32.mxu0 %v429
      %2873 = vmatmul.mubr.f32.gmra.mrb[0].mxu0 %v171
      %v2874 = vpop.f32.mrb[0].mxu0
      %v2875 = vadd.f32 0.0, %v2874
      %v2876 = vpop.f32.mrb[0].mxu0
      %v2877 = vadd.f32 0.0, %v2876
      %2878 = vdwg.mxu0
      %s2879 = scalar_lea.vmem %s1, 10240
      %v2880 = vld [vmem:[%s2879] sm:$0xff]
      %v2881 = vld [vmem:[%s2879 + $0x8] sm:$0xff]
      %v2882 = vld [vmem:[%s2879 + $0x10] sm:$0xff]
      %v2883 = vld [vmem:[%s2879 + $0x18] sm:$0xff]
      %v2884 = vld [vmem:[%s2879 + $0x20] sm:$0xff]
      %v2885 = vld [vmem:[%s2879 + $0x28] sm:$0xff]
      %v2886 = vld [vmem:[%s2879 + $0x30] sm:$0xff]
      %v2887 = vld [vmem:[%s2879 + $0x38] sm:$0xff]
      %v2888 = vld [vmem:[%s2879 + $0x40] sm:$0xff]
      %v2889 = vld [vmem:[%s2879 + $0x48] sm:$0xff]
      %v2890 = vld [vmem:[%s2879 + $0x50] sm:$0xff]
      %v2891 = vld [vmem:[%s2879 + $0x58] sm:$0xff]
      %v2892 = vld [vmem:[%s2879 + $0x60] sm:$0xff]
      %v2893 = vld [vmem:[%s2879 + $0x68] sm:$0xff]
      %v2894 = vld [vmem:[%s2879 + $0x70] sm:$0xff]
      %v2895 = vld [vmem:[%s2879 + $0x78] sm:$0xff]
      %v2896 = vld [vmem:[%s2879 + $0x80] sm:$0xff]
      %v2897 = vld [vmem:[%s2879 + $0x88] sm:$0xff]
      %v2898 = vld [vmem:[%s2879 + $0x90] sm:$0xff]
      %v2899 = vld [vmem:[%s2879 + $0x98] sm:$0xff]
      %v2900 = vld [vmem:[%s2879 + $0xa0] sm:$0xff]
      %v2901 = vld [vmem:[%s2879 + $0xa8] sm:$0xff]
      %v2902 = vld [vmem:[%s2879 + $0xb0] sm:$0xff]
      %v2903 = vld [vmem:[%s2879 + $0xb8] sm:$0xff]
      %v2904 = vld [vmem:[%s2879 + $0xc0] sm:$0xff]
      %v2905 = vld [vmem:[%s2879 + $0xc8] sm:$0xff]
      %v2906 = vld [vmem:[%s2879 + $0xd0] sm:$0xff]
      %v2907 = vld [vmem:[%s2879 + $0xd8] sm:$0xff]
      %v2908 = vld [vmem:[%s2879 + $0xe0] sm:$0xff]
      %v2909 = vld [vmem:[%s2879 + $0xe8] sm:$0xff]
      %v2910 = vld [vmem:[%s2879 + $0xf0] sm:$0xff]
      %v2911 = vld [vmem:[%s2879 + $0xf8] sm:$0xff]
      %v2912 = vld [vmem:[%s2879 + $0x100] sm:$0xff]
      %v2913 = vld [vmem:[%s2879 + $0x108] sm:$0xff]
      %v2914 = vld [vmem:[%s2879 + $0x110] sm:$0xff]
      %v2915 = vld [vmem:[%s2879 + $0x118] sm:$0xff]
      %v2916 = vld [vmem:[%s2879 + $0x120] sm:$0xff]
      %v2917 = vld [vmem:[%s2879 + $0x128] sm:$0xff]
      %v2918 = vld [vmem:[%s2879 + $0x130] sm:$0xff]
      %v2919 = vld [vmem:[%s2879 + $0x138] sm:$0xff]
      %v2920 = vld [vmem:[%s2879 + $0x140] sm:$0xff]
      %v2921 = vld [vmem:[%s2879 + $0x148] sm:$0xff]
      %v2922 = vld [vmem:[%s2879 + $0x150] sm:$0xff]
      %v2923 = vld [vmem:[%s2879 + $0x158] sm:$0xff]
      %v2924 = vld [vmem:[%s2879 + $0x160] sm:$0xff]
      %v2925 = vld [vmem:[%s2879 + $0x168] sm:$0xff]
      %v2926 = vld [vmem:[%s2879 + $0x170] sm:$0xff]
      %v2927 = vld [vmem:[%s2879 + $0x178] sm:$0xff]
      %v2928 = vld [vmem:[%s2879 + $0x180] sm:$0xff]
      %v2929 = vld [vmem:[%s2879 + $0x188] sm:$0xff]
      %v2930 = vld [vmem:[%s2879 + $0x190] sm:$0xff]
      %v2931 = vld [vmem:[%s2879 + $0x198] sm:$0xff]
      %v2932 = vld [vmem:[%s2879 + $0x1a0] sm:$0xff]
      %v2933 = vld [vmem:[%s2879 + $0x1a8] sm:$0xff]
      %v2934 = vld [vmem:[%s2879 + $0x1b0] sm:$0xff]
      %v2935 = vld [vmem:[%s2879 + $0x1b8] sm:$0xff]
      %v2936 = vld [vmem:[%s2879 + $0x1c0] sm:$0xff]
      %v2937 = vld [vmem:[%s2879 + $0x1c8] sm:$0xff]
      %v2938 = vld [vmem:[%s2879 + $0x1d0] sm:$0xff]
      %v2939 = vld [vmem:[%s2879 + $0x1d8] sm:$0xff]
      %v2940 = vld [vmem:[%s2879 + $0x1e0] sm:$0xff]
      %v2941 = vld [vmem:[%s2879 + $0x1e8] sm:$0xff]
      %v2942 = vld [vmem:[%s2879 + $0x1f0] sm:$0xff]
      %v2943 = vld [vmem:[%s2879 + $0x1f8] sm:$0xff]
      %v2944 = vld [vmem:[%s2879 + $0x200] sm:$0xff]
      %v2945 = vld [vmem:[%s2879 + $0x208] sm:$0xff]
      %v2946 = vld [vmem:[%s2879 + $0x210] sm:$0xff]
      %v2947 = vld [vmem:[%s2879 + $0x218] sm:$0xff]
      %v2948 = vld [vmem:[%s2879 + $0x220] sm:$0xff]
      %v2949 = vld [vmem:[%s2879 + $0x228] sm:$0xff]
      %v2950 = vld [vmem:[%s2879 + $0x230] sm:$0xff]
      %v2951 = vld [vmem:[%s2879 + $0x238] sm:$0xff]
      %v2952 = vld [vmem:[%s2879 + $0x240] sm:$0xff]
      %v2953 = vld [vmem:[%s2879 + $0x248] sm:$0xff]
      %v2954 = vld [vmem:[%s2879 + $0x250] sm:$0xff]
      %v2955 = vld [vmem:[%s2879 + $0x258] sm:$0xff]
      %v2956 = vld [vmem:[%s2879 + $0x260] sm:$0xff]
      %v2957 = vld [vmem:[%s2879 + $0x268] sm:$0xff]
      %v2958 = vld [vmem:[%s2879 + $0x270] sm:$0xff]
      %v2959 = vld [vmem:[%s2879 + $0x278] sm:$0xff]
      %v2960 = vld [vmem:[%s2879 + $0x280] sm:$0xff]
      %v2961 = vld [vmem:[%s2879 + $0x288] sm:$0xff]
      %v2962 = vld [vmem:[%s2879 + $0x290] sm:$0xff]
      %v2963 = vld [vmem:[%s2879 + $0x298] sm:$0xff]
      %v2964 = vld [vmem:[%s2879 + $0x2a0] sm:$0xff]
      %v2965 = vld [vmem:[%s2879 + $0x2a8] sm:$0xff]
      %v2966 = vld [vmem:[%s2879 + $0x2b0] sm:$0xff]
      %v2967 = vld [vmem:[%s2879 + $0x2b8] sm:$0xff]
      %v2968 = vld [vmem:[%s2879 + $0x2c0] sm:$0xff]
      %v2969 = vld [vmem:[%s2879 + $0x2c8] sm:$0xff]
      %v2970 = vld [vmem:[%s2879 + $0x2d0] sm:$0xff]
      %v2971 = vld [vmem:[%s2879 + $0x2d8] sm:$0xff]
      %v2972 = vld [vmem:[%s2879 + $0x2e0] sm:$0xff]
      %v2973 = vld [vmem:[%s2879 + $0x2e8] sm:$0xff]
      %v2974 = vld [vmem:[%s2879 + $0x2f0] sm:$0xff]
      %v2975 = vld [vmem:[%s2879 + $0x2f8] sm:$0xff]
      %v2976 = vld [vmem:[%s2879 + $0x300] sm:$0xff]
      %v2977 = vld [vmem:[%s2879 + $0x308] sm:$0xff]
      %v2978 = vld [vmem:[%s2879 + $0x310] sm:$0xff]
      %v2979 = vld [vmem:[%s2879 + $0x318] sm:$0xff]
      %v2980 = vld [vmem:[%s2879 + $0x320] sm:$0xff]
      %v2981 = vld [vmem:[%s2879 + $0x328] sm:$0xff]
      %v2982 = vld [vmem:[%s2879 + $0x330] sm:$0xff]
      %v2983 = vld [vmem:[%s2879 + $0x338] sm:$0xff]
      %v2984 = vld [vmem:[%s2879 + $0x340] sm:$0xff]
      %v2985 = vld [vmem:[%s2879 + $0x348] sm:$0xff]
      %v2986 = vld [vmem:[%s2879 + $0x350] sm:$0xff]
      %v2987 = vld [vmem:[%s2879 + $0x358] sm:$0xff]
      %v2988 = vld [vmem:[%s2879 + $0x360] sm:$0xff]
      %v2989 = vld [vmem:[%s2879 + $0x368] sm:$0xff]
      %v2990 = vld [vmem:[%s2879 + $0x370] sm:$0xff]
      %v2991 = vld [vmem:[%s2879 + $0x378] sm:$0xff]
      %v2992 = vld [vmem:[%s2879 + $0x380] sm:$0xff]
      %v2993 = vld [vmem:[%s2879 + $0x388] sm:$0xff]
      %v2994 = vld [vmem:[%s2879 + $0x390] sm:$0xff]
      %v2995 = vld [vmem:[%s2879 + $0x398] sm:$0xff]
      %v2996 = vld [vmem:[%s2879 + $0x3a0] sm:$0xff]
      %v2997 = vld [vmem:[%s2879 + $0x3a8] sm:$0xff]
      %v2998 = vld [vmem:[%s2879 + $0x3b0] sm:$0xff]
      %v2999 = vld [vmem:[%s2879 + $0x3b8] sm:$0xff]
      %v3000 = vld [vmem:[%s2879 + $0x3c0] sm:$0xff]
      %v3001 = vld [vmem:[%s2879 + $0x3c8] sm:$0xff]
      %v3002 = vld [vmem:[%s2879 + $0x3d0] sm:$0xff]
      %v3003 = vld [vmem:[%s2879 + $0x3d8] sm:$0xff]
      %v3004 = vld [vmem:[%s2879 + $0x3e0] sm:$0xff]
      %v3005 = vld [vmem:[%s2879 + $0x3e8] sm:$0xff]
      %v3006 = vld [vmem:[%s2879 + $0x3f0] sm:$0xff]
      %v3007 = vld [vmem:[%s2879 + $0x3f8] sm:$0xff]
      %v3008 = vld [vmem:[%s2879 + $0x400] sm:$0xff]
      %v3009 = vld [vmem:[%s2879 + $0x408] sm:$0xff]
      %v3010 = vld [vmem:[%s2879 + $0x410] sm:$0xff]
      %v3011 = vld [vmem:[%s2879 + $0x418] sm:$0xff]
      %v3012 = vld [vmem:[%s2879 + $0x420] sm:$0xff]
      %v3013 = vld [vmem:[%s2879 + $0x428] sm:$0xff]
      %v3014 = vld [vmem:[%s2879 + $0x430] sm:$0xff]
      %v3015 = vld [vmem:[%s2879 + $0x438] sm:$0xff]
      %v3016 = vld [vmem:[%s2879 + $0x440] sm:$0xff]
      %v3017 = vld [vmem:[%s2879 + $0x448] sm:$0xff]
      %v3018 = vld [vmem:[%s2879 + $0x450] sm:$0xff]
      %v3019 = vld [vmem:[%s2879 + $0x458] sm:$0xff]
      %v3020 = vld [vmem:[%s2879 + $0x460] sm:$0xff]
      %v3021 = vld [vmem:[%s2879 + $0x468] sm:$0xff]
      %v3022 = vld [vmem:[%s2879 + $0x470] sm:$0xff]
      %v3023 = vld [vmem:[%s2879 + $0x478] sm:$0xff]
      %v3024 = vld [vmem:[%s2879 + $0x480] sm:$0xff]
      %v3025 = vld [vmem:[%s2879 + $0x488] sm:$0xff]
      %v3026 = vld [vmem:[%s2879 + $0x490] sm:$0xff]
      %v3027 = vld [vmem:[%s2879 + $0x498] sm:$0xff]
      %v3028 = vld [vmem:[%s2879 + $0x4a0] sm:$0xff]
      %v3029 = vld [vmem:[%s2879 + $0x4a8] sm:$0xff]
      %v3030 = vld [vmem:[%s2879 + $0x4b0] sm:$0xff]
      %v3031 = vld [vmem:[%s2879 + $0x4b8] sm:$0xff]
      %v3032 = vld [vmem:[%s2879 + $0x4c0] sm:$0xff]
      %v3033 = vld [vmem:[%s2879 + $0x4c8] sm:$0xff]
      %v3034 = vld [vmem:[%s2879 + $0x4d0] sm:$0xff]
      %v3035 = vld [vmem:[%s2879 + $0x4d8] sm:$0xff]
      %v3036 = vld [vmem:[%s2879 + $0x4e0] sm:$0xff]
      %v3037 = vld [vmem:[%s2879 + $0x4e8] sm:$0xff]
      %v3038 = vld [vmem:[%s2879 + $0x4f0] sm:$0xff]
      %v3039 = vld [vmem:[%s2879 + $0x4f8] sm:$0xff]
      %v3040 = vld [vmem:[%s2879 + $0x500] sm:$0xff]
      %v3041 = vld [vmem:[%s2879 + $0x508] sm:$0xff]
      %v3042 = vld [vmem:[%s2879 + $0x510] sm:$0xff]
      %v3043 = vld [vmem:[%s2879 + $0x518] sm:$0xff]
      %v3044 = vld [vmem:[%s2879 + $0x520] sm:$0xff]
      %v3045 = vld [vmem:[%s2879 + $0x528] sm:$0xff]
      %v3046 = vld [vmem:[%s2879 + $0x530] sm:$0xff]
      %v3047 = vld [vmem:[%s2879 + $0x538] sm:$0xff]
      %v3048 = vld [vmem:[%s2879 + $0x540] sm:$0xff]
      %v3049 = vld [vmem:[%s2879 + $0x548] sm:$0xff]
      %v3050 = vld [vmem:[%s2879 + $0x550] sm:$0xff]
      %v3051 = vld [vmem:[%s2879 + $0x558] sm:$0xff]
      %v3052 = vld [vmem:[%s2879 + $0x560] sm:$0xff]
      %v3053 = vld [vmem:[%s2879 + $0x568] sm:$0xff]
      %v3054 = vld [vmem:[%s2879 + $0x570] sm:$0xff]
      %v3055 = vld [vmem:[%s2879 + $0x578] sm:$0xff]
      %v3056 = vld [vmem:[%s2879 + $0x580] sm:$0xff]
      %v3057 = vld [vmem:[%s2879 + $0x588] sm:$0xff]
      %v3058 = vld [vmem:[%s2879 + $0x590] sm:$0xff]
      %v3059 = vld [vmem:[%s2879 + $0x598] sm:$0xff]
      %v3060 = vld [vmem:[%s2879 + $0x5a0] sm:$0xff]
      %v3061 = vld [vmem:[%s2879 + $0x5a8] sm:$0xff]
      %v3062 = vld [vmem:[%s2879 + $0x5b0] sm:$0xff]
      %v3063 = vld [vmem:[%s2879 + $0x5b8] sm:$0xff]
      %v3064 = vld [vmem:[%s2879 + $0x5c0] sm:$0xff]
      %v3065 = vld [vmem:[%s2879 + $0x5c8] sm:$0xff]
      %v3066 = vld [vmem:[%s2879 + $0x5d0] sm:$0xff]
      %v3067 = vld [vmem:[%s2879 + $0x5d8] sm:$0xff]
      %v3068 = vld [vmem:[%s2879 + $0x5e0] sm:$0xff]
      %v3069 = vld [vmem:[%s2879 + $0x5e8] sm:$0xff]
      %v3070 = vld [vmem:[%s2879 + $0x5f0] sm:$0xff]
      %v3071 = vld [vmem:[%s2879 + $0x5f8] sm:$0xff]
      %v3072 = vld [vmem:[%s2879 + $0x600] sm:$0xff]
      %v3073 = vld [vmem:[%s2879 + $0x608] sm:$0xff]
      %v3074 = vld [vmem:[%s2879 + $0x610] sm:$0xff]
      %v3075 = vld [vmem:[%s2879 + $0x618] sm:$0xff]
      %v3076 = vld [vmem:[%s2879 + $0x620] sm:$0xff]
      %v3077 = vld [vmem:[%s2879 + $0x628] sm:$0xff]
      %v3078 = vld [vmem:[%s2879 + $0x630] sm:$0xff]
      %v3079 = vld [vmem:[%s2879 + $0x638] sm:$0xff]
      %v3080 = vld [vmem:[%s2879 + $0x640] sm:$0xff]
      %v3081 = vld [vmem:[%s2879 + $0x648] sm:$0xff]
      %v3082 = vld [vmem:[%s2879 + $0x650] sm:$0xff]
      %v3083 = vld [vmem:[%s2879 + $0x658] sm:$0xff]
      %v3084 = vld [vmem:[%s2879 + $0x660] sm:$0xff]
      %v3085 = vld [vmem:[%s2879 + $0x668] sm:$0xff]
      %v3086 = vld [vmem:[%s2879 + $0x670] sm:$0xff]
      %v3087 = vld [vmem:[%s2879 + $0x678] sm:$0xff]
      %v3088 = vld [vmem:[%s2879 + $0x680] sm:$0xff]
      %v3089 = vld [vmem:[%s2879 + $0x688] sm:$0xff]
      %v3090 = vld [vmem:[%s2879 + $0x690] sm:$0xff]
      %v3091 = vld [vmem:[%s2879 + $0x698] sm:$0xff]
      %v3092 = vld [vmem:[%s2879 + $0x6a0] sm:$0xff]
      %v3093 = vld [vmem:[%s2879 + $0x6a8] sm:$0xff]
      %v3094 = vld [vmem:[%s2879 + $0x6b0] sm:$0xff]
      %v3095 = vld [vmem:[%s2879 + $0x6b8] sm:$0xff]
      %v3096 = vld [vmem:[%s2879 + $0x6c0] sm:$0xff]
      %v3097 = vld [vmem:[%s2879 + $0x6c8] sm:$0xff]
      %v3098 = vld [vmem:[%s2879 + $0x6d0] sm:$0xff]
      %v3099 = vld [vmem:[%s2879 + $0x6d8] sm:$0xff]
      %v3100 = vld [vmem:[%s2879 + $0x6e0] sm:$0xff]
      %v3101 = vld [vmem:[%s2879 + $0x6e8] sm:$0xff]
      %v3102 = vld [vmem:[%s2879 + $0x6f0] sm:$0xff]
      %v3103 = vld [vmem:[%s2879 + $0x6f8] sm:$0xff]
      %v3104 = vld [vmem:[%s2879 + $0x700] sm:$0xff]
      %v3105 = vld [vmem:[%s2879 + $0x708] sm:$0xff]
      %v3106 = vld [vmem:[%s2879 + $0x710] sm:$0xff]
      %v3107 = vld [vmem:[%s2879 + $0x718] sm:$0xff]
      %v3108 = vld [vmem:[%s2879 + $0x720] sm:$0xff]
      %v3109 = vld [vmem:[%s2879 + $0x728] sm:$0xff]
      %v3110 = vld [vmem:[%s2879 + $0x730] sm:$0xff]
      %v3111 = vld [vmem:[%s2879 + $0x738] sm:$0xff]
      %v3112 = vld [vmem:[%s2879 + $0x740] sm:$0xff]
      %v3113 = vld [vmem:[%s2879 + $0x748] sm:$0xff]
      %v3114 = vld [vmem:[%s2879 + $0x750] sm:$0xff]
      %v3115 = vld [vmem:[%s2879 + $0x758] sm:$0xff]
      %v3116 = vld [vmem:[%s2879 + $0x760] sm:$0xff]
      %v3117 = vld [vmem:[%s2879 + $0x768] sm:$0xff]
      %v3118 = vld [vmem:[%s2879 + $0x770] sm:$0xff]
      %v3119 = vld [vmem:[%s2879 + $0x778] sm:$0xff]
      %v3120 = vld [vmem:[%s2879 + $0x780] sm:$0xff]
      %v3121 = vld [vmem:[%s2879 + $0x788] sm:$0xff]
      %v3122 = vld [vmem:[%s2879 + $0x790] sm:$0xff]
      %v3123 = vld [vmem:[%s2879 + $0x798] sm:$0xff]
      %v3124 = vld [vmem:[%s2879 + $0x7a0] sm:$0xff]
      %v3125 = vld [vmem:[%s2879 + $0x7a8] sm:$0xff]
      %v3126 = vld [vmem:[%s2879 + $0x7b0] sm:$0xff]
      %v3127 = vld [vmem:[%s2879 + $0x7b8] sm:$0xff]
      %v3128 = vld [vmem:[%s2879 + $0x7c0] sm:$0xff]
      %v3129 = vld [vmem:[%s2879 + $0x7c8] sm:$0xff]
      %v3130 = vld [vmem:[%s2879 + $0x7d0] sm:$0xff]
      %v3131 = vld [vmem:[%s2879 + $0x7d8] sm:$0xff]
      %v3132 = vld [vmem:[%s2879 + $0x7e0] sm:$0xff]
      %v3133 = vld [vmem:[%s2879 + $0x7e8] sm:$0xff]
      %v3134 = vld [vmem:[%s2879 + $0x7f0] sm:$0xff]
      %v3135 = vld [vmem:[%s2879 + $0x7f8] sm:$0xff]
      %3136 = vmatprep.subr.mxu0 %v2881
      %3137 = vmatpush1.msra.mxu0 %v2880
      %3138 = vmatprep.subr.mxu0 %v2889
      %3139 = vmatpush1.msra.mxu0 %v2888
      %3140 = vmatprep.subr.mxu0 %v2897
      %3141 = vmatpush1.msra.mxu0 %v2896
      %3142 = vmatprep.subr.mxu0 %v2905
      %3143 = vmatpush1.msra.mxu0 %v2904
      %3144 = vmatprep.subr.mxu0 %v2913
      %3145 = vmatpush1.msra.mxu0 %v2912
      %3146 = vmatprep.subr.mxu0 %v2921
      %3147 = vmatpush1.msra.mxu0 %v2920
      %3148 = vmatprep.subr.mxu0 %v2929
      %3149 = vmatpush1.msra.mxu0 %v2928
      %3150 = vmatprep.subr.mxu0 %v2937
      %3151 = vmatpush1.msra.mxu0 %v2936
      %3152 = vmatprep.subr.mxu0 %v2945
      %3153 = vmatpush1.msra.mxu0 %v2944
      %3154 = vmatprep.subr.mxu0 %v2953
      %3155 = vmatpush1.msra.mxu0 %v2952
      %3156 = vmatprep.subr.mxu0 %v2961
      %3157 = vmatpush1.msra.mxu0 %v2960
      %3158 = vmatprep.subr.mxu0 %v2969
      %3159 = vmatpush1.msra.mxu0 %v2968
      %3160 = vmatprep.subr.mxu0 %v2977
      %3161 = vmatpush1.msra.mxu0 %v2976
      %3162 = vmatprep.subr.mxu0 %v2985
      %3163 = vmatpush1.msra.mxu0 %v2984
      %3164 = vmatprep.subr.mxu0 %v2993
      %3165 = vmatpush1.msra.mxu0 %v2992
      %3166 = vmatprep.subr.mxu0 %v3001
      %3167 = vmatpush1.msra.mxu0 %v3000
      %3168 = vmatprep.subr.mxu0 %v3009
      %3169 = vmatpush1.msra.mxu0 %v3008
      %3170 = vmatprep.subr.mxu0 %v3017
      %3171 = vmatpush1.msra.mxu0 %v3016
      %3172 = vmatprep.subr.mxu0 %v3025
      %3173 = vmatpush1.msra.mxu0 %v3024
      %3174 = vmatprep.subr.mxu0 %v3033
      %3175 = vmatpush1.msra.mxu0 %v3032
      %3176 = vmatprep.subr.mxu0 %v3041
      %3177 = vmatpush1.msra.mxu0 %v3040
      %3178 = vmatprep.subr.mxu0 %v3049
      %3179 = vmatpush1.msra.mxu0 %v3048
      %3180 = vmatprep.subr.mxu0 %v3057
      %3181 = vmatpush1.msra.mxu0 %v3056
      %3182 = vmatprep.subr.mxu0 %v3065
      %3183 = vmatpush1.msra.mxu0 %v3064
      %3184 = vmatprep.subr.mxu0 %v3073
      %3185 = vmatpush1.msra.mxu0 %v3072
      %3186 = vmatprep.subr.mxu0 %v3081
      %3187 = vmatpush1.msra.mxu0 %v3080
      %3188 = vmatprep.subr.mxu0 %v3089
      %3189 = vmatpush1.msra.mxu0 %v3088
      %3190 = vmatprep.subr.mxu0 %v3097
      %3191 = vmatpush1.msra.mxu0 %v3096
      %3192 = vmatprep.subr.mxu0 %v3105
      %3193 = vmatpush1.msra.mxu0 %v3104
      %3194 = vmatprep.subr.mxu0 %v3113
      %3195 = vmatpush1.msra.mxu0 %v3112
      %3196 = vmatprep.subr.mxu0 %v3121
      %3197 = vmatpush1.msra.mxu0 %v3120
      %3198 = vmatprep.subr.mxu0 %v3129
      %3199 = vmatpush1.msra.mxu0 %v3128
      %3200 = vmatprep.mubr.f32.mxu0 %v429
      %3201 = vmatmul.mubr.f32.gmra.mrb[0].mxu0 %v171
      %v3202 = vpop.f32.mrb[0].mxu0
      %v3203 = vadd.f32 0.0, %v3202
      %v3204 = vpop.f32.mrb[0].mxu0
      %v3205 = vadd.f32 0.0, %v3204
      %3206 = vdwg.mxu0
      %3207 = vmatprep.subr.mxu0 %v2883
      %3208 = vmatpush1.msra.mxu0 %v2882
      %3209 = vmatprep.subr.mxu0 %v2891
      %3210 = vmatpush1.msra.mxu0 %v2890
      %3211 = vmatprep.subr.mxu0 %v2899
      %3212 = vmatpush1.msra.mxu0 %v2898
      %3213 = vmatprep.subr.mxu0 %v2907
      %3214 = vmatpush1.msra.mxu0 %v2906
      %3215 = vmatprep.subr.mxu0 %v2915
      %3216 = vmatpush1.msra.mxu0 %v2914
      %3217 = vmatprep.subr.mxu0 %v2923
      %3218 = vmatpush1.msra.mxu0 %v2922
      %3219 = vmatprep.subr.mxu0 %v2931
      %3220 = vmatpush1.msra.mxu0 %v2930
      %3221 = vmatprep.subr.mxu0 %v2939
      %3222 = vmatpush1.msra.mxu0 %v2938
      %3223 = vmatprep.subr.mxu0 %v2947
      %3224 = vmatpush1.msra.mxu0 %v2946
      %3225 = vmatprep.subr.mxu0 %v2955
      %3226 = vmatpush1.msra.mxu0 %v2954
      %3227 = vmatprep.subr.mxu0 %v2963
      %3228 = vmatpush1.msra.mxu0 %v2962
      %3229 = vmatprep.subr.mxu0 %v2971
      %3230 = vmatpush1.msra.mxu0 %v2970
      %3231 = vmatprep.subr.mxu0 %v2979
      %3232 = vmatpush1.msra.mxu0 %v2978
      %3233 = vmatprep.subr.mxu0 %v2987
      %3234 = vmatpush1.msra.mxu0 %v2986
      %3235 = vmatprep.subr.mxu0 %v2995
      %3236 = vmatpush1.msra.mxu0 %v2994
      %3237 = vmatprep.subr.mxu0 %v3003
      %3238 = vmatpush1.msra.mxu0 %v3002
      %3239 = vmatprep.subr.mxu0 %v3011
      %3240 = vmatpush1.msra.mxu0 %v3010
      %3241 = vmatprep.subr.mxu0 %v3019
      %3242 = vmatpush1.msra.mxu0 %v3018
      %3243 = vmatprep.subr.mxu0 %v3027
      %3244 = vmatpush1.msra.mxu0 %v3026
      %3245 = vmatprep.subr.mxu0 %v3035
      %3246 = vmatpush1.msra.mxu0 %v3034
      %3247 = vmatprep.subr.mxu0 %v3043
      %3248 = vmatpush1.msra.mxu0 %v3042
      %3249 = vmatprep.subr.mxu0 %v3051
      %3250 = vmatpush1.msra.mxu0 %v3050
      %3251 = vmatprep.subr.mxu0 %v3059
      %3252 = vmatpush1.msra.mxu0 %v3058
      %3253 = vmatprep.subr.mxu0 %v3067
      %3254 = vmatpush1.msra.mxu0 %v3066
      %3255 = vmatprep.subr.mxu0 %v3075
      %3256 = vmatpush1.msra.mxu0 %v3074
      %3257 = vmatprep.subr.mxu0 %v3083
      %3258 = vmatpush1.msra.mxu0 %v3082
      %3259 = vmatprep.subr.mxu0 %v3091
      %3260 = vmatpush1.msra.mxu0 %v3090
      %3261 = vmatprep.subr.mxu0 %v3099
      %3262 = vmatpush1.msra.mxu0 %v3098
      %3263 = vmatprep.subr.mxu0 %v3107
      %3264 = vmatpush1.msra.mxu0 %v3106
      %3265 = vmatprep.subr.mxu0 %v3115
      %3266 = vmatpush1.msra.mxu0 %v3114
      %3267 = vmatprep.subr.mxu0 %v3123
      %3268 = vmatpush1.msra.mxu0 %v3122
      %3269 = vmatprep.subr.mxu0 %v3131
      %3270 = vmatpush1.msra.mxu0 %v3130
      %3271 = vmatprep.mubr.f32.mxu0 %v429
      %3272 = vmatmul.mubr.f32.gmra.mrb[0].mxu0 %v171
      %v3273 = vpop.f32.mrb[0].mxu0
      %v3274 = vadd.f32 0.0, %v3273
      %v3275 = vpop.f32.mrb[0].mxu0
      %v3276 = vadd.f32 0.0, %v3275
      %3277 = vdwg.mxu0
      %3278 = vmatprep.subr.mxu0 %v2885
      %3279 = vmatpush1.msra.mxu0 %v2884
      %3280 = vmatprep.subr.mxu0 %v2893
      %3281 = vmatpush1.msra.mxu0 %v2892
      %3282 = vmatprep.subr.mxu0 %v2901
      %3283 = vmatpush1.msra.mxu0 %v2900
      %3284 = vmatprep.subr.mxu0 %v2909
      %3285 = vmatpush1.msra.mxu0 %v2908
      %3286 = vmatprep.subr.mxu0 %v2917
      %3287 = vmatpush1.msra.mxu0 %v2916
      %3288 = vmatprep.subr.mxu0 %v2925
      %3289 = vmatpush1.msra.mxu0 %v2924
      %3290 = vmatprep.subr.mxu0 %v2933
      %3291 = vmatpush1.msra.mxu0 %v2932
      %3292 = vmatprep.subr.mxu0 %v2941
      %3293 = vmatpush1.msra.mxu0 %v2940
      %3294 = vmatprep.subr.mxu0 %v2949
      %3295 = vmatpush1.msra.mxu0 %v2948
      %3296 = vmatprep.subr.mxu0 %v2957
      %3297 = vmatpush1.msra.mxu0 %v2956
      %3298 = vmatprep.subr.mxu0 %v2965
      %3299 = vmatpush1.msra.mxu0 %v2964
      %3300 = vmatprep.subr.mxu0 %v2973
      %3301 = vmatpush1.msra.mxu0 %v2972
      %3302 = vmatprep.subr.mxu0 %v2981
      %3303 = vmatpush1.msra.mxu0 %v2980
      %3304 = vmatprep.subr.mxu0 %v2989
      %3305 = vmatpush1.msra.mxu0 %v2988
      %3306 = vmatprep.subr.mxu0 %v2997
      %3307 = vmatpush1.msra.mxu0 %v2996
      %3308 = vmatprep.subr.mxu0 %v3005
      %3309 = vmatpush1.msra.mxu0 %v3004
      %3310 = vmatprep.subr.mxu0 %v3013
      %3311 = vmatpush1.msra.mxu0 %v3012
      %3312 = vmatprep.subr.mxu0 %v3021
      %3313 = vmatpush1.msra.mxu0 %v3020
      %3314 = vmatprep.subr.mxu0 %v3029
      %3315 = vmatpush1.msra.mxu0 %v3028
      %3316 = vmatprep.subr.mxu0 %v3037
      %3317 = vmatpush1.msra.mxu0 %v3036
      %3318 = vmatprep.subr.mxu0 %v3045
      %3319 = vmatpush1.msra.mxu0 %v3044
      %3320 = vmatprep.subr.mxu0 %v3053
      %3321 = vmatpush1.msra.mxu0 %v3052
      %3322 = vmatprep.subr.mxu0 %v3061
      %3323 = vmatpush1.msra.mxu0 %v3060
      %3324 = vmatprep.subr.mxu0 %v3069
      %3325 = vmatpush1.msra.mxu0 %v3068
      %3326 = vmatprep.subr.mxu0 %v3077
      %3327 = vmatpush1.msra.mxu0 %v3076
      %3328 = vmatprep.subr.mxu0 %v3085
      %3329 = vmatpush1.msra.mxu0 %v3084
      %3330 = vmatprep.subr.mxu0 %v3093
      %3331 = vmatpush1.msra.mxu0 %v3092
      %3332 = vmatprep.subr.mxu0 %v3101
      %3333 = vmatpush1.msra.mxu0 %v3100
      %3334 = vmatprep.subr.mxu0 %v3109
      %3335 = vmatpush1.msra.mxu0 %v3108
      %3336 = vmatprep.subr.mxu0 %v3117
      %3337 = vmatpush1.msra.mxu0 %v3116
      %3338 = vmatprep.subr.mxu0 %v3125
      %3339 = vmatpush1.msra.mxu0 %v3124
      %3340 = vmatprep.subr.mxu0 %v3133
      %3341 = vmatpush1.msra.mxu0 %v3132
      %3342 = vmatprep.mubr.f32.mxu0 %v429
      %3343 = vmatmul.mubr.f32.gmra.mrb[0].mxu0 %v171
      %v3344 = vpop.f32.mrb[0].mxu0
      %v3345 = vadd.f32 0.0, %v3344
      %v3346 = vpop.f32.mrb[0].mxu0
      %v3347 = vadd.f32 0.0, %v3346
      %3348 = vdwg.mxu0
      %3349 = vmatprep.subr.mxu0 %v2887
      %3350 = vmatpush1.msra.mxu0 %v2886
      %3351 = vmatprep.subr.mxu0 %v2895
      %3352 = vmatpush1.msra.mxu0 %v2894
      %3353 = vmatprep.subr.mxu0 %v2903
      %3354 = vmatpush1.msra.mxu0 %v2902
      %3355 = vmatprep.subr.mxu0 %v2911
      %3356 = vmatpush1.msra.mxu0 %v2910
      %3357 = vmatprep.subr.mxu0 %v2919
      %3358 = vmatpush1.msra.mxu0 %v2918
      %3359 = vmatprep.subr.mxu0 %v2927
      %3360 = vmatpush1.msra.mxu0 %v2926
      %3361 = vmatprep.subr.mxu0 %v2935
      %3362 = vmatpush1.msra.mxu0 %v2934
      %3363 = vmatprep.subr.mxu0 %v2943
      %3364 = vmatpush1.msra.mxu0 %v2942
      %3365 = vmatprep.subr.mxu0 %v2951
      %3366 = vmatpush1.msra.mxu0 %v2950
      %3367 = vmatprep.subr.mxu0 %v2959
      %3368 = vmatpush1.msra.mxu0 %v2958
      %3369 = vmatprep.subr.mxu0 %v2967
      %3370 = vmatpush1.msra.mxu0 %v2966
      %3371 = vmatprep.subr.mxu0 %v2975
      %3372 = vmatpush1.msra.mxu0 %v2974
      %3373 = vmatprep.subr.mxu0 %v2983
      %3374 = vmatpush1.msra.mxu0 %v2982
      %3375 = vmatprep.subr.mxu0 %v2991
      %3376 = vmatpush1.msra.mxu0 %v2990
      %3377 = vmatprep.subr.mxu0 %v2999
      %3378 = vmatpush1.msra.mxu0 %v2998
      %3379 = vmatprep.subr.mxu0 %v3007
      %3380 = vmatpush1.msra.mxu0 %v3006
      %3381 = vmatprep.subr.mxu0 %v3015
      %3382 = vmatpush1.msra.mxu0 %v3014
      %3383 = vmatprep.subr.mxu0 %v3023
      %3384 = vmatpush1.msra.mxu0 %v3022
      %3385 = vmatprep.subr.mxu0 %v3031
      %3386 = vmatpush1.msra.mxu0 %v3030
      %3387 = vmatprep.subr.mxu0 %v3039
      %3388 = vmatpush1.msra.mxu0 %v3038
      %3389 = vmatprep.subr.mxu0 %v3047
      %3390 = vmatpush1.msra.mxu0 %v3046
      %3391 = vmatprep.subr.mxu0 %v3055
      %3392 = vmatpush1.msra.mxu0 %v3054
      %3393 = vmatprep.subr.mxu0 %v3063
      %3394 = vmatpush1.msra.mxu0 %v3062
      %3395 = vmatprep.subr.mxu0 %v3071
      %3396 = vmatpush1.msra.mxu0 %v3070
      %3397 = vmatprep.subr.mxu0 %v3079
      %3398 = vmatpush1.msra.mxu0 %v3078
      %3399 = vmatprep.subr.mxu0 %v3087
      %3400 = vmatpush1.msra.mxu0 %v3086
      %3401 = vmatprep.subr.mxu0 %v3095
      %3402 = vmatpush1.msra.mxu0 %v3094
      %3403 = vmatprep.subr.mxu0 %v3103
      %3404 = vmatpush1.msra.mxu0 %v3102
      %3405 = vmatprep.subr.mxu0 %v3111
      %3406 = vmatpush1.msra.mxu0 %v3110
      %3407 = vmatprep.subr.mxu0 %v3119
      %3408 = vmatpush1.msra.mxu0 %v3118
      %3409 = vmatprep.subr.mxu0 %v3127
      %3410 = vmatpush1.msra.mxu0 %v3126
      %3411 = vmatprep.subr.mxu0 %v3135
      %3412 = vmatpush1.msra.mxu0 %v3134
      %3413 = vmatprep.mubr.f32.mxu0 %v429
      %3414 = vmatmul.mubr.f32.gmra.mrb[0].mxu0 %v171
      %v3415 = vpop.f32.mrb[0].mxu0
      %v3416 = vadd.f32 0.0, %v3415
      %v3417 = vpop.f32.mrb[0].mxu0
      %v3418 = vadd.f32 0.0, %v3417
      %3419 = vdwg.mxu0
      %s3420 = scalar_lea.vmem %s1, 12288
      %v3421 = vld [vmem:[%s3420] sm:$0xff]
      %v3422 = vld [vmem:[%s3420 + $0x8] sm:$0xff]
      %v3423 = vld [vmem:[%s3420 + $0x10] sm:$0xff]
      %v3424 = vld [vmem:[%s3420 + $0x18] sm:$0xff]
      %v3425 = vld [vmem:[%s3420 + $0x20] sm:$0xff]
      %v3426 = vld [vmem:[%s3420 + $0x28] sm:$0xff]
      %v3427 = vld [vmem:[%s3420 + $0x30] sm:$0xff]
      %v3428 = vld [vmem:[%s3420 + $0x38] sm:$0xff]
      %v3429 = vld [vmem:[%s3420 + $0x40] sm:$0xff]
      %v3430 = vld [vmem:[%s3420 + $0x48] sm:$0xff]
      %v3431 = vld [vmem:[%s3420 + $0x50] sm:$0xff]
      %v3432 = vld [vmem:[%s3420 + $0x58] sm:$0xff]
      %v3433 = vld [vmem:[%s3420 + $0x60] sm:$0xff]
      %v3434 = vld [vmem:[%s3420 + $0x68] sm:$0xff]
      %v3435 = vld [vmem:[%s3420 + $0x70] sm:$0xff]
      %v3436 = vld [vmem:[%s3420 + $0x78] sm:$0xff]
      %v3437 = vld [vmem:[%s3420 + $0x80] sm:$0xff]
      %v3438 = vld [vmem:[%s3420 + $0x88] sm:$0xff]
      %v3439 = vld [vmem:[%s3420 + $0x90] sm:$0xff]
      %v3440 = vld [vmem:[%s3420 + $0x98] sm:$0xff]
      %v3441 = vld [vmem:[%s3420 + $0xa0] sm:$0xff]
      %v3442 = vld [vmem:[%s3420 + $0xa8] sm:$0xff]
      %v3443 = vld [vmem:[%s3420 + $0xb0] sm:$0xff]
      %v3444 = vld [vmem:[%s3420 + $0xb8] sm:$0xff]
      %v3445 = vld [vmem:[%s3420 + $0xc0] sm:$0xff]
      %v3446 = vld [vmem:[%s3420 + $0xc8] sm:$0xff]
      %v3447 = vld [vmem:[%s3420 + $0xd0] sm:$0xff]
      %v3448 = vld [vmem:[%s3420 + $0xd8] sm:$0xff]
      %v3449 = vld [vmem:[%s3420 + $0xe0] sm:$0xff]
      %v3450 = vld [vmem:[%s3420 + $0xe8] sm:$0xff]
      %v3451 = vld [vmem:[%s3420 + $0xf0] sm:$0xff]
      %v3452 = vld [vmem:[%s3420 + $0xf8] sm:$0xff]
      %v3453 = vld [vmem:[%s3420 + $0x100] sm:$0xff]
      %v3454 = vld [vmem:[%s3420 + $0x108] sm:$0xff]
      %v3455 = vld [vmem:[%s3420 + $0x110] sm:$0xff]
      %v3456 = vld [vmem:[%s3420 + $0x118] sm:$0xff]
      %v3457 = vld [vmem:[%s3420 + $0x120] sm:$0xff]
      %v3458 = vld [vmem:[%s3420 + $0x128] sm:$0xff]
      %v3459 = vld [vmem:[%s3420 + $0x130] sm:$0xff]
      %v3460 = vld [vmem:[%s3420 + $0x138] sm:$0xff]
      %v3461 = vld [vmem:[%s3420 + $0x140] sm:$0xff]
      %v3462 = vld [vmem:[%s3420 + $0x148] sm:$0xff]
      %v3463 = vld [vmem:[%s3420 + $0x150] sm:$0xff]
      %v3464 = vld [vmem:[%s3420 + $0x158] sm:$0xff]
      %v3465 = vld [vmem:[%s3420 + $0x160] sm:$0xff]
      %v3466 = vld [vmem:[%s3420 + $0x168] sm:$0xff]
      %v3467 = vld [vmem:[%s3420 + $0x170] sm:$0xff]
      %v3468 = vld [vmem:[%s3420 + $0x178] sm:$0xff]
      %v3469 = vld [vmem:[%s3420 + $0x180] sm:$0xff]
      %v3470 = vld [vmem:[%s3420 + $0x188] sm:$0xff]
      %v3471 = vld [vmem:[%s3420 + $0x190] sm:$0xff]
      %v3472 = vld [vmem:[%s3420 + $0x198] sm:$0xff]
      %v3473 = vld [vmem:[%s3420 + $0x1a0] sm:$0xff]
      %v3474 = vld [vmem:[%s3420 + $0x1a8] sm:$0xff]
      %v3475 = vld [vmem:[%s3420 + $0x1b0] sm:$0xff]
      %v3476 = vld [vmem:[%s3420 + $0x1b8] sm:$0xff]
      %v3477 = vld [vmem:[%s3420 + $0x1c0] sm:$0xff]
      %v3478 = vld [vmem:[%s3420 + $0x1c8] sm:$0xff]
      %v3479 = vld [vmem:[%s3420 + $0x1d0] sm:$0xff]
      %v3480 = vld [vmem:[%s3420 + $0x1d8] sm:$0xff]
      %v3481 = vld [vmem:[%s3420 + $0x1e0] sm:$0xff]
      %v3482 = vld [vmem:[%s3420 + $0x1e8] sm:$0xff]
      %v3483 = vld [vmem:[%s3420 + $0x1f0] sm:$0xff]
      %v3484 = vld [vmem:[%s3420 + $0x1f8] sm:$0xff]
      %v3485 = vld [vmem:[%s3420 + $0x200] sm:$0xff]
      %v3486 = vld [vmem:[%s3420 + $0x208] sm:$0xff]
      %v3487 = vld [vmem:[%s3420 + $0x210] sm:$0xff]
      %v3488 = vld [vmem:[%s3420 + $0x218] sm:$0xff]
      %v3489 = vld [vmem:[%s3420 + $0x220] sm:$0xff]
      %v3490 = vld [vmem:[%s3420 + $0x228] sm:$0xff]
      %v3491 = vld [vmem:[%s3420 + $0x230] sm:$0xff]
      %v3492 = vld [vmem:[%s3420 + $0x238] sm:$0xff]
      %v3493 = vld [vmem:[%s3420 + $0x240] sm:$0xff]
      %v3494 = vld [vmem:[%s3420 + $0x248] sm:$0xff]
      %v3495 = vld [vmem:[%s3420 + $0x250] sm:$0xff]
      %v3496 = vld [vmem:[%s3420 + $0x258] sm:$0xff]
      %v3497 = vld [vmem:[%s3420 + $0x260] sm:$0xff]
      %v3498 = vld [vmem:[%s3420 + $0x268] sm:$0xff]
      %v3499 = vld [vmem:[%s3420 + $0x270] sm:$0xff]
      %v3500 = vld [vmem:[%s3420 + $0x278] sm:$0xff]
      %v3501 = vld [vmem:[%s3420 + $0x280] sm:$0xff]
      %v3502 = vld [vmem:[%s3420 + $0x288] sm:$0xff]
      %v3503 = vld [vmem:[%s3420 + $0x290] sm:$0xff]
      %v3504 = vld [vmem:[%s3420 + $0x298] sm:$0xff]
      %v3505 = vld [vmem:[%s3420 + $0x2a0] sm:$0xff]
      %v3506 = vld [vmem:[%s3420 + $0x2a8] sm:$0xff]
      %v3507 = vld [vmem:[%s3420 + $0x2b0] sm:$0xff]
      %v3508 = vld [vmem:[%s3420 + $0x2b8] sm:$0xff]
      %v3509 = vld [vmem:[%s3420 + $0x2c0] sm:$0xff]
      %v3510 = vld [vmem:[%s3420 + $0x2c8] sm:$0xff]
      %v3511 = vld [vmem:[%s3420 + $0x2d0] sm:$0xff]
      %v3512 = vld [vmem:[%s3420 + $0x2d8] sm:$0xff]
      %v3513 = vld [vmem:[%s3420 + $0x2e0] sm:$0xff]
      %v3514 = vld [vmem:[%s3420 + $0x2e8] sm:$0xff]
      %v3515 = vld [vmem:[%s3420 + $0x2f0] sm:$0xff]
      %v3516 = vld [vmem:[%s3420 + $0x2f8] sm:$0xff]
      %v3517 = vld [vmem:[%s3420 + $0x300] sm:$0xff]
      %v3518 = vld [vmem:[%s3420 + $0x308] sm:$0xff]
      %v3519 = vld [vmem:[%s3420 + $0x310] sm:$0xff]
      %v3520 = vld [vmem:[%s3420 + $0x318] sm:$0xff]
      %v3521 = vld [vmem:[%s3420 + $0x320] sm:$0xff]
      %v3522 = vld [vmem:[%s3420 + $0x328] sm:$0xff]
      %v3523 = vld [vmem:[%s3420 + $0x330] sm:$0xff]
      %v3524 = vld [vmem:[%s3420 + $0x338] sm:$0xff]
      %v3525 = vld [vmem:[%s3420 + $0x340] sm:$0xff]
      %v3526 = vld [vmem:[%s3420 + $0x348] sm:$0xff]
      %v3527 = vld [vmem:[%s3420 + $0x350] sm:$0xff]
      %v3528 = vld [vmem:[%s3420 + $0x358] sm:$0xff]
      %v3529 = vld [vmem:[%s3420 + $0x360] sm:$0xff]
      %v3530 = vld [vmem:[%s3420 + $0x368] sm:$0xff]
      %v3531 = vld [vmem:[%s3420 + $0x370] sm:$0xff]
      %v3532 = vld [vmem:[%s3420 + $0x378] sm:$0xff]
      %v3533 = vld [vmem:[%s3420 + $0x380] sm:$0xff]
      %v3534 = vld [vmem:[%s3420 + $0x388] sm:$0xff]
      %v3535 = vld [vmem:[%s3420 + $0x390] sm:$0xff]
      %v3536 = vld [vmem:[%s3420 + $0x398] sm:$0xff]
      %v3537 = vld [vmem:[%s3420 + $0x3a0] sm:$0xff]
      %v3538 = vld [vmem:[%s3420 + $0x3a8] sm:$0xff]
      %v3539 = vld [vmem:[%s3420 + $0x3b0] sm:$0xff]
      %v3540 = vld [vmem:[%s3420 + $0x3b8] sm:$0xff]
      %v3541 = vld [vmem:[%s3420 + $0x3c0] sm:$0xff]
      %v3542 = vld [vmem:[%s3420 + $0x3c8] sm:$0xff]
      %v3543 = vld [vmem:[%s3420 + $0x3d0] sm:$0xff]
      %v3544 = vld [vmem:[%s3420 + $0x3d8] sm:$0xff]
      %v3545 = vld [vmem:[%s3420 + $0x3e0] sm:$0xff]
      %v3546 = vld [vmem:[%s3420 + $0x3e8] sm:$0xff]
      %v3547 = vld [vmem:[%s3420 + $0x3f0] sm:$0xff]
      %v3548 = vld [vmem:[%s3420 + $0x3f8] sm:$0xff]
      %v3549 = vld [vmem:[%s3420 + $0x400] sm:$0xff]
      %v3550 = vld [vmem:[%s3420 + $0x408] sm:$0xff]
      %v3551 = vld [vmem:[%s3420 + $0x410] sm:$0xff]
      %v3552 = vld [vmem:[%s3420 + $0x418] sm:$0xff]
      %v3553 = vld [vmem:[%s3420 + $0x420] sm:$0xff]
      %v3554 = vld [vmem:[%s3420 + $0x428] sm:$0xff]
      %v3555 = vld [vmem:[%s3420 + $0x430] sm:$0xff]
      %v3556 = vld [vmem:[%s3420 + $0x438] sm:$0xff]
      %v3557 = vld [vmem:[%s3420 + $0x440] sm:$0xff]
      %v3558 = vld [vmem:[%s3420 + $0x448] sm:$0xff]
      %v3559 = vld [vmem:[%s3420 + $0x450] sm:$0xff]
      %v3560 = vld [vmem:[%s3420 + $0x458] sm:$0xff]
      %v3561 = vld [vmem:[%s3420 + $0x460] sm:$0xff]
      %v3562 = vld [vmem:[%s3420 + $0x468] sm:$0xff]
      %v3563 = vld [vmem:[%s3420 + $0x470] sm:$0xff]
      %v3564 = vld [vmem:[%s3420 + $0x478] sm:$0xff]
      %v3565 = vld [vmem:[%s3420 + $0x480] sm:$0xff]
      %v3566 = vld [vmem:[%s3420 + $0x488] sm:$0xff]
      %v3567 = vld [vmem:[%s3420 + $0x490] sm:$0xff]
      %v3568 = vld [vmem:[%s3420 + $0x498] sm:$0xff]
      %v3569 = vld [vmem:[%s3420 + $0x4a0] sm:$0xff]
      %v3570 = vld [vmem:[%s3420 + $0x4a8] sm:$0xff]
      %v3571 = vld [vmem:[%s3420 + $0x4b0] sm:$0xff]
      %v3572 = vld [vmem:[%s3420 + $0x4b8] sm:$0xff]
      %v3573 = vld [vmem:[%s3420 + $0x4c0] sm:$0xff]
      %v3574 = vld [vmem:[%s3420 + $0x4c8] sm:$0xff]
      %v3575 = vld [vmem:[%s3420 + $0x4d0] sm:$0xff]
      %v3576 = vld [vmem:[%s3420 + $0x4d8] sm:$0xff]
      %v3577 = vld [vmem:[%s3420 + $0x4e0] sm:$0xff]
      %v3578 = vld [vmem:[%s3420 + $0x4e8] sm:$0xff]
      %v3579 = vld [vmem:[%s3420 + $0x4f0] sm:$0xff]
      %v3580 = vld [vmem:[%s3420 + $0x4f8] sm:$0xff]
      %v3581 = vld [vmem:[%s3420 + $0x500] sm:$0xff]
      %v3582 = vld [vmem:[%s3420 + $0x508] sm:$0xff]
      %v3583 = vld [vmem:[%s3420 + $0x510] sm:$0xff]
      %v3584 = vld [vmem:[%s3420 + $0x518] sm:$0xff]
      %v3585 = vld [vmem:[%s3420 + $0x520] sm:$0xff]
      %v3586 = vld [vmem:[%s3420 + $0x528] sm:$0xff]
      %v3587 = vld [vmem:[%s3420 + $0x530] sm:$0xff]
      %v3588 = vld [vmem:[%s3420 + $0x538] sm:$0xff]
      %v3589 = vld [vmem:[%s3420 + $0x540] sm:$0xff]
      %v3590 = vld [vmem:[%s3420 + $0x548] sm:$0xff]
      %v3591 = vld [vmem:[%s3420 + $0x550] sm:$0xff]
      %v3592 = vld [vmem:[%s3420 + $0x558] sm:$0xff]
      %v3593 = vld [vmem:[%s3420 + $0x560] sm:$0xff]
      %v3594 = vld [vmem:[%s3420 + $0x568] sm:$0xff]
      %v3595 = vld [vmem:[%s3420 + $0x570] sm:$0xff]
      %v3596 = vld [vmem:[%s3420 + $0x578] sm:$0xff]
      %v3597 = vld [vmem:[%s3420 + $0x580] sm:$0xff]
      %v3598 = vld [vmem:[%s3420 + $0x588] sm:$0xff]
      %v3599 = vld [vmem:[%s3420 + $0x590] sm:$0xff]
      %v3600 = vld [vmem:[%s3420 + $0x598] sm:$0xff]
      %v3601 = vld [vmem:[%s3420 + $0x5a0] sm:$0xff]
      %v3602 = vld [vmem:[%s3420 + $0x5a8] sm:$0xff]
      %v3603 = vld [vmem:[%s3420 + $0x5b0] sm:$0xff]
      %v3604 = vld [vmem:[%s3420 + $0x5b8] sm:$0xff]
      %v3605 = vld [vmem:[%s3420 + $0x5c0] sm:$0xff]
      %v3606 = vld [vmem:[%s3420 + $0x5c8] sm:$0xff]
      %v3607 = vld [vmem:[%s3420 + $0x5d0] sm:$0xff]
      %v3608 = vld [vmem:[%s3420 + $0x5d8] sm:$0xff]
      %v3609 = vld [vmem:[%s3420 + $0x5e0] sm:$0xff]
      %v3610 = vld [vmem:[%s3420 + $0x5e8] sm:$0xff]
      %v3611 = vld [vmem:[%s3420 + $0x5f0] sm:$0xff]
      %v3612 = vld [vmem:[%s3420 + $0x5f8] sm:$0xff]
      %v3613 = vld [vmem:[%s3420 + $0x600] sm:$0xff]
      %v3614 = vld [vmem:[%s3420 + $0x608] sm:$0xff]
      %v3615 = vld [vmem:[%s3420 + $0x610] sm:$0xff]
      %v3616 = vld [vmem:[%s3420 + $0x618] sm:$0xff]
      %v3617 = vld [vmem:[%s3420 + $0x620] sm:$0xff]
      %v3618 = vld [vmem:[%s3420 + $0x628] sm:$0xff]
      %v3619 = vld [vmem:[%s3420 + $0x630] sm:$0xff]
      %v3620 = vld [vmem:[%s3420 + $0x638] sm:$0xff]
      %v3621 = vld [vmem:[%s3420 + $0x640] sm:$0xff]
      %v3622 = vld [vmem:[%s3420 + $0x648] sm:$0xff]
      %v3623 = vld [vmem:[%s3420 + $0x650] sm:$0xff]
      %v3624 = vld [vmem:[%s3420 + $0x658] sm:$0xff]
      %v3625 = vld [vmem:[%s3420 + $0x660] sm:$0xff]
      %v3626 = vld [vmem:[%s3420 + $0x668] sm:$0xff]
      %v3627 = vld [vmem:[%s3420 + $0x670] sm:$0xff]
      %v3628 = vld [vmem:[%s3420 + $0x678] sm:$0xff]
      %v3629 = vld [vmem:[%s3420 + $0x680] sm:$0xff]
      %v3630 = vld [vmem:[%s3420 + $0x688] sm:$0xff]
      %v3631 = vld [vmem:[%s3420 + $0x690] sm:$0xff]
      %v3632 = vld [vmem:[%s3420 + $0x698] sm:$0xff]
      %v3633 = vld [vmem:[%s3420 + $0x6a0] sm:$0xff]
      %v3634 = vld [vmem:[%s3420 + $0x6a8] sm:$0xff]
      %v3635 = vld [vmem:[%s3420 + $0x6b0] sm:$0xff]
      %v3636 = vld [vmem:[%s3420 + $0x6b8] sm:$0xff]
      %v3637 = vld [vmem:[%s3420 + $0x6c0] sm:$0xff]
      %v3638 = vld [vmem:[%s3420 + $0x6c8] sm:$0xff]
      %v3639 = vld [vmem:[%s3420 + $0x6d0] sm:$0xff]
      %v3640 = vld [vmem:[%s3420 + $0x6d8] sm:$0xff]
      %v3641 = vld [vmem:[%s3420 + $0x6e0] sm:$0xff]
      %v3642 = vld [vmem:[%s3420 + $0x6e8] sm:$0xff]
      %v3643 = vld [vmem:[%s3420 + $0x6f0] sm:$0xff]
      %v3644 = vld [vmem:[%s3420 + $0x6f8] sm:$0xff]
      %v3645 = vld [vmem:[%s3420 + $0x700] sm:$0xff]
      %v3646 = vld [vmem:[%s3420 + $0x708] sm:$0xff]
      %v3647 = vld [vmem:[%s3420 + $0x710] sm:$0xff]
      %v3648 = vld [vmem:[%s3420 + $0x718] sm:$0xff]
      %v3649 = vld [vmem:[%s3420 + $0x720] sm:$0xff]
      %v3650 = vld [vmem:[%s3420 + $0x728] sm:$0xff]
      %v3651 = vld [vmem:[%s3420 + $0x730] sm:$0xff]
      %v3652 = vld [vmem:[%s3420 + $0x738] sm:$0xff]
      %v3653 = vld [vmem:[%s3420 + $0x740] sm:$0xff]
      %v3654 = vld [vmem:[%s3420 + $0x748] sm:$0xff]
      %v3655 = vld [vmem:[%s3420 + $0x750] sm:$0xff]
      %v3656 = vld [vmem:[%s3420 + $0x758] sm:$0xff]
      %v3657 = vld [vmem:[%s3420 + $0x760] sm:$0xff]
      %v3658 = vld [vmem:[%s3420 + $0x768] sm:$0xff]
      %v3659 = vld [vmem:[%s3420 + $0x770] sm:$0xff]
      %v3660 = vld [vmem:[%s3420 + $0x778] sm:$0xff]
      %v3661 = vld [vmem:[%s3420 + $0x780] sm:$0xff]
      %v3662 = vld [vmem:[%s3420 + $0x788] sm:$0xff]
      %v3663 = vld [vmem:[%s3420 + $0x790] sm:$0xff]
      %v3664 = vld [vmem:[%s3420 + $0x798] sm:$0xff]
      %v3665 = vld [vmem:[%s3420 + $0x7a0] sm:$0xff]
      %v3666 = vld [vmem:[%s3420 + $0x7a8] sm:$0xff]
      %v3667 = vld [vmem:[%s3420 + $0x7b0] sm:$0xff]
      %v3668 = vld [vmem:[%s3420 + $0x7b8] sm:$0xff]
      %v3669 = vld [vmem:[%s3420 + $0x7c0] sm:$0xff]
      %v3670 = vld [vmem:[%s3420 + $0x7c8] sm:$0xff]
      %v3671 = vld [vmem:[%s3420 + $0x7d0] sm:$0xff]
      %v3672 = vld [vmem:[%s3420 + $0x7d8] sm:$0xff]
      %v3673 = vld [vmem:[%s3420 + $0x7e0] sm:$0xff]
      %v3674 = vld [vmem:[%s3420 + $0x7e8] sm:$0xff]
      %v3675 = vld [vmem:[%s3420 + $0x7f0] sm:$0xff]
      %v3676 = vld [vmem:[%s3420 + $0x7f8] sm:$0xff]
      %3677 = vmatprep.subr.mxu0 %v3422
      %3678 = vmatpush1.msra.mxu0 %v3421
      %3679 = vmatprep.subr.mxu0 %v3430
      %3680 = vmatpush1.msra.mxu0 %v3429
      %3681 = vmatprep.subr.mxu0 %v3438
      %3682 = vmatpush1.msra.mxu0 %v3437
      %3683 = vmatprep.subr.mxu0 %v3446
      %3684 = vmatpush1.msra.mxu0 %v3445
      %3685 = vmatprep.subr.mxu0 %v3454
      %3686 = vmatpush1.msra.mxu0 %v3453
      %3687 = vmatprep.subr.mxu0 %v3462
      %3688 = vmatpush1.msra.mxu0 %v3461
      %3689 = vmatprep.subr.mxu0 %v3470
      %3690 = vmatpush1.msra.mxu0 %v3469
      %3691 = vmatprep.subr.mxu0 %v3478
      %3692 = vmatpush1.msra.mxu0 %v3477
      %3693 = vmatprep.subr.mxu0 %v3486
      %3694 = vmatpush1.msra.mxu0 %v3485
      %3695 = vmatprep.subr.mxu0 %v3494
      %3696 = vmatpush1.msra.mxu0 %v3493
      %3697 = vmatprep.subr.mxu0 %v3502
      %3698 = vmatpush1.msra.mxu0 %v3501
      %3699 = vmatprep.subr.mxu0 %v3510
      %3700 = vmatpush1.msra.mxu0 %v3509
      %3701 = vmatprep.subr.mxu0 %v3518
      %3702 = vmatpush1.msra.mxu0 %v3517
      %3703 = vmatprep.subr.mxu0 %v3526
      %3704 = vmatpush1.msra.mxu0 %v3525
      %3705 = vmatprep.subr.mxu0 %v3534
      %3706 = vmatpush1.msra.mxu0 %v3533
      %3707 = vmatprep.subr.mxu0 %v3542
      %3708 = vmatpush1.msra.mxu0 %v3541
      %3709 = vmatprep.subr.mxu0 %v3550
      %3710 = vmatpush1.msra.mxu0 %v3549
      %3711 = vmatprep.subr.mxu0 %v3558
      %3712 = vmatpush1.msra.mxu0 %v3557
      %3713 = vmatprep.subr.mxu0 %v3566
      %3714 = vmatpush1.msra.mxu0 %v3565
      %3715 = vmatprep.subr.mxu0 %v3574
      %3716 = vmatpush1.msra.mxu0 %v3573
      %3717 = vmatprep.subr.mxu0 %v3582
      %3718 = vmatpush1.msra.mxu0 %v3581
      %3719 = vmatprep.subr.mxu0 %v3590
      %3720 = vmatpush1.msra.mxu0 %v3589
      %3721 = vmatprep.subr.mxu0 %v3598
      %3722 = vmatpush1.msra.mxu0 %v3597
      %3723 = vmatprep.subr.mxu0 %v3606
      %3724 = vmatpush1.msra.mxu0 %v3605
      %3725 = vmatprep.subr.mxu0 %v3614
      %3726 = vmatpush1.msra.mxu0 %v3613
      %3727 = vmatprep.subr.mxu0 %v3622
      %3728 = vmatpush1.msra.mxu0 %v3621
      %3729 = vmatprep.subr.mxu0 %v3630
      %3730 = vmatpush1.msra.mxu0 %v3629
      %3731 = vmatprep.subr.mxu0 %v3638
      %3732 = vmatpush1.msra.mxu0 %v3637
      %3733 = vmatprep.subr.mxu0 %v3646
      %3734 = vmatpush1.msra.mxu0 %v3645
      %3735 = vmatprep.subr.mxu0 %v3654
      %3736 = vmatpush1.msra.mxu0 %v3653
      %3737 = vmatprep.subr.mxu0 %v3662
      %3738 = vmatpush1.msra.mxu0 %v3661
      %3739 = vmatprep.subr.mxu0 %v3670
      %3740 = vmatpush1.msra.mxu0 %v3669
      %3741 = vmatprep.mubr.f32.mxu0 %v429
      %3742 = vmatmul.mubr.f32.gmra.mrb[0].mxu0 %v171
      %v3743 = vpop.f32.mrb[0].mxu0
      %v3744 = vadd.f32 0.0, %v3743
      %v3745 = vpop.f32.mrb[0].mxu0
      %v3746 = vadd.f32 0.0, %v3745
      %3747 = vdwg.mxu0
      %3748 = vmatprep.subr.mxu0 %v3424
      %3749 = vmatpush1.msra.mxu0 %v3423
      %3750 = vmatprep.subr.mxu0 %v3432
      %3751 = vmatpush1.msra.mxu0 %v3431
      %3752 = vmatprep.subr.mxu0 %v3440
      %3753 = vmatpush1.msra.mxu0 %v3439
      %3754 = vmatprep.subr.mxu0 %v3448
      %3755 = vmatpush1.msra.mxu0 %v3447
      %3756 = vmatprep.subr.mxu0 %v3456
      %3757 = vmatpush1.msra.mxu0 %v3455
      %3758 = vmatprep.subr.mxu0 %v3464
      %3759 = vmatpush1.msra.mxu0 %v3463
      %3760 = vmatprep.subr.mxu0 %v3472
      %3761 = vmatpush1.msra.mxu0 %v3471
      %3762 = vmatprep.subr.mxu0 %v3480
      %3763 = vmatpush1.msra.mxu0 %v3479
      %3764 = vmatprep.subr.mxu0 %v3488
      %3765 = vmatpush1.msra.mxu0 %v3487
      %3766 = vmatprep.subr.mxu0 %v3496
      %3767 = vmatpush1.msra.mxu0 %v3495
      %3768 = vmatprep.subr.mxu0 %v3504
      %3769 = vmatpush1.msra.mxu0 %v3503
      %3770 = vmatprep.subr.mxu0 %v3512
      %3771 = vmatpush1.msra.mxu0 %v3511
      %3772 = vmatprep.subr.mxu0 %v3520
      %3773 = vmatpush1.msra.mxu0 %v3519
      %3774 = vmatprep.subr.mxu0 %v3528
      %3775 = vmatpush1.msra.mxu0 %v3527
      %3776 = vmatprep.subr.mxu0 %v3536
      %3777 = vmatpush1.msra.mxu0 %v3535
      %3778 = vmatprep.subr.mxu0 %v3544
      %3779 = vmatpush1.msra.mxu0 %v3543
      %3780 = vmatprep.subr.mxu0 %v3552
      %3781 = vmatpush1.msra.mxu0 %v3551
      %3782 = vmatprep.subr.mxu0 %v3560
      %3783 = vmatpush1.msra.mxu0 %v3559
      %3784 = vmatprep.subr.mxu0 %v3568
      %3785 = vmatpush1.msra.mxu0 %v3567
      %3786 = vmatprep.subr.mxu0 %v3576
      %3787 = vmatpush1.msra.mxu0 %v3575
      %3788 = vmatprep.subr.mxu0 %v3584
      %3789 = vmatpush1.msra.mxu0 %v3583
      %3790 = vmatprep.subr.mxu0 %v3592
      %3791 = vmatpush1.msra.mxu0 %v3591
      %3792 = vmatprep.subr.mxu0 %v3600
      %3793 = vmatpush1.msra.mxu0 %v3599
      %3794 = vmatprep.subr.mxu0 %v3608
      %3795 = vmatpush1.msra.mxu0 %v3607
      %3796 = vmatprep.subr.mxu0 %v3616
      %3797 = vmatpush1.msra.mxu0 %v3615
      %3798 = vmatprep.subr.mxu0 %v3624
      %3799 = vmatpush1.msra.mxu0 %v3623
      %3800 = vmatprep.subr.mxu0 %v3632
      %3801 = vmatpush1.msra.mxu0 %v3631
      %3802 = vmatprep.subr.mxu0 %v3640
      %3803 = vmatpush1.msra.mxu0 %v3639
      %3804 = vmatprep.subr.mxu0 %v3648
      %3805 = vmatpush1.msra.mxu0 %v3647
      %3806 = vmatprep.subr.mxu0 %v3656
      %3807 = vmatpush1.msra.mxu0 %v3655
      %3808 = vmatprep.subr.mxu0 %v3664
      %3809 = vmatpush1.msra.mxu0 %v3663
      %3810 = vmatprep.subr.mxu0 %v3672
      %3811 = vmatpush1.msra.mxu0 %v3671
      %3812 = vmatprep.mubr.f32.mxu0 %v429
      %3813 = vmatmul.mubr.f32.gmra.mrb[0].mxu0 %v171
      %v3814 = vpop.f32.mrb[0].mxu0
      %v3815 = vadd.f32 0.0, %v3814
      %v3816 = vpop.f32.mrb[0].mxu0
      %v3817 = vadd.f32 0.0, %v3816
      %3818 = vdwg.mxu0
      %3819 = vmatprep.subr.mxu0 %v3426
      %3820 = vmatpush1.msra.mxu0 %v3425
      %3821 = vmatprep.subr.mxu0 %v3434
      %3822 = vmatpush1.msra.mxu0 %v3433
      %3823 = vmatprep.subr.mxu0 %v3442
      %3824 = vmatpush1.msra.mxu0 %v3441
      %3825 = vmatprep.subr.mxu0 %v3450
      %3826 = vmatpush1.msra.mxu0 %v3449
      %3827 = vmatprep.subr.mxu0 %v3458
      %3828 = vmatpush1.msra.mxu0 %v3457
      %3829 = vmatprep.subr.mxu0 %v3466
      %3830 = vmatpush1.msra.mxu0 %v3465
      %3831 = vmatprep.subr.mxu0 %v3474
      %3832 = vmatpush1.msra.mxu0 %v3473
      %3833 = vmatprep.subr.mxu0 %v3482
      %3834 = vmatpush1.msra.mxu0 %v3481
      %3835 = vmatprep.subr.mxu0 %v3490
      %3836 = vmatpush1.msra.mxu0 %v3489
      %3837 = vmatprep.subr.mxu0 %v3498
      %3838 = vmatpush1.msra.mxu0 %v3497
      %3839 = vmatprep.subr.mxu0 %v3506
      %3840 = vmatpush1.msra.mxu0 %v3505
      %3841 = vmatprep.subr.mxu0 %v3514
      %3842 = vmatpush1.msra.mxu0 %v3513
      %3843 = vmatprep.subr.mxu0 %v3522
      %3844 = vmatpush1.msra.mxu0 %v3521
      %3845 = vmatprep.subr.mxu0 %v3530
      %3846 = vmatpush1.msra.mxu0 %v3529
      %3847 = vmatprep.subr.mxu0 %v3538
      %3848 = vmatpush1.msra.mxu0 %v3537
      %3849 = vmatprep.subr.mxu0 %v3546
      %3850 = vmatpush1.msra.mxu0 %v3545
      %3851 = vmatprep.subr.mxu0 %v3554
      %3852 = vmatpush1.msra.mxu0 %v3553
      %3853 = vmatprep.subr.mxu0 %v3562
      %3854 = vmatpush1.msra.mxu0 %v3561
      %3855 = vmatprep.subr.mxu0 %v3570
      %3856 = vmatpush1.msra.mxu0 %v3569
      %3857 = vmatprep.subr.mxu0 %v3578
      %3858 = vmatpush1.msra.mxu0 %v3577
      %3859 = vmatprep.subr.mxu0 %v3586
      %3860 = vmatpush1.msra.mxu0 %v3585
      %3861 = vmatprep.subr.mxu0 %v3594
      %3862 = vmatpush1.msra.mxu0 %v3593
      %3863 = vmatprep.subr.mxu0 %v3602
      %3864 = vmatpush1.msra.mxu0 %v3601
      %3865 = vmatprep.subr.mxu0 %v3610
      %3866 = vmatpush1.msra.mxu0 %v3609
      %3867 = vmatprep.subr.mxu0 %v3618
      %3868 = vmatpush1.msra.mxu0 %v3617
      %3869 = vmatprep.subr.mxu0 %v3626
      %3870 = vmatpush1.msra.mxu0 %v3625
      %3871 = vmatprep.subr.mxu0 %v3634
      %3872 = vmatpush1.msra.mxu0 %v3633
      %3873 = vmatprep.subr.mxu0 %v3642
      %3874 = vmatpush1.msra.mxu0 %v3641
      %3875 = vmatprep.subr.mxu0 %v3650
      %3876 = vmatpush1.msra.mxu0 %v3649
      %3877 = vmatprep.subr.mxu0 %v3658
      %3878 = vmatpush1.msra.mxu0 %v3657
      %3879 = vmatprep.subr.mxu0 %v3666
      %3880 = vmatpush1.msra.mxu0 %v3665
      %3881 = vmatprep.subr.mxu0 %v3674
      %3882 = vmatpush1.msra.mxu0 %v3673
      %3883 = vmatprep.mubr.f32.mxu0 %v429
      %3884 = vmatmul.mubr.f32.gmra.mrb[0].mxu0 %v171
      %v3885 = vpop.f32.mrb[0].mxu0
      %v3886 = vadd.f32 0.0, %v3885
      %v3887 = vpop.f32.mrb[0].mxu0
      %v3888 = vadd.f32 0.0, %v3887
      %3889 = vdwg.mxu0
      %3890 = vmatprep.subr.mxu0 %v3428
      %3891 = vmatpush1.msra.mxu0 %v3427
      %3892 = vmatprep.subr.mxu0 %v3436
      %3893 = vmatpush1.msra.mxu0 %v3435
      %3894 = vmatprep.subr.mxu0 %v3444
      %3895 = vmatpush1.msra.mxu0 %v3443
      %3896 = vmatprep.subr.mxu0 %v3452
      %3897 = vmatpush1.msra.mxu0 %v3451
      %3898 = vmatprep.subr.mxu0 %v3460
      %3899 = vmatpush1.msra.mxu0 %v3459
      %3900 = vmatprep.subr.mxu0 %v3468
      %3901 = vmatpush1.msra.mxu0 %v3467
      %3902 = vmatprep.subr.mxu0 %v3476
      %3903 = vmatpush1.msra.mxu0 %v3475
      %3904 = vmatprep.subr.mxu0 %v3484
      %3905 = vmatpush1.msra.mxu0 %v3483
      %3906 = vmatprep.subr.mxu0 %v3492
      %3907 = vmatpush1.msra.mxu0 %v3491
      %3908 = vmatprep.subr.mxu0 %v3500
      %3909 = vmatpush1.msra.mxu0 %v3499
      %3910 = vmatprep.subr.mxu0 %v3508
      %3911 = vmatpush1.msra.mxu0 %v3507
      %3912 = vmatprep.subr.mxu0 %v3516
      %3913 = vmatpush1.msra.mxu0 %v3515
      %3914 = vmatprep.subr.mxu0 %v3524
      %3915 = vmatpush1.msra.mxu0 %v3523
      %3916 = vmatprep.subr.mxu0 %v3532
      %3917 = vmatpush1.msra.mxu0 %v3531
      %3918 = vmatprep.subr.mxu0 %v3540
      %3919 = vmatpush1.msra.mxu0 %v3539
      %3920 = vmatprep.subr.mxu0 %v3548
      %3921 = vmatpush1.msra.mxu0 %v3547
      %3922 = vmatprep.subr.mxu0 %v3556
      %3923 = vmatpush1.msra.mxu0 %v3555
      %3924 = vmatprep.subr.mxu0 %v3564
      %3925 = vmatpush1.msra.mxu0 %v3563
      %3926 = vmatprep.subr.mxu0 %v3572
      %3927 = vmatpush1.msra.mxu0 %v3571
      %3928 = vmatprep.subr.mxu0 %v3580
      %3929 = vmatpush1.msra.mxu0 %v3579
      %3930 = vmatprep.subr.mxu0 %v3588
      %3931 = vmatpush1.msra.mxu0 %v3587
      %3932 = vmatprep.subr.mxu0 %v3596
      %3933 = vmatpush1.msra.mxu0 %v3595
      %3934 = vmatprep.subr.mxu0 %v3604
      %3935 = vmatpush1.msra.mxu0 %v3603
      %3936 = vmatprep.subr.mxu0 %v3612
      %3937 = vmatpush1.msra.mxu0 %v3611
      %3938 = vmatprep.subr.mxu0 %v3620
      %3939 = vmatpush1.msra.mxu0 %v3619
      %3940 = vmatprep.subr.mxu0 %v3628
      %3941 = vmatpush1.msra.mxu0 %v3627
      %3942 = vmatprep.subr.mxu0 %v3636
      %3943 = vmatpush1.msra.mxu0 %v3635
      %3944 = vmatprep.subr.mxu0 %v3644
      %3945 = vmatpush1.msra.mxu0 %v3643
      %3946 = vmatprep.subr.mxu0 %v3652
      %3947 = vmatpush1.msra.mxu0 %v3651
      %3948 = vmatprep.subr.mxu0 %v3660
      %3949 = vmatpush1.msra.mxu0 %v3659
      %3950 = vmatprep.subr.mxu0 %v3668
      %3951 = vmatpush1.msra.mxu0 %v3667
      %3952 = vmatprep.subr.mxu0 %v3676
      %3953 = vmatpush1.msra.mxu0 %v3675
      %3954 = vmatprep.mubr.f32.mxu0 %v429
      %3955 = vmatmul.mubr.f32.gmra.mrb[0].mxu0 %v171
      %v3956 = vpop.f32.mrb[0].mxu0
      %v3957 = vadd.f32 0.0, %v3956
      %v3958 = vpop.f32.mrb[0].mxu0
      %v3959 = vadd.f32 0.0, %v3958
      %3960 = vdwg.mxu0
      %s3961 = scalar_lea.vmem %s1, 14336
      %v3962 = vld [vmem:[%s3961] sm:$0xff]
      %v3963 = vld [vmem:[%s3961 + $0x8] sm:$0xff]
      %v3964 = vld [vmem:[%s3961 + $0x10] sm:$0xff]
      %v3965 = vld [vmem:[%s3961 + $0x18] sm:$0xff]
      %v3966 = vld [vmem:[%s3961 + $0x20] sm:$0xff]
      %v3967 = vld [vmem:[%s3961 + $0x28] sm:$0xff]
      %v3968 = vld [vmem:[%s3961 + $0x30] sm:$0xff]
      %v3969 = vld [vmem:[%s3961 + $0x38] sm:$0xff]
      %v3970 = vld [vmem:[%s3961 + $0x40] sm:$0xff]
      %v3971 = vld [vmem:[%s3961 + $0x48] sm:$0xff]
      %v3972 = vld [vmem:[%s3961 + $0x50] sm:$0xff]
      %v3973 = vld [vmem:[%s3961 + $0x58] sm:$0xff]
      %v3974 = vld [vmem:[%s3961 + $0x60] sm:$0xff]
      %v3975 = vld [vmem:[%s3961 + $0x68] sm:$0xff]
      %v3976 = vld [vmem:[%s3961 + $0x70] sm:$0xff]
      %v3977 = vld [vmem:[%s3961 + $0x78] sm:$0xff]
      %v3978 = vld [vmem:[%s3961 + $0x80] sm:$0xff]
      %v3979 = vld [vmem:[%s3961 + $0x88] sm:$0xff]
      %v3980 = vld [vmem:[%s3961 + $0x90] sm:$0xff]
      %v3981 = vld [vmem:[%s3961 + $0x98] sm:$0xff]
      %v3982 = vld [vmem:[%s3961 + $0xa0] sm:$0xff]
      %v3983 = vld [vmem:[%s3961 + $0xa8] sm:$0xff]
      %v3984 = vld [vmem:[%s3961 + $0xb0] sm:$0xff]
      %v3985 = vld [vmem:[%s3961 + $0xb8] sm:$0xff]
      %v3986 = vld [vmem:[%s3961 + $0xc0] sm:$0xff]
      %v3987 = vld [vmem:[%s3961 + $0xc8] sm:$0xff]
      %v3988 = vld [vmem:[%s3961 + $0xd0] sm:$0xff]
      %v3989 = vld [vmem:[%s3961 + $0xd8] sm:$0xff]
      %v3990 = vld [vmem:[%s3961 + $0xe0] sm:$0xff]
      %v3991 = vld [vmem:[%s3961 + $0xe8] sm:$0xff]
      %v3992 = vld [vmem:[%s3961 + $0xf0] sm:$0xff]
      %v3993 = vld [vmem:[%s3961 + $0xf8] sm:$0xff]
      %v3994 = vld [vmem:[%s3961 + $0x100] sm:$0xff]
      %v3995 = vld [vmem:[%s3961 + $0x108] sm:$0xff]
      %v3996 = vld [vmem:[%s3961 + $0x110] sm:$0xff]
      %v3997 = vld [vmem:[%s3961 + $0x118] sm:$0xff]
      %v3998 = vld [vmem:[%s3961 + $0x120] sm:$0xff]
      %v3999 = vld [vmem:[%s3961 + $0x128] sm:$0xff]
      %v4000 = vld [vmem:[%s3961 + $0x130] sm:$0xff]
      %v4001 = vld [vmem:[%s3961 + $0x138] sm:$0xff]
      %v4002 = vld [vmem:[%s3961 + $0x140] sm:$0xff]
      %v4003 = vld [vmem:[%s3961 + $0x148] sm:$0xff]
      %v4004 = vld [vmem:[%s3961 + $0x150] sm:$0xff]
      %v4005 = vld [vmem:[%s3961 + $0x158] sm:$0xff]
      %v4006 = vld [vmem:[%s3961 + $0x160] sm:$0xff]
      %v4007 = vld [vmem:[%s3961 + $0x168] sm:$0xff]
      %v4008 = vld [vmem:[%s3961 + $0x170] sm:$0xff]
      %v4009 = vld [vmem:[%s3961 + $0x178] sm:$0xff]
      %v4010 = vld [vmem:[%s3961 + $0x180] sm:$0xff]
      %v4011 = vld [vmem:[%s3961 + $0x188] sm:$0xff]
      %v4012 = vld [vmem:[%s3961 + $0x190] sm:$0xff]
      %v4013 = vld [vmem:[%s3961 + $0x198] sm:$0xff]
      %v4014 = vld [vmem:[%s3961 + $0x1a0] sm:$0xff]
      %v4015 = vld [vmem:[%s3961 + $0x1a8] sm:$0xff]
      %v4016 = vld [vmem:[%s3961 + $0x1b0] sm:$0xff]
      %v4017 = vld [vmem:[%s3961 + $0x1b8] sm:$0xff]
      %v4018 = vld [vmem:[%s3961 + $0x1c0] sm:$0xff]
      %v4019 = vld [vmem:[%s3961 + $0x1c8] sm:$0xff]
      %v4020 = vld [vmem:[%s3961 + $0x1d0] sm:$0xff]
      %v4021 = vld [vmem:[%s3961 + $0x1d8] sm:$0xff]
      %v4022 = vld [vmem:[%s3961 + $0x1e0] sm:$0xff]
      %v4023 = vld [vmem:[%s3961 + $0x1e8] sm:$0xff]
      %v4024 = vld [vmem:[%s3961 + $0x1f0] sm:$0xff]
      %v4025 = vld [vmem:[%s3961 + $0x1f8] sm:$0xff]
      %v4026 = vld [vmem:[%s3961 + $0x200] sm:$0xff]
      %v4027 = vld [vmem:[%s3961 + $0x208] sm:$0xff]
      %v4028 = vld [vmem:[%s3961 + $0x210] sm:$0xff]
      %v4029 = vld [vmem:[%s3961 + $0x218] sm:$0xff]
      %v4030 = vld [vmem:[%s3961 + $0x220] sm:$0xff]
      %v4031 = vld [vmem:[%s3961 + $0x228] sm:$0xff]
      %v4032 = vld [vmem:[%s3961 + $0x230] sm:$0xff]
      %v4033 = vld [vmem:[%s3961 + $0x238] sm:$0xff]
      %v4034 = vld [vmem:[%s3961 + $0x240] sm:$0xff]
      %v4035 = vld [vmem:[%s3961 + $0x248] sm:$0xff]
      %v4036 = vld [vmem:[%s3961 + $0x250] sm:$0xff]
      %v4037 = vld [vmem:[%s3961 + $0x258] sm:$0xff]
      %v4038 = vld [vmem:[%s3961 + $0x260] sm:$0xff]
      %v4039 = vld [vmem:[%s3961 + $0x268] sm:$0xff]
      %v4040 = vld [vmem:[%s3961 + $0x270] sm:$0xff]
      %v4041 = vld [vmem:[%s3961 + $0x278] sm:$0xff]
      %v4042 = vld [vmem:[%s3961 + $0x280] sm:$0xff]
      %v4043 = vld [vmem:[%s3961 + $0x288] sm:$0xff]
      %v4044 = vld [vmem:[%s3961 + $0x290] sm:$0xff]
      %v4045 = vld [vmem:[%s3961 + $0x298] sm:$0xff]
      %v4046 = vld [vmem:[%s3961 + $0x2a0] sm:$0xff]
      %v4047 = vld [vmem:[%s3961 + $0x2a8] sm:$0xff]
      %v4048 = vld [vmem:[%s3961 + $0x2b0] sm:$0xff]
      %v4049 = vld [vmem:[%s3961 + $0x2b8] sm:$0xff]
      %v4050 = vld [vmem:[%s3961 + $0x2c0] sm:$0xff]
      %v4051 = vld [vmem:[%s3961 + $0x2c8] sm:$0xff]
      %v4052 = vld [vmem:[%s3961 + $0x2d0] sm:$0xff]
      %v4053 = vld [vmem:[%s3961 + $0x2d8] sm:$0xff]
      %v4054 = vld [vmem:[%s3961 + $0x2e0] sm:$0xff]
      %v4055 = vld [vmem:[%s3961 + $0x2e8] sm:$0xff]
      %v4056 = vld [vmem:[%s3961 + $0x2f0] sm:$0xff]
      %v4057 = vld [vmem:[%s3961 + $0x2f8] sm:$0xff]
      %v4058 = vld [vmem:[%s3961 + $0x300] sm:$0xff]
      %v4059 = vld [vmem:[%s3961 + $0x308] sm:$0xff]
      %v4060 = vld [vmem:[%s3961 + $0x310] sm:$0xff]
      %v4061 = vld [vmem:[%s3961 + $0x318] sm:$0xff]
      %v4062 = vld [vmem:[%s3961 + $0x320] sm:$0xff]
      %v4063 = vld [vmem:[%s3961 + $0x328] sm:$0xff]
      %v4064 = vld [vmem:[%s3961 + $0x330] sm:$0xff]
      %v4065 = vld [vmem:[%s3961 + $0x338] sm:$0xff]
      %v4066 = vld [vmem:[%s3961 + $0x340] sm:$0xff]
      %v4067 = vld [vmem:[%s3961 + $0x348] sm:$0xff]
      %v4068 = vld [vmem:[%s3961 + $0x350] sm:$0xff]
      %v4069 = vld [vmem:[%s3961 + $0x358] sm:$0xff]
      %v4070 = vld [vmem:[%s3961 + $0x360] sm:$0xff]
      %v4071 = vld [vmem:[%s3961 + $0x368] sm:$0xff]
      %v4072 = vld [vmem:[%s3961 + $0x370] sm:$0xff]
      %v4073 = vld [vmem:[%s3961 + $0x378] sm:$0xff]
      %v4074 = vld [vmem:[%s3961 + $0x380] sm:$0xff]
      %v4075 = vld [vmem:[%s3961 + $0x388] sm:$0xff]
      %v4076 = vld [vmem:[%s3961 + $0x390] sm:$0xff]
      %v4077 = vld [vmem:[%s3961 + $0x398] sm:$0xff]
      %v4078 = vld [vmem:[%s3961 + $0x3a0] sm:$0xff]
      %v4079 = vld [vmem:[%s3961 + $0x3a8] sm:$0xff]
      %v4080 = vld [vmem:[%s3961 + $0x3b0] sm:$0xff]
      %v4081 = vld [vmem:[%s3961 + $0x3b8] sm:$0xff]
      %v4082 = vld [vmem:[%s3961 + $0x3c0] sm:$0xff]
      %v4083 = vld [vmem:[%s3961 + $0x3c8] sm:$0xff]
      %v4084 = vld [vmem:[%s3961 + $0x3d0] sm:$0xff]
      %v4085 = vld [vmem:[%s3961 + $0x3d8] sm:$0xff]
      %v4086 = vld [vmem:[%s3961 + $0x3e0] sm:$0xff]
      %v4087 = vld [vmem:[%s3961 + $0x3e8] sm:$0xff]
      %v4088 = vld [vmem:[%s3961 + $0x3f0] sm:$0xff]
      %v4089 = vld [vmem:[%s3961 + $0x3f8] sm:$0xff]
      %v4090 = vld [vmem:[%s3961 + $0x400] sm:$0xff]
      %v4091 = vld [vmem:[%s3961 + $0x408] sm:$0xff]
      %v4092 = vld [vmem:[%s3961 + $0x410] sm:$0xff]
      %v4093 = vld [vmem:[%s3961 + $0x418] sm:$0xff]
      %v4094 = vld [vmem:[%s3961 + $0x420] sm:$0xff]
      %v4095 = vld [vmem:[%s3961 + $0x428] sm:$0xff]
      %v4096 = vld [vmem:[%s3961 + $0x430] sm:$0xff]
      %v4097 = vld [vmem:[%s3961 + $0x438] sm:$0xff]
      %v4098 = vld [vmem:[%s3961 + $0x440] sm:$0xff]
      %v4099 = vld [vmem:[%s3961 + $0x448] sm:$0xff]
      %v4100 = vld [vmem:[%s3961 + $0x450] sm:$0xff]
      %v4101 = vld [vmem:[%s3961 + $0x458] sm:$0xff]
      %v4102 = vld [vmem:[%s3961 + $0x460] sm:$0xff]
      %v4103 = vld [vmem:[%s3961 + $0x468] sm:$0xff]
      %v4104 = vld [vmem:[%s3961 + $0x470] sm:$0xff]
      %v4105 = vld [vmem:[%s3961 + $0x478] sm:$0xff]
      %v4106 = vld [vmem:[%s3961 + $0x480] sm:$0xff]
      %v4107 = vld [vmem:[%s3961 + $0x488] sm:$0xff]
      %v4108 = vld [vmem:[%s3961 + $0x490] sm:$0xff]
      %v4109 = vld [vmem:[%s3961 + $0x498] sm:$0xff]
      %v4110 = vld [vmem:[%s3961 + $0x4a0] sm:$0xff]
      %v4111 = vld [vmem:[%s3961 + $0x4a8] sm:$0xff]
      %v4112 = vld [vmem:[%s3961 + $0x4b0] sm:$0xff]
      %v4113 = vld [vmem:[%s3961 + $0x4b8] sm:$0xff]
      %v4114 = vld [vmem:[%s3961 + $0x4c0] sm:$0xff]
      %v4115 = vld [vmem:[%s3961 + $0x4c8] sm:$0xff]
      %v4116 = vld [vmem:[%s3961 + $0x4d0] sm:$0xff]
      %v4117 = vld [vmem:[%s3961 + $0x4d8] sm:$0xff]
      %v4118 = vld [vmem:[%s3961 + $0x4e0] sm:$0xff]
      %v4119 = vld [vmem:[%s3961 + $0x4e8] sm:$0xff]
      %v4120 = vld [vmem:[%s3961 + $0x4f0] sm:$0xff]
      %v4121 = vld [vmem:[%s3961 + $0x4f8] sm:$0xff]
      %v4122 = vld [vmem:[%s3961 + $0x500] sm:$0xff]
      %v4123 = vld [vmem:[%s3961 + $0x508] sm:$0xff]
      %v4124 = vld [vmem:[%s3961 + $0x510] sm:$0xff]
      %v4125 = vld [vmem:[%s3961 + $0x518] sm:$0xff]
      %v4126 = vld [vmem:[%s3961 + $0x520] sm:$0xff]
      %v4127 = vld [vmem:[%s3961 + $0x528] sm:$0xff]
      %v4128 = vld [vmem:[%s3961 + $0x530] sm:$0xff]
      %v4129 = vld [vmem:[%s3961 + $0x538] sm:$0xff]
      %v4130 = vld [vmem:[%s3961 + $0x540] sm:$0xff]
      %v4131 = vld [vmem:[%s3961 + $0x548] sm:$0xff]
      %v4132 = vld [vmem:[%s3961 + $0x550] sm:$0xff]
      %v4133 = vld [vmem:[%s3961 + $0x558] sm:$0xff]
      %v4134 = vld [vmem:[%s3961 + $0x560] sm:$0xff]
      %v4135 = vld [vmem:[%s3961 + $0x568] sm:$0xff]
      %v4136 = vld [vmem:[%s3961 + $0x570] sm:$0xff]
      %v4137 = vld [vmem:[%s3961 + $0x578] sm:$0xff]
      %v4138 = vld [vmem:[%s3961 + $0x580] sm:$0xff]
      %v4139 = vld [vmem:[%s3961 + $0x588] sm:$0xff]
      %v4140 = vld [vmem:[%s3961 + $0x590] sm:$0xff]
      %v4141 = vld [vmem:[%s3961 + $0x598] sm:$0xff]
      %v4142 = vld [vmem:[%s3961 + $0x5a0] sm:$0xff]
      %v4143 = vld [vmem:[%s3961 + $0x5a8] sm:$0xff]
      %v4144 = vld [vmem:[%s3961 + $0x5b0] sm:$0xff]
      %v4145 = vld [vmem:[%s3961 + $0x5b8] sm:$0xff]
      %v4146 = vld [vmem:[%s3961 + $0x5c0] sm:$0xff]
      %v4147 = vld [vmem:[%s3961 + $0x5c8] sm:$0xff]
      %v4148 = vld [vmem:[%s3961 + $0x5d0] sm:$0xff]
      %v4149 = vld [vmem:[%s3961 + $0x5d8] sm:$0xff]
      %v4150 = vld [vmem:[%s3961 + $0x5e0] sm:$0xff]
      %v4151 = vld [vmem:[%s3961 + $0x5e8] sm:$0xff]
      %v4152 = vld [vmem:[%s3961 + $0x5f0] sm:$0xff]
      %v4153 = vld [vmem:[%s3961 + $0x5f8] sm:$0xff]
      %v4154 = vld [vmem:[%s3961 + $0x600] sm:$0xff]
      %v4155 = vld [vmem:[%s3961 + $0x608] sm:$0xff]
      %v4156 = vld [vmem:[%s3961 + $0x610] sm:$0xff]
      %v4157 = vld [vmem:[%s3961 + $0x618] sm:$0xff]
      %v4158 = vld [vmem:[%s3961 + $0x620] sm:$0xff]
      %v4159 = vld [vmem:[%s3961 + $0x628] sm:$0xff]
      %v4160 = vld [vmem:[%s3961 + $0x630] sm:$0xff]
      %v4161 = vld [vmem:[%s3961 + $0x638] sm:$0xff]
      %v4162 = vld [vmem:[%s3961 + $0x640] sm:$0xff]
      %v4163 = vld [vmem:[%s3961 + $0x648] sm:$0xff]
      %v4164 = vld [vmem:[%s3961 + $0x650] sm:$0xff]
      %v4165 = vld [vmem:[%s3961 + $0x658] sm:$0xff]
      %v4166 = vld [vmem:[%s3961 + $0x660] sm:$0xff]
      %v4167 = vld [vmem:[%s3961 + $0x668] sm:$0xff]
      %v4168 = vld [vmem:[%s3961 + $0x670] sm:$0xff]
      %v4169 = vld [vmem:[%s3961 + $0x678] sm:$0xff]
      %v4170 = vld [vmem:[%s3961 + $0x680] sm:$0xff]
      %v4171 = vld [vmem:[%s3961 + $0x688] sm:$0xff]
      %v4172 = vld [vmem:[%s3961 + $0x690] sm:$0xff]
      %v4173 = vld [vmem:[%s3961 + $0x698] sm:$0xff]
      %v4174 = vld [vmem:[%s3961 + $0x6a0] sm:$0xff]
      %v4175 = vld [vmem:[%s3961 + $0x6a8] sm:$0xff]
      %v4176 = vld [vmem:[%s3961 + $0x6b0] sm:$0xff]
      %v4177 = vld [vmem:[%s3961 + $0x6b8] sm:$0xff]
      %v4178 = vld [vmem:[%s3961 + $0x6c0] sm:$0xff]
      %v4179 = vld [vmem:[%s3961 + $0x6c8] sm:$0xff]
      %v4180 = vld [vmem:[%s3961 + $0x6d0] sm:$0xff]
      %v4181 = vld [vmem:[%s3961 + $0x6d8] sm:$0xff]
      %v4182 = vld [vmem:[%s3961 + $0x6e0] sm:$0xff]
      %v4183 = vld [vmem:[%s3961 + $0x6e8] sm:$0xff]
      %v4184 = vld [vmem:[%s3961 + $0x6f0] sm:$0xff]
      %v4185 = vld [vmem:[%s3961 + $0x6f8] sm:$0xff]
      %v4186 = vld [vmem:[%s3961 + $0x700] sm:$0xff]
      %v4187 = vld [vmem:[%s3961 + $0x708] sm:$0xff]
      %v4188 = vld [vmem:[%s3961 + $0x710] sm:$0xff]
      %v4189 = vld [vmem:[%s3961 + $0x718] sm:$0xff]
      %v4190 = vld [vmem:[%s3961 + $0x720] sm:$0xff]
      %v4191 = vld [vmem:[%s3961 + $0x728] sm:$0xff]
      %v4192 = vld [vmem:[%s3961 + $0x730] sm:$0xff]
      %v4193 = vld [vmem:[%s3961 + $0x738] sm:$0xff]
      %v4194 = vld [vmem:[%s3961 + $0x740] sm:$0xff]
      %v4195 = vld [vmem:[%s3961 + $0x748] sm:$0xff]
      %v4196 = vld [vmem:[%s3961 + $0x750] sm:$0xff]
      %v4197 = vld [vmem:[%s3961 + $0x758] sm:$0xff]
      %v4198 = vld [vmem:[%s3961 + $0x760] sm:$0xff]
      %v4199 = vld [vmem:[%s3961 + $0x768] sm:$0xff]
      %v4200 = vld [vmem:[%s3961 + $0x770] sm:$0xff]
      %v4201 = vld [vmem:[%s3961 + $0x778] sm:$0xff]
      %v4202 = vld [vmem:[%s3961 + $0x780] sm:$0xff]
      %v4203 = vld [vmem:[%s3961 + $0x788] sm:$0xff]
      %v4204 = vld [vmem:[%s3961 + $0x790] sm:$0xff]
      %v4205 = vld [vmem:[%s3961 + $0x798] sm:$0xff]
      %v4206 = vld [vmem:[%s3961 + $0x7a0] sm:$0xff]
      %v4207 = vld [vmem:[%s3961 + $0x7a8] sm:$0xff]
      %v4208 = vld [vmem:[%s3961 + $0x7b0] sm:$0xff]
      %v4209 = vld [vmem:[%s3961 + $0x7b8] sm:$0xff]
      %v4210 = vld [vmem:[%s3961 + $0x7c0] sm:$0xff]
      %v4211 = vld [vmem:[%s3961 + $0x7c8] sm:$0xff]
      %v4212 = vld [vmem:[%s3961 + $0x7d0] sm:$0xff]
      %v4213 = vld [vmem:[%s3961 + $0x7d8] sm:$0xff]
      %v4214 = vld [vmem:[%s3961 + $0x7e0] sm:$0xff]
      %v4215 = vld [vmem:[%s3961 + $0x7e8] sm:$0xff]
      %v4216 = vld [vmem:[%s3961 + $0x7f0] sm:$0xff]
      %v4217 = vld [vmem:[%s3961 + $0x7f8] sm:$0xff]
      %4218 = vmatprep.subr.mxu0 %v3963
      %4219 = vmatpush1.msra.mxu0 %v3962
      %4220 = vmatprep.subr.mxu0 %v3971
      %4221 = vmatpush1.msra.mxu0 %v3970
      %4222 = vmatprep.subr.mxu0 %v3979
      %4223 = vmatpush1.msra.mxu0 %v3978
      %4224 = vmatprep.subr.mxu0 %v3987
      %4225 = vmatpush1.msra.mxu0 %v3986
      %4226 = vmatprep.subr.mxu0 %v3995
      %4227 = vmatpush1.msra.mxu0 %v3994
      %4228 = vmatprep.subr.mxu0 %v4003
      %4229 = vmatpush1.msra.mxu0 %v4002
      %4230 = vmatprep.subr.mxu0 %v4011
      %4231 = vmatpush1.msra.mxu0 %v4010
      %4232 = vmatprep.subr.mxu0 %v4019
      %4233 = vmatpush1.msra.mxu0 %v4018
      %4234 = vmatprep.subr.mxu0 %v4027
      %4235 = vmatpush1.msra.mxu0 %v4026
      %4236 = vmatprep.subr.mxu0 %v4035
      %4237 = vmatpush1.msra.mxu0 %v4034
      %4238 = vmatprep.subr.mxu0 %v4043
      %4239 = vmatpush1.msra.mxu0 %v4042
      %4240 = vmatprep.subr.mxu0 %v4051
      %4241 = vmatpush1.msra.mxu0 %v4050
      %4242 = vmatprep.subr.mxu0 %v4059
      %4243 = vmatpush1.msra.mxu0 %v4058
      %4244 = vmatprep.subr.mxu0 %v4067
      %4245 = vmatpush1.msra.mxu0 %v4066
      %4246 = vmatprep.subr.mxu0 %v4075
      %4247 = vmatpush1.msra.mxu0 %v4074
      %4248 = vmatprep.subr.mxu0 %v4083
      %4249 = vmatpush1.msra.mxu0 %v4082
      %4250 = vmatprep.subr.mxu0 %v4091
      %4251 = vmatpush1.msra.mxu0 %v4090
      %4252 = vmatprep.subr.mxu0 %v4099
      %4253 = vmatpush1.msra.mxu0 %v4098
      %4254 = vmatprep.subr.mxu0 %v4107
      %4255 = vmatpush1.msra.mxu0 %v4106
      %4256 = vmatprep.subr.mxu0 %v4115
      %4257 = vmatpush1.msra.mxu0 %v4114
      %4258 = vmatprep.subr.mxu0 %v4123
      %4259 = vmatpush1.msra.mxu0 %v4122
      %4260 = vmatprep.subr.mxu0 %v4131
      %4261 = vmatpush1.msra.mxu0 %v4130
      %4262 = vmatprep.subr.mxu0 %v4139
      %4263 = vmatpush1.msra.mxu0 %v4138
      %4264 = vmatprep.subr.mxu0 %v4147
      %4265 = vmatpush1.msra.mxu0 %v4146
      %4266 = vmatprep.subr.mxu0 %v4155
      %4267 = vmatpush1.msra.mxu0 %v4154
      %4268 = vmatprep.subr.mxu0 %v4163
      %4269 = vmatpush1.msra.mxu0 %v4162
      %4270 = vmatprep.subr.mxu0 %v4171
      %4271 = vmatpush1.msra.mxu0 %v4170
      %4272 = vmatprep.subr.mxu0 %v4179
      %4273 = vmatpush1.msra.mxu0 %v4178
      %4274 = vmatprep.subr.mxu0 %v4187
      %4275 = vmatpush1.msra.mxu0 %v4186
      %4276 = vmatprep.subr.mxu0 %v4195
      %4277 = vmatpush1.msra.mxu0 %v4194
      %4278 = vmatprep.subr.mxu0 %v4203
      %4279 = vmatpush1.msra.mxu0 %v4202
      %4280 = vmatprep.subr.mxu0 %v4211
      %4281 = vmatpush1.msra.mxu0 %v4210
      %4282 = vmatprep.mubr.f32.mxu0 %v429
      %4283 = vmatmul.mubr.f32.gmra.mrb[0].mxu0 %v171
      %v4284 = vpop.f32.mrb[0].mxu0
      %v4285 = vadd.f32 0.0, %v4284
      %v4286 = vpop.f32.mrb[0].mxu0
      %v4287 = vadd.f32 0.0, %v4286
      %4288 = vdwg.mxu0
      %4289 = vmatprep.subr.mxu0 %v3965
      %4290 = vmatpush1.msra.mxu0 %v3964
      %4291 = vmatprep.subr.mxu0 %v3973
      %4292 = vmatpush1.msra.mxu0 %v3972
      %4293 = vmatprep.subr.mxu0 %v3981
      %4294 = vmatpush1.msra.mxu0 %v3980
      %4295 = vmatprep.subr.mxu0 %v3989
      %4296 = vmatpush1.msra.mxu0 %v3988
      %4297 = vmatprep.subr.mxu0 %v3997
      %4298 = vmatpush1.msra.mxu0 %v3996
      %4299 = vmatprep.subr.mxu0 %v4005
      %4300 = vmatpush1.msra.mxu0 %v4004
      %4301 = vmatprep.subr.mxu0 %v4013
      %4302 = vmatpush1.msra.mxu0 %v4012
      %4303 = vmatprep.subr.mxu0 %v4021
      %4304 = vmatpush1.msra.mxu0 %v4020
      %4305 = vmatprep.subr.mxu0 %v4029
      %4306 = vmatpush1.msra.mxu0 %v4028
      %4307 = vmatprep.subr.mxu0 %v4037
      %4308 = vmatpush1.msra.mxu0 %v4036
      %4309 = vmatprep.subr.mxu0 %v4045
      %4310 = vmatpush1.msra.mxu0 %v4044
      %4311 = vmatprep.subr.mxu0 %v4053
      %4312 = vmatpush1.msra.mxu0 %v4052
      %4313 = vmatprep.subr.mxu0 %v4061
      %4314 = vmatpush1.msra.mxu0 %v4060
      %4315 = vmatprep.subr.mxu0 %v4069
      %4316 = vmatpush1.msra.mxu0 %v4068
      %4317 = vmatprep.subr.mxu0 %v4077
      %4318 = vmatpush1.msra.mxu0 %v4076
      %4319 = vmatprep.subr.mxu0 %v4085
      %4320 = vmatpush1.msra.mxu0 %v4084
      %4321 = vmatprep.subr.mxu0 %v4093
      %4322 = vmatpush1.msra.mxu0 %v4092
      %4323 = vmatprep.subr.mxu0 %v4101
      %4324 = vmatpush1.msra.mxu0 %v4100
      %4325 = vmatprep.subr.mxu0 %v4109
      %4326 = vmatpush1.msra.mxu0 %v4108
      %4327 = vmatprep.subr.mxu0 %v4117
      %4328 = vmatpush1.msra.mxu0 %v4116
      %4329 = vmatprep.subr.mxu0 %v4125
      %4330 = vmatpush1.msra.mxu0 %v4124
      %4331 = vmatprep.subr.mxu0 %v4133
      %4332 = vmatpush1.msra.mxu0 %v4132
      %4333 = vmatprep.subr.mxu0 %v4141
      %4334 = vmatpush1.msra.mxu0 %v4140
      %4335 = vmatprep.subr.mxu0 %v4149
      %4336 = vmatpush1.msra.mxu0 %v4148
      %4337 = vmatprep.subr.mxu0 %v4157
      %4338 = vmatpush1.msra.mxu0 %v4156
      %4339 = vmatprep.subr.mxu0 %v4165
      %4340 = vmatpush1.msra.mxu0 %v4164
      %4341 = vmatprep.subr.mxu0 %v4173
      %4342 = vmatpush1.msra.mxu0 %v4172
      %4343 = vmatprep.subr.mxu0 %v4181
      %4344 = vmatpush1.msra.mxu0 %v4180
      %4345 = vmatprep.subr.mxu0 %v4189
      %4346 = vmatpush1.msra.mxu0 %v4188
      %4347 = vmatprep.subr.mxu0 %v4197
      %4348 = vmatpush1.msra.mxu0 %v4196
      %4349 = vmatprep.subr.mxu0 %v4205
      %4350 = vmatpush1.msra.mxu0 %v4204
      %4351 = vmatprep.subr.mxu0 %v4213
      %4352 = vmatpush1.msra.mxu0 %v4212
      %4353 = vmatprep.mubr.f32.mxu0 %v429
      %4354 = vmatmul.mubr.f32.gmra.mrb[0].mxu0 %v171
      %v4355 = vpop.f32.mrb[0].mxu0
      %v4356 = vadd.f32 0.0, %v4355
      %v4357 = vpop.f32.mrb[0].mxu0
      %v4358 = vadd.f32 0.0, %v4357
      %4359 = vdwg.mxu0
      %4360 = vmatprep.subr.mxu0 %v3967
      %4361 = vmatpush1.msra.mxu0 %v3966
      %4362 = vmatprep.subr.mxu0 %v3975
      %4363 = vmatpush1.msra.mxu0 %v3974
      %4364 = vmatprep.subr.mxu0 %v3983
      %4365 = vmatpush1.msra.mxu0 %v3982
      %4366 = vmatprep.subr.mxu0 %v3991
      %4367 = vmatpush1.msra.mxu0 %v3990
      %4368 = vmatprep.subr.mxu0 %v3999
      %4369 = vmatpush1.msra.mxu0 %v3998
      %4370 = vmatprep.subr.mxu0 %v4007
      %4371 = vmatpush1.msra.mxu0 %v4006
      %4372 = vmatprep.subr.mxu0 %v4015
      %4373 = vmatpush1.msra.mxu0 %v4014
      %4374 = vmatprep.subr.mxu0 %v4023
      %4375 = vmatpush1.msra.mxu0 %v4022
      %4376 = vmatprep.subr.mxu0 %v4031
      %4377 = vmatpush1.msra.mxu0 %v4030
      %4378 = vmatprep.subr.mxu0 %v4039
      %4379 = vmatpush1.msra.mxu0 %v4038
      %4380 = vmatprep.subr.mxu0 %v4047
      %4381 = vmatpush1.msra.mxu0 %v4046
      %4382 = vmatprep.subr.mxu0 %v4055
      %4383 = vmatpush1.msra.mxu0 %v4054
      %4384 = vmatprep.subr.mxu0 %v4063
      %4385 = vmatpush1.msra.mxu0 %v4062
      %4386 = vmatprep.subr.mxu0 %v4071
      %4387 = vmatpush1.msra.mxu0 %v4070
      %4388 = vmatprep.subr.mxu0 %v4079
      %4389 = vmatpush1.msra.mxu0 %v4078
      %4390 = vmatprep.subr.mxu0 %v4087
      %4391 = vmatpush1.msra.mxu0 %v4086
      %4392 = vmatprep.subr.mxu0 %v4095
      %4393 = vmatpush1.msra.mxu0 %v4094
      %4394 = vmatprep.subr.mxu0 %v4103
      %4395 = vmatpush1.msra.mxu0 %v4102
      %4396 = vmatprep.subr.mxu0 %v4111
      %4397 = vmatpush1.msra.mxu0 %v4110
      %4398 = vmatprep.subr.mxu0 %v4119
      %4399 = vmatpush1.msra.mxu0 %v4118
      %4400 = vmatprep.subr.mxu0 %v4127
      %4401 = vmatpush1.msra.mxu0 %v4126
      %4402 = vmatprep.subr.mxu0 %v4135
      %4403 = vmatpush1.msra.mxu0 %v4134
      %4404 = vmatprep.subr.mxu0 %v4143
      %4405 = vmatpush1.msra.mxu0 %v4142
      %4406 = vmatprep.subr.mxu0 %v4151
      %4407 = vmatpush1.msra.mxu0 %v4150
      %4408 = vmatprep.subr.mxu0 %v4159
      %4409 = vmatpush1.msra.mxu0 %v4158
      %4410 = vmatprep.subr.mxu0 %v4167
      %4411 = vmatpush1.msra.mxu0 %v4166
      %4412 = vmatprep.subr.mxu0 %v4175
      %4413 = vmatpush1.msra.mxu0 %v4174
      %4414 = vmatprep.subr.mxu0 %v4183
      %4415 = vmatpush1.msra.mxu0 %v4182
      %4416 = vmatprep.subr.mxu0 %v4191
      %4417 = vmatpush1.msra.mxu0 %v4190
      %4418 = vmatprep.subr.mxu0 %v4199
      %4419 = vmatpush1.msra.mxu0 %v4198
      %4420 = vmatprep.subr.mxu0 %v4207
      %4421 = vmatpush1.msra.mxu0 %v4206
      %4422 = vmatprep.subr.mxu0 %v4215
      %4423 = vmatpush1.msra.mxu0 %v4214
      %4424 = vmatprep.mubr.f32.mxu0 %v429
      %4425 = vmatmul.mubr.f32.gmra.mrb[0].mxu0 %v171
      %v4426 = vpop.f32.mrb[0].mxu0
      %v4427 = vadd.f32 0.0, %v4426
      %v4428 = vpop.f32.mrb[0].mxu0
      %v4429 = vadd.f32 0.0, %v4428
      %4430 = vdwg.mxu0
      %4431 = vmatprep.subr.mxu0 %v3969
      %4432 = vmatpush1.msra.mxu0 %v3968
      %4433 = vmatprep.subr.mxu0 %v3977
      %4434 = vmatpush1.msra.mxu0 %v3976
      %4435 = vmatprep.subr.mxu0 %v3985
      %4436 = vmatpush1.msra.mxu0 %v3984
      %4437 = vmatprep.subr.mxu0 %v3993
      %4438 = vmatpush1.msra.mxu0 %v3992
      %4439 = vmatprep.subr.mxu0 %v4001
      %4440 = vmatpush1.msra.mxu0 %v4000
      %4441 = vmatprep.subr.mxu0 %v4009
      %4442 = vmatpush1.msra.mxu0 %v4008
      %4443 = vmatprep.subr.mxu0 %v4017
      %4444 = vmatpush1.msra.mxu0 %v4016
      %4445 = vmatprep.subr.mxu0 %v4025
      %4446 = vmatpush1.msra.mxu0 %v4024
      %4447 = vmatprep.subr.mxu0 %v4033
      %4448 = vmatpush1.msra.mxu0 %v4032
      %4449 = vmatprep.subr.mxu0 %v4041
      %4450 = vmatpush1.msra.mxu0 %v4040
      %4451 = vmatprep.subr.mxu0 %v4049
      %4452 = vmatpush1.msra.mxu0 %v4048
      %4453 = vmatprep.subr.mxu0 %v4057
      %4454 = vmatpush1.msra.mxu0 %v4056
      %4455 = vmatprep.subr.mxu0 %v4065
      %4456 = vmatpush1.msra.mxu0 %v4064
      %4457 = vmatprep.subr.mxu0 %v4073
      %4458 = vmatpush1.msra.mxu0 %v4072
      %4459 = vmatprep.subr.mxu0 %v4081
      %4460 = vmatpush1.msra.mxu0 %v4080
      %4461 = vmatprep.subr.mxu0 %v4089
      %4462 = vmatpush1.msra.mxu0 %v4088
      %4463 = vmatprep.subr.mxu0 %v4097
      %4464 = vmatpush1.msra.mxu0 %v4096
      %4465 = vmatprep.subr.mxu0 %v4105
      %4466 = vmatpush1.msra.mxu0 %v4104
      %4467 = vmatprep.subr.mxu0 %v4113
      %4468 = vmatpush1.msra.mxu0 %v4112
      %4469 = vmatprep.subr.mxu0 %v4121
      %4470 = vmatpush1.msra.mxu0 %v4120
      %4471 = vmatprep.subr.mxu0 %v4129
      %4472 = vmatpush1.msra.mxu0 %v4128
      %4473 = vmatprep.subr.mxu0 %v4137
      %4474 = vmatpush1.msra.mxu0 %v4136
      %4475 = vmatprep.subr.mxu0 %v4145
      %4476 = vmatpush1.msra.mxu0 %v4144
      %4477 = vmatprep.subr.mxu0 %v4153
      %4478 = vmatpush1.msra.mxu0 %v4152
      %4479 = vmatprep.subr.mxu0 %v4161
      %4480 = vmatpush1.msra.mxu0 %v4160
      %4481 = vmatprep.subr.mxu0 %v4169
      %4482 = vmatpush1.msra.mxu0 %v4168
      %4483 = vmatprep.subr.mxu0 %v4177
      %4484 = vmatpush1.msra.mxu0 %v4176
      %4485 = vmatprep.subr.mxu0 %v4185
      %4486 = vmatpush1.msra.mxu0 %v4184
      %4487 = vmatprep.subr.mxu0 %v4193
      %4488 = vmatpush1.msra.mxu0 %v4192
      %4489 = vmatprep.subr.mxu0 %v4201
      %4490 = vmatpush1.msra.mxu0 %v4200
      %4491 = vmatprep.subr.mxu0 %v4209
      %4492 = vmatpush1.msra.mxu0 %v4208
      %4493 = vmatprep.subr.mxu0 %v4217
      %4494 = vmatpush1.msra.mxu0 %v4216
      %4495 = vmatprep.mubr.f32.mxu0 %v429
      %4496 = vmatmul.mubr.f32.gmra.mrb[0].mxu0 %v171
      %v4497 = vpop.f32.mrb[0].mxu0
      %v4498 = vadd.f32 0.0, %v4497
      %v4499 = vpop.f32.mrb[0].mxu0
      %v4500 = vadd.f32 0.0, %v4499
      %4501 = vdwg.mxu0
      %s4502 = scalar_lea.vmem %s1, 16384
      %v4503 = vld [vmem:[%s4502] sm:$0xff]
      %v4504 = vld [vmem:[%s4502 + $0x8] sm:$0xff]
      %v4505 = vld [vmem:[%s4502 + $0x10] sm:$0xff]
      %v4506 = vld [vmem:[%s4502 + $0x18] sm:$0xff]
      %v4507 = vld [vmem:[%s4502 + $0x20] sm:$0xff]
      %v4508 = vld [vmem:[%s4502 + $0x28] sm:$0xff]
      %v4509 = vld [vmem:[%s4502 + $0x30] sm:$0xff]
      %v4510 = vld [vmem:[%s4502 + $0x38] sm:$0xff]
      %v4511 = vld [vmem:[%s4502 + $0x40] sm:$0xff]
      %v4512 = vld [vmem:[%s4502 + $0x48] sm:$0xff]
      %v4513 = vld [vmem:[%s4502 + $0x50] sm:$0xff]
      %v4514 = vld [vmem:[%s4502 + $0x58] sm:$0xff]
      %v4515 = vld [vmem:[%s4502 + $0x60] sm:$0xff]
      %v4516 = vld [vmem:[%s4502 + $0x68] sm:$0xff]
      %v4517 = vld [vmem:[%s4502 + $0x70] sm:$0xff]
      %v4518 = vld [vmem:[%s4502 + $0x78] sm:$0xff]
      %v4519 = vld [vmem:[%s4502 + $0x80] sm:$0xff]
      %v4520 = vld [vmem:[%s4502 + $0x88] sm:$0xff]
      %v4521 = vld [vmem:[%s4502 + $0x90] sm:$0xff]
      %v4522 = vld [vmem:[%s4502 + $0x98] sm:$0xff]
      %v4523 = vld [vmem:[%s4502 + $0xa0] sm:$0xff]
      %v4524 = vld [vmem:[%s4502 + $0xa8] sm:$0xff]
      %v4525 = vld [vmem:[%s4502 + $0xb0] sm:$0xff]
      %v4526 = vld [vmem:[%s4502 + $0xb8] sm:$0xff]
      %v4527 = vld [vmem:[%s4502 + $0xc0] sm:$0xff]
      %v4528 = vld [vmem:[%s4502 + $0xc8] sm:$0xff]
      %v4529 = vld [vmem:[%s4502 + $0xd0] sm:$0xff]
      %v4530 = vld [vmem:[%s4502 + $0xd8] sm:$0xff]
      %v4531 = vld [vmem:[%s4502 + $0xe0] sm:$0xff]
      %v4532 = vld [vmem:[%s4502 + $0xe8] sm:$0xff]
      %v4533 = vld [vmem:[%s4502 + $0xf0] sm:$0xff]
      %v4534 = vld [vmem:[%s4502 + $0xf8] sm:$0xff]
      %v4535 = vld [vmem:[%s4502 + $0x100] sm:$0xff]
      %v4536 = vld [vmem:[%s4502 + $0x108] sm:$0xff]
      %v4537 = vld [vmem:[%s4502 + $0x110] sm:$0xff]
      %v4538 = vld [vmem:[%s4502 + $0x118] sm:$0xff]
      %v4539 = vld [vmem:[%s4502 + $0x120] sm:$0xff]
      %v4540 = vld [vmem:[%s4502 + $0x128] sm:$0xff]
      %v4541 = vld [vmem:[%s4502 + $0x130] sm:$0xff]
      %v4542 = vld [vmem:[%s4502 + $0x138] sm:$0xff]
      %v4543 = vld [vmem:[%s4502 + $0x140] sm:$0xff]
      %v4544 = vld [vmem:[%s4502 + $0x148] sm:$0xff]
      %v4545 = vld [vmem:[%s4502 + $0x150] sm:$0xff]
      %v4546 = vld [vmem:[%s4502 + $0x158] sm:$0xff]
      %v4547 = vld [vmem:[%s4502 + $0x160] sm:$0xff]
      %v4548 = vld [vmem:[%s4502 + $0x168] sm:$0xff]
      %v4549 = vld [vmem:[%s4502 + $0x170] sm:$0xff]
      %v4550 = vld [vmem:[%s4502 + $0x178] sm:$0xff]
      %v4551 = vld [vmem:[%s4502 + $0x180] sm:$0xff]
      %v4552 = vld [vmem:[%s4502 + $0x188] sm:$0xff]
      %v4553 = vld [vmem:[%s4502 + $0x190] sm:$0xff]
      %v4554 = vld [vmem:[%s4502 + $0x198] sm:$0xff]
      %v4555 = vld [vmem:[%s4502 + $0x1a0] sm:$0xff]
      %v4556 = vld [vmem:[%s4502 + $0x1a8] sm:$0xff]
      %v4557 = vld [vmem:[%s4502 + $0x1b0] sm:$0xff]
      %v4558 = vld [vmem:[%s4502 + $0x1b8] sm:$0xff]
      %v4559 = vld [vmem:[%s4502 + $0x1c0] sm:$0xff]
      %v4560 = vld [vmem:[%s4502 + $0x1c8] sm:$0xff]
      %v4561 = vld [vmem:[%s4502 + $0x1d0] sm:$0xff]
      %v4562 = vld [vmem:[%s4502 + $0x1d8] sm:$0xff]
      %v4563 = vld [vmem:[%s4502 + $0x1e0] sm:$0xff]
      %v4564 = vld [vmem:[%s4502 + $0x1e8] sm:$0xff]
      %v4565 = vld [vmem:[%s4502 + $0x1f0] sm:$0xff]
      %v4566 = vld [vmem:[%s4502 + $0x1f8] sm:$0xff]
      %v4567 = vld [vmem:[%s4502 + $0x200] sm:$0xff]
      %v4568 = vld [vmem:[%s4502 + $0x208] sm:$0xff]
      %v4569 = vld [vmem:[%s4502 + $0x210] sm:$0xff]
      %v4570 = vld [vmem:[%s4502 + $0x218] sm:$0xff]
      %v4571 = vld [vmem:[%s4502 + $0x220] sm:$0xff]
      %v4572 = vld [vmem:[%s4502 + $0x228] sm:$0xff]
      %v4573 = vld [vmem:[%s4502 + $0x230] sm:$0xff]
      %v4574 = vld [vmem:[%s4502 + $0x238] sm:$0xff]
      %v4575 = vld [vmem:[%s4502 + $0x240] sm:$0xff]
      %v4576 = vld [vmem:[%s4502 + $0x248] sm:$0xff]
      %v4577 = vld [vmem:[%s4502 + $0x250] sm:$0xff]
      %v4578 = vld [vmem:[%s4502 + $0x258] sm:$0xff]
      %v4579 = vld [vmem:[%s4502 + $0x260] sm:$0xff]
      %v4580 = vld [vmem:[%s4502 + $0x268] sm:$0xff]
      %v4581 = vld [vmem:[%s4502 + $0x270] sm:$0xff]
      %v4582 = vld [vmem:[%s4502 + $0x278] sm:$0xff]
      %v4583 = vld [vmem:[%s4502 + $0x280] sm:$0xff]
      %v4584 = vld [vmem:[%s4502 + $0x288] sm:$0xff]
      %v4585 = vld [vmem:[%s4502 + $0x290] sm:$0xff]
      %v4586 = vld [vmem:[%s4502 + $0x298] sm:$0xff]
      %v4587 = vld [vmem:[%s4502 + $0x2a0] sm:$0xff]
      %v4588 = vld [vmem:[%s4502 + $0x2a8] sm:$0xff]
      %v4589 = vld [vmem:[%s4502 + $0x2b0] sm:$0xff]
      %v4590 = vld [vmem:[%s4502 + $0x2b8] sm:$0xff]
      %v4591 = vld [vmem:[%s4502 + $0x2c0] sm:$0xff]
      %v4592 = vld [vmem:[%s4502 + $0x2c8] sm:$0xff]
      %v4593 = vld [vmem:[%s4502 + $0x2d0] sm:$0xff]
      %v4594 = vld [vmem:[%s4502 + $0x2d8] sm:$0xff]
      %v4595 = vld [vmem:[%s4502 + $0x2e0] sm:$0xff]
      %v4596 = vld [vmem:[%s4502 + $0x2e8] sm:$0xff]
      %v4597 = vld [vmem:[%s4502 + $0x2f0] sm:$0xff]
      %v4598 = vld [vmem:[%s4502 + $0x2f8] sm:$0xff]
      %v4599 = vld [vmem:[%s4502 + $0x300] sm:$0xff]
      %v4600 = vld [vmem:[%s4502 + $0x308] sm:$0xff]
      %v4601 = vld [vmem:[%s4502 + $0x310] sm:$0xff]
      %v4602 = vld [vmem:[%s4502 + $0x318] sm:$0xff]
      %v4603 = vld [vmem:[%s4502 + $0x320] sm:$0xff]
      %v4604 = vld [vmem:[%s4502 + $0x328] sm:$0xff]
      %v4605 = vld [vmem:[%s4502 + $0x330] sm:$0xff]
      %v4606 = vld [vmem:[%s4502 + $0x338] sm:$0xff]
      %v4607 = vld [vmem:[%s4502 + $0x340] sm:$0xff]
      %v4608 = vld [vmem:[%s4502 + $0x348] sm:$0xff]
      %v4609 = vld [vmem:[%s4502 + $0x350] sm:$0xff]
      %v4610 = vld [vmem:[%s4502 + $0x358] sm:$0xff]
      %v4611 = vld [vmem:[%s4502 + $0x360] sm:$0xff]
      %v4612 = vld [vmem:[%s4502 + $0x368] sm:$0xff]
      %v4613 = vld [vmem:[%s4502 + $0x370] sm:$0xff]
      %v4614 = vld [vmem:[%s4502 + $0x378] sm:$0xff]
      %v4615 = vld [vmem:[%s4502 + $0x380] sm:$0xff]
      %v4616 = vld [vmem:[%s4502 + $0x388] sm:$0xff]
      %v4617 = vld [vmem:[%s4502 + $0x390] sm:$0xff]
      %v4618 = vld [vmem:[%s4502 + $0x398] sm:$0xff]
      %v4619 = vld [vmem:[%s4502 + $0x3a0] sm:$0xff]
      %v4620 = vld [vmem:[%s4502 + $0x3a8] sm:$0xff]
      %v4621 = vld [vmem:[%s4502 + $0x3b0] sm:$0xff]
      %v4622 = vld [vmem:[%s4502 + $0x3b8] sm:$0xff]
      %v4623 = vld [vmem:[%s4502 + $0x3c0] sm:$0xff]
      %v4624 = vld [vmem:[%s4502 + $0x3c8] sm:$0xff]
      %v4625 = vld [vmem:[%s4502 + $0x3d0] sm:$0xff]
      %v4626 = vld [vmem:[%s4502 + $0x3d8] sm:$0xff]
      %v4627 = vld [vmem:[%s4502 + $0x3e0] sm:$0xff]
      %v4628 = vld [vmem:[%s4502 + $0x3e8] sm:$0xff]
      %v4629 = vld [vmem:[%s4502 + $0x3f0] sm:$0xff]
      %v4630 = vld [vmem:[%s4502 + $0x3f8] sm:$0xff]
      %v4631 = vld [vmem:[%s4502 + $0x400] sm:$0xff]
      %v4632 = vld [vmem:[%s4502 + $0x408] sm:$0xff]
      %v4633 = vld [vmem:[%s4502 + $0x410] sm:$0xff]
      %v4634 = vld [vmem:[%s4502 + $0x418] sm:$0xff]
      %v4635 = vld [vmem:[%s4502 + $0x420] sm:$0xff]
      %v4636 = vld [vmem:[%s4502 + $0x428] sm:$0xff]
      %v4637 = vld [vmem:[%s4502 + $0x430] sm:$0xff]
      %v4638 = vld [vmem:[%s4502 + $0x438] sm:$0xff]
      %v4639 = vld [vmem:[%s4502 + $0x440] sm:$0xff]
      %v4640 = vld [vmem:[%s4502 + $0x448] sm:$0xff]
      %v4641 = vld [vmem:[%s4502 + $0x450] sm:$0xff]
      %v4642 = vld [vmem:[%s4502 + $0x458] sm:$0xff]
      %v4643 = vld [vmem:[%s4502 + $0x460] sm:$0xff]
      %v4644 = vld [vmem:[%s4502 + $0x468] sm:$0xff]
      %v4645 = vld [vmem:[%s4502 + $0x470] sm:$0xff]
      %v4646 = vld [vmem:[%s4502 + $0x478] sm:$0xff]
      %v4647 = vld [vmem:[%s4502 + $0x480] sm:$0xff]
      %v4648 = vld [vmem:[%s4502 + $0x488] sm:$0xff]
      %v4649 = vld [vmem:[%s4502 + $0x490] sm:$0xff]
      %v4650 = vld [vmem:[%s4502 + $0x498] sm:$0xff]
      %v4651 = vld [vmem:[%s4502 + $0x4a0] sm:$0xff]
      %v4652 = vld [vmem:[%s4502 + $0x4a8] sm:$0xff]
      %v4653 = vld [vmem:[%s4502 + $0x4b0] sm:$0xff]
      %v4654 = vld [vmem:[%s4502 + $0x4b8] sm:$0xff]
      %v4655 = vld [vmem:[%s4502 + $0x4c0] sm:$0xff]
      %v4656 = vld [vmem:[%s4502 + $0x4c8] sm:$0xff]
      %v4657 = vld [vmem:[%s4502 + $0x4d0] sm:$0xff]
      %v4658 = vld [vmem:[%s4502 + $0x4d8] sm:$0xff]
      %v4659 = vld [vmem:[%s4502 + $0x4e0] sm:$0xff]
      %v4660 = vld [vmem:[%s4502 + $0x4e8] sm:$0xff]
      %v4661 = vld [vmem:[%s4502 + $0x4f0] sm:$0xff]
      %v4662 = vld [vmem:[%s4502 + $0x4f8] sm:$0xff]
      %v4663 = vld [vmem:[%s4502 + $0x500] sm:$0xff]
      %v4664 = vld [vmem:[%s4502 + $0x508] sm:$0xff]
      %v4665 = vld [vmem:[%s4502 + $0x510] sm:$0xff]
      %v4666 = vld [vmem:[%s4502 + $0x518] sm:$0xff]
      %v4667 = vld [vmem:[%s4502 + $0x520] sm:$0xff]
      %v4668 = vld [vmem:[%s4502 + $0x528] sm:$0xff]
      %v4669 = vld [vmem:[%s4502 + $0x530] sm:$0xff]
      %v4670 = vld [vmem:[%s4502 + $0x538] sm:$0xff]
      %v4671 = vld [vmem:[%s4502 + $0x540] sm:$0xff]
      %v4672 = vld [vmem:[%s4502 + $0x548] sm:$0xff]
      %v4673 = vld [vmem:[%s4502 + $0x550] sm:$0xff]
      %v4674 = vld [vmem:[%s4502 + $0x558] sm:$0xff]
      %v4675 = vld [vmem:[%s4502 + $0x560] sm:$0xff]
      %v4676 = vld [vmem:[%s4502 + $0x568] sm:$0xff]
      %v4677 = vld [vmem:[%s4502 + $0x570] sm:$0xff]
      %v4678 = vld [vmem:[%s4502 + $0x578] sm:$0xff]
      %v4679 = vld [vmem:[%s4502 + $0x580] sm:$0xff]
      %v4680 = vld [vmem:[%s4502 + $0x588] sm:$0xff]
      %v4681 = vld [vmem:[%s4502 + $0x590] sm:$0xff]
      %v4682 = vld [vmem:[%s4502 + $0x598] sm:$0xff]
      %v4683 = vld [vmem:[%s4502 + $0x5a0] sm:$0xff]
      %v4684 = vld [vmem:[%s4502 + $0x5a8] sm:$0xff]
      %v4685 = vld [vmem:[%s4502 + $0x5b0] sm:$0xff]
      %v4686 = vld [vmem:[%s4502 + $0x5b8] sm:$0xff]
      %v4687 = vld [vmem:[%s4502 + $0x5c0] sm:$0xff]
      %v4688 = vld [vmem:[%s4502 + $0x5c8] sm:$0xff]
      %v4689 = vld [vmem:[%s4502 + $0x5d0] sm:$0xff]
      %v4690 = vld [vmem:[%s4502 + $0x5d8] sm:$0xff]
      %v4691 = vld [vmem:[%s4502 + $0x5e0] sm:$0xff]
      %v4692 = vld [vmem:[%s4502 + $0x5e8] sm:$0xff]
      %v4693 = vld [vmem:[%s4502 + $0x5f0] sm:$0xff]
      %v4694 = vld [vmem:[%s4502 + $0x5f8] sm:$0xff]
      %v4695 = vld [vmem:[%s4502 + $0x600] sm:$0xff]
      %v4696 = vld [vmem:[%s4502 + $0x608] sm:$0xff]
      %v4697 = vld [vmem:[%s4502 + $0x610] sm:$0xff]
      %v4698 = vld [vmem:[%s4502 + $0x618] sm:$0xff]
      %v4699 = vld [vmem:[%s4502 + $0x620] sm:$0xff]
      %v4700 = vld [vmem:[%s4502 + $0x628] sm:$0xff]
      %v4701 = vld [vmem:[%s4502 + $0x630] sm:$0xff]
      %v4702 = vld [vmem:[%s4502 + $0x638] sm:$0xff]
      %v4703 = vld [vmem:[%s4502 + $0x640] sm:$0xff]
      %v4704 = vld [vmem:[%s4502 + $0x648] sm:$0xff]
      %v4705 = vld [vmem:[%s4502 + $0x650] sm:$0xff]
      %v4706 = vld [vmem:[%s4502 + $0x658] sm:$0xff]
      %v4707 = vld [vmem:[%s4502 + $0x660] sm:$0xff]
      %v4708 = vld [vmem:[%s4502 + $0x668] sm:$0xff]
      %v4709 = vld [vmem:[%s4502 + $0x670] sm:$0xff]
      %v4710 = vld [vmem:[%s4502 + $0x678] sm:$0xff]
      %v4711 = vld [vmem:[%s4502 + $0x680] sm:$0xff]
      %v4712 = vld [vmem:[%s4502 + $0x688] sm:$0xff]
      %v4713 = vld [vmem:[%s4502 + $0x690] sm:$0xff]
      %v4714 = vld [vmem:[%s4502 + $0x698] sm:$0xff]
      %v4715 = vld [vmem:[%s4502 + $0x6a0] sm:$0xff]
      %v4716 = vld [vmem:[%s4502 + $0x6a8] sm:$0xff]
      %v4717 = vld [vmem:[%s4502 + $0x6b0] sm:$0xff]
      %v4718 = vld [vmem:[%s4502 + $0x6b8] sm:$0xff]
      %v4719 = vld [vmem:[%s4502 + $0x6c0] sm:$0xff]
      %v4720 = vld [vmem:[%s4502 + $0x6c8] sm:$0xff]
      %v4721 = vld [vmem:[%s4502 + $0x6d0] sm:$0xff]
      %v4722 = vld [vmem:[%s4502 + $0x6d8] sm:$0xff]
      %v4723 = vld [vmem:[%s4502 + $0x6e0] sm:$0xff]
      %v4724 = vld [vmem:[%s4502 + $0x6e8] sm:$0xff]
      %v4725 = vld [vmem:[%s4502 + $0x6f0] sm:$0xff]
      %v4726 = vld [vmem:[%s4502 + $0x6f8] sm:$0xff]
      %v4727 = vld [vmem:[%s4502 + $0x700] sm:$0xff]
      %v4728 = vld [vmem:[%s4502 + $0x708] sm:$0xff]
      %v4729 = vld [vmem:[%s4502 + $0x710] sm:$0xff]
      %v4730 = vld [vmem:[%s4502 + $0x718] sm:$0xff]
      %v4731 = vld [vmem:[%s4502 + $0x720] sm:$0xff]
      %v4732 = vld [vmem:[%s4502 + $0x728] sm:$0xff]
      %v4733 = vld [vmem:[%s4502 + $0x730] sm:$0xff]
      %v4734 = vld [vmem:[%s4502 + $0x738] sm:$0xff]
      %v4735 = vld [vmem:[%s4502 + $0x740] sm:$0xff]
      %v4736 = vld [vmem:[%s4502 + $0x748] sm:$0xff]
      %v4737 = vld [vmem:[%s4502 + $0x750] sm:$0xff]
      %v4738 = vld [vmem:[%s4502 + $0x758] sm:$0xff]
      %v4739 = vld [vmem:[%s4502 + $0x760] sm:$0xff]
      %v4740 = vld [vmem:[%s4502 + $0x768] sm:$0xff]
      %v4741 = vld [vmem:[%s4502 + $0x770] sm:$0xff]
      %v4742 = vld [vmem:[%s4502 + $0x778] sm:$0xff]
      %v4743 = vld [vmem:[%s4502 + $0x780] sm:$0xff]
      %v4744 = vld [vmem:[%s4502 + $0x788] sm:$0xff]
      %v4745 = vld [vmem:[%s4502 + $0x790] sm:$0xff]
      %v4746 = vld [vmem:[%s4502 + $0x798] sm:$0xff]
      %v4747 = vld [vmem:[%s4502 + $0x7a0] sm:$0xff]
      %v4748 = vld [vmem:[%s4502 + $0x7a8] sm:$0xff]
      %v4749 = vld [vmem:[%s4502 + $0x7b0] sm:$0xff]
      %v4750 = vld [vmem:[%s4502 + $0x7b8] sm:$0xff]
      %v4751 = vld [vmem:[%s4502 + $0x7c0] sm:$0xff]
      %v4752 = vld [vmem:[%s4502 + $0x7c8] sm:$0xff]
      %v4753 = vld [vmem:[%s4502 + $0x7d0] sm:$0xff]
      %v4754 = vld [vmem:[%s4502 + $0x7d8] sm:$0xff]
      %v4755 = vld [vmem:[%s4502 + $0x7e0] sm:$0xff]
      %v4756 = vld [vmem:[%s4502 + $0x7e8] sm:$0xff]
      %v4757 = vld [vmem:[%s4502 + $0x7f0] sm:$0xff]
      %v4758 = vld [vmem:[%s4502 + $0x7f8] sm:$0xff]
      %4759 = vmatprep.subr.mxu0 %v4504
      %4760 = vmatpush1.msra.mxu0 %v4503
      %4761 = vmatprep.subr.mxu0 %v4512
      %4762 = vmatpush1.msra.mxu0 %v4511
      %4763 = vmatprep.subr.mxu0 %v4520
      %4764 = vmatpush1.msra.mxu0 %v4519
      %4765 = vmatprep.subr.mxu0 %v4528
      %4766 = vmatpush1.msra.mxu0 %v4527
      %4767 = vmatprep.subr.mxu0 %v4536
      %4768 = vmatpush1.msra.mxu0 %v4535
      %4769 = vmatprep.subr.mxu0 %v4544
      %4770 = vmatpush1.msra.mxu0 %v4543
      %4771 = vmatprep.subr.mxu0 %v4552
      %4772 = vmatpush1.msra.mxu0 %v4551
      %4773 = vmatprep.subr.mxu0 %v4560
      %4774 = vmatpush1.msra.mxu0 %v4559
      %4775 = vmatprep.subr.mxu0 %v4568
      %4776 = vmatpush1.msra.mxu0 %v4567
      %4777 = vmatprep.subr.mxu0 %v4576
      %4778 = vmatpush1.msra.mxu0 %v4575
      %4779 = vmatprep.subr.mxu0 %v4584
      %4780 = vmatpush1.msra.mxu0 %v4583
      %4781 = vmatprep.subr.mxu0 %v4592
      %4782 = vmatpush1.msra.mxu0 %v4591
      %4783 = vmatprep.subr.mxu0 %v4600
      %4784 = vmatpush1.msra.mxu0 %v4599
      %4785 = vmatprep.subr.mxu0 %v4608
      %4786 = vmatpush1.msra.mxu0 %v4607
      %4787 = vmatprep.subr.mxu0 %v4616
      %4788 = vmatpush1.msra.mxu0 %v4615
      %4789 = vmatprep.subr.mxu0 %v4624
      %4790 = vmatpush1.msra.mxu0 %v4623
      %4791 = vmatprep.subr.mxu0 %v4632
      %4792 = vmatpush1.msra.mxu0 %v4631
      %4793 = vmatprep.subr.mxu0 %v4640
      %4794 = vmatpush1.msra.mxu0 %v4639
      %4795 = vmatprep.subr.mxu0 %v4648
      %4796 = vmatpush1.msra.mxu0 %v4647
      %4797 = vmatprep.subr.mxu0 %v4656
      %4798 = vmatpush1.msra.mxu0 %v4655
      %4799 = vmatprep.subr.mxu0 %v4664
      %4800 = vmatpush1.msra.mxu0 %v4663
      %4801 = vmatprep.subr.mxu0 %v4672
      %4802 = vmatpush1.msra.mxu0 %v4671
      %4803 = vmatprep.subr.mxu0 %v4680
      %4804 = vmatpush1.msra.mxu0 %v4679
      %4805 = vmatprep.subr.mxu0 %v4688
      %4806 = vmatpush1.msra.mxu0 %v4687
      %4807 = vmatprep.subr.mxu0 %v4696
      %4808 = vmatpush1.msra.mxu0 %v4695
      %4809 = vmatprep.subr.mxu0 %v4704
      %4810 = vmatpush1.msra.mxu0 %v4703
      %4811 = vmatprep.subr.mxu0 %v4712
      %4812 = vmatpush1.msra.mxu0 %v4711
      %4813 = vmatprep.subr.mxu0 %v4720
      %4814 = vmatpush1.msra.mxu0 %v4719
      %4815 = vmatprep.subr.mxu0 %v4728
      %4816 = vmatpush1.msra.mxu0 %v4727
      %4817 = vmatprep.subr.mxu0 %v4736
      %4818 = vmatpush1.msra.mxu0 %v4735
      %4819 = vmatprep.subr.mxu0 %v4744
      %4820 = vmatpush1.msra.mxu0 %v4743
      %4821 = vmatprep.subr.mxu0 %v4752
      %4822 = vmatpush1.msra.mxu0 %v4751
      %4823 = vmatprep.mubr.f32.mxu0 %v429
      %4824 = vmatmul.mubr.f32.gmra.mrb[0].mxu0 %v171
      %v4825 = vpop.f32.mrb[0].mxu0
      %v4826 = vadd.f32 0.0, %v4825
      %v4827 = vpop.f32.mrb[0].mxu0
      %v4828 = vadd.f32 0.0, %v4827
      %4829 = vdwg.mxu0
      %4830 = vmatprep.subr.mxu0 %v4506
      %4831 = vmatpush1.msra.mxu0 %v4505
      %4832 = vmatprep.subr.mxu0 %v4514
      %4833 = vmatpush1.msra.mxu0 %v4513
      %4834 = vmatprep.subr.mxu0 %v4522
      %4835 = vmatpush1.msra.mxu0 %v4521
      %4836 = vmatprep.subr.mxu0 %v4530
      %4837 = vmatpush1.msra.mxu0 %v4529
      %4838 = vmatprep.subr.mxu0 %v4538
      %4839 = vmatpush1.msra.mxu0 %v4537
      %4840 = vmatprep.subr.mxu0 %v4546
      %4841 = vmatpush1.msra.mxu0 %v4545
      %4842 = vmatprep.subr.mxu0 %v4554
      %4843 = vmatpush1.msra.mxu0 %v4553
      %4844 = vmatprep.subr.mxu0 %v4562
      %4845 = vmatpush1.msra.mxu0 %v4561
      %4846 = vmatprep.subr.mxu0 %v4570
      %4847 = vmatpush1.msra.mxu0 %v4569
      %4848 = vmatprep.subr.mxu0 %v4578
      %4849 = vmatpush1.msra.mxu0 %v4577
      %4850 = vmatprep.subr.mxu0 %v4586
      %4851 = vmatpush1.msra.mxu0 %v4585
      %4852 = vmatprep.subr.mxu0 %v4594
      %4853 = vmatpush1.msra.mxu0 %v4593
      %4854 = vmatprep.subr.mxu0 %v4602
      %4855 = vmatpush1.msra.mxu0 %v4601
      %4856 = vmatprep.subr.mxu0 %v4610
      %4857 = vmatpush1.msra.mxu0 %v4609
      %4858 = vmatprep.subr.mxu0 %v4618
      %4859 = vmatpush1.msra.mxu0 %v4617
      %4860 = vmatprep.subr.mxu0 %v4626
      %4861 = vmatpush1.msra.mxu0 %v4625
      %4862 = vmatprep.subr.mxu0 %v4634
      %4863 = vmatpush1.msra.mxu0 %v4633
      %4864 = vmatprep.subr.mxu0 %v4642
      %4865 = vmatpush1.msra.mxu0 %v4641
      %4866 = vmatprep.subr.mxu0 %v4650
      %4867 = vmatpush1.msra.mxu0 %v4649
      %4868 = vmatprep.subr.mxu0 %v4658
      %4869 = vmatpush1.msra.mxu0 %v4657
      %4870 = vmatprep.subr.mxu0 %v4666
      %4871 = vmatpush1.msra.mxu0 %v4665
      %4872 = vmatprep.subr.mxu0 %v4674
      %4873 = vmatpush1.msra.mxu0 %v4673
      %4874 = vmatprep.subr.mxu0 %v4682
      %4875 = vmatpush1.msra.mxu0 %v4681
      %4876 = vmatprep.subr.mxu0 %v4690
      %4877 = vmatpush1.msra.mxu0 %v4689
      %4878 = vmatprep.subr.mxu0 %v4698
      %4879 = vmatpush1.msra.mxu0 %v4697
      %4880 = vmatprep.subr.mxu0 %v4706
      %4881 = vmatpush1.msra.mxu0 %v4705
      %4882 = vmatprep.subr.mxu0 %v4714
      %4883 = vmatpush1.msra.mxu0 %v4713
      %4884 = vmatprep.subr.mxu0 %v4722
      %4885 = vmatpush1.msra.mxu0 %v4721
      %4886 = vmatprep.subr.mxu0 %v4730
      %4887 = vmatpush1.msra.mxu0 %v4729
      %4888 = vmatprep.subr.mxu0 %v4738
      %4889 = vmatpush1.msra.mxu0 %v4737
      %4890 = vmatprep.subr.mxu0 %v4746
      %4891 = vmatpush1.msra.mxu0 %v4745
      %4892 = vmatprep.subr.mxu0 %v4754
      %4893 = vmatpush1.msra.mxu0 %v4753
      %4894 = vmatprep.mubr.f32.mxu0 %v429
      %4895 = vmatmul.mubr.f32.gmra.mrb[0].mxu0 %v171
      %v4896 = vpop.f32.mrb[0].mxu0
      %v4897 = vadd.f32 0.0, %v4896
      %v4898 = vpop.f32.mrb[0].mxu0
      %v4899 = vadd.f32 0.0, %v4898
      %4900 = vdwg.mxu0
      %4901 = vmatprep.subr.mxu0 %v4508
      %4902 = vmatpush1.msra.mxu0 %v4507
      %4903 = vmatprep.subr.mxu0 %v4516
      %4904 = vmatpush1.msra.mxu0 %v4515
      %4905 = vmatprep.subr.mxu0 %v4524
      %4906 = vmatpush1.msra.mxu0 %v4523
      %4907 = vmatprep.subr.mxu0 %v4532
      %4908 = vmatpush1.msra.mxu0 %v4531
      %4909 = vmatprep.subr.mxu0 %v4540
      %4910 = vmatpush1.msra.mxu0 %v4539
      %4911 = vmatprep.subr.mxu0 %v4548
      %4912 = vmatpush1.msra.mxu0 %v4547
      %4913 = vmatprep.subr.mxu0 %v4556
      %4914 = vmatpush1.msra.mxu0 %v4555
      %4915 = vmatprep.subr.mxu0 %v4564
      %4916 = vmatpush1.msra.mxu0 %v4563
      %4917 = vmatprep.subr.mxu0 %v4572
      %4918 = vmatpush1.msra.mxu0 %v4571
      %4919 = vmatprep.subr.mxu0 %v4580
      %4920 = vmatpush1.msra.mxu0 %v4579
      %4921 = vmatprep.subr.mxu0 %v4588
      %4922 = vmatpush1.msra.mxu0 %v4587
      %4923 = vmatprep.subr.mxu0 %v4596
      %4924 = vmatpush1.msra.mxu0 %v4595
      %4925 = vmatprep.subr.mxu0 %v4604
      %4926 = vmatpush1.msra.mxu0 %v4603
      %4927 = vmatprep.subr.mxu0 %v4612
      %4928 = vmatpush1.msra.mxu0 %v4611
      %4929 = vmatprep.subr.mxu0 %v4620
      %4930 = vmatpush1.msra.mxu0 %v4619
      %4931 = vmatprep.subr.mxu0 %v4628
      %4932 = vmatpush1.msra.mxu0 %v4627
      %4933 = vmatprep.subr.mxu0 %v4636
      %4934 = vmatpush1.msra.mxu0 %v4635
      %4935 = vmatprep.subr.mxu0 %v4644
      %4936 = vmatpush1.msra.mxu0 %v4643
      %4937 = vmatprep.subr.mxu0 %v4652
      %4938 = vmatpush1.msra.mxu0 %v4651
      %4939 = vmatprep.subr.mxu0 %v4660
      %4940 = vmatpush1.msra.mxu0 %v4659
      %4941 = vmatprep.subr.mxu0 %v4668
      %4942 = vmatpush1.msra.mxu0 %v4667
      %4943 = vmatprep.subr.mxu0 %v4676
      %4944 = vmatpush1.msra.mxu0 %v4675
      %4945 = vmatprep.subr.mxu0 %v4684
      %4946 = vmatpush1.msra.mxu0 %v4683
      %4947 = vmatprep.subr.mxu0 %v4692
      %4948 = vmatpush1.msra.mxu0 %v4691
      %4949 = vmatprep.subr.mxu0 %v4700
      %4950 = vmatpush1.msra.mxu0 %v4699
      %4951 = vmatprep.subr.mxu0 %v4708
      %4952 = vmatpush1.msra.mxu0 %v4707
      %4953 = vmatprep.subr.mxu0 %v4716
      %4954 = vmatpush1.msra.mxu0 %v4715
      %4955 = vmatprep.subr.mxu0 %v4724
      %4956 = vmatpush1.msra.mxu0 %v4723
      %4957 = vmatprep.subr.mxu0 %v4732
      %4958 = vmatpush1.msra.mxu0 %v4731
      %4959 = vmatprep.subr.mxu0 %v4740
      %4960 = vmatpush1.msra.mxu0 %v4739
      %4961 = vmatprep.subr.mxu0 %v4748
      %4962 = vmatpush1.msra.mxu0 %v4747
      %4963 = vmatprep.subr.mxu0 %v4756
      %4964 = vmatpush1.msra.mxu0 %v4755
      %4965 = vmatprep.mubr.f32.mxu0 %v429
      %4966 = vmatmul.mubr.f32.gmra.mrb[0].mxu0 %v171
      %v4967 = vpop.f32.mrb[0].mxu0
      %v4968 = vadd.f32 0.0, %v4967
      %v4969 = vpop.f32.mrb[0].mxu0
      %v4970 = vadd.f32 0.0, %v4969
      %4971 = vdwg.mxu0
      %4972 = vmatprep.subr.mxu0 %v4510
      %4973 = vmatpush1.msra.mxu0 %v4509
      %4974 = vmatprep.subr.mxu0 %v4518
      %4975 = vmatpush1.msra.mxu0 %v4517
      %4976 = vmatprep.subr.mxu0 %v4526
      %4977 = vmatpush1.msra.mxu0 %v4525
      %4978 = vmatprep.subr.mxu0 %v4534
      %4979 = vmatpush1.msra.mxu0 %v4533
      %4980 = vmatprep.subr.mxu0 %v4542
      %4981 = vmatpush1.msra.mxu0 %v4541
      %4982 = vmatprep.subr.mxu0 %v4550
      %4983 = vmatpush1.msra.mxu0 %v4549
      %4984 = vmatprep.subr.mxu0 %v4558
      %4985 = vmatpush1.msra.mxu0 %v4557
      %4986 = vmatprep.subr.mxu0 %v4566
      %4987 = vmatpush1.msra.mxu0 %v4565
      %4988 = vmatprep.subr.mxu0 %v4574
      %4989 = vmatpush1.msra.mxu0 %v4573
      %4990 = vmatprep.subr.mxu0 %v4582
      %4991 = vmatpush1.msra.mxu0 %v4581
      %4992 = vmatprep.subr.mxu0 %v4590
      %4993 = vmatpush1.msra.mxu0 %v4589
      %4994 = vmatprep.subr.mxu0 %v4598
      %4995 = vmatpush1.msra.mxu0 %v4597
      %4996 = vmatprep.subr.mxu0 %v4606
      %4997 = vmatpush1.msra.mxu0 %v4605
      %4998 = vmatprep.subr.mxu0 %v4614
      %4999 = vmatpush1.msra.mxu0 %v4613
      %5000 = vmatprep.subr.mxu0 %v4622
      %5001 = vmatpush1.msra.mxu0 %v4621
      %5002 = vmatprep.subr.mxu0 %v4630
      %5003 = vmatpush1.msra.mxu0 %v4629
      %5004 = vmatprep.subr.mxu0 %v4638
      %5005 = vmatpush1.msra.mxu0 %v4637
      %5006 = vmatprep.subr.mxu0 %v4646
      %5007 = vmatpush1.msra.mxu0 %v4645
      %5008 = vmatprep.subr.mxu0 %v4654
      %5009 = vmatpush1.msra.mxu0 %v4653
      %5010 = vmatprep.subr.mxu0 %v4662
      %5011 = vmatpush1.msra.mxu0 %v4661
      %5012 = vmatprep.subr.mxu0 %v4670
      %5013 = vmatpush1.msra.mxu0 %v4669
      %5014 = vmatprep.subr.mxu0 %v4678
      %5015 = vmatpush1.msra.mxu0 %v4677
      %5016 = vmatprep.subr.mxu0 %v4686
      %5017 = vmatpush1.msra.mxu0 %v4685
      %5018 = vmatprep.subr.mxu0 %v4694
      %5019 = vmatpush1.msra.mxu0 %v4693
      %5020 = vmatprep.subr.mxu0 %v4702
      %5021 = vmatpush1.msra.mxu0 %v4701
      %5022 = vmatprep.subr.mxu0 %v4710
      %5023 = vmatpush1.msra.mxu0 %v4709
      %5024 = vmatprep.subr.mxu0 %v4718
      %5025 = vmatpush1.msra.mxu0 %v4717
      %5026 = vmatprep.subr.mxu0 %v4726
      %5027 = vmatpush1.msra.mxu0 %v4725
      %5028 = vmatprep.subr.mxu0 %v4734
      %5029 = vmatpush1.msra.mxu0 %v4733
      %5030 = vmatprep.subr.mxu0 %v4742
      %5031 = vmatpush1.msra.mxu0 %v4741
      %5032 = vmatprep.subr.mxu0 %v4750
      %5033 = vmatpush1.msra.mxu0 %v4749
      %5034 = vmatprep.subr.mxu0 %v4758
      %5035 = vmatpush1.msra.mxu0 %v4757
      %5036 = vmatprep.mubr.f32.mxu0 %v429
      %5037 = vmatmul.mubr.f32.gmra.mrb[0].mxu0 %v171
      %v5038 = vpop.f32.mrb[0].mxu0
      %v5039 = vadd.f32 0.0, %v5038
      %v5040 = vpop.f32.mrb[0].mxu0
      %v5041 = vadd.f32 0.0, %v5040
      %5042 = vdwg.mxu0
      %v5051 = vrot.slane %v1039, 4
      %v5052 = vrot.slane %v1041, 4
      %v5053 = vrot.slane %v1110, 4
      %v5054 = vrot.slane %v1112, 4
      %v5055 = vrot.slane %v1181, 4
      %v5056 = vrot.slane %v1183, 4
      %v5057 = vrot.slane %v1252, 4
      %v5058 = vrot.slane %v1254, 4
      %v5075 = vrot.slane %v2121, 4
      %v5076 = vrot.slane %v2123, 4
      %v5077 = vrot.slane %v2192, 4
      %v5078 = vrot.slane %v2194, 4
      %v5079 = vrot.slane %v2263, 4
      %v5080 = vrot.slane %v2265, 4
      %v5081 = vrot.slane %v2334, 4
      %v5082 = vrot.slane %v2336, 4
      %v5099 = vrot.slane %v3203, 4
      %v5100 = vrot.slane %v3205, 4
      %v5101 = vrot.slane %v3274, 4
      %v5102 = vrot.slane %v3276, 4
      %v5103 = vrot.slane %v3345, 4
      %v5104 = vrot.slane %v3347, 4
      %v5105 = vrot.slane %v3416, 4
      %v5106 = vrot.slane %v3418, 4
      %v5123 = vrot.slane %v4285, 4
      %v5124 = vrot.slane %v4287, 4
      %v5125 = vrot.slane %v4356, 4
      %v5126 = vrot.slane %v4358, 4
      %v5127 = vrot.slane %v4427, 4
      %v5128 = vrot.slane %v4429, 4
      %v5129 = vrot.slane %v4498, 4
      %v5130 = vrot.slane %v4500, 4
      %vm5139 = vcmask 1043456
      %v5140 = vsel %vm5139, %v498, %v5051
      %v5141 = vsel %vm5139, %v500, %v5052
      %v5142 = vsel %vm5139, %v569, %v5053
      %v5143 = vsel %vm5139, %v571, %v5054
      %v5144 = vsel %vm5139, %v640, %v5055
      %v5145 = vsel %vm5139, %v642, %v5056
      %v5146 = vsel %vm5139, %v711, %v5057
      %v5147 = vsel %vm5139, %v713, %v5058
      %v5148 = vsel %vm5139, %v1580, %v5075
      %v5149 = vsel %vm5139, %v1582, %v5076
      %v5150 = vsel %vm5139, %v1651, %v5077
      %v5151 = vsel %vm5139, %v1653, %v5078
      %v5152 = vsel %vm5139, %v1722, %v5079
      %v5153 = vsel %vm5139, %v1724, %v5080
      %v5154 = vsel %vm5139, %v1793, %v5081
      %v5155 = vsel %vm5139, %v1795, %v5082
      %v5156 = vsel %vm5139, %v2662, %v5099
      %v5157 = vsel %vm5139, %v2664, %v5100
      %v5158 = vsel %vm5139, %v2733, %v5101
      %v5159 = vsel %vm5139, %v2735, %v5102
      %v5160 = vsel %vm5139, %v2804, %v5103
      %v5161 = vsel %vm5139, %v2806, %v5104
      %v5162 = vsel %vm5139, %v2875, %v5105
      %v5163 = vsel %vm5139, %v2877, %v5106
      %v5164 = vsel %vm5139, %v3744, %v5123
      %v5165 = vsel %vm5139, %v3746, %v5124
      %v5166 = vsel %vm5139, %v3815, %v5125
      %v5167 = vsel %vm5139, %v3817, %v5126
      %v5168 = vsel %vm5139, %v3886, %v5127
      %v5169 = vsel %vm5139, %v3888, %v5128
      %v5170 = vsel %vm5139, %v3957, %v5129
      %v5171 = vsel %vm5139, %v3959, %v5130
      %v5172 = vld [vmem:[%s2] sm:$0xff]
      %vm5173 = vcmask 293888
      %v5175 = vsel %vm5173, %v5172, 0
      %v5178 = vsel %vm5139, %v4826, 0
      %v5181 = vsel %vm5139, %v4828, 0
      %v5184 = vsel %vm5139, %v4897, 0
      %v5187 = vsel %vm5139, %v4899, 0
      %v5190 = vsel %vm5139, %v4968, 0
      %v5193 = vsel %vm5139, %v4970, 0
      %v5196 = vsel %vm5139, %v5039, 0
      %v5199 = vsel %vm5139, %v5041, 0
      %5201 = vmatprep.subr.mxu0 %v5141
      %5202 = vmatpush1.msra.mxu0 %v5140
      %5203 = vmatprep.subr.mxu0 %v5149
      %5204 = vmatpush1.msra.mxu0 %v5148
      %5205 = vmatprep.subr.mxu0 %v5157
      %5206 = vmatpush1.msra.mxu0 %v5156
      %5207 = vmatprep.subr.mxu0 %v5165
      %5208 = vmatpush1.msra.mxu0 %v5164
      %5209 = vmatprep.subr.mxu0 %v5181
      %5210 = vmatpush1.msra.mxu0 %v5178
      %5211 = vmatprep.subr.mxu0 0.0
      %5212 = vmatpush1.msra.mxu0 0.0
      %5213 = vmatprep.subr.mxu0 0.0
      %5214 = vmatpush1.msra.mxu0 0.0
      %5215 = vmatprep.subr.mxu0 0.0
      %5216 = vmatpush1.msra.mxu0 0.0
      %5217 = vmatprep.subr.mxu0 0.0
      %5218 = vmatpush1.msra.mxu0 0.0
      %5219 = vmatprep.subr.mxu0 0.0
      %5220 = vmatpush1.msra.mxu0 0.0
      %5221 = vmatprep.subr.mxu0 0.0
      %5222 = vmatpush1.msra.mxu0 0.0
      %5223 = vmatprep.subr.mxu0 0.0
      %5224 = vmatpush1.msra.mxu0 0.0
      %5225 = vmatprep.subr.mxu0 0.0
      %5226 = vmatpush1.msra.mxu0 0.0
      %5227 = vmatprep.subr.mxu0 0.0
      %5228 = vmatpush1.msra.mxu0 0.0
      %5229 = vmatprep.subr.mxu0 0.0
      %5230 = vmatpush1.msra.mxu0 0.0
      %5231 = vmatprep.subr.mxu0 0.0
      %5232 = vmatpush1.msra.mxu0 0.0
      %5233 = vmatprep.subr.mxu0 0.0
      %5234 = vmatpush1.msra.mxu0 0.0
      %5235 = vmatprep.subr.mxu0 0.0
      %5236 = vmatpush1.msra.mxu0 0.0
      %5237 = vmatprep.subr.mxu0 0.0
      %5238 = vmatpush1.msra.mxu0 0.0
      %5239 = vmatprep.subr.mxu0 0.0
      %5240 = vmatpush1.msra.mxu0 0.0
      %5241 = vmatprep.subr.mxu0 0.0
      %5242 = vmatpush1.msra.mxu0 0.0
      %5243 = vmatprep.subr.mxu0 0.0
      %5244 = vmatpush1.msra.mxu0 0.0
      %5245 = vmatprep.subr.mxu0 0.0
      %5246 = vmatpush1.msra.mxu0 0.0
      %5247 = vmatprep.subr.mxu0 0.0
      %5248 = vmatpush1.msra.mxu0 0.0
      %5249 = vmatprep.subr.mxu0 0.0
      %5250 = vmatpush1.msra.mxu0 0.0
      %5251 = vmatprep.subr.mxu0 0.0
      %5252 = vmatpush1.msra.mxu0 0.0
      %5253 = vmatprep.subr.mxu0 0.0
      %5254 = vmatpush1.msra.mxu0 0.0
      %5255 = vmatprep.subr.mxu0 0.0
      %5256 = vmatpush1.msra.mxu0 0.0
      %5257 = vmatprep.subr.mxu0 0.0
      %5258 = vmatpush1.msra.mxu0 0.0
      %5259 = vmatprep.subr.mxu0 0.0
      %5260 = vmatpush1.msra.mxu0 0.0
      %5261 = vmatprep.subr.mxu0 0.0
      %5262 = vmatpush1.msra.mxu0 0.0
      %5263 = vmatprep.subr.mxu0 0.0
      %5264 = vmatpush1.msra.mxu0 0.0
      %5265 = vmatprep.mubr.f32.mxu0 0.0
      %5266 = vmatmul.mubr.f32.gmra.mrb[0].mxu0 %v5175
      %v5267 = vpop.f32.mrb[0].mxu0
      %v5268 = vadd.f32 0.0, %v5267
      %v5269 = vpop.f32.mrb[0].mxu0
      %v5270 = vadd.f32 0.0, %v5269
      %5271 = vdwg.mxu0
      %5272 = vmatprep.subr.mxu0 %v5143
      %5273 = vmatpush1.msra.mxu0 %v5142
      %5274 = vmatprep.subr.mxu0 %v5151
      %5275 = vmatpush1.msra.mxu0 %v5150
      %5276 = vmatprep.subr.mxu0 %v5159
      %5277 = vmatpush1.msra.mxu0 %v5158
      %5278 = vmatprep.subr.mxu0 %v5167
      %5279 = vmatpush1.msra.mxu0 %v5166
      %5280 = vmatprep.subr.mxu0 %v5187
      %5281 = vmatpush1.msra.mxu0 %v5184
      %5282 = vmatprep.subr.mxu0 0.0
      %5283 = vmatpush1.msra.mxu0 0.0
      %5284 = vmatprep.subr.mxu0 0.0
      %5285 = vmatpush1.msra.mxu0 0.0
      %5286 = vmatprep.subr.mxu0 0.0
      %5287 = vmatpush1.msra.mxu0 0.0
      %5288 = vmatprep.subr.mxu0 0.0
      %5289 = vmatpush1.msra.mxu0 0.0
      %5290 = vmatprep.subr.mxu0 0.0
      %5291 = vmatpush1.msra.mxu0 0.0
      %5292 = vmatprep.subr.mxu0 0.0
      %5293 = vmatpush1.msra.mxu0 0.0
      %5294 = vmatprep.subr.mxu0 0.0
      %5295 = vmatpush1.msra.mxu0 0.0
      %5296 = vmatprep.subr.mxu0 0.0
      %5297 = vmatpush1.msra.mxu0 0.0
      %5298 = vmatprep.subr.mxu0 0.0
      %5299 = vmatpush1.msra.mxu0 0.0
      %5300 = vmatprep.subr.mxu0 0.0
      %5301 = vmatpush1.msra.mxu0 0.0
      %5302 = vmatprep.subr.mxu0 0.0
      %5303 = vmatpush1.msra.mxu0 0.0
      %5304 = vmatprep.subr.mxu0 0.0
      %5305 = vmatpush1.msra.mxu0 0.0
      %5306 = vmatprep.subr.mxu0 0.0
      %5307 = vmatpush1.msra.mxu0 0.0
      %5308 = vmatprep.subr.mxu0 0.0
      %5309 = vmatpush1.msra.mxu0 0.0
      %5310 = vmatprep.subr.mxu0 0.0
      %5311 = vmatpush1.msra.mxu0 0.0
      %5312 = vmatprep.subr.mxu0 0.0
      %5313 = vmatpush1.msra.mxu0 0.0
      %5314 = vmatprep.subr.mxu0 0.0
      %5315 = vmatpush1.msra.mxu0 0.0
      %5316 = vmatprep.subr.mxu0 0.0
      %5317 = vmatpush1.msra.mxu0 0.0
      %5318 = vmatprep.subr.mxu0 0.0
      %5319 = vmatpush1.msra.mxu0 0.0
      %5320 = vmatprep.subr.mxu0 0.0
      %5321 = vmatpush1.msra.mxu0 0.0
      %5322 = vmatprep.subr.mxu0 0.0
      %5323 = vmatpush1.msra.mxu0 0.0
      %5324 = vmatprep.subr.mxu0 0.0
      %5325 = vmatpush1.msra.mxu0 0.0
      %5326 = vmatprep.subr.mxu0 0.0
      %5327 = vmatpush1.msra.mxu0 0.0
      %5328 = vmatprep.subr.mxu0 0.0
      %5329 = vmatpush1.msra.mxu0 0.0
      %5330 = vmatprep.subr.mxu0 0.0
      %5331 = vmatpush1.msra.mxu0 0.0
      %5332 = vmatprep.subr.mxu0 0.0
      %5333 = vmatpush1.msra.mxu0 0.0
      %5334 = vmatprep.subr.mxu0 0.0
      %5335 = vmatpush1.msra.mxu0 0.0
      %5336 = vmatprep.mubr.f32.mxu0 0.0
      %5337 = vmatmul.mubr.f32.gmra.mrb[0].mxu0 %v5175
      %v5338 = vpop.f32.mrb[0].mxu0
      %v5339 = vadd.f32 0.0, %v5338
      %v5340 = vpop.f32.mrb[0].mxu0
      %v5341 = vadd.f32 0.0, %v5340
      %5342 = vdwg.mxu0
      %5343 = vmatprep.subr.mxu0 %v5145
      %5344 = vmatpush1.msra.mxu0 %v5144
      %5345 = vmatprep.subr.mxu0 %v5153
      %5346 = vmatpush1.msra.mxu0 %v5152
      %5347 = vmatprep.subr.mxu0 %v5161
      %5348 = vmatpush1.msra.mxu0 %v5160
      %5349 = vmatprep.subr.mxu0 %v5169
      %5350 = vmatpush1.msra.mxu0 %v5168
      %5351 = vmatprep.subr.mxu0 %v5193
      %5352 = vmatpush1.msra.mxu0 %v5190
      %5353 = vmatprep.subr.mxu0 0.0
      %5354 = vmatpush1.msra.mxu0 0.0
      %5355 = vmatprep.subr.mxu0 0.0
      %5356 = vmatpush1.msra.mxu0 0.0
      %5357 = vmatprep.subr.mxu0 0.0
      %5358 = vmatpush1.msra.mxu0 0.0
      %5359 = vmatprep.subr.mxu0 0.0
      %5360 = vmatpush1.msra.mxu0 0.0
      %5361 = vmatprep.subr.mxu0 0.0
      %5362 = vmatpush1.msra.mxu0 0.0
      %5363 = vmatprep.subr.mxu0 0.0
      %5364 = vmatpush1.msra.mxu0 0.0
      %5365 = vmatprep.subr.mxu0 0.0
      %5366 = vmatpush1.msra.mxu0 0.0
      %5367 = vmatprep.subr.mxu0 0.0
      %5368 = vmatpush1.msra.mxu0 0.0
      %5369 = vmatprep.subr.mxu0 0.0
      %5370 = vmatpush1.msra.mxu0 0.0
      %5371 = vmatprep.subr.mxu0 0.0
      %5372 = vmatpush1.msra.mxu0 0.0
      %5373 = vmatprep.subr.mxu0 0.0
      %5374 = vmatpush1.msra.mxu0 0.0
      %5375 = vmatprep.subr.mxu0 0.0
      %5376 = vmatpush1.msra.mxu0 0.0
      %5377 = vmatprep.subr.mxu0 0.0
      %5378 = vmatpush1.msra.mxu0 0.0
      %5379 = vmatprep.subr.mxu0 0.0
      %5380 = vmatpush1.msra.mxu0 0.0
      %5381 = vmatprep.subr.mxu0 0.0
      %5382 = vmatpush1.msra.mxu0 0.0
      %5383 = vmatprep.subr.mxu0 0.0
      %5384 = vmatpush1.msra.mxu0 0.0
      %5385 = vmatprep.subr.mxu0 0.0
      %5386 = vmatpush1.msra.mxu0 0.0
      %5387 = vmatprep.subr.mxu0 0.0
      %5388 = vmatpush1.msra.mxu0 0.0
      %5389 = vmatprep.subr.mxu0 0.0
      %5390 = vmatpush1.msra.mxu0 0.0
      %5391 = vmatprep.subr.mxu0 0.0
      %5392 = vmatpush1.msra.mxu0 0.0
      %5393 = vmatprep.subr.mxu0 0.0
      %5394 = vmatpush1.msra.mxu0 0.0
      %5395 = vmatprep.subr.mxu0 0.0
      %5396 = vmatpush1.msra.mxu0 0.0
      %5397 = vmatprep.subr.mxu0 0.0
      %5398 = vmatpush1.msra.mxu0 0.0
      %5399 = vmatprep.subr.mxu0 0.0
      %5400 = vmatpush1.msra.mxu0 0.0
      %5401 = vmatprep.subr.mxu0 0.0
      %5402 = vmatpush1.msra.mxu0 0.0
      %5403 = vmatprep.subr.mxu0 0.0
      %5404 = vmatpush1.msra.mxu0 0.0
      %5405 = vmatprep.subr.mxu0 0.0
      %5406 = vmatpush1.msra.mxu0 0.0
      %5407 = vmatprep.mubr.f32.mxu0 0.0
      %5408 = vmatmul.mubr.f32.gmra.mrb[0].mxu0 %v5175
      %v5409 = vpop.f32.mrb[0].mxu0
      %v5410 = vadd.f32 0.0, %v5409
      %v5411 = vpop.f32.mrb[0].mxu0
      %v5412 = vadd.f32 0.0, %v5411
      %5413 = vdwg.mxu0
      %5414 = vmatprep.subr.mxu0 %v5147
      %5415 = vmatpush1.msra.mxu0 %v5146
      %5416 = vmatprep.subr.mxu0 %v5155
      %5417 = vmatpush1.msra.mxu0 %v5154
      %5418 = vmatprep.subr.mxu0 %v5163
      %5419 = vmatpush1.msra.mxu0 %v5162
      %5420 = vmatprep.subr.mxu0 %v5171
      %5421 = vmatpush1.msra.mxu0 %v5170
      %5422 = vmatprep.subr.mxu0 %v5199
      %5423 = vmatpush1.msra.mxu0 %v5196
      %5424 = vmatprep.subr.mxu0 0.0
      %5425 = vmatpush1.msra.mxu0 0.0
      %5426 = vmatprep.subr.mxu0 0.0
      %5427 = vmatpush1.msra.mxu0 0.0
      %5428 = vmatprep.subr.mxu0 0.0
      %5429 = vmatpush1.msra.mxu0 0.0
      %5430 = vmatprep.subr.mxu0 0.0
      %5431 = vmatpush1.msra.mxu0 0.0
      %5432 = vmatprep.subr.mxu0 0.0
      %5433 = vmatpush1.msra.mxu0 0.0
      %5434 = vmatprep.subr.mxu0 0.0
      %5435 = vmatpush1.msra.mxu0 0.0
      %5436 = vmatprep.subr.mxu0 0.0
      %5437 = vmatpush1.msra.mxu0 0.0
      %5438 = vmatprep.subr.mxu0 0.0
      %5439 = vmatpush1.msra.mxu0 0.0
      %5440 = vmatprep.subr.mxu0 0.0
      %5441 = vmatpush1.msra.mxu0 0.0
      %5442 = vmatprep.subr.mxu0 0.0
      %5443 = vmatpush1.msra.mxu0 0.0
      %5444 = vmatprep.subr.mxu0 0.0
      %5445 = vmatpush1.msra.mxu0 0.0
      %5446 = vmatprep.subr.mxu0 0.0
      %5447 = vmatpush1.msra.mxu0 0.0
      %5448 = vmatprep.subr.mxu0 0.0
      %5449 = vmatpush1.msra.mxu0 0.0
      %5450 = vmatprep.subr.mxu0 0.0
      %5451 = vmatpush1.msra.mxu0 0.0
      %5452 = vmatprep.subr.mxu0 0.0
      %5453 = vmatpush1.msra.mxu0 0.0
      %5454 = vmatprep.subr.mxu0 0.0
      %5455 = vmatpush1.msra.mxu0 0.0
      %5456 = vmatprep.subr.mxu0 0.0
      %5457 = vmatpush1.msra.mxu0 0.0
      %5458 = vmatprep.subr.mxu0 0.0
      %5459 = vmatpush1.msra.mxu0 0.0
      %5460 = vmatprep.subr.mxu0 0.0
      %5461 = vmatpush1.msra.mxu0 0.0
      %5462 = vmatprep.subr.mxu0 0.0
      %5463 = vmatpush1.msra.mxu0 0.0
      %5464 = vmatprep.subr.mxu0 0.0
      %5465 = vmatpush1.msra.mxu0 0.0
      %5466 = vmatprep.subr.mxu0 0.0
      %5467 = vmatpush1.msra.mxu0 0.0
      %5468 = vmatprep.subr.mxu0 0.0
      %5469 = vmatpush1.msra.mxu0 0.0
      %5470 = vmatprep.subr.mxu0 0.0
      %5471 = vmatpush1.msra.mxu0 0.0
      %5472 = vmatprep.subr.mxu0 0.0
      %5473 = vmatpush1.msra.mxu0 0.0
      %5474 = vmatprep.subr.mxu0 0.0
      %5475 = vmatpush1.msra.mxu0 0.0
      %5476 = vmatprep.subr.mxu0 0.0
      %5477 = vmatpush1.msra.mxu0 0.0
      %5478 = vmatprep.mubr.f32.mxu0 0.0
      %5479 = vmatmul.mubr.f32.gmra.mrb[0].mxu0 %v5175
      %v5480 = vpop.f32.mrb[0].mxu0
      %v5481 = vadd.f32 0.0, %v5480
      %v5482 = vpop.f32.mrb[0].mxu0
      %v5483 = vadd.f32 0.0, %v5482
      %5484 = vdwg.mxu0
      %v5485 = vadd.f32 %v5268, %v5270
      %v5486 = vadd.f32 %v5485, %v5339
      %v5487 = vadd.f32 %v5486, %v5341
      %v5488 = vadd.f32 %v5487, %v5410
      %v5489 = vadd.f32 %v5488, %v5412
      %v5490 = vadd.f32 %v5489, %v5481
      %v5491 = vadd.f32 %v5490, %v5483
      %5492 = vadd.xlane.f32.xlu0 %v5491
      %v5493 = vpop.xlane.xlu0 %5492
      %v5494 = vrcp.pop 1024.0
      %v5495 = vmul.f32 %v5493, %v5494
      %v5496 = vsub.f32 %v5268, %v5495
      %v5497 = vsub.f32 %v5270, %v5495
      %v5498 = vsub.f32 %v5339, %v5495
      %v5499 = vsub.f32 %v5341, %v5495
      %v5500 = vsub.f32 %v5410, %v5495
      %v5501 = vsub.f32 %v5412, %v5495
      %v5502 = vsub.f32 %v5481, %v5495
      %v5503 = vsub.f32 %v5483, %v5495
      %v5504 = vmul.f32 %v5496, %v5496
      %v5505 = vmul.f32 %v5497, %v5497
      %v5506 = vmul.f32 %v5498, %v5498
      %v5507 = vmul.f32 %v5499, %v5499
      %v5508 = vmul.f32 %v5500, %v5500
      %v5509 = vmul.f32 %v5501, %v5501
      %v5510 = vmul.f32 %v5502, %v5502
      %v5511 = vmul.f32 %v5503, %v5503
      %v5512 = vadd.f32 %v5504, %v5505
      %v5513 = vadd.f32 %v5512, %v5506
      %v5514 = vadd.f32 %v5513, %v5507
      %v5515 = vadd.f32 %v5514, %v5508
      %v5516 = vadd.f32 %v5515, %v5509
      %v5517 = vadd.f32 %v5516, %v5510
      %v5518 = vadd.f32 %v5517, %v5511
      %5519 = vadd.xlane.f32.xlu0 %v5518
      %v5520 = vpop.xlane.xlu0 %5519
      %v5521 = vmul.f32 %v5520, %v5494
      %v5522 = vadd.f32 %v5521, 1e-05
      %v5523 = vrsqrt.pop %v5522
      %v5524 = vmul.f32 %v5496, %v5523
      %v5525 = vmul.f32 %v5497, %v5523
      %v5526 = vmul.f32 %v5498, %v5523
      %v5527 = vmul.f32 %v5499, %v5523
      %v5528 = vmul.f32 %v5500, %v5523
      %v5529 = vmul.f32 %v5501, %v5523
      %v5530 = vmul.f32 %v5502, %v5523
      %v5531 = vmul.f32 %v5503, %v5523
      %vm5532 = vcmp.ge.f32.partialorder %v5524, 0.0
      %vm5533 = vcmp.ge.f32.partialorder %v5525, 0.0
      %vm5534 = vcmp.ge.f32.partialorder %v5526, 0.0
      %vm5535 = vcmp.ge.f32.partialorder %v5527, 0.0
      %vm5536 = vcmp.ge.f32.partialorder %v5528, 0.0
      %vm5537 = vcmp.ge.f32.partialorder %v5529, 0.0
      %vm5538 = vcmp.ge.f32.partialorder %v5530, 0.0
      %vm5539 = vcmp.ge.f32.partialorder %v5531, 0.0
      %v5540 = vmul.f32 %v5524, 0.2
      %v5541 = vmul.f32 %v5525, 0.2
      %v5542 = vmul.f32 %v5526, 0.2
      %v5543 = vmul.f32 %v5527, 0.2
      %v5544 = vmul.f32 %v5528, 0.2
      %v5545 = vmul.f32 %v5529, 0.2
      %v5546 = vmul.f32 %v5530, 0.2
      %v5547 = vmul.f32 %v5531, 0.2
      %v5548 = vsel %vm5532, %v5524, %v5540
      %v5549 = vsel %vm5533, %v5525, %v5541
      %v5550 = vsel %vm5534, %v5526, %v5542
      %v5551 = vsel %vm5535, %v5527, %v5543
      %v5552 = vsel %vm5536, %v5528, %v5544
      %v5553 = vsel %vm5537, %v5529, %v5545
      %v5554 = vsel %vm5538, %v5530, %v5546
      %v5555 = vsel %vm5539, %v5531, %v5547
      %5556 = vst [vmem:[%s170] sm:$0xff] %v5548
      %5557 = vst [vmem:[%s170 + $0x8] sm:$0xff] %v5549
      %5558 = vst [vmem:[%s170 + $0x10] sm:$0xff] %v5550
      %5559 = vst [vmem:[%s170 + $0x18] sm:$0xff] %v5551
      %5560 = vst [vmem:[%s170 + $0x20] sm:$0xff] %v5552
      %5561 = vst [vmem:[%s170 + $0x28] sm:$0xff] %v5553
      %5562 = vst [vmem:[%s170 + $0x30] sm:$0xff] %v5554
      %5563 = vst [vmem:[%s170 + $0x38] sm:$0xff] %v5555
      %p5564 = scmp.lt.s32.totalorder %s14, 1
      %s5565 = scalar_select %p5564, %s14, 1
      %s5566 = smul.addr %s5565, 8
      %s5567 = smul.addr %s5566, 8
      %s5568 = scalar_lea.vmem %s3, %s5567
      // Predicated region
      $region33: #{upblock_forward.1} parent=31 // pred_check
        %p5569 = pneg %p100
      $region34: #{upblock_forward.1} parent=31 // pred_check_branch
        %5571 = sbr.rel (%p5569) target = $region36
      $region35: #{upblock_forward.1} parent=31 // pred_region
        _
      $region36: #{upblock_forward.1} parent=31 // pred_fallthru
        _
    $region32: #{upblock_forward.1} parent=5 // pred_fallthru
      _
    %p5572 = scmp.le.s32.totalorder 2, %s9
    // Predicated region
    $region37: #{upblock_forward.1} parent=5 // pred_check
      %p5573 = pneg %p5572
    $region38: #{upblock_forward.1} parent=5 // pred_check_branch
      %5575 = sbr.rel (%p5573) target = $region40
    $region39: #{upblock_forward.1} parent=5 // pred_region
      %s5576 = ssub.s32 %s9, 2
      // Predicated region
      $region41: #{upblock_forward.1} parent=39 // pred_check
        %p5577 = pneg %p106
      $region42: #{upblock_forward.1} parent=39 // pred_check_branch
        %5579 = sbr.rel (%p5577) target = $region44
      $region43: #{upblock_forward.1} parent=39 // pred_region
        %p5580 = scmp.lt.s32.totalorder %s15, 1
        %s5581 = scalar_select %p5580, %s15, 1
        %s5582 = smul.addr %s5581, 8
        %s5583 = smul.addr %s5582, 8
        %s5584 = scalar_lea.vmem %s3, %s5583
      $region44: #{upblock_forward.1} parent=39 // pred_fallthru
        _
    $region40: #{upblock_forward.1} parent=5 // pred_fallthru
      _
  $region6: #{upblock_forward.1} parent=0 // loop_footer
    %s13 = sadd.s32 1, %s9
  $region7: #{upblock_forward.1} parent=0 // loop_footer_branch
    %8 = sbr.rel target = $region3
  $region8: #{upblock_forward.1} parent=0 // loop_exit
    _

</llo_original>
